<compile_context>
chip_gen: v5e
topology: v5e:2x2
jax: 0.10.0
libtpu: 0.0.40
codegen_flags: <defaults>
</compile_context>

<pallas_src>
import functools

import jax
import jax.numpy as jnp
from jax import lax
from jax.experimental import pallas as pl
from jax.experimental.pallas import tpu as pltpu

LATENT_DIM = 2


# ----------------------------------------------------------------------------
# fc + relu  (K = latent_dim = 2  ->  VPU broadcast-MAC, scalars from SMEM)
# ----------------------------------------------------------------------------
def _fc_relu_kernel(z_ref, w_ref, b_ref, o_ref, *, batch, latent):
    # z_ref: (batch, latent) in SMEM; w_ref: (latent, C, HW); b_ref: (C, HW)
    # o_ref: (batch, C, HW)
    for b in range(batch):
        acc = b_ref[...]
        for k in range(latent):
            acc = acc + z_ref[b, k] * w_ref[k]
        o_ref[b] = jnp.maximum(acc, 0.0)


def fc_relu_channel_major(z, w_kchw, b_chw):
    """relu(z @ W.T + b), returned per-image channel-major: (B, C, H*W)."""
    batch, latent = z.shape
    c, hw = b_chw.shape
    return pl.pallas_call(
        functools.partial(_fc_relu_kernel, batch=batch, latent=latent),
        out_shape=jax.ShapeDtypeStruct((batch, c, hw), jnp.float32),
        in_specs=[
            pl.BlockSpec(memory_space=pltpu.MemorySpace.SMEM),   # z scalars
            pl.BlockSpec(memory_space=pltpu.MemorySpace.VMEM),   # weights
            pl.BlockSpec(memory_space=pltpu.MemorySpace.VMEM),   # bias
        ],
        out_specs=pl.BlockSpec(memory_space=pltpu.MemorySpace.VMEM),
    )(z, w_kchw, b_chw)


# ----------------------------------------------------------------------------
# ConvTranspose2d(k=3, stride=2, padding=1, output_padding=1) + ReLU
# Sub-pixel decomposition: the 4 output parity planes
#   y[2m  , 2n  ] = x[m,n]·W11
#   y[2m  , 2n+1] = x[m,n]·W12 + x[m,n+1]·W10
#   y[2m+1, 2n  ] = x[m,n]·W21 + x[m+1,n]·W01
#   y[2m+1, 2n+1] = x[m,n]·W22 + x[m,n+1]·W20 + x[m+1,n]·W02 + x[m+1,n+1]·W00
# are computed on the flat (Cin, B*(H+1)*(W+1)) input (zero pad bottom/right);
# "x[m+1,n+1]" etc. are just lane shifts of the flat spatial axis.
# ----------------------------------------------------------------------------
def _deconv_s2_relu_kernel(x_ref, w_ref, b_ref, o_ref, *, npix, wpad):
    # x_ref: (Cin, npix + wpad + 1)   flat, bottom/right zero-padded input
    # w_ref: (3, 3, Cout, Cin)        w_ref[ki, kj] = W_{ki,kj}^T
    # b_ref: (Cout, 1);  o_ref: (4, Cout, npix)  parity planes (ee, eo, oe, oo)
    def tap(ki, kj, shift):
        return jnp.dot(w_ref[ki, kj], x_ref[:, shift:shift + npix],
                       preferred_element_type=jnp.float32)

    bias = b_ref[...]
    o_ref[0] = jnp.maximum(tap(1, 1, 0) + bias, 0.0)
    o_ref[1] = jnp.maximum(tap(1, 2, 0) + tap(1, 0, 1) + bias, 0.0)
    o_ref[2] = jnp.maximum(tap(2, 1, 0) + tap(0, 1, wpad) + bias, 0.0)
    o_ref[3] = jnp.maximum(
        tap(2, 2, 0) + tap(2, 0, 1) + tap(0, 2, wpad) + tap(0, 0, wpad + 1)
        + bias, 0.0)


def conv_transpose2d_s2_relu(x_cm, w_taps, b_col):
    """x_cm: (Cin, B, H, W) channel-major -> (Cout, B, 2H, 2W)."""
    cin, batch, h, w = x_cm.shape
    cout = w_taps.shape[2]
    hp, wp = h + 1, w + 1
    npix = batch * hp * wp
    xp = jnp.pad(x_cm, ((0, 0), (0, 0), (0, 1), (0, 1))).reshape(cin, npix)
    xp = jnp.pad(xp, ((0, 0), (0, wp + 1)))          # tail pad for largest shift
    y4 = pl.pallas_call(
        functools.partial(_deconv_s2_relu_kernel, npix=npix, wpad=wp),
        out_shape=jax.ShapeDtypeStruct((4, cout, npix), jnp.float32),
        in_specs=[pl.BlockSpec(memory_space=pltpu.MemorySpace.VMEM)] * 3,
        out_specs=pl.BlockSpec(memory_space=pltpu.MemorySpace.VMEM),
    )(xp, w_taps, b_col)
    # Drop garbage columns from the padding, interleave the 4 parity planes.
    y4 = y4.reshape(4, cout, batch, hp, wp)[:, :, :, :h, :w]
    even = jnp.stack([y4[0], y4[1]], axis=-1)        # y[2m  , 2n+s]
    odd = jnp.stack([y4[2], y4[3]], axis=-1)         # y[2m+1, 2n+s]
    full = jnp.stack([even, odd], axis=3)            # (Cout, B, H, 2, W, 2)
    return full.reshape(cout, batch, 2 * h, 2 * w)


# ----------------------------------------------------------------------------
# ConvTranspose2d(k=3, stride=1, padding=1) + tanh  (= conv with flipped kernel)
# ----------------------------------------------------------------------------
def _conv_s1_tanh_kernel(x_ref, w_ref, b_ref, o_ref, *, npix, wpad):
    # x_ref: (Cin, npix + 2*wpad + 2) flat, 1-pixel zero-padded input
    # w_ref: (3, 3, Cout, Cin) spatially flipped taps; b_ref: (Cout, 1)
    acc = b_ref[...]
    for di in range(3):
        for dj in range(3):
            shift = di * wpad + dj
            acc = acc + jnp.dot(w_ref[di, dj], x_ref[:, shift:shift + npix],
                                preferred_element_type=jnp.float32)
    o_ref[...] = jnp.tanh(acc)


def conv_transpose2d_s1_tanh(x_cm, w_taps, b_col):
    """x_cm: (Cin, B, H, W) channel-major -> (Cout, B, H, W)."""
    cin, batch, h, w = x_cm.shape
    cout = w_taps.shape[2]
    hp, wp = h + 2, w + 2
    npix = batch * hp * wp
    xp = jnp.pad(x_cm, ((0, 0), (0, 0), (1, 1), (1, 1))).reshape(cin, npix)
    xp = jnp.pad(xp, ((0, 0), (0, 2 * wp + 2)))
    y = pl.pallas_call(
        functools.partial(_conv_s1_tanh_kernel, npix=npix, wpad=wp),
        out_shape=jax.ShapeDtypeStruct((cout, npix), jnp.float32),
        in_specs=[pl.BlockSpec(memory_space=pltpu.MemorySpace.VMEM)] * 3,
        out_specs=pl.BlockSpec(memory_space=pltpu.MemorySpace.VMEM),
    )(xp, w_taps, b_col)
    return y.reshape(cout, batch, hp, wp)[:, :, :h, :w]


# ----------------------------------------------------------------------------
# Decoder parameters (PyTorch layouts) + forward
# ----------------------------------------------------------------------------
def init_decoder_params(key, latent_dim=LATENT_DIM):
    ks = jax.random.split(key, 8)

    def u(k, shape, fan_in):
        bound = 1.0 / jnp.sqrt(jnp.float32(fan_in))
        return jax.random.uniform(k, shape, jnp.float32, -bound, bound)

    return {
        "fc_w": u(ks[0], (64 * 7 * 7, latent_dim), latent_dim),   # (out, in)
        "fc_b": u(ks[1], (64 * 7 * 7,), latent_dim),
        "deconv1_w": u(ks[2], (64, 64, 3, 3), 64 * 9),            # (Cin,Cout,kh,kw)
        "deconv1_b": u(ks[3], (64,), 64 * 9),
        "deconv2_w": u(ks[4], (64, 32, 3, 3), 64 * 9),
        "deconv2_b": u(ks[5], (32,), 64 * 9),
        "out_w": u(ks[6], (32, 1, 3, 3), 32 * 9),
        "out_b": u(ks[7], (1,), 32 * 9),
    }


def decoder_forward(params, z):
    """Forward pass matching the PyTorch Decoder; NCHW at the boundary."""
    batch, latent = z.shape

    # One-time (tiny) weight re-layouts into kernel-friendly shapes.
    fc_w = params["fc_w"].T.reshape(latent, 64, 49)               # (K, C, H*W)
    fc_b = params["fc_b"].reshape(64, 49)
    d1_w = jnp.transpose(params["deconv1_w"], (2, 3, 1, 0))        # (3,3,Cout,Cin)
    d2_w = jnp.transpose(params["deconv2_w"], (2, 3, 1, 0))
    out_w = jnp.transpose(jnp.flip(params["out_w"], axis=(2, 3)), (2, 3, 1, 0))
    d1_b = params["deconv1_b"].reshape(-1, 1)
    d2_b = params["deconv2_b"].reshape(-1, 1)
    out_b = params["out_b"].reshape(-1, 1)

    # fc + relu : (B, K) -> channel-major (64, B, 7, 7)
    x = fc_relu_channel_major(z, fc_w, fc_b)                       # (B, 64, 49)
    x = jnp.transpose(x, (1, 0, 2)).reshape(64, batch, 7, 7)
    # deconv1 + relu : (64, B, 7, 7)  -> (64, B, 14, 14)
    x = conv_transpose2d_s2_relu(x, d1_w, d1_b)
    # deconv2 + relu : (64, B, 14, 14) -> (32, B, 28, 28)
    x = conv_transpose2d_s2_relu(x, d2_w, d2_b)
    # output_layer + tanh : (32, B, 28, 28) -> (1, B, 28, 28)
    x = conv_transpose2d_s1_tanh(x, out_w, out_b)
    return jnp.transpose(x, (1, 0, 2, 3))                          # (B, 1, 28, 28)


# ----------------------------------------------------------------------------
# Pure-JAX reference (PyTorch ConvTranspose2d semantics) for self-checking
# ----------------------------------------------------------------------------
def _ref_conv_transpose(x, w_t, b, stride, padding, output_padding):
    k = w_t.shape[-1]
    w_conv = jnp.transpose(jnp.flip(w_t, axis=(2, 3)), (1, 0, 2, 3))   # OIHW
    lo = k - 1 - padding
    hi = k - 1 - padding + output_padding
    y = lax.conv_general_dilated(
        x, w_conv, window_strides=(1, 1), padding=[(lo, hi), (lo, hi)],
        lhs_dilation=(stride, stride),
        dimension_numbers=("NCHW", "OIHW", "NCHW"),
        precision=lax.Precision.HIGHEST)
    return y + b.reshape(1, -1, 1, 1)


def decoder_reference(params, z):
    x = jax.nn.relu(jnp.dot(z, params["fc_w"].T,
                            precision=lax.Precision.HIGHEST) + params["fc_b"])
    x = x.reshape(-1, 64, 7, 7)
    x = jax.nn.relu(_ref_conv_transpose(x, params["deconv1_w"],
                                        params["deconv1_b"], 2, 1, 1))
    x = jax.nn.relu(_ref_conv_transpose(x, params["deconv2_w"],
                                        params["deconv2_b"], 2, 1, 1))
    x = jnp.tanh(_ref_conv_transpose(x, params["out_w"], params["out_b"],
                                     1, 1, 0))
    return x


if __name__ == "__main__":
    params = init_decoder_params(jax.random.PRNGKey(42))
    z = jax.random.normal(jax.random.PRNGKey(0), (2, LATENT_DIM),
                          dtype=jnp.float32)

    out = jax.block_until_ready(jax.jit(decoder_forward)(params, z))

    assert out.shape == (2, 1, 28, 28), out.shape
    assert bool(jnp.all(jnp.isfinite(out)))
    assert bool(jnp.all(jnp.abs(out) <= 1.0 + 1e-6))   # tanh range

    ref = jax.block_until_ready(jax.jit(decoder_reference)(params, z))
    max_err = float(jnp.max(jnp.abs(out - ref)))
    assert max_err < 5e-3, f"mismatch vs pure-JAX reference: {max_err}"

    print("KERNEL_OK")
</pallas_src>

<mosaic_0001>
module attributes {stable_mosaic.version = 11 : i64} {
  func.func @_fc_relu_kernel(%arg0: memref<2x2xf32, #tpu.memory_space<smem>>, %arg1: memref<2x64x49xf32, #tpu.memory_space<vmem>>, %arg2: memref<64x49xf32, #tpu.memory_space<vmem>>, %arg3: memref<2x64x49xf32, #tpu.memory_space<vmem>>) attributes {dimension_semantics = [], scalar_prefetch = 0 : i64, scratch_operands = 0 : i64, tpu.core_type = #tpu.core_type<tc>} {
    %c0 = arith.constant 0 : index
    %c0_0 = arith.constant 0 : index
    %0 = vector.load %arg2[%c0, %c0_0] : memref<64x49xf32, #tpu.memory_space<vmem>>, vector<64x49xf32>
    %c0_1 = arith.constant 0 : index
    %c0_2 = arith.constant 0 : index
    %1 = memref.load %arg0[%c0_1, %c0_2] : memref<2x2xf32, #tpu.memory_space<smem>>
    %c0_3 = arith.constant 0 : index
    %c0_4 = arith.constant 0 : index
    %c0_5 = arith.constant 0 : index
    %2 = vector.load %arg1[%c0_3, %c0_4, %c0_5] : memref<2x64x49xf32, #tpu.memory_space<vmem>>, vector<1x64x49xf32>
    %3 = vector.shape_cast %2 : vector<1x64x49xf32> to vector<64x49xf32>
    %4 = vector.broadcast %1 : f32 to vector<64x49xf32>
    %5 = arith.mulf %4, %3 : vector<64x49xf32>
    %6 = arith.addf %0, %5 : vector<64x49xf32>
    %c0_6 = arith.constant 0 : index
    %c1 = arith.constant 1 : index
    %7 = memref.load %arg0[%c0_6, %c1] : memref<2x2xf32, #tpu.memory_space<smem>>
    %c1_7 = arith.constant 1 : index
    %c0_8 = arith.constant 0 : index
    %c0_9 = arith.constant 0 : index
    %8 = vector.load %arg1[%c1_7, %c0_8, %c0_9] : memref<2x64x49xf32, #tpu.memory_space<vmem>>, vector<1x64x49xf32>
    %9 = vector.shape_cast %8 : vector<1x64x49xf32> to vector<64x49xf32>
    %10 = vector.broadcast %7 : f32 to vector<64x49xf32>
    %11 = arith.mulf %10, %9 : vector<64x49xf32>
    %12 = arith.addf %6, %11 : vector<64x49xf32>
    %cst = arith.constant 0.000000e+00 : f32
    %13 = vector.broadcast %cst : f32 to vector<64x49xf32>
    %14 = arith.maximumf %12, %13 : vector<64x49xf32>
    %c0_10 = arith.constant 0 : index
    %c0_11 = arith.constant 0 : index
    %c0_12 = arith.constant 0 : index
    %15 = vector.load %arg3[%c0_10, %c0_11, %c0_12] : memref<2x64x49xf32, #tpu.memory_space<vmem>>, vector<1x64x49xf32>
    %16 = vector.shape_cast %15 : vector<1x64x49xf32> to vector<64x49xf32>
    %17 = vector.shape_cast %14 : vector<64x49xf32> to vector<1x64x49xf32>
    tpu.vector_store %arg3[%c0_10, %c0_11, %c0_12], %17 {strides = array<i32>} : memref<2x64x49xf32, #tpu.memory_space<vmem>>, vector<1x64x49xf32>,
    %c0_13 = arith.constant 0 : index
    %c0_14 = arith.constant 0 : index
    %18 = vector.load %arg2[%c0_13, %c0_14] : memref<64x49xf32, #tpu.memory_space<vmem>>, vector<64x49xf32>
    %c1_15 = arith.constant 1 : index
    %c0_16 = arith.constant 0 : index
    %19 = memref.load %arg0[%c1_15, %c0_16] : memref<2x2xf32, #tpu.memory_space<smem>>
    %c0_17 = arith.constant 0 : index
    %c0_18 = arith.constant 0 : index
    %c0_19 = arith.constant 0 : index
    %20 = vector.load %arg1[%c0_17, %c0_18, %c0_19] : memref<2x64x49xf32, #tpu.memory_space<vmem>>, vector<1x64x49xf32>
    %21 = vector.shape_cast %20 : vector<1x64x49xf32> to vector<64x49xf32>
    %22 = vector.broadcast %19 : f32 to vector<64x49xf32>
    %23 = arith.mulf %22, %21 : vector<64x49xf32>
    %24 = arith.addf %18, %23 : vector<64x49xf32>
    %c1_20 = arith.constant 1 : index
    %c1_21 = arith.constant 1 : index
    %25 = memref.load %arg0[%c1_20, %c1_21] : memref<2x2xf32, #tpu.memory_space<smem>>
    %c1_22 = arith.constant 1 : index
    %c0_23 = arith.constant 0 : index
    %c0_24 = arith.constant 0 : index
    %26 = vector.load %arg1[%c1_22, %c0_23, %c0_24] : memref<2x64x49xf32, #tpu.memory_space<vmem>>, vector<1x64x49xf32>
    %27 = vector.shape_cast %26 : vector<1x64x49xf32> to vector<64x49xf32>
    %28 = vector.broadcast %25 : f32 to vector<64x49xf32>
    %29 = arith.mulf %28, %27 : vector<64x49xf32>
    %30 = arith.addf %24, %29 : vector<64x49xf32>
    %cst_25 = arith.constant 0.000000e+00 : f32
    %31 = vector.broadcast %cst_25 : f32 to vector<64x49xf32>
    %32 = arith.maximumf %30, %31 : vector<64x49xf32>
    %c1_26 = arith.constant 1 : index
    %c0_27 = arith.constant 0 : index
    %c0_28 = arith.constant 0 : index
    %33 = vector.load %arg3[%c1_26, %c0_27, %c0_28] : memref<2x64x49xf32, #tpu.memory_space<vmem>>, vector<1x64x49xf32>
    %34 = vector.shape_cast %33 : vector<1x64x49xf32> to vector<64x49xf32>
    %35 = vector.shape_cast %32 : vector<64x49xf32> to vector<1x64x49xf32>
    tpu.vector_store %arg3[%c1_26, %c0_27, %c0_28], %35 {strides = array<i32>} : memref<2x64x49xf32, #tpu.memory_space<vmem>>, vector<1x64x49xf32>,
    return
  }
}

module attributes {stable_mosaic.version = 11 : i64} {
  func.func @_deconv_s2_relu_kernel(%arg0: memref<64x137xf32, #tpu.memory_space<vmem>>, %arg1: memref<3x3x64x64xf32, #tpu.memory_space<vmem>>, %arg2: memref<64x1xf32, #tpu.memory_space<vmem>>, %arg3: memref<4x64x128xf32, #tpu.memory_space<vmem>>) attributes {dimension_semantics = [], scalar_prefetch = 0 : i64, scratch_operands = 0 : i64, tpu.core_type = #tpu.core_type<tc>} {
    %c0 = arith.constant 0 : index
    %c0_0 = arith.constant 0 : index
    %0 = vector.load %arg2[%c0, %c0_0] : memref<64x1xf32, #tpu.memory_space<vmem>>, vector<64x1xf32>
    %c1 = arith.constant 1 : index
    %c1_1 = arith.constant 1 : index
    %c0_2 = arith.constant 0 : index
    %c0_3 = arith.constant 0 : index
    %1 = vector.load %arg1[%c1, %c1_1, %c0_2, %c0_3] : memref<3x3x64x64xf32, #tpu.memory_space<vmem>>, vector<1x1x64x64xf32>
    %2 = vector.shape_cast %1 : vector<1x1x64x64xf32> to vector<64x64xf32>
    %c0_4 = arith.constant 0 : index
    %c0_5 = arith.constant 0 : index
    %3 = vector.load %arg0[%c0_4, %c0_5] : memref<64x137xf32, #tpu.memory_space<vmem>>, vector<64x128xf32>
    %cst = arith.constant dense<0.000000e+00> : vector<64x128xf32>
    %4 = tpu.matmul %2, %3, %cst {dimension_numbers = #tpu.dot_dimension_numbers<[1], [0], [0], [1], [0, 0, 1, 1], [], []>} : vector<64x64xf32>, vector<64x128xf32>, vector<64x128xf32> -> vector<64x128xf32>
    %5 = vector.broadcast %0 : vector<64x1xf32> to vector<64x128xf32>
    %6 = arith.addf %4, %5 : vector<64x128xf32>
    %cst_6 = arith.constant 0.000000e+00 : f32
    %7 = vector.broadcast %cst_6 : f32 to vector<64x128xf32>
    %8 = arith.maximumf %6, %7 : vector<64x128xf32>
    %c0_7 = arith.constant 0 : index
    %c0_8 = arith.constant 0 : index
    %c0_9 = arith.constant 0 : index
    %9 = vector.load %arg3[%c0_7, %c0_8, %c0_9] : memref<4x64x128xf32, #tpu.memory_space<vmem>>, vector<1x64x128xf32>
    %10 = vector.shape_cast %9 : vector<1x64x128xf32> to vector<64x128xf32>
    %11 = vector.shape_cast %8 : vector<64x128xf32> to vector<1x64x128xf32>
    tpu.vector_store %arg3[%c0_7, %c0_8, %c0_9], %11 {strides = array<i32>} : memref<4x64x128xf32, #tpu.memory_space<vmem>>, vector<1x64x128xf32>,
    %c1_10 = arith.constant 1 : index
    %c2 = arith.constant 2 : index
    %c0_11 = arith.constant 0 : index
    %c0_12 = arith.constant 0 : index
    %12 = vector.load %arg1[%c1_10, %c2, %c0_11, %c0_12] : memref<3x3x64x64xf32, #tpu.memory_space<vmem>>, vector<1x1x64x64xf32>
    %13 = vector.shape_cast %12 : vector<1x1x64x64xf32> to vector<64x64xf32>
    %c0_13 = arith.constant 0 : index
    %c0_14 = arith.constant 0 : index
    %14 = vector.load %arg0[%c0_13, %c0_14] : memref<64x137xf32, #tpu.memory_space<vmem>>, vector<64x128xf32>
    %cst_15 = arith.constant dense<0.000000e+00> : vector<64x128xf32>
    %15 = tpu.matmul %13, %14, %cst_15 {dimension_numbers = #tpu.dot_dimension_numbers<[1], [0], [0], [1], [0, 0, 1, 1], [], []>} : vector<64x64xf32>, vector<64x128xf32>, vector<64x128xf32> -> vector<64x128xf32>
    %c1_16 = arith.constant 1 : index
    %c0_17 = arith.constant 0 : index
    %c0_18 = arith.constant 0 : index
    %c0_19 = arith.constant 0 : index
    %16 = vector.load %arg1[%c1_16, %c0_17, %c0_18, %c0_19] : memref<3x3x64x64xf32, #tpu.memory_space<vmem>>, vector<1x1x64x64xf32>
    %17 = vector.shape_cast %16 : vector<1x1x64x64xf32> to vector<64x64xf32>
    %c0_20 = arith.constant 0 : index
    %c1_21 = arith.constant 1 : index
    %18 = vector.load %arg0[%c0_20, %c1_21] : memref<64x137xf32, #tpu.memory_space<vmem>>, vector<64x128xf32>
    %cst_22 = arith.constant dense<0.000000e+00> : vector<64x128xf32>
    %19 = tpu.matmul %17, %18, %cst_22 {dimension_numbers = #tpu.dot_dimension_numbers<[1], [0], [0], [1], [0, 0, 1, 1], [], []>} : vector<64x64xf32>, vector<64x128xf32>, vector<64x128xf32> -> vector<64x128xf32>
    %20 = arith.addf %15, %19 : vector<64x128xf32>
    %21 = vector.broadcast %0 : vector<64x1xf32> to vector<64x128xf32>
    %22 = arith.addf %20, %21 : vector<64x128xf32>
    %cst_23 = arith.constant 0.000000e+00 : f32
    %23 = vector.broadcast %cst_23 : f32 to vector<64x128xf32>
    %24 = arith.maximumf %22, %23 : vector<64x128xf32>
    %c1_24 = arith.constant 1 : index
    %c0_25 = arith.constant 0 : index
    %c0_26 = arith.constant 0 : index
    %25 = vector.load %arg3[%c1_24, %c0_25, %c0_26] : memref<4x64x128xf32, #tpu.memory_space<vmem>>, vector<1x64x128xf32>
    %26 = vector.shape_cast %25 : vector<1x64x128xf32> to vector<64x128xf32>
    %27 = vector.shape_cast %24 : vector<64x128xf32> to vector<1x64x128xf32>
    tpu.vector_store %arg3[%c1_24, %c0_25, %c0_26], %27 {strides = array<i32>} : memref<4x64x128xf32, #tpu.memory_space<vmem>>, vector<1x64x128xf32>,
    %c2_27 = arith.constant 2 : index
    %c1_28 = arith.constant 1 : index
    %c0_29 = arith.constant 0 : index
    %c0_30 = arith.constant 0 : index
    %28 = vector.load %arg1[%c2_27, %c1_28, %c0_29, %c0_30] : memref<3x3x64x64xf32, #tpu.memory_space<vmem>>, vector<1x1x64x64xf32>
    %29 = vector.shape_cast %28 : vector<1x1x64x64xf32> to vector<64x64xf32>
    %c0_31 = arith.constant 0 : index
    %c0_32 = arith.constant 0 : index
    %30 = vector.load %arg0[%c0_31, %c0_32] : memref<64x137xf32, #tpu.memory_space<vmem>>, vector<64x128xf32>
    %cst_33 = arith.constant dense<0.000000e+00> : vector<64x128xf32>
    %31 = tpu.matmul %29, %30, %cst_33 {dimension_numbers = #tpu.dot_dimension_numbers<[1], [0], [0], [1], [0, 0, 1, 1], [], []>} : vector<64x64xf32>, vector<64x128xf32>, vector<64x128xf32> -> vector<64x128xf32>
    %c0_34 = arith.constant 0 : index
    %c1_35 = arith.constant 1 : index
    %c0_36 = arith.constant 0 : index
    %c0_37 = arith.constant 0 : index
    %32 = vector.load %arg1[%c0_34, %c1_35, %c0_36, %c0_37] : memref<3x3x64x64xf32, #tpu.memory_space<vmem>>, vector<1x1x64x64xf32>
    %33 = vector.shape_cast %32 : vector<1x1x64x64xf32> to vector<64x64xf32>
    %c0_38 = arith.constant 0 : index
    %c8 = arith.constant 8 : index
    %34 = vector.load %arg0[%c0_38, %c8] : memref<64x137xf32, #tpu.memory_space<vmem>>, vector<64x128xf32>
    %cst_39 = arith.constant dense<0.000000e+00> : vector<64x128xf32>
    %35 = tpu.matmul %33, %34, %cst_39 {dimension_numbers = #tpu.dot_dimension_numbers<[1], [0], [0], [1], [0, 0, 1, 1], [], []>} : vector<64x64xf32>, vector<64x128xf32>, vector<64x128xf32> -> vector<64x128xf32>
    %36 = arith.addf %31, %35 : vector<64x128xf32>
    %37 = vector.broadcast %0 : vector<64x1xf32> to vector<64x128xf32>
    %38 = arith.addf %36, %37 : vector<64x128xf32>
    %cst_40 = arith.constant 0.000000e+00 : f32
    %39 = vector.broadcast %cst_40 : f32 to vector<64x128xf32>
    %40 = arith.maximumf %38, %39 : vector<64x128xf32>
    %c2_41 = arith.constant 2 : index
    %c0_42 = arith.constant 0 : index
    %c0_43 = arith.constant 0 : index
    %41 = vector.load %arg3[%c2_41, %c0_42, %c0_43] : memref<4x64x128xf32, #tpu.memory_space<vmem>>, vector<1x64x128xf32>
    %42 = vector.shape_cast %41 : vector<1x64x128xf32> to vector<64x128xf32>
    %43 = vector.shape_cast %40 : vector<64x128xf32> to vector<1x64x128xf32>
    tpu.vector_store %arg3[%c2_41, %c0_42, %c0_43], %43 {strides = array<i32>} : memref<4x64x128xf32, #tpu.memory_space<vmem>>, vector<1x64x128xf32>,
    %c2_44 = arith.constant 2 : index
    %c2_45 = arith.constant 2 : index
    %c0_46 = arith.constant 0 : index
    %c0_47 = arith.constant 0 : index
    %44 = vector.load %arg1[%c2_44, %c2_45, %c0_46, %c0_47] : memref<3x3x64x64xf32, #tpu.memory_space<vmem>>, vector<1x1x64x64xf32>
    %45 = vector.shape_cast %44 : vector<1x1x64x64xf32> to vector<64x64xf32>
    %c0_48 = arith.constant 0 : index
    %c0_49 = arith.constant 0 : index
    %46 = vector.load %arg0[%c0_48, %c0_49] : memref<64x137xf32, #tpu.memory_space<vmem>>, vector<64x128xf32>
    %cst_50 = arith.constant dense<0.000000e+00> : vector<64x128xf32>
    %47 = tpu.matmul %45, %46, %cst_50 {dimension_numbers = #tpu.dot_dimension_numbers<[1], [0], [0], [1], [0, 0, 1, 1], [], []>} : vector<64x64xf32>, vector<64x128xf32>, vector<64x128xf32> -> vector<64x128xf32>
    %c2_51 = arith.constant 2 : index
    %c0_52 = arith.constant 0 : index
    %c0_53 = arith.constant 0 : index
    %c0_54 = arith.constant 0 : index
    %48 = vector.load %arg1[%c2_51, %c0_52, %c0_53, %c0_54] : memref<3x3x64x64xf32, #tpu.memory_space<vmem>>, vector<1x1x64x64xf32>
    %49 = vector.shape_cast %48 : vector<1x1x64x64xf32> to vector<64x64xf32>
    %c0_55 = arith.constant 0 : index
    %c1_56 = arith.constant 1 : index
    %50 = vector.load %arg0[%c0_55, %c1_56] : memref<64x137xf32, #tpu.memory_space<vmem>>, vector<64x128xf32>
    %cst_57 = arith.constant dense<0.000000e+00> : vector<64x128xf32>
    %51 = tpu.matmul %49, %50, %cst_57 {dimension_numbers = #tpu.dot_dimension_numbers<[1], [0], [0], [1], [0, 0, 1, 1], [], []>} : vector<64x64xf32>, vector<64x128xf32>, vector<64x128xf32> -> vector<64x128xf32>
    %52 = arith.addf %47, %51 : vector<64x128xf32>
    %c0_58 = arith.constant 0 : index
    %c2_59 = arith.constant 2 : index
    %c0_60 = arith.constant 0 : index
    %c0_61 = arith.constant 0 : index
    %53 = vector.load %arg1[%c0_58, %c2_59, %c0_60, %c0_61] : memref<3x3x64x64xf32, #tpu.memory_space<vmem>>, vector<1x1x64x64xf32>
    %54 = vector.shape_cast %53 : vector<1x1x64x64xf32> to vector<64x64xf32>
    %c0_62 = arith.constant 0 : index
    %c8_63 = arith.constant 8 : index
    %55 = vector.load %arg0[%c0_62, %c8_63] : memref<64x137xf32, #tpu.memory_space<vmem>>, vector<64x128xf32>
    %cst_64 = arith.constant dense<0.000000e+00> : vector<64x128xf32>
    %56 = tpu.matmul %54, %55, %cst_64 {dimension_numbers = #tpu.dot_dimension_numbers<[1], [0], [0], [1], [0, 0, 1, 1], [], []>} : vector<64x64xf32>, vector<64x128xf32>, vector<64x128xf32> -> vector<64x128xf32>
    %57 = arith.addf %52, %56 : vector<64x128xf32>
    %c0_65 = arith.constant 0 : index
    %c0_66 = arith.constant 0 : index
    %c0_67 = arith.constant 0 : index
    %c0_68 = arith.constant 0 : index
    %58 = vector.load %arg1[%c0_65, %c0_66, %c0_67, %c0_68] : memref<3x3x64x64xf32, #tpu.memory_space<vmem>>, vector<1x1x64x64xf32>
    %59 = vector.shape_cast %58 : vector<1x1x64x64xf32> to vector<64x64xf32>
    %c0_69 = arith.constant 0 : index
    %c9 = arith.constant 9 : index
    %60 = vector.load %arg0[%c0_69, %c9] : memref<64x137xf32, #tpu.memory_space<vmem>>, vector<64x128xf32>
    %cst_70 = arith.constant dense<0.000000e+00> : vector<64x128xf32>
    %61 = tpu.matmul %59, %60, %cst_70 {dimension_numbers = #tpu.dot_dimension_numbers<[1], [0], [0], [1], [0, 0, 1, 1], [], []>} : vector<64x64xf32>, vector<64x128xf32>, vector<64x128xf32> -> vector<64x128xf32>
    %62 = arith.addf %57, %61 : vector<64x128xf32>
    %63 = vector.broadcast %0 : vector<64x1xf32> to vector<64x128xf32>
    %64 = arith.addf %62, %63 : vector<64x128xf32>
    %cst_71 = arith.constant 0.000000e+00 : f32
    %65 = vector.broadcast %cst_71 : f32 to vector<64x128xf32>
    %66 = arith.maximumf %64, %65 : vector<64x128xf32>
    %c3 = arith.constant 3 : index
    %c0_72 = arith.constant 0 : index
    %c0_73 = arith.constant 0 : index
    %67 = vector.load %arg3[%c3, %c0_72, %c0_73] : memref<4x64x128xf32, #tpu.memory_space<vmem>>, vector<1x64x128xf32>
    %68 = vector.shape_cast %67 : vector<1x64x128xf32> to vector<64x128xf32>
    %69 = vector.shape_cast %66 : vector<64x128xf32> to vector<1x64x128xf32>
    tpu.vector_store %arg3[%c3, %c0_72, %c0_73], %69 {strides = array<i32>} : memref<4x64x128xf32, #tpu.memory_space<vmem>>, vector<1x64x128xf32>,
    return
  }
}

module attributes {stable_mosaic.version = 11 : i64} {
  func.func @_deconv_s2_relu_kernel(%arg0: memref<64x466xf32, #tpu.memory_space<vmem>>, %arg1: memref<3x3x32x64xf32, #tpu.memory_space<vmem>>, %arg2: memref<32x1xf32, #tpu.memory_space<vmem>>, %arg3: memref<4x32x450xf32, #tpu.memory_space<vmem>>) attributes {dimension_semantics = [], scalar_prefetch = 0 : i64, scratch_operands = 0 : i64, tpu.core_type = #tpu.core_type<tc>} {
    %c0 = arith.constant 0 : index
    %c0_0 = arith.constant 0 : index
    %0 = vector.load %arg2[%c0, %c0_0] : memref<32x1xf32, #tpu.memory_space<vmem>>, vector<32x1xf32>
    %c1 = arith.constant 1 : index
    %c1_1 = arith.constant 1 : index
    %c0_2 = arith.constant 0 : index
    %c0_3 = arith.constant 0 : index
    %1 = vector.load %arg1[%c1, %c1_1, %c0_2, %c0_3] : memref<3x3x32x64xf32, #tpu.memory_space<vmem>>, vector<1x1x32x64xf32>
    %2 = vector.shape_cast %1 : vector<1x1x32x64xf32> to vector<32x64xf32>
    %c0_4 = arith.constant 0 : index
    %c0_5 = arith.constant 0 : index
    %3 = vector.load %arg0[%c0_4, %c0_5] : memref<64x466xf32, #tpu.memory_space<vmem>>, vector<64x450xf32>
    %cst = arith.constant dense<0.000000e+00> : vector<32x450xf32>
    %4 = tpu.matmul %2, %3, %cst {dimension_numbers = #tpu.dot_dimension_numbers<[1], [0], [0], [1], [0, 0, 1, 1], [], []>} : vector<32x64xf32>, vector<64x450xf32>, vector<32x450xf32> -> vector<32x450xf32>
    %5 = vector.broadcast %0 : vector<32x1xf32> to vector<32x450xf32>
    %6 = arith.addf %4, %5 : vector<32x450xf32>
    %cst_6 = arith.constant 0.000000e+00 : f32
    %7 = vector.broadcast %cst_6 : f32 to vector<32x450xf32>
    %8 = arith.maximumf %6, %7 : vector<32x450xf32>
    %c0_7 = arith.constant 0 : index
    %c0_8 = arith.constant 0 : index
    %c0_9 = arith.constant 0 : index
    %9 = vector.load %arg3[%c0_7, %c0_8, %c0_9] : memref<4x32x450xf32, #tpu.memory_space<vmem>>, vector<1x32x450xf32>
    %10 = vector.shape_cast %9 : vector<1x32x450xf32> to vector<32x450xf32>
    %11 = vector.shape_cast %8 : vector<32x450xf32> to vector<1x32x450xf32>
    tpu.vector_store %arg3[%c0_7, %c0_8, %c0_9], %11 {strides = array<i32>} : memref<4x32x450xf32, #tpu.memory_space<vmem>>, vector<1x32x450xf32>,
    %c1_10 = arith.constant 1 : index
    %c2 = arith.constant 2 : index
    %c0_11 = arith.constant 0 : index
    %c0_12 = arith.constant 0 : index
    %12 = vector.load %arg1[%c1_10, %c2, %c0_11, %c0_12] : memref<3x3x32x64xf32, #tpu.memory_space<vmem>>, vector<1x1x32x64xf32>
    %13 = vector.shape_cast %12 : vector<1x1x32x64xf32> to vector<32x64xf32>
    %c0_13 = arith.constant 0 : index
    %c0_14 = arith.constant 0 : index
    %14 = vector.load %arg0[%c0_13, %c0_14] : memref<64x466xf32, #tpu.memory_space<vmem>>, vector<64x450xf32>
    %cst_15 = arith.constant dense<0.000000e+00> : vector<32x450xf32>
    %15 = tpu.matmul %13, %14, %cst_15 {dimension_numbers = #tpu.dot_dimension_numbers<[1], [0], [0], [1], [0, 0, 1, 1], [], []>} : vector<32x64xf32>, vector<64x450xf32>, vector<32x450xf32> -> vector<32x450xf32>
    %c1_16 = arith.constant 1 : index
    %c0_17 = arith.constant 0 : index
    %c0_18 = arith.constant 0 : index
    %c0_19 = arith.constant 0 : index
    %16 = vector.load %arg1[%c1_16, %c0_17, %c0_18, %c0_19] : memref<3x3x32x64xf32, #tpu.memory_space<vmem>>, vector<1x1x32x64xf32>
    %17 = vector.shape_cast %16 : vector<1x1x32x64xf32> to vector<32x64xf32>
    %c0_20 = arith.constant 0 : index
    %c1_21 = arith.constant 1 : index
    %18 = vector.load %arg0[%c0_20, %c1_21] : memref<64x466xf32, #tpu.memory_space<vmem>>, vector<64x450xf32>
    %cst_22 = arith.constant dense<0.000000e+00> : vector<32x450xf32>
    %19 = tpu.matmul %17, %18, %cst_22 {dimension_numbers = #tpu.dot_dimension_numbers<[1], [0], [0], [1], [0, 0, 1, 1], [], []>} : vector<32x64xf32>, vector<64x450xf32>, vector<32x450xf32> -> vector<32x450xf32>
    %20 = arith.addf %15, %19 : vector<32x450xf32>
    %21 = vector.broadcast %0 : vector<32x1xf32> to vector<32x450xf32>
    %22 = arith.addf %20, %21 : vector<32x450xf32>
    %cst_23 = arith.constant 0.000000e+00 : f32
    %23 = vector.broadcast %cst_23 : f32 to vector<32x450xf32>
    %24 = arith.maximumf %22, %23 : vector<32x450xf32>
    %c1_24 = arith.constant 1 : index
    %c0_25 = arith.constant 0 : index
    %c0_26 = arith.constant 0 : index
    %25 = vector.load %arg3[%c1_24, %c0_25, %c0_26] : memref<4x32x450xf32, #tpu.memory_space<vmem>>, vector<1x32x450xf32>
    %26 = vector.shape_cast %25 : vector<1x32x450xf32> to vector<32x450xf32>
    %27 = vector.shape_cast %24 : vector<32x450xf32> to vector<1x32x450xf32>
    tpu.vector_store %arg3[%c1_24, %c0_25, %c0_26], %27 {strides = array<i32>} : memref<4x32x450xf32, #tpu.memory_space<vmem>>, vector<1x32x450xf32>,
    %c2_27 = arith.constant 2 : index
    %c1_28 = arith.constant 1 : index
    %c0_29 = arith.constant 0 : index
    %c0_30 = arith.constant 0 : index
    %28 = vector.load %arg1[%c2_27, %c1_28, %c0_29, %c0_30] : memref<3x3x32x64xf32, #tpu.memory_space<vmem>>, vector<1x1x32x64xf32>
    %29 = vector.shape_cast %28 : vector<1x1x32x64xf32> to vector<32x64xf32>
    %c0_31 = arith.constant 0 : index
    %c0_32 = arith.constant 0 : index
    %30 = vector.load %arg0[%c0_31, %c0_32] : memref<64x466xf32, #tpu.memory_space<vmem>>, vector<64x450xf32>
    %cst_33 = arith.constant dense<0.000000e+00> : vector<32x450xf32>
    %31 = tpu.matmul %29, %30, %cst_33 {dimension_numbers = #tpu.dot_dimension_numbers<[1], [0], [0], [1], [0, 0, 1, 1], [], []>} : vector<32x64xf32>, vector<64x450xf32>, vector<32x450xf32> -> vector<32x450xf32>
    %c0_34 = arith.constant 0 : index
    %c1_35 = arith.constant 1 : index
    %c0_36 = arith.constant 0 : index
    %c0_37 = arith.constant 0 : index
    %32 = vector.load %arg1[%c0_34, %c1_35, %c0_36, %c0_37] : memref<3x3x32x64xf32, #tpu.memory_space<vmem>>, vector<1x1x32x64xf32>
    %33 = vector.shape_cast %32 : vector<1x1x32x64xf32> to vector<32x64xf32>
    %c0_38 = arith.constant 0 : index
    %c15 = arith.constant 15 : index
    %34 = vector.load %arg0[%c0_38, %c15] : memref<64x466xf32, #tpu.memory_space<vmem>>, vector<64x450xf32>
    %cst_39 = arith.constant dense<0.000000e+00> : vector<32x450xf32>
    %35 = tpu.matmul %33, %34, %cst_39 {dimension_numbers = #tpu.dot_dimension_numbers<[1], [0], [0], [1], [0, 0, 1, 1], [], []>} : vector<32x64xf32>, vector<64x450xf32>, vector<32x450xf32> -> vector<32x450xf32>
    %36 = arith.addf %31, %35 : vector<32x450xf32>
    %37 = vector.broadcast %0 : vector<32x1xf32> to vector<32x450xf32>
    %38 = arith.addf %36, %37 : vector<32x450xf32>
    %cst_40 = arith.constant 0.000000e+00 : f32
    %39 = vector.broadcast %cst_40 : f32 to vector<32x450xf32>
    %40 = arith.maximumf %38, %39 : vector<32x450xf32>
    %c2_41 = arith.constant 2 : index
    %c0_42 = arith.constant 0 : index
    %c0_43 = arith.constant 0 : index
    %41 = vector.load %arg3[%c2_41, %c0_42, %c0_43] : memref<4x32x450xf32, #tpu.memory_space<vmem>>, vector<1x32x450xf32>
    %42 = vector.shape_cast %41 : vector<1x32x450xf32> to vector<32x450xf32>
    %43 = vector.shape_cast %40 : vector<32x450xf32> to vector<1x32x450xf32>
    tpu.vector_store %arg3[%c2_41, %c0_42, %c0_43], %43 {strides = array<i32>} : memref<4x32x450xf32, #tpu.memory_space<vmem>>, vector<1x32x450xf32>,
    %c2_44 = arith.constant 2 : index
    %c2_45 = arith.constant 2 : index
    %c0_46 = arith.constant 0 : index
    %c0_47 = arith.constant 0 : index
    %44 = vector.load %arg1[%c2_44, %c2_45, %c0_46, %c0_47] : memref<3x3x32x64xf32, #tpu.memory_space<vmem>>, vector<1x1x32x64xf32>
    %45 = vector.shape_cast %44 : vector<1x1x32x64xf32> to vector<32x64xf32>
    %c0_48 = arith.constant 0 : index
    %c0_49 = arith.constant 0 : index
    %46 = vector.load %arg0[%c0_48, %c0_49] : memref<64x466xf32, #tpu.memory_space<vmem>>, vector<64x450xf32>
    %cst_50 = arith.constant dense<0.000000e+00> : vector<32x450xf32>
    %47 = tpu.matmul %45, %46, %cst_50 {dimension_numbers = #tpu.dot_dimension_numbers<[1], [0], [0], [1], [0, 0, 1, 1], [], []>} : vector<32x64xf32>, vector<64x450xf32>, vector<32x450xf32> -> vector<32x450xf32>
    %c2_51 = arith.constant 2 : index
    %c0_52 = arith.constant 0 : index
    %c0_53 = arith.constant 0 : index
    %c0_54 = arith.constant 0 : index
    %48 = vector.load %arg1[%c2_51, %c0_52, %c0_53, %c0_54] : memref<3x3x32x64xf32, #tpu.memory_space<vmem>>, vector<1x1x32x64xf32>
    %49 = vector.shape_cast %48 : vector<1x1x32x64xf32> to vector<32x64xf32>
    %c0_55 = arith.constant 0 : index
    %c1_56 = arith.constant 1 : index
    %50 = vector.load %arg0[%c0_55, %c1_56] : memref<64x466xf32, #tpu.memory_space<vmem>>, vector<64x450xf32>
    %cst_57 = arith.constant dense<0.000000e+00> : vector<32x450xf32>
    %51 = tpu.matmul %49, %50, %cst_57 {dimension_numbers = #tpu.dot_dimension_numbers<[1], [0], [0], [1], [0, 0, 1, 1], [], []>} : vector<32x64xf32>, vector<64x450xf32>, vector<32x450xf32> -> vector<32x450xf32>
    %52 = arith.addf %47, %51 : vector<32x450xf32>
    %c0_58 = arith.constant 0 : index
    %c2_59 = arith.constant 2 : index
    %c0_60 = arith.constant 0 : index
    %c0_61 = arith.constant 0 : index
    %53 = vector.load %arg1[%c0_58, %c2_59, %c0_60, %c0_61] : memref<3x3x32x64xf32, #tpu.memory_space<vmem>>, vector<1x1x32x64xf32>
    %54 = vector.shape_cast %53 : vector<1x1x32x64xf32> to vector<32x64xf32>
    %c0_62 = arith.constant 0 : index
    %c15_63 = arith.constant 15 : index
    %55 = vector.load %arg0[%c0_62, %c15_63] : memref<64x466xf32, #tpu.memory_space<vmem>>, vector<64x450xf32>
    %cst_64 = arith.constant dense<0.000000e+00> : vector<32x450xf32>
    %56 = tpu.matmul %54, %55, %cst_64 {dimension_numbers = #tpu.dot_dimension_numbers<[1], [0], [0], [1], [0, 0, 1, 1], [], []>} : vector<32x64xf32>, vector<64x450xf32>, vector<32x450xf32> -> vector<32x450xf32>
    %57 = arith.addf %52, %56 : vector<32x450xf32>
    %c0_65 = arith.constant 0 : index
    %c0_66 = arith.constant 0 : index
    %c0_67 = arith.constant 0 : index
    %c0_68 = arith.constant 0 : index
    %58 = vector.load %arg1[%c0_65, %c0_66, %c0_67, %c0_68] : memref<3x3x32x64xf32, #tpu.memory_space<vmem>>, vector<1x1x32x64xf32>
    %59 = vector.shape_cast %58 : vector<1x1x32x64xf32> to vector<32x64xf32>
    %c0_69 = arith.constant 0 : index
    %c16 = arith.constant 16 : index
    %60 = vector.load %arg0[%c0_69, %c16] : memref<64x466xf32, #tpu.memory_space<vmem>>, vector<64x450xf32>
    %cst_70 = arith.constant dense<0.000000e+00> : vector<32x450xf32>
    %61 = tpu.matmul %59, %60, %cst_70 {dimension_numbers = #tpu.dot_dimension_numbers<[1], [0], [0], [1], [0, 0, 1, 1], [], []>} : vector<32x64xf32>, vector<64x450xf32>, vector<32x450xf32> -> vector<32x450xf32>
    %62 = arith.addf %57, %61 : vector<32x450xf32>
    %63 = vector.broadcast %0 : vector<32x1xf32> to vector<32x450xf32>
    %64 = arith.addf %62, %63 : vector<32x450xf32>
    %cst_71 = arith.constant 0.000000e+00 : f32
    %65 = vector.broadcast %cst_71 : f32 to vector<32x450xf32>
    %66 = arith.maximumf %64, %65 : vector<32x450xf32>
    %c3 = arith.constant 3 : index
    %c0_72 = arith.constant 0 : index
    %c0_73 = arith.constant 0 : index
    %67 = vector.load %arg3[%c3, %c0_72, %c0_73] : memref<4x32x450xf32, #tpu.memory_space<vmem>>, vector<1x32x450xf32>
    %68 = vector.shape_cast %67 : vector<1x32x450xf32> to vector<32x450xf32>
    %69 = vector.shape_cast %66 : vector<32x450xf32> to vector<1x32x450xf32>
    tpu.vector_store %arg3[%c3, %c0_72, %c0_73], %69 {strides = array<i32>} : memref<4x32x450xf32, #tpu.memory_space<vmem>>, vector<1x32x450xf32>,
    return
  }
}

module attributes {stable_mosaic.version = 11 : i64} {
  func.func @_conv_s1_tanh_kernel(%arg0: memref<32x1862xf32, #tpu.memory_space<vmem>>, %arg1: memref<3x3x1x32xf32, #tpu.memory_space<vmem>>, %arg2: memref<1x1xf32, #tpu.memory_space<vmem>>, %arg3: memref<1x1800xf32, #tpu.memory_space<vmem>>) attributes {dimension_semantics = [], scalar_prefetch = 0 : i64, scratch_operands = 0 : i64, tpu.core_type = #tpu.core_type<tc>} {
    %c0 = arith.constant 0 : index
    %c0_0 = arith.constant 0 : index
    %0 = vector.load %arg2[%c0, %c0_0] : memref<1x1xf32, #tpu.memory_space<vmem>>, vector<1x1xf32>
    %c0_1 = arith.constant 0 : index
    %c0_2 = arith.constant 0 : index
    %c0_3 = arith.constant 0 : index
    %c0_4 = arith.constant 0 : index
    %1 = vector.load %arg1[%c0_1, %c0_2, %c0_3, %c0_4] : memref<3x3x1x32xf32, #tpu.memory_space<vmem>>, vector<1x1x1x32xf32>
    %2 = vector.shape_cast %1 : vector<1x1x1x32xf32> to vector<1x32xf32>
    %c0_5 = arith.constant 0 : index
    %c0_6 = arith.constant 0 : index
    %3 = vector.load %arg0[%c0_5, %c0_6] : memref<32x1862xf32, #tpu.memory_space<vmem>>, vector<32x1800xf32>
    %cst = arith.constant dense<0.000000e+00> : vector<1x1800xf32>
    %4 = tpu.matmul %2, %3, %cst {dimension_numbers = #tpu.dot_dimension_numbers<[1], [0], [0], [1], [0, 0, 1, 1], [], []>} : vector<1x32xf32>, vector<32x1800xf32>, vector<1x1800xf32> -> vector<1x1800xf32>
    %5 = vector.broadcast %0 : vector<1x1xf32> to vector<1x1800xf32>
    %6 = arith.addf %5, %4 : vector<1x1800xf32>
    %c0_7 = arith.constant 0 : index
    %c1 = arith.constant 1 : index
    %c0_8 = arith.constant 0 : index
    %c0_9 = arith.constant 0 : index
    %7 = vector.load %arg1[%c0_7, %c1, %c0_8, %c0_9] : memref<3x3x1x32xf32, #tpu.memory_space<vmem>>, vector<1x1x1x32xf32>
    %8 = vector.shape_cast %7 : vector<1x1x1x32xf32> to vector<1x32xf32>
    %c0_10 = arith.constant 0 : index
    %c1_11 = arith.constant 1 : index
    %9 = vector.load %arg0[%c0_10, %c1_11] : memref<32x1862xf32, #tpu.memory_space<vmem>>, vector<32x1800xf32>
    %cst_12 = arith.constant dense<0.000000e+00> : vector<1x1800xf32>
    %10 = tpu.matmul %8, %9, %cst_12 {dimension_numbers = #tpu.dot_dimension_numbers<[1], [0], [0], [1], [0, 0, 1, 1], [], []>} : vector<1x32xf32>, vector<32x1800xf32>, vector<1x1800xf32> -> vector<1x1800xf32>
    %11 = arith.addf %6, %10 : vector<1x1800xf32>
    %c0_13 = arith.constant 0 : index
    %c2 = arith.constant 2 : index
    %c0_14 = arith.constant 0 : index
    %c0_15 = arith.constant 0 : index
    %12 = vector.load %arg1[%c0_13, %c2, %c0_14, %c0_15] : memref<3x3x1x32xf32, #tpu.memory_space<vmem>>, vector<1x1x1x32xf32>
    %13 = vector.shape_cast %12 : vector<1x1x1x32xf32> to vector<1x32xf32>
    %c0_16 = arith.constant 0 : index
    %c2_17 = arith.constant 2 : index
    %14 = vector.load %arg0[%c0_16, %c2_17] : memref<32x1862xf32, #tpu.memory_space<vmem>>, vector<32x1800xf32>
    %cst_18 = arith.constant dense<0.000000e+00> : vector<1x1800xf32>
    %15 = tpu.matmul %13, %14, %cst_18 {dimension_numbers = #tpu.dot_dimension_numbers<[1], [0], [0], [1], [0, 0, 1, 1], [], []>} : vector<1x32xf32>, vector<32x1800xf32>, vector<1x1800xf32> -> vector<1x1800xf32>
    %16 = arith.addf %11, %15 : vector<1x1800xf32>
    %c1_19 = arith.constant 1 : index
    %c0_20 = arith.constant 0 : index
    %c0_21 = arith.constant 0 : index
    %c0_22 = arith.constant 0 : index
    %17 = vector.load %arg1[%c1_19, %c0_20, %c0_21, %c0_22] : memref<3x3x1x32xf32, #tpu.memory_space<vmem>>, vector<1x1x1x32xf32>
    %18 = vector.shape_cast %17 : vector<1x1x1x32xf32> to vector<1x32xf32>
    %c0_23 = arith.constant 0 : index
    %c30 = arith.constant 30 : index
    %19 = vector.load %arg0[%c0_23, %c30] : memref<32x1862xf32, #tpu.memory_space<vmem>>, vector<32x1800xf32>
    %cst_24 = arith.constant dense<0.000000e+00> : vector<1x1800xf32>
    %20 = tpu.matmul %18, %19, %cst_24 {dimension_numbers = #tpu.dot_dimension_numbers<[1], [0], [0], [1], [0, 0, 1, 1], [], []>} : vector<1x32xf32>, vector<32x1800xf32>, vector<1x1800xf32> -> vector<1x1800xf32>
    %21 = arith.addf %16, %20 : vector<1x1800xf32>
    %c1_25 = arith.constant 1 : index
    %c1_26 = arith.constant 1 : index
    %c0_27 = arith.constant 0 : index
    %c0_28 = arith.constant 0 : index
    %22 = vector.load %arg1[%c1_25, %c1_26, %c0_27, %c0_28] : memref<3x3x1x32xf32, #tpu.memory_space<vmem>>, vector<1x1x1x32xf32>
    %23 = vector.shape_cast %22 : vector<1x1x1x32xf32> to vector<1x32xf32>
    %c0_29 = arith.constant 0 : index
    %c31 = arith.constant 31 : index
    %24 = vector.load %arg0[%c0_29, %c31] : memref<32x1862xf32, #tpu.memory_space<vmem>>, vector<32x1800xf32>
    %cst_30 = arith.constant dense<0.000000e+00> : vector<1x1800xf32>
    %25 = tpu.matmul %23, %24, %cst_30 {dimension_numbers = #tpu.dot_dimension_numbers<[1], [0], [0], [1], [0, 0, 1, 1], [], []>} : vector<1x32xf32>, vector<32x1800xf32>, vector<1x1800xf32> -> vector<1x1800xf32>
    %26 = arith.addf %21, %25 : vector<1x1800xf32>
    %c1_31 = arith.constant 1 : index
    %c2_32 = arith.constant 2 : index
    %c0_33 = arith.constant 0 : index
    %c0_34 = arith.constant 0 : index
    %27 = vector.load %arg1[%c1_31, %c2_32, %c0_33, %c0_34] : memref<3x3x1x32xf32, #tpu.memory_space<vmem>>, vector<1x1x1x32xf32>
    %28 = vector.shape_cast %27 : vector<1x1x1x32xf32> to vector<1x32xf32>
    %c0_35 = arith.constant 0 : index
    %c32 = arith.constant 32 : index
    %29 = vector.load %arg0[%c0_35, %c32] : memref<32x1862xf32, #tpu.memory_space<vmem>>, vector<32x1800xf32>
    %cst_36 = arith.constant dense<0.000000e+00> : vector<1x1800xf32>
    %30 = tpu.matmul %28, %29, %cst_36 {dimension_numbers = #tpu.dot_dimension_numbers<[1], [0], [0], [1], [0, 0, 1, 1], [], []>} : vector<1x32xf32>, vector<32x1800xf32>, vector<1x1800xf32> -> vector<1x1800xf32>
    %31 = arith.addf %26, %30 : vector<1x1800xf32>
    %c2_37 = arith.constant 2 : index
    %c0_38 = arith.constant 0 : index
    %c0_39 = arith.constant 0 : index
    %c0_40 = arith.constant 0 : index
    %32 = vector.load %arg1[%c2_37, %c0_38, %c0_39, %c0_40] : memref<3x3x1x32xf32, #tpu.memory_space<vmem>>, vector<1x1x1x32xf32>
    %33 = vector.shape_cast %32 : vector<1x1x1x32xf32> to vector<1x32xf32>
    %c0_41 = arith.constant 0 : index
    %c60 = arith.constant 60 : index
    %34 = vector.load %arg0[%c0_41, %c60] : memref<32x1862xf32, #tpu.memory_space<vmem>>, vector<32x1800xf32>
    %cst_42 = arith.constant dense<0.000000e+00> : vector<1x1800xf32>
    %35 = tpu.matmul %33, %34, %cst_42 {dimension_numbers = #tpu.dot_dimension_numbers<[1], [0], [0], [1], [0, 0, 1, 1], [], []>} : vector<1x32xf32>, vector<32x1800xf32>, vector<1x1800xf32> -> vector<1x1800xf32>
    %36 = arith.addf %31, %35 : vector<1x1800xf32>
    %c2_43 = arith.constant 2 : index
    %c1_44 = arith.constant 1 : index
    %c0_45 = arith.constant 0 : index
    %c0_46 = arith.constant 0 : index
    %37 = vector.load %arg1[%c2_43, %c1_44, %c0_45, %c0_46] : memref<3x3x1x32xf32, #tpu.memory_space<vmem>>, vector<1x1x1x32xf32>
    %38 = vector.shape_cast %37 : vector<1x1x1x32xf32> to vector<1x32xf32>
    %c0_47 = arith.constant 0 : index
    %c61 = arith.constant 61 : index
    %39 = vector.load %arg0[%c0_47, %c61] : memref<32x1862xf32, #tpu.memory_space<vmem>>, vector<32x1800xf32>
    %cst_48 = arith.constant dense<0.000000e+00> : vector<1x1800xf32>
    %40 = tpu.matmul %38, %39, %cst_48 {dimension_numbers = #tpu.dot_dimension_numbers<[1], [0], [0], [1], [0, 0, 1, 1], [], []>} : vector<1x32xf32>, vector<32x1800xf32>, vector<1x1800xf32> -> vector<1x1800xf32>
    %41 = arith.addf %36, %40 : vector<1x1800xf32>
    %c2_49 = arith.constant 2 : index
    %c2_50 = arith.constant 2 : index
    %c0_51 = arith.constant 0 : index
    %c0_52 = arith.constant 0 : index
    %42 = vector.load %arg1[%c2_49, %c2_50, %c0_51, %c0_52] : memref<3x3x1x32xf32, #tpu.memory_space<vmem>>, vector<1x1x1x32xf32>
    %43 = vector.shape_cast %42 : vector<1x1x1x32xf32> to vector<1x32xf32>
    %c0_53 = arith.constant 0 : index
    %c62 = arith.constant 62 : index
    %44 = vector.load %arg0[%c0_53, %c62] : memref<32x1862xf32, #tpu.memory_space<vmem>>, vector<32x1800xf32>
    %cst_54 = arith.constant dense<0.000000e+00> : vector<1x1800xf32>
    %45 = tpu.matmul %43, %44, %cst_54 {dimension_numbers = #tpu.dot_dimension_numbers<[1], [0], [0], [1], [0, 0, 1, 1], [], []>} : vector<1x32xf32>, vector<32x1800xf32>, vector<1x1800xf32> -> vector<1x1800xf32>
    %46 = arith.addf %41, %45 : vector<1x1800xf32>
    %47 = math.tanh %46 : vector<1x1800xf32>
    %c0_55 = arith.constant 0 : index
    %c0_56 = arith.constant 0 : index
    %48 = vector.load %arg3[%c0_55, %c0_56] : memref<1x1800xf32, #tpu.memory_space<vmem>>, vector<1x1800xf32>
    tpu.vector_store %arg3[%c0_55, %c0_56], %47 {strides = array<i32>} : memref<1x1800xf32, #tpu.memory_space<vmem>>, vector<1x1800xf32>,
    return
  }
}

</mosaic_0001>

<llo_original>
// kernel: decoder_forward.4
$region0: #{decoder_forward.4}
  #allocation0 [shape = 'u32[]', space=smem, size = 0x4, offset = 0x4, fixed_abs, tag = 'smem constant byte address 0x4 - core index']
  #allocation1 [shape = 'u32[72,128]{1,0:T(1,128)}', space=vmem, size = 0x9000, scoped, tag = 'internal scratch']
  %s0 = inlined_call_operand.vmem [shape: f32[2,2], index: 0, kind: input, shape index: {}]
  %s1 = inlined_call_operand.vmem [shape: f32[2,64,49], index: 1, kind: input, shape index: {}]
  %s2 = inlined_call_operand.vmem [shape: f32[64,49], index: 2, kind: input, shape index: {}]
  %s3 = inlined_call_operand.vmem [shape: f32[2,64,49], index: 3, kind: output, shape index: {}]
  %s4 = sld [smem:[#allocation0]]
  $region26: #{decoder_forward.4} parent=0
    _
  %s6 = ssub.s32 1, %s4
  %s7 = scalar_select 0, %s6, %s4
  $region1: #{decoder_forward.4} parent=0
    #allocation2 [shape = 'u8[1024]{0}', space=smem, size = 0x400, scoped, tag = 'input window, operand 0, single buffered']
    #allocation3 [shape = 's32[1]{0}', space=sflag, size = 0x4, scoped, tag = 'scoped memory for decoder_forward.4']
    %8 = vsyncpa [#allocation3], 0
    // Predicated region
    $region2: #{decoder_forward.4} parent=1 // pred_check
      _
    $region3: #{decoder_forward.4} parent=1 // pred_check_branch
      %10 = sbr.rel (0) target = $region5
    $region4: #{decoder_forward.4} parent=1 // pred_region
      %12 = vsyncadd [#allocation3], 0
      %s14 = sshll.u32 %s0, 4
      %s15 = int_to_ptr.vmem [resolvable:$true] %s14
      %17 = dma.vmem_to_smem %s15, 32, [#allocation2], [#allocation3]
    $region5: #{decoder_forward.4} parent=1 // pred_fallthru
      _
    // Predicated region
    $region6: #{decoder_forward.4} parent=1 // pred_check
      _
    $region7: #{decoder_forward.4} parent=1 // pred_check_branch
      %19 = sbr.rel (0) target = $region9
    $region8: #{decoder_forward.4} parent=1 // pred_region
      _
    $region9: #{decoder_forward.4} parent=1 // pred_fallthru
      _
    // Predicated region
    $region10: #{decoder_forward.4} parent=1 // pred_check
      _
    $region11: #{decoder_forward.4} parent=1 // pred_check_branch
      %21 = sbr.rel (0) target = $region13
    $region12: #{decoder_forward.4} parent=1 // pred_region
      _
    $region13: #{decoder_forward.4} parent=1 // pred_fallthru
      _
    // Predicated region
    $region14: #{decoder_forward.4} parent=1 // pred_check
      _
    $region15: #{decoder_forward.4} parent=1 // pred_check_branch
      %23 = sbr.rel (0) target = $region17
    $region16: #{decoder_forward.4} parent=1 // pred_region
      %25 = dma.done [#allocation3], 32
    $region17: #{decoder_forward.4} parent=1 // pred_fallthru
      _
    %26 = sfence
    %v27 = vld [vmem:[%s2] sm:$0xff]
    %v28 = vld [vmem:[%s2 + $0x8] sm:$0xff]
    %v29 = vld [vmem:[%s2 + $0x10] sm:$0xff]
    %v30 = vld [vmem:[%s2 + $0x18] sm:$0xff]
    %v31 = vld [vmem:[%s2 + $0x20] sm:$0xff]
    %v32 = vld [vmem:[%s2 + $0x28] sm:$0xff]
    %v33 = vld [vmem:[%s2 + $0x30] sm:$0xff]
    %v34 = vld [vmem:[%s2 + $0x38] sm:$0xff]
    %s35 = sld [smem:[#allocation2]]
    %v36 = vld [vmem:[%s1] sm:$0xff]
    %v37 = vld [vmem:[%s1 + $0x8] sm:$0xff]
    %v38 = vld [vmem:[%s1 + $0x10] sm:$0xff]
    %v39 = vld [vmem:[%s1 + $0x18] sm:$0xff]
    %v40 = vld [vmem:[%s1 + $0x20] sm:$0xff]
    %v41 = vld [vmem:[%s1 + $0x28] sm:$0xff]
    %v42 = vld [vmem:[%s1 + $0x30] sm:$0xff]
    %v43 = vld [vmem:[%s1 + $0x38] sm:$0xff]
    %v44 = vstv %s35
    %v45 = vmul.f32 %v44, %v36
    %v46 = vmul.f32 %v44, %v37
    %v47 = vmul.f32 %v44, %v38
    %v48 = vmul.f32 %v44, %v39
    %v49 = vmul.f32 %v44, %v40
    %v50 = vmul.f32 %v44, %v41
    %v51 = vmul.f32 %v44, %v42
    %v52 = vmul.f32 %v44, %v43
    %v53 = vadd.f32 %v27, %v45
    %v54 = vadd.f32 %v28, %v46
    %v55 = vadd.f32 %v29, %v47
    %v56 = vadd.f32 %v30, %v48
    %v57 = vadd.f32 %v31, %v49
    %v58 = vadd.f32 %v32, %v50
    %v59 = vadd.f32 %v33, %v51
    %v60 = vadd.f32 %v34, %v52
    %s61 = sld [smem:[#allocation2 + $0x1]]
    %s62 = scalar_lea.vmem %s1, 64
    %v63 = vld [vmem:[%s62] sm:$0xff]
    %v64 = vld [vmem:[%s62 + $0x8] sm:$0xff]
    %v65 = vld [vmem:[%s62 + $0x10] sm:$0xff]
    %v66 = vld [vmem:[%s62 + $0x18] sm:$0xff]
    %v67 = vld [vmem:[%s62 + $0x20] sm:$0xff]
    %v68 = vld [vmem:[%s62 + $0x28] sm:$0xff]
    %v69 = vld [vmem:[%s62 + $0x30] sm:$0xff]
    %v70 = vld [vmem:[%s62 + $0x38] sm:$0xff]
    %v71 = vstv %s61
    %v72 = vmul.f32 %v71, %v63
    %v73 = vmul.f32 %v71, %v64
    %v74 = vmul.f32 %v71, %v65
    %v75 = vmul.f32 %v71, %v66
    %v76 = vmul.f32 %v71, %v67
    %v77 = vmul.f32 %v71, %v68
    %v78 = vmul.f32 %v71, %v69
    %v79 = vmul.f32 %v71, %v70
    %v80 = vadd.f32 %v53, %v72
    %v81 = vadd.f32 %v54, %v73
    %v82 = vadd.f32 %v55, %v74
    %v83 = vadd.f32 %v56, %v75
    %v84 = vadd.f32 %v57, %v76
    %v85 = vadd.f32 %v58, %v77
    %v86 = vadd.f32 %v59, %v78
    %v87 = vadd.f32 %v60, %v79
    %v88 = vmax.f32 %v80, 0.0
    %v89 = vmax.f32 %v81, 0.0
    %v90 = vmax.f32 %v82, 0.0
    %v91 = vmax.f32 %v83, 0.0
    %v92 = vmax.f32 %v84, 0.0
    %v93 = vmax.f32 %v85, 0.0
    %v94 = vmax.f32 %v86, 0.0
    %v95 = vmax.f32 %v87, 0.0
    %vm96 = vcmask 400384
    %97 = vst.msk [vmem:[%s3] sm:$0xff] %vm96, %v88
    %98 = vst.msk [vmem:[%s3 + $0x8] sm:$0xff] %vm96, %v89
    %99 = vst.msk [vmem:[%s3 + $0x10] sm:$0xff] %vm96, %v90
    %100 = vst.msk [vmem:[%s3 + $0x18] sm:$0xff] %vm96, %v91
    %101 = vst.msk [vmem:[%s3 + $0x20] sm:$0xff] %vm96, %v92
    %102 = vst.msk [vmem:[%s3 + $0x28] sm:$0xff] %vm96, %v93
    %103 = vst.msk [vmem:[%s3 + $0x30] sm:$0xff] %vm96, %v94
    %104 = vst.msk [vmem:[%s3 + $0x38] sm:$0xff] %vm96, %v95
    %v105 = vld [vmem:[%s2] sm:$0xff]
    %v106 = vld [vmem:[%s2 + $0x8] sm:$0xff]
    %v107 = vld [vmem:[%s2 + $0x10] sm:$0xff]
    %v108 = vld [vmem:[%s2 + $0x18] sm:$0xff]
    %v109 = vld [vmem:[%s2 + $0x20] sm:$0xff]
    %v110 = vld [vmem:[%s2 + $0x28] sm:$0xff]
    %v111 = vld [vmem:[%s2 + $0x30] sm:$0xff]
    %v112 = vld [vmem:[%s2 + $0x38] sm:$0xff]
    %s113 = sld [smem:[#allocation2 + $0x80]]
    %v114 = vld [vmem:[%s1] sm:$0xff]
    %v115 = vld [vmem:[%s1 + $0x8] sm:$0xff]
    %v116 = vld [vmem:[%s1 + $0x10] sm:$0xff]
    %v117 = vld [vmem:[%s1 + $0x18] sm:$0xff]
    %v118 = vld [vmem:[%s1 + $0x20] sm:$0xff]
    %v119 = vld [vmem:[%s1 + $0x28] sm:$0xff]
    %v120 = vld [vmem:[%s1 + $0x30] sm:$0xff]
    %v121 = vld [vmem:[%s1 + $0x38] sm:$0xff]
    %v122 = vstv %s113
    %v123 = vmul.f32 %v122, %v114
    %v124 = vmul.f32 %v122, %v115
    %v125 = vmul.f32 %v122, %v116
    %v126 = vmul.f32 %v122, %v117
    %v127 = vmul.f32 %v122, %v118
    %v128 = vmul.f32 %v122, %v119
    %v129 = vmul.f32 %v122, %v120
    %v130 = vmul.f32 %v122, %v121
    %v131 = vadd.f32 %v105, %v123
    %v132 = vadd.f32 %v106, %v124
    %v133 = vadd.f32 %v107, %v125
    %v134 = vadd.f32 %v108, %v126
    %v135 = vadd.f32 %v109, %v127
    %v136 = vadd.f32 %v110, %v128
    %v137 = vadd.f32 %v111, %v129
    %v138 = vadd.f32 %v112, %v130
    %s139 = sld [smem:[#allocation2 + $0x81]]
    %v140 = vld [vmem:[%s62] sm:$0xff]
    %v141 = vld [vmem:[%s62 + $0x8] sm:$0xff]
    %v142 = vld [vmem:[%s62 + $0x10] sm:$0xff]
    %v143 = vld [vmem:[%s62 + $0x18] sm:$0xff]
    %v144 = vld [vmem:[%s62 + $0x20] sm:$0xff]
    %v145 = vld [vmem:[%s62 + $0x28] sm:$0xff]
    %v146 = vld [vmem:[%s62 + $0x30] sm:$0xff]
    %v147 = vld [vmem:[%s62 + $0x38] sm:$0xff]
    %v148 = vstv %s139
    %v149 = vmul.f32 %v148, %v140
    %v150 = vmul.f32 %v148, %v141
    %v151 = vmul.f32 %v148, %v142
    %v152 = vmul.f32 %v148, %v143
    %v153 = vmul.f32 %v148, %v144
    %v154 = vmul.f32 %v148, %v145
    %v155 = vmul.f32 %v148, %v146
    %v156 = vmul.f32 %v148, %v147
    %v157 = vadd.f32 %v131, %v149
    %v158 = vadd.f32 %v132, %v150
    %v159 = vadd.f32 %v133, %v151
    %v160 = vadd.f32 %v134, %v152
    %v161 = vadd.f32 %v135, %v153
    %v162 = vadd.f32 %v136, %v154
    %v163 = vadd.f32 %v137, %v155
    %v164 = vadd.f32 %v138, %v156
    %v165 = vmax.f32 %v157, 0.0
    %v166 = vmax.f32 %v158, 0.0
    %v167 = vmax.f32 %v159, 0.0
    %v168 = vmax.f32 %v160, 0.0
    %v169 = vmax.f32 %v161, 0.0
    %v170 = vmax.f32 %v162, 0.0
    %v171 = vmax.f32 %v163, 0.0
    %v172 = vmax.f32 %v164, 0.0
    %s173 = scalar_lea.vmem %s3, 64
    %174 = vst.msk [vmem:[%s173] sm:$0xff] %vm96, %v165
    %175 = vst.msk [vmem:[%s173 + $0x8] sm:$0xff] %vm96, %v166
    %176 = vst.msk [vmem:[%s173 + $0x10] sm:$0xff] %vm96, %v167
    %177 = vst.msk [vmem:[%s173 + $0x18] sm:$0xff] %vm96, %v168
    %178 = vst.msk [vmem:[%s173 + $0x20] sm:$0xff] %vm96, %v169
    %179 = vst.msk [vmem:[%s173 + $0x28] sm:$0xff] %vm96, %v170
    %180 = vst.msk [vmem:[%s173 + $0x30] sm:$0xff] %vm96, %v171
    %181 = vst.msk [vmem:[%s173 + $0x38] sm:$0xff] %vm96, %v172
    // Predicated region
    $region18: #{decoder_forward.4} parent=1 // pred_check
      _
    $region19: #{decoder_forward.4} parent=1 // pred_check_branch
      %183 = sbr.rel (0) target = $region21
    $region20: #{decoder_forward.4} parent=1 // pred_region
      _
    $region21: #{decoder_forward.4} parent=1 // pred_fallthru
      _
    // Predicated region
    $region22: #{decoder_forward.4} parent=1 // pred_check
      _
    $region23: #{decoder_forward.4} parent=1 // pred_check_branch
      %185 = sbr.rel (0) target = $region25
    $region24: #{decoder_forward.4} parent=1 // pred_region
      _
    $region25: #{decoder_forward.4} parent=1 // pred_fallthru
      _
    %186 = vsyncpa [#allocation3], 1

// kernel: decoder_forward.5
$region0: #{decoder_forward.5}
  #allocation0 [shape = 'u32[]', space=smem, size = 0x4, offset = 0x4, fixed_abs, tag = 'smem constant byte address 0x4 - core index']
  #allocation1 [shape = 'u32[72,128]{1,0:T(1,128)}', space=vmem, size = 0x9000, scoped, tag = 'internal scratch']
  %s0 = inlined_call_operand.vmem [shape: f32[64,137], index: 0, kind: input, shape index: {}]
  %s1 = inlined_call_operand.vmem [shape: f32[3,3,64,64], index: 1, kind: input, shape index: {}]
  %s2 = inlined_call_operand.vmem [shape: f32[64,1], index: 2, kind: input, shape index: {}]
  %s3 = inlined_call_operand.vmem [shape: f32[4,64,128], index: 3, kind: output, shape index: {}]
  %s4 = sld [smem:[#allocation0]]
  $region22: #{decoder_forward.5} parent=0
    _
  %s6 = ssub.s32 1, %s4
  %s7 = scalar_select 0, %s6, %s4
  // Predicated region
  $region2: #{decoder_forward.5} parent=0 // pred_check
    _
  $region3: #{decoder_forward.5} parent=0 // pred_check_branch
    %9 = sbr.rel (0) target = $region5
  $region4: #{decoder_forward.5} parent=0 // pred_region
    _
  $region5: #{decoder_forward.5} parent=0 // pred_fallthru
    _
  // Predicated region
  $region6: #{decoder_forward.5} parent=0 // pred_check
    _
  $region7: #{decoder_forward.5} parent=0 // pred_check_branch
    %11 = sbr.rel (0) target = $region9
  $region8: #{decoder_forward.5} parent=0 // pred_region
    _
  $region9: #{decoder_forward.5} parent=0 // pred_fallthru
    _
  // Predicated region
  $region10: #{decoder_forward.5} parent=0 // pred_check
    _
  $region11: #{decoder_forward.5} parent=0 // pred_check_branch
    %13 = sbr.rel (0) target = $region13
  $region12: #{decoder_forward.5} parent=0 // pred_region
    _
  $region13: #{decoder_forward.5} parent=0 // pred_fallthru
    _
  %v14 = vld [vmem:[%s2] sm:$0xff]
  %v15 = vld [vmem:[%s2 + $0x8] sm:$0xff]
  %v16 = vld [vmem:[%s2 + $0x10] sm:$0xff]
  %v17 = vld [vmem:[%s2 + $0x18] sm:$0xff]
  %v18 = vld [vmem:[%s2 + $0x20] sm:$0xff]
  %v19 = vld [vmem:[%s2 + $0x28] sm:$0xff]
  %v20 = vld [vmem:[%s2 + $0x30] sm:$0xff]
  %v21 = vld [vmem:[%s2 + $0x38] sm:$0xff]
  %s22 = scalar_lea.vmem %s1, 256
  %v23 = vld [vmem:[%s22] sm:$0xff]
  %v24 = vld [vmem:[%s22 + $0x8] sm:$0xff]
  %v25 = vld [vmem:[%s22 + $0x10] sm:$0xff]
  %v26 = vld [vmem:[%s22 + $0x18] sm:$0xff]
  %v27 = vld [vmem:[%s22 + $0x20] sm:$0xff]
  %v28 = vld [vmem:[%s22 + $0x28] sm:$0xff]
  %v29 = vld [vmem:[%s22 + $0x30] sm:$0xff]
  %v30 = vld [vmem:[%s22 + $0x38] sm:$0xff]
  %v31 = vld [vmem:[%s0] sm:$0xff]
  %v32 = vld [vmem:[%s0 + $0x10] sm:$0xff]
  %v33 = vld [vmem:[%s0 + $0x20] sm:$0xff]
  %v34 = vld [vmem:[%s0 + $0x30] sm:$0xff]
  %v35 = vld [vmem:[%s0 + $0x40] sm:$0xff]
  %v36 = vld [vmem:[%s0 + $0x50] sm:$0xff]
  %v37 = vld [vmem:[%s0 + $0x60] sm:$0xff]
  %v38 = vld [vmem:[%s0 + $0x70] sm:$0xff]
  %40 = vset.pattern.permute.xlu0 0
  %41 = vperm.xlu0 %40, %v14
  %v42 = vpop.permute.xlu0 %41
  %45 = vset.pattern.permute.xlu0 0
  %46 = vperm.xlu0 %45, %v15
  %v47 = vpop.permute.xlu0 %46
  %50 = vset.pattern.permute.xlu0 0
  %51 = vperm.xlu0 %50, %v16
  %v52 = vpop.permute.xlu0 %51
  %55 = vset.pattern.permute.xlu0 0
  %56 = vperm.xlu0 %55, %v17
  %v57 = vpop.permute.xlu0 %56
  %60 = vset.pattern.permute.xlu0 0
  %61 = vperm.xlu0 %60, %v18
  %v62 = vpop.permute.xlu0 %61
  %65 = vset.pattern.permute.xlu0 0
  %66 = vperm.xlu0 %65, %v19
  %v67 = vpop.permute.xlu0 %66
  %70 = vset.pattern.permute.xlu0 0
  %71 = vperm.xlu0 %70, %v20
  %v72 = vpop.permute.xlu0 %71
  %75 = vset.pattern.permute.xlu0 0
  %76 = vperm.xlu0 %75, %v21
  %v77 = vpop.permute.xlu0 %76
  %vm79 = vcmask 523264
  %v81 = vsel %vm79, %v23, 0
  %v84 = vsel %vm79, %v24, 0
  %v87 = vsel %vm79, %v25, 0
  %v90 = vsel %vm79, %v26, 0
  %v93 = vsel %vm79, %v27, 0
  %v96 = vsel %vm79, %v28, 0
  %v99 = vsel %vm79, %v29, 0
  %v102 = vsel %vm79, %v30, 0
  %104 = vmatpush.msra.mxu0 0.0
  %105 = vmatpush.msra.mxu0 0.0
  %106 = vmatpush.msra.mxu0 0.0
  %107 = vmatpush.msra.mxu0 0.0
  %108 = vmatpush.msra.mxu0 0.0
  %109 = vmatpush.msra.mxu0 0.0
  %110 = vmatpush.msra.mxu0 0.0
  %111 = vmatpush.msra.mxu0 0.0
  %112 = vmatpush.msra.mxu0 %v38
  %113 = vmatpush.msra.mxu0 %v37
  %114 = vmatpush.msra.mxu0 %v36
  %115 = vmatpush.msra.mxu0 %v35
  %116 = vmatpush.msra.mxu0 %v34
  %117 = vmatpush.msra.mxu0 %v33
  %118 = vmatpush.msra.mxu0 %v32
  %119 = vmatpush.msra.mxu0 %v31
  %120 = vmatmul.f32.gmra.mxu0 %v81
  %v121 = vpop.f32.mrf.mxu0
  %v122 = vadd.f32 %v42, %v121
  %123 = vmatmul.f32.gmra.mxu0 %v84
  %v124 = vpop.f32.mrf.mxu0
  %v125 = vadd.f32 %v47, %v124
  %126 = vmatmul.f32.gmra.mxu0 %v87
  %v127 = vpop.f32.mrf.mxu0
  %v128 = vadd.f32 %v52, %v127
  %129 = vmatmul.f32.gmra.mxu0 %v90
  %v130 = vpop.f32.mrf.mxu0
  %v131 = vadd.f32 %v57, %v130
  %132 = vmatmul.f32.gmra.mxu0 %v93
  %v133 = vpop.f32.mrf.mxu0
  %v134 = vadd.f32 %v62, %v133
  %135 = vmatmul.f32.gmra.mxu0 %v96
  %v136 = vpop.f32.mrf.mxu0
  %v137 = vadd.f32 %v67, %v136
  %138 = vmatmul.f32.gmra.mxu0 %v99
  %v139 = vpop.f32.mrf.mxu0
  %v140 = vadd.f32 %v72, %v139
  %141 = vmatmul.f32.gmra.mxu0 %v102
  %v142 = vpop.f32.mrf.mxu0
  %v143 = vadd.f32 %v77, %v142
  %144 = vdwg.mxu0
  %v145 = vmax.f32 %v122, 0.0
  %v146 = vmax.f32 %v125, 0.0
  %v147 = vmax.f32 %v128, 0.0
  %v148 = vmax.f32 %v131, 0.0
  %v149 = vmax.f32 %v134, 0.0
  %v150 = vmax.f32 %v137, 0.0
  %v151 = vmax.f32 %v140, 0.0
  %v152 = vmax.f32 %v143, 0.0
  %153 = vst [vmem:[%s3] sm:$0xff] %v145
  %154 = vst [vmem:[%s3 + $0x8] sm:$0xff] %v146
  %155 = vst [vmem:[%s3 + $0x10] sm:$0xff] %v147
  %156 = vst [vmem:[%s3 + $0x18] sm:$0xff] %v148
  %157 = vst [vmem:[%s3 + $0x20] sm:$0xff] %v149
  %158 = vst [vmem:[%s3 + $0x28] sm:$0xff] %v150
  %159 = vst [vmem:[%s3 + $0x30] sm:$0xff] %v151
  %160 = vst [vmem:[%s3 + $0x38] sm:$0xff] %v152
  %s161 = scalar_lea.vmem %s1, 320
  %v162 = vld [vmem:[%s161] sm:$0xff]
  %v163 = vld [vmem:[%s161 + $0x8] sm:$0xff]
  %v164 = vld [vmem:[%s161 + $0x10] sm:$0xff]
  %v165 = vld [vmem:[%s161 + $0x18] sm:$0xff]
  %v166 = vld [vmem:[%s161 + $0x20] sm:$0xff]
  %v167 = vld [vmem:[%s161 + $0x28] sm:$0xff]
  %v168 = vld [vmem:[%s161 + $0x30] sm:$0xff]
  %v169 = vld [vmem:[%s161 + $0x38] sm:$0xff]
  %v170 = vld [vmem:[%s0] sm:$0xff]
  %v171 = vld [vmem:[%s0 + $0x10] sm:$0xff]
  %v172 = vld [vmem:[%s0 + $0x20] sm:$0xff]
  %v173 = vld [vmem:[%s0 + $0x30] sm:$0xff]
  %v174 = vld [vmem:[%s0 + $0x40] sm:$0xff]
  %v175 = vld [vmem:[%s0 + $0x50] sm:$0xff]
  %v176 = vld [vmem:[%s0 + $0x60] sm:$0xff]
  %v177 = vld [vmem:[%s0 + $0x70] sm:$0xff]
  %s178 = scalar_lea.vmem %s1, 192
  %v179 = vld [vmem:[%s178] sm:$0xff]
  %v180 = vld [vmem:[%s178 + $0x8] sm:$0xff]
  %v181 = vld [vmem:[%s178 + $0x10] sm:$0xff]
  %v182 = vld [vmem:[%s178 + $0x18] sm:$0xff]
  %v183 = vld [vmem:[%s178 + $0x20] sm:$0xff]
  %v184 = vld [vmem:[%s178 + $0x28] sm:$0xff]
  %v185 = vld [vmem:[%s178 + $0x30] sm:$0xff]
  %v186 = vld [vmem:[%s178 + $0x38] sm:$0xff]
  %v187 = vld [vmem:[%s0 + $0x8] sm:$0xff]
  %v188 = vld [vmem:[%s0 + $0x18] sm:$0xff]
  %v189 = vld [vmem:[%s0 + $0x28] sm:$0xff]
  %v190 = vld [vmem:[%s0 + $0x38] sm:$0xff]
  %v191 = vld [vmem:[%s0 + $0x48] sm:$0xff]
  %v192 = vld [vmem:[%s0 + $0x58] sm:$0xff]
  %v193 = vld [vmem:[%s0 + $0x68] sm:$0xff]
  %v194 = vld [vmem:[%s0 + $0x78] sm:$0xff]
  %211 = vrot.lane.b32.xlu0 %v170, 127
  %v212 = vpop.permute.xlu0 %211
  %213 = vrot.lane.b32.xlu0 %v187, 127
  %v214 = vpop.permute.xlu0 %213
  %215 = vrot.lane.b32.xlu0 %v171, 127
  %v216 = vpop.permute.xlu0 %215
  %217 = vrot.lane.b32.xlu0 %v188, 127
  %v218 = vpop.permute.xlu0 %217
  %219 = vrot.lane.b32.xlu0 %v172, 127
  %v220 = vpop.permute.xlu0 %219
  %221 = vrot.lane.b32.xlu0 %v189, 127
  %v222 = vpop.permute.xlu0 %221
  %223 = vrot.lane.b32.xlu0 %v173, 127
  %v224 = vpop.permute.xlu0 %223
  %225 = vrot.lane.b32.xlu0 %v190, 127
  %v226 = vpop.permute.xlu0 %225
  %227 = vrot.lane.b32.xlu0 %v174, 127
  %v228 = vpop.permute.xlu0 %227
  %229 = vrot.lane.b32.xlu0 %v191, 127
  %v230 = vpop.permute.xlu0 %229
  %231 = vrot.lane.b32.xlu0 %v175, 127
  %v232 = vpop.permute.xlu0 %231
  %233 = vrot.lane.b32.xlu0 %v192, 127
  %v234 = vpop.permute.xlu0 %233
  %235 = vrot.lane.b32.xlu0 %v176, 127
  %v236 = vpop.permute.xlu0 %235
  %237 = vrot.lane.b32.xlu0 %v193, 127
  %v238 = vpop.permute.xlu0 %237
  %239 = vrot.lane.b32.xlu0 %v177, 127
  %v240 = vpop.permute.xlu0 %239
  %241 = vrot.lane.b32.xlu0 %v194, 127
  %v242 = vpop.permute.xlu0 %241
  %vm243 = vcmask 1039360
  %v244 = vsel %vm243, %v212, %v214
  %v245 = vsel %vm243, %v216, %v218
  %v246 = vsel %vm243, %v220, %v222
  %v247 = vsel %vm243, %v224, %v226
  %v248 = vsel %vm243, %v228, %v230
  %v249 = vsel %vm243, %v232, %v234
  %v250 = vsel %vm243, %v236, %v238
  %v251 = vsel %vm243, %v240, %v242
  %v261 = vsel %vm79, %v179, 0
  %v264 = vsel %vm79, %v180, 0
  %v267 = vsel %vm79, %v181, 0
  %v270 = vsel %vm79, %v182, 0
  %v273 = vsel %vm79, %v183, 0
  %v276 = vsel %vm79, %v184, 0
  %v279 = vsel %vm79, %v185, 0
  %v282 = vsel %vm79, %v186, 0
  %284 = vmatpush.msra.mxu0 0.0
  %285 = vmatpush.msra.mxu0 0.0
  %286 = vmatpush.msra.mxu0 0.0
  %287 = vmatpush.msra.mxu0 0.0
  %288 = vmatpush.msra.mxu0 0.0
  %289 = vmatpush.msra.mxu0 0.0
  %290 = vmatpush.msra.mxu0 0.0
  %291 = vmatpush.msra.mxu0 0.0
  %292 = vmatpush.msra.mxu0 %v251
  %293 = vmatpush.msra.mxu0 %v250
  %294 = vmatpush.msra.mxu0 %v249
  %295 = vmatpush.msra.mxu0 %v248
  %296 = vmatpush.msra.mxu0 %v247
  %297 = vmatpush.msra.mxu0 %v246
  %298 = vmatpush.msra.mxu0 %v245
  %299 = vmatpush.msra.mxu0 %v244
  %300 = vmatmul.f32.gmra.mxu0 %v261
  %v301 = vpop.f32.mrf.mxu0
  %v302 = vadd.f32 0.0, %v301
  %303 = vmatmul.f32.gmra.mxu0 %v264
  %v304 = vpop.f32.mrf.mxu0
  %v305 = vadd.f32 0.0, %v304
  %306 = vmatmul.f32.gmra.mxu0 %v267
  %v307 = vpop.f32.mrf.mxu0
  %v308 = vadd.f32 0.0, %v307
  %309 = vmatmul.f32.gmra.mxu0 %v270
  %v310 = vpop.f32.mrf.mxu0
  %v311 = vadd.f32 0.0, %v310
  %312 = vmatmul.f32.gmra.mxu0 %v273
  %v313 = vpop.f32.mrf.mxu0
  %v314 = vadd.f32 0.0, %v313
  %315 = vmatmul.f32.gmra.mxu0 %v276
  %v316 = vpop.f32.mrf.mxu0
  %v317 = vadd.f32 0.0, %v316
  %318 = vmatmul.f32.gmra.mxu0 %v279
  %v319 = vpop.f32.mrf.mxu0
  %v320 = vadd.f32 0.0, %v319
  %321 = vmatmul.f32.gmra.mxu0 %v282
  %v322 = vpop.f32.mrf.mxu0
  %v323 = vadd.f32 0.0, %v322
  %324 = vdwg.mxu0
  %v326 = vsel %vm79, %v162, 0
  %v329 = vsel %vm79, %v163, 0
  %v332 = vsel %vm79, %v164, 0
  %v335 = vsel %vm79, %v165, 0
  %v338 = vsel %vm79, %v166, 0
  %v341 = vsel %vm79, %v167, 0
  %v344 = vsel %vm79, %v168, 0
  %v347 = vsel %vm79, %v169, 0
  %349 = vmatpush.msra.mxu0 0.0
  %350 = vmatpush.msra.mxu0 0.0
  %351 = vmatpush.msra.mxu0 0.0
  %352 = vmatpush.msra.mxu0 0.0
  %353 = vmatpush.msra.mxu0 0.0
  %354 = vmatpush.msra.mxu0 0.0
  %355 = vmatpush.msra.mxu0 0.0
  %356 = vmatpush.msra.mxu0 0.0
  %357 = vmatpush.msra.mxu0 %v177
  %358 = vmatpush.msra.mxu0 %v176
  %359 = vmatpush.msra.mxu0 %v175
  %360 = vmatpush.msra.mxu0 %v174
  %361 = vmatpush.msra.mxu0 %v173
  %362 = vmatpush.msra.mxu0 %v172
  %363 = vmatpush.msra.mxu0 %v171
  %364 = vmatpush.msra.mxu0 %v170
  %365 = vmatmul.f32.gmra.mxu0 %v326
  %v366 = vpop.f32.mrf.mxu0
  %v367 = vadd.f32 %v302, %v366
  %368 = vmatmul.f32.gmra.mxu0 %v329
  %v369 = vpop.f32.mrf.mxu0
  %v370 = vadd.f32 %v305, %v369
  %371 = vmatmul.f32.gmra.mxu0 %v332
  %v372 = vpop.f32.mrf.mxu0
  %v373 = vadd.f32 %v308, %v372
  %374 = vmatmul.f32.gmra.mxu0 %v335
  %v375 = vpop.f32.mrf.mxu0
  %v376 = vadd.f32 %v311, %v375
  %377 = vmatmul.f32.gmra.mxu0 %v338
  %v378 = vpop.f32.mrf.mxu0
  %v379 = vadd.f32 %v314, %v378
  %380 = vmatmul.f32.gmra.mxu0 %v341
  %v381 = vpop.f32.mrf.mxu0
  %v382 = vadd.f32 %v317, %v381
  %383 = vmatmul.f32.gmra.mxu0 %v344
  %v384 = vpop.f32.mrf.mxu0
  %v385 = vadd.f32 %v320, %v384
  %386 = vmatmul.f32.gmra.mxu0 %v347
  %v387 = vpop.f32.mrf.mxu0
  %v388 = vadd.f32 %v323, %v387
  %389 = vdwg.mxu0
  %v390 = vadd.f32 %v367, %v42
  %v391 = vadd.f32 %v370, %v47
  %v392 = vadd.f32 %v373, %v52
  %v393 = vadd.f32 %v376, %v57
  %v394 = vadd.f32 %v379, %v62
  %v395 = vadd.f32 %v382, %v67
  %v396 = vadd.f32 %v385, %v72
  %v397 = vadd.f32 %v388, %v77
  %v398 = vmax.f32 %v390, 0.0
  %v399 = vmax.f32 %v391, 0.0
  %v400 = vmax.f32 %v392, 0.0
  %v401 = vmax.f32 %v393, 0.0
  %v402 = vmax.f32 %v394, 0.0
  %v403 = vmax.f32 %v395, 0.0
  %v404 = vmax.f32 %v396, 0.0
  %v405 = vmax.f32 %v397, 0.0
  %s406 = scalar_lea.vmem %s3, 64
  %407 = vst [vmem:[%s406] sm:$0xff] %v398
  %408 = vst [vmem:[%s406 + $0x8] sm:$0xff] %v399
  %409 = vst [vmem:[%s406 + $0x10] sm:$0xff] %v400
  %410 = vst [vmem:[%s406 + $0x18] sm:$0xff] %v401
  %411 = vst [vmem:[%s406 + $0x20] sm:$0xff] %v402
  %412 = vst [vmem:[%s406 + $0x28] sm:$0xff] %v403
  %413 = vst [vmem:[%s406 + $0x30] sm:$0xff] %v404
  %414 = vst [vmem:[%s406 + $0x38] sm:$0xff] %v405
  %s415 = scalar_lea.vmem %s1, 448
  %v416 = vld [vmem:[%s415] sm:$0xff]
  %v417 = vld [vmem:[%s415 + $0x8] sm:$0xff]
  %v418 = vld [vmem:[%s415 + $0x10] sm:$0xff]
  %v419 = vld [vmem:[%s415 + $0x18] sm:$0xff]
  %v420 = vld [vmem:[%s415 + $0x20] sm:$0xff]
  %v421 = vld [vmem:[%s415 + $0x28] sm:$0xff]
  %v422 = vld [vmem:[%s415 + $0x30] sm:$0xff]
  %v423 = vld [vmem:[%s415 + $0x38] sm:$0xff]
  %v424 = vld [vmem:[%s0] sm:$0xff]
  %v425 = vld [vmem:[%s0 + $0x10] sm:$0xff]
  %v426 = vld [vmem:[%s0 + $0x20] sm:$0xff]
  %v427 = vld [vmem:[%s0 + $0x30] sm:$0xff]
  %v428 = vld [vmem:[%s0 + $0x40] sm:$0xff]
  %v429 = vld [vmem:[%s0 + $0x50] sm:$0xff]
  %v430 = vld [vmem:[%s0 + $0x60] sm:$0xff]
  %v431 = vld [vmem:[%s0 + $0x70] sm:$0xff]
  %s432 = scalar_lea.vmem %s1, 64
  %v433 = vld [vmem:[%s432] sm:$0xff]
  %v434 = vld [vmem:[%s432 + $0x8] sm:$0xff]
  %v435 = vld [vmem:[%s432 + $0x10] sm:$0xff]
  %v436 = vld [vmem:[%s432 + $0x18] sm:$0xff]
  %v437 = vld [vmem:[%s432 + $0x20] sm:$0xff]
  %v438 = vld [vmem:[%s432 + $0x28] sm:$0xff]
  %v439 = vld [vmem:[%s432 + $0x30] sm:$0xff]
  %v440 = vld [vmem:[%s432 + $0x38] sm:$0xff]
  %v441 = vld [vmem:[%s0 + $0x8] sm:$0xff]
  %v442 = vld [vmem:[%s0 + $0x18] sm:$0xff]
  %v443 = vld [vmem:[%s0 + $0x28] sm:$0xff]
  %v444 = vld [vmem:[%s0 + $0x38] sm:$0xff]
  %v445 = vld [vmem:[%s0 + $0x48] sm:$0xff]
  %v446 = vld [vmem:[%s0 + $0x58] sm:$0xff]
  %v447 = vld [vmem:[%s0 + $0x68] sm:$0xff]
  %v448 = vld [vmem:[%s0 + $0x78] sm:$0xff]
  %465 = vrot.lane.b32.xlu0 %v424, 120
  %v466 = vpop.permute.xlu0 %465
  %467 = vrot.lane.b32.xlu0 %v441, 120
  %v468 = vpop.permute.xlu0 %467
  %469 = vrot.lane.b32.xlu0 %v425, 120
  %v470 = vpop.permute.xlu0 %469
  %471 = vrot.lane.b32.xlu0 %v442, 120
  %v472 = vpop.permute.xlu0 %471
  %473 = vrot.lane.b32.xlu0 %v426, 120
  %v474 = vpop.permute.xlu0 %473
  %475 = vrot.lane.b32.xlu0 %v443, 120
  %v476 = vpop.permute.xlu0 %475
  %477 = vrot.lane.b32.xlu0 %v427, 120
  %v478 = vpop.permute.xlu0 %477
  %479 = vrot.lane.b32.xlu0 %v444, 120
  %v480 = vpop.permute.xlu0 %479
  %481 = vrot.lane.b32.xlu0 %v428, 120
  %v482 = vpop.permute.xlu0 %481
  %483 = vrot.lane.b32.xlu0 %v445, 120
  %v484 = vpop.permute.xlu0 %483
  %485 = vrot.lane.b32.xlu0 %v429, 120
  %v486 = vpop.permute.xlu0 %485
  %487 = vrot.lane.b32.xlu0 %v446, 120
  %v488 = vpop.permute.xlu0 %487
  %489 = vrot.lane.b32.xlu0 %v430, 120
  %v490 = vpop.permute.xlu0 %489
  %491 = vrot.lane.b32.xlu0 %v447, 120
  %v492 = vpop.permute.xlu0 %491
  %493 = vrot.lane.b32.xlu0 %v431, 120
  %v494 = vpop.permute.xlu0 %493
  %495 = vrot.lane.b32.xlu0 %v448, 120
  %v496 = vpop.permute.xlu0 %495
  %vm497 = vcmask 982016
  %v498 = vsel %vm497, %v466, %v468
  %v499 = vsel %vm497, %v470, %v472
  %v500 = vsel %vm497, %v474, %v476
  %v501 = vsel %vm497, %v478, %v480
  %v502 = vsel %vm497, %v482, %v484
  %v503 = vsel %vm497, %v486, %v488
  %v504 = vsel %vm497, %v490, %v492
  %v505 = vsel %vm497, %v494, %v496
  %v515 = vsel %vm79, %v433, 0
  %v518 = vsel %vm79, %v434, 0
  %v521 = vsel %vm79, %v435, 0
  %v524 = vsel %vm79, %v436, 0
  %v527 = vsel %vm79, %v437, 0
  %v530 = vsel %vm79, %v438, 0
  %v533 = vsel %vm79, %v439, 0
  %v536 = vsel %vm79, %v440, 0
  %538 = vmatpush.msra.mxu0 0.0
  %539 = vmatpush.msra.mxu0 0.0
  %540 = vmatpush.msra.mxu0 0.0
  %541 = vmatpush.msra.mxu0 0.0
  %542 = vmatpush.msra.mxu0 0.0
  %543 = vmatpush.msra.mxu0 0.0
  %544 = vmatpush.msra.mxu0 0.0
  %545 = vmatpush.msra.mxu0 0.0
  %546 = vmatpush.msra.mxu0 %v505
  %547 = vmatpush.msra.mxu0 %v504
  %548 = vmatpush.msra.mxu0 %v503
  %549 = vmatpush.msra.mxu0 %v502
  %550 = vmatpush.msra.mxu0 %v501
  %551 = vmatpush.msra.mxu0 %v500
  %552 = vmatpush.msra.mxu0 %v499
  %553 = vmatpush.msra.mxu0 %v498
  %554 = vmatmul.f32.gmra.mxu0 %v515
  %v555 = vpop.f32.mrf.mxu0
  %v556 = vadd.f32 0.0, %v555
  %557 = vmatmul.f32.gmra.mxu0 %v518
  %v558 = vpop.f32.mrf.mxu0
  %v559 = vadd.f32 0.0, %v558
  %560 = vmatmul.f32.gmra.mxu0 %v521
  %v561 = vpop.f32.mrf.mxu0
  %v562 = vadd.f32 0.0, %v561
  %563 = vmatmul.f32.gmra.mxu0 %v524
  %v564 = vpop.f32.mrf.mxu0
  %v565 = vadd.f32 0.0, %v564
  %566 = vmatmul.f32.gmra.mxu0 %v527
  %v567 = vpop.f32.mrf.mxu0
  %v568 = vadd.f32 0.0, %v567
  %569 = vmatmul.f32.gmra.mxu0 %v530
  %v570 = vpop.f32.mrf.mxu0
  %v571 = vadd.f32 0.0, %v570
  %572 = vmatmul.f32.gmra.mxu0 %v533
  %v573 = vpop.f32.mrf.mxu0
  %v574 = vadd.f32 0.0, %v573
  %575 = vmatmul.f32.gmra.mxu0 %v536
  %v576 = vpop.f32.mrf.mxu0
  %v577 = vadd.f32 0.0, %v576
  %578 = vdwg.mxu0
  %v580 = vsel %vm79, %v416, 0
  %v583 = vsel %vm79, %v417, 0
  %v586 = vsel %vm79, %v418, 0
  %v589 = vsel %vm79, %v419, 0
  %v592 = vsel %vm79, %v420, 0
  %v595 = vsel %vm79, %v421, 0
  %v598 = vsel %vm79, %v422, 0
  %v601 = vsel %vm79, %v423, 0
  %603 = vmatpush.msra.mxu0 0.0
  %604 = vmatpush.msra.mxu0 0.0
  %605 = vmatpush.msra.mxu0 0.0
  %606 = vmatpush.msra.mxu0 0.0
  %607 = vmatpush.msra.mxu0 0.0
  %608 = vmatpush.msra.mxu0 0.0
  %609 = vmatpush.msra.mxu0 0.0
  %610 = vmatpush.msra.mxu0 0.0
  %611 = vmatpush.msra.mxu0 %v431
  %612 = vmatpush.msra.mxu0 %v430
  %613 = vmatpush.msra.mxu0 %v429
  %614 = vmatpush.msra.mxu0 %v428
  %615 = vmatpush.msra.mxu0 %v427
  %616 = vmatpush.msra.mxu0 %v426
  %617 = vmatpush.msra.mxu0 %v425
  %618 = vmatpush.msra.mxu0 %v424
  %619 = vmatmul.f32.gmra.mxu0 %v580
  %v620 = vpop.f32.mrf.mxu0
  %v621 = vadd.f32 %v556, %v620
  %622 = vmatmul.f32.gmra.mxu0 %v583
  %v623 = vpop.f32.mrf.mxu0
  %v624 = vadd.f32 %v559, %v623
  %625 = vmatmul.f32.gmra.mxu0 %v586
  %v626 = vpop.f32.mrf.mxu0
  %v627 = vadd.f32 %v562, %v626
  %628 = vmatmul.f32.gmra.mxu0 %v589
  %v629 = vpop.f32.mrf.mxu0
  %v630 = vadd.f32 %v565, %v629
  %631 = vmatmul.f32.gmra.mxu0 %v592
  %v632 = vpop.f32.mrf.mxu0
  %v633 = vadd.f32 %v568, %v632
  %634 = vmatmul.f32.gmra.mxu0 %v595
  %v635 = vpop.f32.mrf.mxu0
  %v636 = vadd.f32 %v571, %v635
  %637 = vmatmul.f32.gmra.mxu0 %v598
  %v638 = vpop.f32.mrf.mxu0
  %v639 = vadd.f32 %v574, %v638
  %640 = vmatmul.f32.gmra.mxu0 %v601
  %v641 = vpop.f32.mrf.mxu0
  %v642 = vadd.f32 %v577, %v641
  %643 = vdwg.mxu0
  %v644 = vadd.f32 %v621, %v42
  %v645 = vadd.f32 %v624, %v47
  %v646 = vadd.f32 %v627, %v52
  %v647 = vadd.f32 %v630, %v57
  %v648 = vadd.f32 %v633, %v62
  %v649 = vadd.f32 %v636, %v67
  %v650 = vadd.f32 %v639, %v72
  %v651 = vadd.f32 %v642, %v77
  %v652 = vmax.f32 %v644, 0.0
  %v653 = vmax.f32 %v645, 0.0
  %v654 = vmax.f32 %v646, 0.0
  %v655 = vmax.f32 %v647, 0.0
  %v656 = vmax.f32 %v648, 0.0
  %v657 = vmax.f32 %v649, 0.0
  %v658 = vmax.f32 %v650, 0.0
  %v659 = vmax.f32 %v651, 0.0
  %s660 = scalar_lea.vmem %s3, 128
  %661 = vst [vmem:[%s660] sm:$0xff] %v652
  %662 = vst [vmem:[%s660 + $0x8] sm:$0xff] %v653
  %663 = vst [vmem:[%s660 + $0x10] sm:$0xff] %v654
  %664 = vst [vmem:[%s660 + $0x18] sm:$0xff] %v655
  %665 = vst [vmem:[%s660 + $0x20] sm:$0xff] %v656
  %666 = vst [vmem:[%s660 + $0x28] sm:$0xff] %v657
  %667 = vst [vmem:[%s660 + $0x30] sm:$0xff] %v658
  %668 = vst [vmem:[%s660 + $0x38] sm:$0xff] %v659
  %s669 = scalar_lea.vmem %s1, 512
  %v670 = vld [vmem:[%s669] sm:$0xff]
  %v671 = vld [vmem:[%s669 + $0x8] sm:$0xff]
  %v672 = vld [vmem:[%s669 + $0x10] sm:$0xff]
  %v673 = vld [vmem:[%s669 + $0x18] sm:$0xff]
  %v674 = vld [vmem:[%s669 + $0x20] sm:$0xff]
  %v675 = vld [vmem:[%s669 + $0x28] sm:$0xff]
  %v676 = vld [vmem:[%s669 + $0x30] sm:$0xff]
  %v677 = vld [vmem:[%s669 + $0x38] sm:$0xff]
  %v678 = vld [vmem:[%s0] sm:$0xff]
  %v679 = vld [vmem:[%s0 + $0x10] sm:$0xff]
  %v680 = vld [vmem:[%s0 + $0x20] sm:$0xff]
  %v681 = vld [vmem:[%s0 + $0x30] sm:$0xff]
  %v682 = vld [vmem:[%s0 + $0x40] sm:$0xff]
  %v683 = vld [vmem:[%s0 + $0x50] sm:$0xff]
  %v684 = vld [vmem:[%s0 + $0x60] sm:$0xff]
  %v685 = vld [vmem:[%s0 + $0x70] sm:$0xff]
  %s686 = scalar_lea.vmem %s1, 384
  %v687 = vld [vmem:[%s686] sm:$0xff]
  %v688 = vld [vmem:[%s686 + $0x8] sm:$0xff]
  %v689 = vld [vmem:[%s686 + $0x10] sm:$0xff]
  %v690 = vld [vmem:[%s686 + $0x18] sm:$0xff]
  %v691 = vld [vmem:[%s686 + $0x20] sm:$0xff]
  %v692 = vld [vmem:[%s686 + $0x28] sm:$0xff]
  %v693 = vld [vmem:[%s686 + $0x30] sm:$0xff]
  %v694 = vld [vmem:[%s686 + $0x38] sm:$0xff]
  %v695 = vld [vmem:[%s0 + $0x8] sm:$0xff]
  %v696 = vld [vmem:[%s0 + $0x18] sm:$0xff]
  %v697 = vld [vmem:[%s0 + $0x28] sm:$0xff]
  %v698 = vld [vmem:[%s0 + $0x38] sm:$0xff]
  %v699 = vld [vmem:[%s0 + $0x48] sm:$0xff]
  %v700 = vld [vmem:[%s0 + $0x58] sm:$0xff]
  %v701 = vld [vmem:[%s0 + $0x68] sm:$0xff]
  %v702 = vld [vmem:[%s0 + $0x78] sm:$0xff]
  %719 = vrot.lane.b32.xlu0 %v678, 127
  %v720 = vpop.permute.xlu0 %719
  %721 = vrot.lane.b32.xlu0 %v695, 127
  %v722 = vpop.permute.xlu0 %721
  %723 = vrot.lane.b32.xlu0 %v679, 127
  %v724 = vpop.permute.xlu0 %723
  %725 = vrot.lane.b32.xlu0 %v696, 127
  %v726 = vpop.permute.xlu0 %725
  %727 = vrot.lane.b32.xlu0 %v680, 127
  %v728 = vpop.permute.xlu0 %727
  %729 = vrot.lane.b32.xlu0 %v697, 127
  %v730 = vpop.permute.xlu0 %729
  %731 = vrot.lane.b32.xlu0 %v681, 127
  %v732 = vpop.permute.xlu0 %731
  %733 = vrot.lane.b32.xlu0 %v698, 127
  %v734 = vpop.permute.xlu0 %733
  %735 = vrot.lane.b32.xlu0 %v682, 127
  %v736 = vpop.permute.xlu0 %735
  %737 = vrot.lane.b32.xlu0 %v699, 127
  %v738 = vpop.permute.xlu0 %737
  %739 = vrot.lane.b32.xlu0 %v683, 127
  %v740 = vpop.permute.xlu0 %739
  %741 = vrot.lane.b32.xlu0 %v700, 127
  %v742 = vpop.permute.xlu0 %741
  %743 = vrot.lane.b32.xlu0 %v684, 127
  %v744 = vpop.permute.xlu0 %743
  %745 = vrot.lane.b32.xlu0 %v701, 127
  %v746 = vpop.permute.xlu0 %745
  %747 = vrot.lane.b32.xlu0 %v685, 127
  %v748 = vpop.permute.xlu0 %747
  %749 = vrot.lane.b32.xlu0 %v702, 127
  %v750 = vpop.permute.xlu0 %749
  %v751 = vsel %vm243, %v720, %v722
  %v752 = vsel %vm243, %v724, %v726
  %v753 = vsel %vm243, %v728, %v730
  %v754 = vsel %vm243, %v732, %v734
  %v755 = vsel %vm243, %v736, %v738
  %v756 = vsel %vm243, %v740, %v742
  %v757 = vsel %vm243, %v744, %v746
  %v758 = vsel %vm243, %v748, %v750
  %v768 = vsel %vm79, %v687, 0
  %v771 = vsel %vm79, %v688, 0
  %v774 = vsel %vm79, %v689, 0
  %v777 = vsel %vm79, %v690, 0
  %v780 = vsel %vm79, %v691, 0
  %v783 = vsel %vm79, %v692, 0
  %v786 = vsel %vm79, %v693, 0
  %v789 = vsel %vm79, %v694, 0
  %791 = vmatpush.msra.mxu0 0.0
  %792 = vmatpush.msra.mxu0 0.0
  %793 = vmatpush.msra.mxu0 0.0
  %794 = vmatpush.msra.mxu0 0.0
  %795 = vmatpush.msra.mxu0 0.0
  %796 = vmatpush.msra.mxu0 0.0
  %797 = vmatpush.msra.mxu0 0.0
  %798 = vmatpush.msra.mxu0 0.0
  %799 = vmatpush.msra.mxu0 %v758
  %800 = vmatpush.msra.mxu0 %v757
  %801 = vmatpush.msra.mxu0 %v756
  %802 = vmatpush.msra.mxu0 %v755
  %803 = vmatpush.msra.mxu0 %v754
  %804 = vmatpush.msra.mxu0 %v753
  %805 = vmatpush.msra.mxu0 %v752
  %806 = vmatpush.msra.mxu0 %v751
  %807 = vmatmul.f32.gmra.mxu0 %v768
  %v808 = vpop.f32.mrf.mxu0
  %v809 = vadd.f32 0.0, %v808
  %810 = vmatmul.f32.gmra.mxu0 %v771
  %v811 = vpop.f32.mrf.mxu0
  %v812 = vadd.f32 0.0, %v811
  %813 = vmatmul.f32.gmra.mxu0 %v774
  %v814 = vpop.f32.mrf.mxu0
  %v815 = vadd.f32 0.0, %v814
  %816 = vmatmul.f32.gmra.mxu0 %v777
  %v817 = vpop.f32.mrf.mxu0
  %v818 = vadd.f32 0.0, %v817
  %819 = vmatmul.f32.gmra.mxu0 %v780
  %v820 = vpop.f32.mrf.mxu0
  %v821 = vadd.f32 0.0, %v820
  %822 = vmatmul.f32.gmra.mxu0 %v783
  %v823 = vpop.f32.mrf.mxu0
  %v824 = vadd.f32 0.0, %v823
  %825 = vmatmul.f32.gmra.mxu0 %v786
  %v826 = vpop.f32.mrf.mxu0
  %v827 = vadd.f32 0.0, %v826
  %828 = vmatmul.f32.gmra.mxu0 %v789
  %v829 = vpop.f32.mrf.mxu0
  %v830 = vadd.f32 0.0, %v829
  %831 = vdwg.mxu0
  %v833 = vsel %vm79, %v670, 0
  %v836 = vsel %vm79, %v671, 0
  %v839 = vsel %vm79, %v672, 0
  %v842 = vsel %vm79, %v673, 0
  %v845 = vsel %vm79, %v674, 0
  %v848 = vsel %vm79, %v675, 0
  %v851 = vsel %vm79, %v676, 0
  %v854 = vsel %vm79, %v677, 0
  %856 = vmatpush.msra.mxu0 0.0
  %857 = vmatpush.msra.mxu0 0.0
  %858 = vmatpush.msra.mxu0 0.0
  %859 = vmatpush.msra.mxu0 0.0
  %860 = vmatpush.msra.mxu0 0.0
  %861 = vmatpush.msra.mxu0 0.0
  %862 = vmatpush.msra.mxu0 0.0
  %863 = vmatpush.msra.mxu0 0.0
  %864 = vmatpush.msra.mxu0 %v685
  %865 = vmatpush.msra.mxu0 %v684
  %866 = vmatpush.msra.mxu0 %v683
  %867 = vmatpush.msra.mxu0 %v682
  %868 = vmatpush.msra.mxu0 %v681
  %869 = vmatpush.msra.mxu0 %v680
  %870 = vmatpush.msra.mxu0 %v679
  %871 = vmatpush.msra.mxu0 %v678
  %872 = vmatmul.f32.gmra.mxu0 %v833
  %v873 = vpop.f32.mrf.mxu0
  %v874 = vadd.f32 %v809, %v873
  %875 = vmatmul.f32.gmra.mxu0 %v836
  %v876 = vpop.f32.mrf.mxu0
  %v877 = vadd.f32 %v812, %v876
  %878 = vmatmul.f32.gmra.mxu0 %v839
  %v879 = vpop.f32.mrf.mxu0
  %v880 = vadd.f32 %v815, %v879
  %881 = vmatmul.f32.gmra.mxu0 %v842
  %v882 = vpop.f32.mrf.mxu0
  %v883 = vadd.f32 %v818, %v882
  %884 = vmatmul.f32.gmra.mxu0 %v845
  %v885 = vpop.f32.mrf.mxu0
  %v886 = vadd.f32 %v821, %v885
  %887 = vmatmul.f32.gmra.mxu0 %v848
  %v888 = vpop.f32.mrf.mxu0
  %v889 = vadd.f32 %v824, %v888
  %890 = vmatmul.f32.gmra.mxu0 %v851
  %v891 = vpop.f32.mrf.mxu0
  %v892 = vadd.f32 %v827, %v891
  %893 = vmatmul.f32.gmra.mxu0 %v854
  %v894 = vpop.f32.mrf.mxu0
  %v895 = vadd.f32 %v830, %v894
  %896 = vdwg.mxu0
  %s897 = scalar_lea.vmem %s1, 128
  %v898 = vld [vmem:[%s897] sm:$0xff]
  %v899 = vld [vmem:[%s897 + $0x8] sm:$0xff]
  %v900 = vld [vmem:[%s897 + $0x10] sm:$0xff]
  %v901 = vld [vmem:[%s897 + $0x18] sm:$0xff]
  %v902 = vld [vmem:[%s897 + $0x20] sm:$0xff]
  %v903 = vld [vmem:[%s897 + $0x28] sm:$0xff]
  %v904 = vld [vmem:[%s897 + $0x30] sm:$0xff]
  %v905 = vld [vmem:[%s897 + $0x38] sm:$0xff]
  %906 = vrot.lane.b32.xlu0 %v678, 120
  %v907 = vpop.permute.xlu0 %906
  %908 = vrot.lane.b32.xlu0 %v695, 120
  %v909 = vpop.permute.xlu0 %908
  %910 = vrot.lane.b32.xlu0 %v679, 120
  %v911 = vpop.permute.xlu0 %910
  %912 = vrot.lane.b32.xlu0 %v696, 120
  %v913 = vpop.permute.xlu0 %912
  %914 = vrot.lane.b32.xlu0 %v680, 120
  %v915 = vpop.permute.xlu0 %914
  %916 = vrot.lane.b32.xlu0 %v697, 120
  %v917 = vpop.permute.xlu0 %916
  %918 = vrot.lane.b32.xlu0 %v681, 120
  %v919 = vpop.permute.xlu0 %918
  %920 = vrot.lane.b32.xlu0 %v698, 120
  %v921 = vpop.permute.xlu0 %920
  %922 = vrot.lane.b32.xlu0 %v682, 120
  %v923 = vpop.permute.xlu0 %922
  %924 = vrot.lane.b32.xlu0 %v699, 120
  %v925 = vpop.permute.xlu0 %924
  %926 = vrot.lane.b32.xlu0 %v683, 120
  %v927 = vpop.permute.xlu0 %926
  %928 = vrot.lane.b32.xlu0 %v700, 120
  %v929 = vpop.permute.xlu0 %928
  %930 = vrot.lane.b32.xlu0 %v684, 120
  %v931 = vpop.permute.xlu0 %930
  %932 = vrot.lane.b32.xlu0 %v701, 120
  %v933 = vpop.permute.xlu0 %932
  %934 = vrot.lane.b32.xlu0 %v685, 120
  %v935 = vpop.permute.xlu0 %934
  %936 = vrot.lane.b32.xlu0 %v702, 120
  %v937 = vpop.permute.xlu0 %936
  %v938 = vsel %vm497, %v907, %v909
  %v939 = vsel %vm497, %v911, %v913
  %v940 = vsel %vm497, %v915, %v917
  %v941 = vsel %vm497, %v919, %v921
  %v942 = vsel %vm497, %v923, %v925
  %v943 = vsel %vm497, %v927, %v929
  %v944 = vsel %vm497, %v931, %v933
  %v945 = vsel %vm497, %v935, %v937
  %v955 = vsel %vm79, %v898, 0
  %v958 = vsel %vm79, %v899, 0
  %v961 = vsel %vm79, %v900, 0
  %v964 = vsel %vm79, %v901, 0
  %v967 = vsel %vm79, %v902, 0
  %v970 = vsel %vm79, %v903, 0
  %v973 = vsel %vm79, %v904, 0
  %v976 = vsel %vm79, %v905, 0
  %978 = vmatpush.msra.mxu0 0.0
  %979 = vmatpush.msra.mxu0 0.0
  %980 = vmatpush.msra.mxu0 0.0
  %981 = vmatpush.msra.mxu0 0.0
  %982 = vmatpush.msra.mxu0 0.0
  %983 = vmatpush.msra.mxu0 0.0
  %984 = vmatpush.msra.mxu0 0.0
  %985 = vmatpush.msra.mxu0 0.0
  %986 = vmatpush.msra.mxu0 %v945
  %987 = vmatpush.msra.mxu0 %v944
  %988 = vmatpush.msra.mxu0 %v943
  %989 = vmatpush.msra.mxu0 %v942
  %990 = vmatpush.msra.mxu0 %v941
  %991 = vmatpush.msra.mxu0 %v940
  %992 = vmatpush.msra.mxu0 %v939
  %993 = vmatpush.msra.mxu0 %v938
  %994 = vmatmul.f32.gmra.mxu0 %v955
  %v995 = vpop.f32.mrf.mxu0
  %v996 = vadd.f32 0.0, %v995
  %997 = vmatmul.f32.gmra.mxu0 %v958
  %v998 = vpop.f32.mrf.mxu0
  %v999 = vadd.f32 0.0, %v998
  %1000 = vmatmul.f32.gmra.mxu0 %v961
  %v1001 = vpop.f32.mrf.mxu0
  %v1002 = vadd.f32 0.0, %v1001
  %1003 = vmatmul.f32.gmra.mxu0 %v964
  %v1004 = vpop.f32.mrf.mxu0
  %v1005 = vadd.f32 0.0, %v1004
  %1006 = vmatmul.f32.gmra.mxu0 %v967
  %v1007 = vpop.f32.mrf.mxu0
  %v1008 = vadd.f32 0.0, %v1007
  %1009 = vmatmul.f32.gmra.mxu0 %v970
  %v1010 = vpop.f32.mrf.mxu0
  %v1011 = vadd.f32 0.0, %v1010
  %1012 = vmatmul.f32.gmra.mxu0 %v973
  %v1013 = vpop.f32.mrf.mxu0
  %v1014 = vadd.f32 0.0, %v1013
  %1015 = vmatmul.f32.gmra.mxu0 %v976
  %v1016 = vpop.f32.mrf.mxu0
  %v1017 = vadd.f32 0.0, %v1016
  %1018 = vdwg.mxu0
  %v1019 = vadd.f32 %v874, %v996
  %v1020 = vadd.f32 %v877, %v999
  %v1021 = vadd.f32 %v880, %v1002
  %v1022 = vadd.f32 %v883, %v1005
  %v1023 = vadd.f32 %v886, %v1008
  %v1024 = vadd.f32 %v889, %v1011
  %v1025 = vadd.f32 %v892, %v1014
  %v1026 = vadd.f32 %v895, %v1017
  %v1027 = vld [vmem:[%s1] sm:$0xff]
  %v1028 = vld [vmem:[%s1 + $0x8] sm:$0xff]
  %v1029 = vld [vmem:[%s1 + $0x10] sm:$0xff]
  %v1030 = vld [vmem:[%s1 + $0x18] sm:$0xff]
  %v1031 = vld [vmem:[%s1 + $0x20] sm:$0xff]
  %v1032 = vld [vmem:[%s1 + $0x28] sm:$0xff]
  %v1033 = vld [vmem:[%s1 + $0x30] sm:$0xff]
  %v1034 = vld [vmem:[%s1 + $0x38] sm:$0xff]
  %1035 = vrot.lane.b32.xlu0 %v678, 119
  %v1036 = vpop.permute.xlu0 %1035
  %1037 = vrot.lane.b32.xlu0 %v695, 119
  %v1038 = vpop.permute.xlu0 %1037
  %1039 = vrot.lane.b32.xlu0 %v679, 119
  %v1040 = vpop.permute.xlu0 %1039
  %1041 = vrot.lane.b32.xlu0 %v696, 119
  %v1042 = vpop.permute.xlu0 %1041
  %1043 = vrot.lane.b32.xlu0 %v680, 119
  %v1044 = vpop.permute.xlu0 %1043
  %1045 = vrot.lane.b32.xlu0 %v697, 119
  %v1046 = vpop.permute.xlu0 %1045
  %1047 = vrot.lane.b32.xlu0 %v681, 119
  %v1048 = vpop.permute.xlu0 %1047
  %1049 = vrot.lane.b32.xlu0 %v698, 119
  %v1050 = vpop.permute.xlu0 %1049
  %1051 = vrot.lane.b32.xlu0 %v682, 119
  %v1052 = vpop.permute.xlu0 %1051
  %1053 = vrot.lane.b32.xlu0 %v699, 119
  %v1054 = vpop.permute.xlu0 %1053
  %1055 = vrot.lane.b32.xlu0 %v683, 119
  %v1056 = vpop.permute.xlu0 %1055
  %1057 = vrot.lane.b32.xlu0 %v700, 119
  %v1058 = vpop.permute.xlu0 %1057
  %1059 = vrot.lane.b32.xlu0 %v684, 119
  %v1060 = vpop.permute.xlu0 %1059
  %1061 = vrot.lane.b32.xlu0 %v701, 119
  %v1062 = vpop.permute.xlu0 %1061
  %1063 = vrot.lane.b32.xlu0 %v685, 119
  %v1064 = vpop.permute.xlu0 %1063
  %1065 = vrot.lane.b32.xlu0 %v702, 119
  %v1066 = vpop.permute.xlu0 %1065
  %vm1067 = vcmask 973824
  %v1068 = vsel %vm1067, %v1036, %v1038
  %v1069 = vsel %vm1067, %v1040, %v1042
  %v1070 = vsel %vm1067, %v1044, %v1046
  %v1071 = vsel %vm1067, %v1048, %v1050
  %v1072 = vsel %vm1067, %v1052, %v1054
  %v1073 = vsel %vm1067, %v1056, %v1058
  %v1074 = vsel %vm1067, %v1060, %v1062
  %v1075 = vsel %vm1067, %v1064, %v1066
  %v1085 = vsel %vm79, %v1027, 0
  %v1088 = vsel %vm79, %v1028, 0
  %v1091 = vsel %vm79, %v1029, 0
  %v1094 = vsel %vm79, %v1030, 0
  %v1097 = vsel %vm79, %v1031, 0
  %v1100 = vsel %vm79, %v1032, 0
  %v1103 = vsel %vm79, %v1033, 0
  %v1106 = vsel %vm79, %v1034, 0
  %1108 = vmatpush.msra.mxu0 0.0
  %1109 = vmatpush.msra.mxu0 0.0
  %1110 = vmatpush.msra.mxu0 0.0
  %1111 = vmatpush.msra.mxu0 0.0
  %1112 = vmatpush.msra.mxu0 0.0
  %1113 = vmatpush.msra.mxu0 0.0
  %1114 = vmatpush.msra.mxu0 0.0
  %1115 = vmatpush.msra.mxu0 0.0
  %1116 = vmatpush.msra.mxu0 %v1075
  %1117 = vmatpush.msra.mxu0 %v1074
  %1118 = vmatpush.msra.mxu0 %v1073
  %1119 = vmatpush.msra.mxu0 %v1072
  %1120 = vmatpush.msra.mxu0 %v1071
  %1121 = vmatpush.msra.mxu0 %v1070
  %1122 = vmatpush.msra.mxu0 %v1069
  %1123 = vmatpush.msra.mxu0 %v1068
  %1124 = vmatmul.f32.gmra.mxu0 %v1085
  %v1125 = vpop.f32.mrf.mxu0
  %v1126 = vadd.f32 0.0, %v1125
  %1127 = vmatmul.f32.gmra.mxu0 %v1088
  %v1128 = vpop.f32.mrf.mxu0
  %v1129 = vadd.f32 0.0, %v1128
  %1130 = vmatmul.f32.gmra.mxu0 %v1091
  %v1131 = vpop.f32.mrf.mxu0
  %v1132 = vadd.f32 0.0, %v1131
  %1133 = vmatmul.f32.gmra.mxu0 %v1094
  %v1134 = vpop.f32.mrf.mxu0
  %v1135 = vadd.f32 0.0, %v1134
  %1136 = vmatmul.f32.gmra.mxu0 %v1097
  %v1137 = vpop.f32.mrf.mxu0
  %v1138 = vadd.f32 0.0, %v1137
  %1139 = vmatmul.f32.gmra.mxu0 %v1100
  %v1140 = vpop.f32.mrf.mxu0
  %v1141 = vadd.f32 0.0, %v1140
  %1142 = vmatmul.f32.gmra.mxu0 %v1103
  %v1143 = vpop.f32.mrf.mxu0
  %v1144 = vadd.f32 0.0, %v1143
  %1145 = vmatmul.f32.gmra.mxu0 %v1106
  %v1146 = vpop.f32.mrf.mxu0
  %v1147 = vadd.f32 0.0, %v1146
  %1148 = vdwg.mxu0
  %v1149 = vadd.f32 %v1019, %v1126
  %v1150 = vadd.f32 %v1020, %v1129
  %v1151 = vadd.f32 %v1021, %v1132
  %v1152 = vadd.f32 %v1022, %v1135
  %v1153 = vadd.f32 %v1023, %v1138
  %v1154 = vadd.f32 %v1024, %v1141
  %v1155 = vadd.f32 %v1025, %v1144
  %v1156 = vadd.f32 %v1026, %v1147
  %v1157 = vadd.f32 %v1149, %v42
  %v1158 = vadd.f32 %v1150, %v47
  %v1159 = vadd.f32 %v1151, %v52
  %v1160 = vadd.f32 %v1152, %v57
  %v1161 = vadd.f32 %v1153, %v62
  %v1162 = vadd.f32 %v1154, %v67
  %v1163 = vadd.f32 %v1155, %v72
  %v1164 = vadd.f32 %v1156, %v77
  %v1165 = vmax.f32 %v1157, 0.0
  %v1166 = vmax.f32 %v1158, 0.0
  %v1167 = vmax.f32 %v1159, 0.0
  %v1168 = vmax.f32 %v1160, 0.0
  %v1169 = vmax.f32 %v1161, 0.0
  %v1170 = vmax.f32 %v1162, 0.0
  %v1171 = vmax.f32 %v1163, 0.0
  %v1172 = vmax.f32 %v1164, 0.0
  %s1173 = scalar_lea.vmem %s3, 192
  %1174 = vst [vmem:[%s1173] sm:$0xff] %v1165
  %1175 = vst [vmem:[%s1173 + $0x8] sm:$0xff] %v1166
  %1176 = vst [vmem:[%s1173 + $0x10] sm:$0xff] %v1167
  %1177 = vst [vmem:[%s1173 + $0x18] sm:$0xff] %v1168
  %1178 = vst [vmem:[%s1173 + $0x20] sm:$0xff] %v1169
  %1179 = vst [vmem:[%s1173 + $0x28] sm:$0xff] %v1170
  %1180 = vst [vmem:[%s1173 + $0x30] sm:$0xff] %v1171
  %1181 = vst [vmem:[%s1173 + $0x38] sm:$0xff] %v1172
  // Predicated region
  $region14: #{decoder_forward.5} parent=0 // pred_check
    _
  $region15: #{decoder_forward.5} parent=0 // pred_check_branch
    %1183 = sbr.rel (0) target = $region17
  $region16: #{decoder_forward.5} parent=0 // pred_region
    _
  $region17: #{decoder_forward.5} parent=0 // pred_fallthru
    _
  // Predicated region
  $region18: #{decoder_forward.5} parent=0 // pred_check
    _
  $region19: #{decoder_forward.5} parent=0 // pred_check_branch
    %1185 = sbr.rel (0) target = $region21
  $region20: #{decoder_forward.5} parent=0 // pred_region
    _
  $region21: #{decoder_forward.5} parent=0 // pred_fallthru
    _

// kernel: decoder_forward.6
$region0: #{decoder_forward.6}
  #allocation0 [shape = 'u32[]', space=smem, size = 0x4, offset = 0x4, fixed_abs, tag = 'smem constant byte address 0x4 - core index']
  #allocation1 [shape = 'u32[72,128]{1,0:T(1,128)}', space=vmem, size = 0x9000, scoped, tag = 'internal scratch']
  %s0 = inlined_call_operand.vmem [shape: f32[64,466], index: 0, kind: input, shape index: {}]
  %s1 = inlined_call_operand.vmem [shape: f32[3,3,32,64], index: 1, kind: input, shape index: {}]
  %s2 = inlined_call_operand.vmem [shape: f32[32,1], index: 2, kind: input, shape index: {}]
  %s3 = inlined_call_operand.vmem [shape: f32[4,32,450], index: 3, kind: output, shape index: {}]
  %s4 = sld [smem:[#allocation0]]
  $region22: #{decoder_forward.6} parent=0
    _
  %s6 = ssub.s32 1, %s4
  %s7 = scalar_select 0, %s6, %s4
  // Predicated region
  $region2: #{decoder_forward.6} parent=0 // pred_check
    _
  $region3: #{decoder_forward.6} parent=0 // pred_check_branch
    %9 = sbr.rel (0) target = $region5
  $region4: #{decoder_forward.6} parent=0 // pred_region
    _
  $region5: #{decoder_forward.6} parent=0 // pred_fallthru
    _
  // Predicated region
  $region6: #{decoder_forward.6} parent=0 // pred_check
    _
  $region7: #{decoder_forward.6} parent=0 // pred_check_branch
    %11 = sbr.rel (0) target = $region9
  $region8: #{decoder_forward.6} parent=0 // pred_region
    _
  $region9: #{decoder_forward.6} parent=0 // pred_fallthru
    _
  // Predicated region
  $region10: #{decoder_forward.6} parent=0 // pred_check
    _
  $region11: #{decoder_forward.6} parent=0 // pred_check_branch
    %13 = sbr.rel (0) target = $region13
  $region12: #{decoder_forward.6} parent=0 // pred_region
    _
  $region13: #{decoder_forward.6} parent=0 // pred_fallthru
    _
  %v14 = vld [vmem:[%s2] sm:$0xff]
  %v15 = vld [vmem:[%s2 + $0x8] sm:$0xff]
  %v16 = vld [vmem:[%s2 + $0x10] sm:$0xff]
  %v17 = vld [vmem:[%s2 + $0x18] sm:$0xff]
  %s18 = scalar_lea.vmem %s1, 128
  %v19 = vld [vmem:[%s18] sm:$0xff]
  %v20 = vld [vmem:[%s18 + $0x8] sm:$0xff]
  %v21 = vld [vmem:[%s18 + $0x10] sm:$0xff]
  %v22 = vld [vmem:[%s18 + $0x18] sm:$0xff]
  %v23 = vld [vmem:[%s0] sm:$0xff]
  %v24 = vld [vmem:[%s0 + $0x8] sm:$0xff]
  %v25 = vld [vmem:[%s0 + $0x10] sm:$0xff]
  %v26 = vld [vmem:[%s0 + $0x18] sm:$0xff]
  %v27 = vld [vmem:[%s0 + $0x20] sm:$0xff]
  %v28 = vld [vmem:[%s0 + $0x28] sm:$0xff]
  %v29 = vld [vmem:[%s0 + $0x30] sm:$0xff]
  %v30 = vld [vmem:[%s0 + $0x38] sm:$0xff]
  %v31 = vld [vmem:[%s0 + $0x40] sm:$0xff]
  %v32 = vld [vmem:[%s0 + $0x48] sm:$0xff]
  %v33 = vld [vmem:[%s0 + $0x50] sm:$0xff]
  %v34 = vld [vmem:[%s0 + $0x58] sm:$0xff]
  %v35 = vld [vmem:[%s0 + $0x60] sm:$0xff]
  %v36 = vld [vmem:[%s0 + $0x68] sm:$0xff]
  %v37 = vld [vmem:[%s0 + $0x70] sm:$0xff]
  %v38 = vld [vmem:[%s0 + $0x78] sm:$0xff]
  %v39 = vld [vmem:[%s0 + $0x80] sm:$0xff]
  %v40 = vld [vmem:[%s0 + $0x88] sm:$0xff]
  %v41 = vld [vmem:[%s0 + $0x90] sm:$0xff]
  %v42 = vld [vmem:[%s0 + $0x98] sm:$0xff]
  %v43 = vld [vmem:[%s0 + $0xa0] sm:$0xff]
  %v44 = vld [vmem:[%s0 + $0xa8] sm:$0xff]
  %v45 = vld [vmem:[%s0 + $0xb0] sm:$0xff]
  %v46 = vld [vmem:[%s0 + $0xb8] sm:$0xff]
  %v47 = vld [vmem:[%s0 + $0xc0] sm:$0xff]
  %v48 = vld [vmem:[%s0 + $0xc8] sm:$0xff]
  %v49 = vld [vmem:[%s0 + $0xd0] sm:$0xff]
  %v50 = vld [vmem:[%s0 + $0xd8] sm:$0xff]
  %v51 = vld [vmem:[%s0 + $0xe0] sm:$0xff]
  %v52 = vld [vmem:[%s0 + $0xe8] sm:$0xff]
  %v53 = vld [vmem:[%s0 + $0xf0] sm:$0xff]
  %v54 = vld [vmem:[%s0 + $0xf8] sm:$0xff]
  %56 = vset.pattern.permute.xlu0 0
  %57 = vperm.xlu0 %56, %v14
  %v58 = vpop.permute.xlu0 %57
  %61 = vset.pattern.permute.xlu0 0
  %62 = vperm.xlu0 %61, %v15
  %v63 = vpop.permute.xlu0 %62
  %66 = vset.pattern.permute.xlu0 0
  %67 = vperm.xlu0 %66, %v16
  %v68 = vpop.permute.xlu0 %67
  %71 = vset.pattern.permute.xlu0 0
  %72 = vperm.xlu0 %71, %v17
  %v73 = vpop.permute.xlu0 %72
  %vm75 = vcmask 523264
  %v77 = vsel %vm75, %v19, 0
  %v80 = vsel %vm75, %v20, 0
  %v83 = vsel %vm75, %v21, 0
  %v86 = vsel %vm75, %v22, 0
  %88 = vmatpush.msra.mxu0 0.0
  %89 = vmatpush.msra.mxu0 0.0
  %90 = vmatpush.msra.mxu0 0.0
  %91 = vmatpush.msra.mxu0 0.0
  %92 = vmatpush.msra.mxu0 0.0
  %93 = vmatpush.msra.mxu0 0.0
  %94 = vmatpush.msra.mxu0 0.0
  %95 = vmatpush.msra.mxu0 0.0
  %96 = vmatpush.msra.mxu0 %v51
  %97 = vmatpush.msra.mxu0 %v47
  %98 = vmatpush.msra.mxu0 %v43
  %99 = vmatpush.msra.mxu0 %v39
  %100 = vmatpush.msra.mxu0 %v35
  %101 = vmatpush.msra.mxu0 %v31
  %102 = vmatpush.msra.mxu0 %v27
  %103 = vmatpush.msra.mxu0 %v23
  %104 = vmatmul.f32.gmra.mxu0 %v77
  %v105 = vpop.f32.mrf.mxu0
  %v106 = vadd.f32 %v58, %v105
  %107 = vmatmul.f32.gmra.mxu0 %v80
  %v108 = vpop.f32.mrf.mxu0
  %v109 = vadd.f32 %v63, %v108
  %110 = vmatmul.f32.gmra.mxu0 %v83
  %v111 = vpop.f32.mrf.mxu0
  %v112 = vadd.f32 %v68, %v111
  %113 = vmatmul.f32.gmra.mxu0 %v86
  %v114 = vpop.f32.mrf.mxu0
  %v115 = vadd.f32 %v73, %v114
  %116 = vdwg.mxu0
  %117 = vmatpush.msra.mxu0 0.0
  %118 = vmatpush.msra.mxu0 0.0
  %119 = vmatpush.msra.mxu0 0.0
  %120 = vmatpush.msra.mxu0 0.0
  %121 = vmatpush.msra.mxu0 0.0
  %122 = vmatpush.msra.mxu0 0.0
  %123 = vmatpush.msra.mxu0 0.0
  %124 = vmatpush.msra.mxu0 0.0
  %125 = vmatpush.msra.mxu0 %v52
  %126 = vmatpush.msra.mxu0 %v48
  %127 = vmatpush.msra.mxu0 %v44
  %128 = vmatpush.msra.mxu0 %v40
  %129 = vmatpush.msra.mxu0 %v36
  %130 = vmatpush.msra.mxu0 %v32
  %131 = vmatpush.msra.mxu0 %v28
  %132 = vmatpush.msra.mxu0 %v24
  %133 = vmatmul.f32.gmra.mxu0 %v77
  %v134 = vpop.f32.mrf.mxu0
  %v135 = vadd.f32 %v58, %v134
  %136 = vmatmul.f32.gmra.mxu0 %v80
  %v137 = vpop.f32.mrf.mxu0
  %v138 = vadd.f32 %v63, %v137
  %139 = vmatmul.f32.gmra.mxu0 %v83
  %v140 = vpop.f32.mrf.mxu0
  %v141 = vadd.f32 %v68, %v140
  %142 = vmatmul.f32.gmra.mxu0 %v86
  %v143 = vpop.f32.mrf.mxu0
  %v144 = vadd.f32 %v73, %v143
  %145 = vdwg.mxu0
  %146 = vmatpush.msra.mxu0 0.0
  %147 = vmatpush.msra.mxu0 0.0
  %148 = vmatpush.msra.mxu0 0.0
  %149 = vmatpush.msra.mxu0 0.0
  %150 = vmatpush.msra.mxu0 0.0
  %151 = vmatpush.msra.mxu0 0.0
  %152 = vmatpush.msra.mxu0 0.0
  %153 = vmatpush.msra.mxu0 0.0
  %154 = vmatpush.msra.mxu0 %v53
  %155 = vmatpush.msra.mxu0 %v49
  %156 = vmatpush.msra.mxu0 %v45
  %157 = vmatpush.msra.mxu0 %v41
  %158 = vmatpush.msra.mxu0 %v37
  %159 = vmatpush.msra.mxu0 %v33
  %160 = vmatpush.msra.mxu0 %v29
  %161 = vmatpush.msra.mxu0 %v25
  %162 = vmatmul.f32.gmra.mxu0 %v77
  %v163 = vpop.f32.mrf.mxu0
  %v164 = vadd.f32 %v58, %v163
  %165 = vmatmul.f32.gmra.mxu0 %v80
  %v166 = vpop.f32.mrf.mxu0
  %v167 = vadd.f32 %v63, %v166
  %168 = vmatmul.f32.gmra.mxu0 %v83
  %v169 = vpop.f32.mrf.mxu0
  %v170 = vadd.f32 %v68, %v169
  %171 = vmatmul.f32.gmra.mxu0 %v86
  %v172 = vpop.f32.mrf.mxu0
  %v173 = vadd.f32 %v73, %v172
  %174 = vdwg.mxu0
  %175 = vmatpush.msra.mxu0 0.0
  %176 = vmatpush.msra.mxu0 0.0
  %177 = vmatpush.msra.mxu0 0.0
  %178 = vmatpush.msra.mxu0 0.0
  %179 = vmatpush.msra.mxu0 0.0
  %180 = vmatpush.msra.mxu0 0.0
  %181 = vmatpush.msra.mxu0 0.0
  %182 = vmatpush.msra.mxu0 0.0
  %183 = vmatpush.msra.mxu0 %v54
  %184 = vmatpush.msra.mxu0 %v50
  %185 = vmatpush.msra.mxu0 %v46
  %186 = vmatpush.msra.mxu0 %v42
  %187 = vmatpush.msra.mxu0 %v38
  %188 = vmatpush.msra.mxu0 %v34
  %189 = vmatpush.msra.mxu0 %v30
  %190 = vmatpush.msra.mxu0 %v26
  %191 = vmatmul.f32.gmra.mxu0 %v77
  %v192 = vpop.f32.mrf.mxu0
  %v193 = vadd.f32 %v58, %v192
  %194 = vmatmul.f32.gmra.mxu0 %v80
  %v195 = vpop.f32.mrf.mxu0
  %v196 = vadd.f32 %v63, %v195
  %197 = vmatmul.f32.gmra.mxu0 %v83
  %v198 = vpop.f32.mrf.mxu0
  %v199 = vadd.f32 %v68, %v198
  %200 = vmatmul.f32.gmra.mxu0 %v86
  %v201 = vpop.f32.mrf.mxu0
  %v202 = vadd.f32 %v73, %v201
  %203 = vdwg.mxu0
  %v204 = vmax.f32 %v106, 0.0
  %v205 = vmax.f32 %v135, 0.0
  %v206 = vmax.f32 %v164, 0.0
  %v207 = vmax.f32 %v193, 0.0
  %v208 = vmax.f32 %v109, 0.0
  %v209 = vmax.f32 %v138, 0.0
  %v210 = vmax.f32 %v167, 0.0
  %v211 = vmax.f32 %v196, 0.0
  %v212 = vmax.f32 %v112, 0.0
  %v213 = vmax.f32 %v141, 0.0
  %v214 = vmax.f32 %v170, 0.0
  %v215 = vmax.f32 %v199, 0.0
  %v216 = vmax.f32 %v115, 0.0
  %v217 = vmax.f32 %v144, 0.0
  %v218 = vmax.f32 %v173, 0.0
  %v219 = vmax.f32 %v202, 0.0
  %220 = vst [vmem:[%s3] sm:$0xff] %v204
  %221 = vst [vmem:[%s3 + $0x8] sm:$0xff] %v205
  %222 = vst [vmem:[%s3 + $0x10] sm:$0xff] %v206
  %vm223 = vcmask 539648
  %224 = vst.msk [vmem:[%s3 + $0x18] sm:$0xff] %vm223, %v207
  %225 = vst [vmem:[%s3 + $0x20] sm:$0xff] %v208
  %226 = vst [vmem:[%s3 + $0x28] sm:$0xff] %v209
  %227 = vst [vmem:[%s3 + $0x30] sm:$0xff] %v210
  %228 = vst.msk [vmem:[%s3 + $0x38] sm:$0xff] %vm223, %v211
  %229 = vst [vmem:[%s3 + $0x40] sm:$0xff] %v212
  %230 = vst [vmem:[%s3 + $0x48] sm:$0xff] %v213
  %231 = vst [vmem:[%s3 + $0x50] sm:$0xff] %v214
  %232 = vst.msk [vmem:[%s3 + $0x58] sm:$0xff] %vm223, %v215
  %233 = vst [vmem:[%s3 + $0x60] sm:$0xff] %v216
  %234 = vst [vmem:[%s3 + $0x68] sm:$0xff] %v217
  %235 = vst [vmem:[%s3 + $0x70] sm:$0xff] %v218
  %236 = vst.msk [vmem:[%s3 + $0x78] sm:$0xff] %vm223, %v219
  %s237 = scalar_lea.vmem %s1, 160
  %v238 = vld [vmem:[%s237] sm:$0xff]
  %v239 = vld [vmem:[%s237 + $0x8] sm:$0xff]
  %v240 = vld [vmem:[%s237 + $0x10] sm:$0xff]
  %v241 = vld [vmem:[%s237 + $0x18] sm:$0xff]
  %v242 = vld [vmem:[%s0] sm:$0xff]
  %v243 = vld [vmem:[%s0 + $0x8] sm:$0xff]
  %v244 = vld [vmem:[%s0 + $0x10] sm:$0xff]
  %v245 = vld [vmem:[%s0 + $0x18] sm:$0xff]
  %v246 = vld [vmem:[%s0 + $0x20] sm:$0xff]
  %v247 = vld [vmem:[%s0 + $0x28] sm:$0xff]
  %v248 = vld [vmem:[%s0 + $0x30] sm:$0xff]
  %v249 = vld [vmem:[%s0 + $0x38] sm:$0xff]
  %v250 = vld [vmem:[%s0 + $0x40] sm:$0xff]
  %v251 = vld [vmem:[%s0 + $0x48] sm:$0xff]
  %v252 = vld [vmem:[%s0 + $0x50] sm:$0xff]
  %v253 = vld [vmem:[%s0 + $0x58] sm:$0xff]
  %v254 = vld [vmem:[%s0 + $0x60] sm:$0xff]
  %v255 = vld [vmem:[%s0 + $0x68] sm:$0xff]
  %v256 = vld [vmem:[%s0 + $0x70] sm:$0xff]
  %v257 = vld [vmem:[%s0 + $0x78] sm:$0xff]
  %v258 = vld [vmem:[%s0 + $0x80] sm:$0xff]
  %v259 = vld [vmem:[%s0 + $0x88] sm:$0xff]
  %v260 = vld [vmem:[%s0 + $0x90] sm:$0xff]
  %v261 = vld [vmem:[%s0 + $0x98] sm:$0xff]
  %v262 = vld [vmem:[%s0 + $0xa0] sm:$0xff]
  %v263 = vld [vmem:[%s0 + $0xa8] sm:$0xff]
  %v264 = vld [vmem:[%s0 + $0xb0] sm:$0xff]
  %v265 = vld [vmem:[%s0 + $0xb8] sm:$0xff]
  %v266 = vld [vmem:[%s0 + $0xc0] sm:$0xff]
  %v267 = vld [vmem:[%s0 + $0xc8] sm:$0xff]
  %v268 = vld [vmem:[%s0 + $0xd0] sm:$0xff]
  %v269 = vld [vmem:[%s0 + $0xd8] sm:$0xff]
  %v270 = vld [vmem:[%s0 + $0xe0] sm:$0xff]
  %v271 = vld [vmem:[%s0 + $0xe8] sm:$0xff]
  %v272 = vld [vmem:[%s0 + $0xf0] sm:$0xff]
  %v273 = vld [vmem:[%s0 + $0xf8] sm:$0xff]
  %s274 = scalar_lea.vmem %s1, 96
  %v275 = vld [vmem:[%s274] sm:$0xff]
  %v276 = vld [vmem:[%s274 + $0x8] sm:$0xff]
  %v277 = vld [vmem:[%s274 + $0x10] sm:$0xff]
  %v278 = vld [vmem:[%s274 + $0x18] sm:$0xff]
  %311 = vrot.lane.b32.xlu0 %v242, 127
  %v312 = vpop.permute.xlu0 %311
  %313 = vrot.lane.b32.xlu0 %v243, 127
  %v314 = vpop.permute.xlu0 %313
  %315 = vrot.lane.b32.xlu0 %v244, 127
  %v316 = vpop.permute.xlu0 %315
  %317 = vrot.lane.b32.xlu0 %v245, 127
  %v318 = vpop.permute.xlu0 %317
  %319 = vrot.lane.b32.xlu0 %v246, 127
  %v320 = vpop.permute.xlu0 %319
  %321 = vrot.lane.b32.xlu0 %v247, 127
  %v322 = vpop.permute.xlu0 %321
  %323 = vrot.lane.b32.xlu0 %v248, 127
  %v324 = vpop.permute.xlu0 %323
  %325 = vrot.lane.b32.xlu0 %v249, 127
  %v326 = vpop.permute.xlu0 %325
  %327 = vrot.lane.b32.xlu0 %v250, 127
  %v328 = vpop.permute.xlu0 %327
  %329 = vrot.lane.b32.xlu0 %v251, 127
  %v330 = vpop.permute.xlu0 %329
  %331 = vrot.lane.b32.xlu0 %v252, 127
  %v332 = vpop.permute.xlu0 %331
  %333 = vrot.lane.b32.xlu0 %v253, 127
  %v334 = vpop.permute.xlu0 %333
  %335 = vrot.lane.b32.xlu0 %v254, 127
  %v336 = vpop.permute.xlu0 %335
  %337 = vrot.lane.b32.xlu0 %v255, 127
  %v338 = vpop.permute.xlu0 %337
  %339 = vrot.lane.b32.xlu0 %v256, 127
  %v340 = vpop.permute.xlu0 %339
  %341 = vrot.lane.b32.xlu0 %v257, 127
  %v342 = vpop.permute.xlu0 %341
  %343 = vrot.lane.b32.xlu0 %v258, 127
  %v344 = vpop.permute.xlu0 %343
  %345 = vrot.lane.b32.xlu0 %v259, 127
  %v346 = vpop.permute.xlu0 %345
  %347 = vrot.lane.b32.xlu0 %v260, 127
  %v348 = vpop.permute.xlu0 %347
  %349 = vrot.lane.b32.xlu0 %v261, 127
  %v350 = vpop.permute.xlu0 %349
  %351 = vrot.lane.b32.xlu0 %v262, 127
  %v352 = vpop.permute.xlu0 %351
  %353 = vrot.lane.b32.xlu0 %v263, 127
  %v354 = vpop.permute.xlu0 %353
  %355 = vrot.lane.b32.xlu0 %v264, 127
  %v356 = vpop.permute.xlu0 %355
  %357 = vrot.lane.b32.xlu0 %v265, 127
  %v358 = vpop.permute.xlu0 %357
  %359 = vrot.lane.b32.xlu0 %v266, 127
  %v360 = vpop.permute.xlu0 %359
  %361 = vrot.lane.b32.xlu0 %v267, 127
  %v362 = vpop.permute.xlu0 %361
  %363 = vrot.lane.b32.xlu0 %v268, 127
  %v364 = vpop.permute.xlu0 %363
  %365 = vrot.lane.b32.xlu0 %v269, 127
  %v366 = vpop.permute.xlu0 %365
  %367 = vrot.lane.b32.xlu0 %v270, 127
  %v368 = vpop.permute.xlu0 %367
  %369 = vrot.lane.b32.xlu0 %v271, 127
  %v370 = vpop.permute.xlu0 %369
  %371 = vrot.lane.b32.xlu0 %v272, 127
  %v372 = vpop.permute.xlu0 %371
  %373 = vrot.lane.b32.xlu0 %v273, 127
  %v374 = vpop.permute.xlu0 %373
  %vm375 = vcmask 1039360
  %v376 = vsel %vm375, %v312, %v314
  %v377 = vsel %vm375, %v314, %v316
  %v378 = vsel %vm375, %v316, %v318
  %v379 = vsel %vm375, %v320, %v322
  %v380 = vsel %vm375, %v322, %v324
  %v381 = vsel %vm375, %v324, %v326
  %v382 = vsel %vm375, %v328, %v330
  %v383 = vsel %vm375, %v330, %v332
  %v384 = vsel %vm375, %v332, %v334
  %v385 = vsel %vm375, %v336, %v338
  %v386 = vsel %vm375, %v338, %v340
  %v387 = vsel %vm375, %v340, %v342
  %v388 = vsel %vm375, %v344, %v346
  %v389 = vsel %vm375, %v346, %v348
  %v390 = vsel %vm375, %v348, %v350
  %v391 = vsel %vm375, %v352, %v354
  %v392 = vsel %vm375, %v354, %v356
  %v393 = vsel %vm375, %v356, %v358
  %v394 = vsel %vm375, %v360, %v362
  %v395 = vsel %vm375, %v362, %v364
  %v396 = vsel %vm375, %v364, %v366
  %v397 = vsel %vm375, %v368, %v370
  %v398 = vsel %vm375, %v370, %v372
  %v399 = vsel %vm375, %v372, %v374
  %v433 = vsel %vm75, %v275, 0
  %v436 = vsel %vm75, %v276, 0
  %v439 = vsel %vm75, %v277, 0
  %v442 = vsel %vm75, %v278, 0
  %444 = vmatpush.msra.mxu0 0.0
  %445 = vmatpush.msra.mxu0 0.0
  %446 = vmatpush.msra.mxu0 0.0
  %447 = vmatpush.msra.mxu0 0.0
  %448 = vmatpush.msra.mxu0 0.0
  %449 = vmatpush.msra.mxu0 0.0
  %450 = vmatpush.msra.mxu0 0.0
  %451 = vmatpush.msra.mxu0 0.0
  %452 = vmatpush.msra.mxu0 %v397
  %453 = vmatpush.msra.mxu0 %v394
  %454 = vmatpush.msra.mxu0 %v391
  %455 = vmatpush.msra.mxu0 %v388
  %456 = vmatpush.msra.mxu0 %v385
  %457 = vmatpush.msra.mxu0 %v382
  %458 = vmatpush.msra.mxu0 %v379
  %459 = vmatpush.msra.mxu0 %v376
  %460 = vmatmul.f32.gmra.mxu0 %v433
  %v461 = vpop.f32.mrf.mxu0
  %v462 = vadd.f32 0.0, %v461
  %463 = vmatmul.f32.gmra.mxu0 %v436
  %v464 = vpop.f32.mrf.mxu0
  %v465 = vadd.f32 0.0, %v464
  %466 = vmatmul.f32.gmra.mxu0 %v439
  %v467 = vpop.f32.mrf.mxu0
  %v468 = vadd.f32 0.0, %v467
  %469 = vmatmul.f32.gmra.mxu0 %v442
  %v470 = vpop.f32.mrf.mxu0
  %v471 = vadd.f32 0.0, %v470
  %472 = vdwg.mxu0
  %473 = vmatpush.msra.mxu0 0.0
  %474 = vmatpush.msra.mxu0 0.0
  %475 = vmatpush.msra.mxu0 0.0
  %476 = vmatpush.msra.mxu0 0.0
  %477 = vmatpush.msra.mxu0 0.0
  %478 = vmatpush.msra.mxu0 0.0
  %479 = vmatpush.msra.mxu0 0.0
  %480 = vmatpush.msra.mxu0 0.0
  %481 = vmatpush.msra.mxu0 %v398
  %482 = vmatpush.msra.mxu0 %v395
  %483 = vmatpush.msra.mxu0 %v392
  %484 = vmatpush.msra.mxu0 %v389
  %485 = vmatpush.msra.mxu0 %v386
  %486 = vmatpush.msra.mxu0 %v383
  %487 = vmatpush.msra.mxu0 %v380
  %488 = vmatpush.msra.mxu0 %v377
  %489 = vmatmul.f32.gmra.mxu0 %v433
  %v490 = vpop.f32.mrf.mxu0
  %v491 = vadd.f32 0.0, %v490
  %492 = vmatmul.f32.gmra.mxu0 %v436
  %v493 = vpop.f32.mrf.mxu0
  %v494 = vadd.f32 0.0, %v493
  %495 = vmatmul.f32.gmra.mxu0 %v439
  %v496 = vpop.f32.mrf.mxu0
  %v497 = vadd.f32 0.0, %v496
  %498 = vmatmul.f32.gmra.mxu0 %v442
  %v499 = vpop.f32.mrf.mxu0
  %v500 = vadd.f32 0.0, %v499
  %501 = vdwg.mxu0
  %502 = vmatpush.msra.mxu0 0.0
  %503 = vmatpush.msra.mxu0 0.0
  %504 = vmatpush.msra.mxu0 0.0
  %505 = vmatpush.msra.mxu0 0.0
  %506 = vmatpush.msra.mxu0 0.0
  %507 = vmatpush.msra.mxu0 0.0
  %508 = vmatpush.msra.mxu0 0.0
  %509 = vmatpush.msra.mxu0 0.0
  %510 = vmatpush.msra.mxu0 %v399
  %511 = vmatpush.msra.mxu0 %v396
  %512 = vmatpush.msra.mxu0 %v393
  %513 = vmatpush.msra.mxu0 %v390
  %514 = vmatpush.msra.mxu0 %v387
  %515 = vmatpush.msra.mxu0 %v384
  %516 = vmatpush.msra.mxu0 %v381
  %517 = vmatpush.msra.mxu0 %v378
  %518 = vmatmul.f32.gmra.mxu0 %v433
  %v519 = vpop.f32.mrf.mxu0
  %v520 = vadd.f32 0.0, %v519
  %521 = vmatmul.f32.gmra.mxu0 %v436
  %v522 = vpop.f32.mrf.mxu0
  %v523 = vadd.f32 0.0, %v522
  %524 = vmatmul.f32.gmra.mxu0 %v439
  %v525 = vpop.f32.mrf.mxu0
  %v526 = vadd.f32 0.0, %v525
  %527 = vmatmul.f32.gmra.mxu0 %v442
  %v528 = vpop.f32.mrf.mxu0
  %v529 = vadd.f32 0.0, %v528
  %530 = vdwg.mxu0
  %531 = vmatpush.msra.mxu0 0.0
  %532 = vmatpush.msra.mxu0 0.0
  %533 = vmatpush.msra.mxu0 0.0
  %534 = vmatpush.msra.mxu0 0.0
  %535 = vmatpush.msra.mxu0 0.0
  %536 = vmatpush.msra.mxu0 0.0
  %537 = vmatpush.msra.mxu0 0.0
  %538 = vmatpush.msra.mxu0 0.0
  %539 = vmatpush.msra.mxu0 %v374
  %540 = vmatpush.msra.mxu0 %v366
  %541 = vmatpush.msra.mxu0 %v358
  %542 = vmatpush.msra.mxu0 %v350
  %543 = vmatpush.msra.mxu0 %v342
  %544 = vmatpush.msra.mxu0 %v334
  %545 = vmatpush.msra.mxu0 %v326
  %546 = vmatpush.msra.mxu0 %v318
  %547 = vmatmul.f32.gmra.mxu0 %v433
  %v548 = vpop.f32.mrf.mxu0
  %v549 = vadd.f32 0.0, %v548
  %550 = vmatmul.f32.gmra.mxu0 %v436
  %v551 = vpop.f32.mrf.mxu0
  %v552 = vadd.f32 0.0, %v551
  %553 = vmatmul.f32.gmra.mxu0 %v439
  %v554 = vpop.f32.mrf.mxu0
  %v555 = vadd.f32 0.0, %v554
  %556 = vmatmul.f32.gmra.mxu0 %v442
  %v557 = vpop.f32.mrf.mxu0
  %v558 = vadd.f32 0.0, %v557
  %559 = vdwg.mxu0
  %v561 = vsel %vm75, %v238, 0
  %v564 = vsel %vm75, %v239, 0
  %v567 = vsel %vm75, %v240, 0
  %v570 = vsel %vm75, %v241, 0
  %572 = vmatpush.msra.mxu0 0.0
  %573 = vmatpush.msra.mxu0 0.0
  %574 = vmatpush.msra.mxu0 0.0
  %575 = vmatpush.msra.mxu0 0.0
  %576 = vmatpush.msra.mxu0 0.0
  %577 = vmatpush.msra.mxu0 0.0
  %578 = vmatpush.msra.mxu0 0.0
  %579 = vmatpush.msra.mxu0 0.0
  %580 = vmatpush.msra.mxu0 %v270
  %581 = vmatpush.msra.mxu0 %v266
  %582 = vmatpush.msra.mxu0 %v262
  %583 = vmatpush.msra.mxu0 %v258
  %584 = vmatpush.msra.mxu0 %v254
  %585 = vmatpush.msra.mxu0 %v250
  %586 = vmatpush.msra.mxu0 %v246
  %587 = vmatpush.msra.mxu0 %v242
  %588 = vmatmul.f32.gmra.mxu0 %v561
  %v589 = vpop.f32.mrf.mxu0
  %v590 = vadd.f32 %v462, %v589
  %591 = vmatmul.f32.gmra.mxu0 %v564
  %v592 = vpop.f32.mrf.mxu0
  %v593 = vadd.f32 %v465, %v592
  %594 = vmatmul.f32.gmra.mxu0 %v567
  %v595 = vpop.f32.mrf.mxu0
  %v596 = vadd.f32 %v468, %v595
  %597 = vmatmul.f32.gmra.mxu0 %v570
  %v598 = vpop.f32.mrf.mxu0
  %v599 = vadd.f32 %v471, %v598
  %600 = vdwg.mxu0
  %601 = vmatpush.msra.mxu0 0.0
  %602 = vmatpush.msra.mxu0 0.0
  %603 = vmatpush.msra.mxu0 0.0
  %604 = vmatpush.msra.mxu0 0.0
  %605 = vmatpush.msra.mxu0 0.0
  %606 = vmatpush.msra.mxu0 0.0
  %607 = vmatpush.msra.mxu0 0.0
  %608 = vmatpush.msra.mxu0 0.0
  %609 = vmatpush.msra.mxu0 %v271
  %610 = vmatpush.msra.mxu0 %v267
  %611 = vmatpush.msra.mxu0 %v263
  %612 = vmatpush.msra.mxu0 %v259
  %613 = vmatpush.msra.mxu0 %v255
  %614 = vmatpush.msra.mxu0 %v251
  %615 = vmatpush.msra.mxu0 %v247
  %616 = vmatpush.msra.mxu0 %v243
  %617 = vmatmul.f32.gmra.mxu0 %v561
  %v618 = vpop.f32.mrf.mxu0
  %v619 = vadd.f32 %v491, %v618
  %620 = vmatmul.f32.gmra.mxu0 %v564
  %v621 = vpop.f32.mrf.mxu0
  %v622 = vadd.f32 %v494, %v621
  %623 = vmatmul.f32.gmra.mxu0 %v567
  %v624 = vpop.f32.mrf.mxu0
  %v625 = vadd.f32 %v497, %v624
  %626 = vmatmul.f32.gmra.mxu0 %v570
  %v627 = vpop.f32.mrf.mxu0
  %v628 = vadd.f32 %v500, %v627
  %629 = vdwg.mxu0
  %630 = vmatpush.msra.mxu0 0.0
  %631 = vmatpush.msra.mxu0 0.0
  %632 = vmatpush.msra.mxu0 0.0
  %633 = vmatpush.msra.mxu0 0.0
  %634 = vmatpush.msra.mxu0 0.0
  %635 = vmatpush.msra.mxu0 0.0
  %636 = vmatpush.msra.mxu0 0.0
  %637 = vmatpush.msra.mxu0 0.0
  %638 = vmatpush.msra.mxu0 %v272
  %639 = vmatpush.msra.mxu0 %v268
  %640 = vmatpush.msra.mxu0 %v264
  %641 = vmatpush.msra.mxu0 %v260
  %642 = vmatpush.msra.mxu0 %v256
  %643 = vmatpush.msra.mxu0 %v252
  %644 = vmatpush.msra.mxu0 %v248
  %645 = vmatpush.msra.mxu0 %v244
  %646 = vmatmul.f32.gmra.mxu0 %v561
  %v647 = vpop.f32.mrf.mxu0
  %v648 = vadd.f32 %v520, %v647
  %649 = vmatmul.f32.gmra.mxu0 %v564
  %v650 = vpop.f32.mrf.mxu0
  %v651 = vadd.f32 %v523, %v650
  %652 = vmatmul.f32.gmra.mxu0 %v567
  %v653 = vpop.f32.mrf.mxu0
  %v654 = vadd.f32 %v526, %v653
  %655 = vmatmul.f32.gmra.mxu0 %v570
  %v656 = vpop.f32.mrf.mxu0
  %v657 = vadd.f32 %v529, %v656
  %658 = vdwg.mxu0
  %659 = vmatpush.msra.mxu0 0.0
  %660 = vmatpush.msra.mxu0 0.0
  %661 = vmatpush.msra.mxu0 0.0
  %662 = vmatpush.msra.mxu0 0.0
  %663 = vmatpush.msra.mxu0 0.0
  %664 = vmatpush.msra.mxu0 0.0
  %665 = vmatpush.msra.mxu0 0.0
  %666 = vmatpush.msra.mxu0 0.0
  %667 = vmatpush.msra.mxu0 %v273
  %668 = vmatpush.msra.mxu0 %v269
  %669 = vmatpush.msra.mxu0 %v265
  %670 = vmatpush.msra.mxu0 %v261
  %671 = vmatpush.msra.mxu0 %v257
  %672 = vmatpush.msra.mxu0 %v253
  %673 = vmatpush.msra.mxu0 %v249
  %674 = vmatpush.msra.mxu0 %v245
  %675 = vmatmul.f32.gmra.mxu0 %v561
  %v676 = vpop.f32.mrf.mxu0
  %v677 = vadd.f32 %v549, %v676
  %678 = vmatmul.f32.gmra.mxu0 %v564
  %v679 = vpop.f32.mrf.mxu0
  %v680 = vadd.f32 %v552, %v679
  %681 = vmatmul.f32.gmra.mxu0 %v567
  %v682 = vpop.f32.mrf.mxu0
  %v683 = vadd.f32 %v555, %v682
  %684 = vmatmul.f32.gmra.mxu0 %v570
  %v685 = vpop.f32.mrf.mxu0
  %v686 = vadd.f32 %v558, %v685
  %687 = vdwg.mxu0
  %v688 = vadd.f32 %v590, %v58
  %v689 = vadd.f32 %v619, %v58
  %v690 = vadd.f32 %v648, %v58
  %v691 = vadd.f32 %v677, %v58
  %v692 = vadd.f32 %v593, %v63
  %v693 = vadd.f32 %v622, %v63
  %v694 = vadd.f32 %v651, %v63
  %v695 = vadd.f32 %v680, %v63
  %v696 = vadd.f32 %v596, %v68
  %v697 = vadd.f32 %v625, %v68
  %v698 = vadd.f32 %v654, %v68
  %v699 = vadd.f32 %v683, %v68
  %v700 = vadd.f32 %v599, %v73
  %v701 = vadd.f32 %v628, %v73
  %v702 = vadd.f32 %v657, %v73
  %v703 = vadd.f32 %v686, %v73
  %v704 = vmax.f32 %v688, 0.0
  %v705 = vmax.f32 %v689, 0.0
  %v706 = vmax.f32 %v690, 0.0
  %v707 = vmax.f32 %v691, 0.0
  %v708 = vmax.f32 %v692, 0.0
  %v709 = vmax.f32 %v693, 0.0
  %v710 = vmax.f32 %v694, 0.0
  %v711 = vmax.f32 %v695, 0.0
  %v712 = vmax.f32 %v696, 0.0
  %v713 = vmax.f32 %v697, 0.0
  %v714 = vmax.f32 %v698, 0.0
  %v715 = vmax.f32 %v699, 0.0
  %v716 = vmax.f32 %v700, 0.0
  %v717 = vmax.f32 %v701, 0.0
  %v718 = vmax.f32 %v702, 0.0
  %v719 = vmax.f32 %v703, 0.0
  %s720 = scalar_lea.vmem %s3, 128
  %721 = vst [vmem:[%s720] sm:$0xff] %v704
  %722 = vst [vmem:[%s720 + $0x8] sm:$0xff] %v705
  %723 = vst [vmem:[%s720 + $0x10] sm:$0xff] %v706
  %724 = vst.msk [vmem:[%s720 + $0x18] sm:$0xff] %vm223, %v707
  %725 = vst [vmem:[%s720 + $0x20] sm:$0xff] %v708
  %726 = vst [vmem:[%s720 + $0x28] sm:$0xff] %v709
  %727 = vst [vmem:[%s720 + $0x30] sm:$0xff] %v710
  %728 = vst.msk [vmem:[%s720 + $0x38] sm:$0xff] %vm223, %v711
  %729 = vst [vmem:[%s720 + $0x40] sm:$0xff] %v712
  %730 = vst [vmem:[%s720 + $0x48] sm:$0xff] %v713
  %731 = vst [vmem:[%s720 + $0x50] sm:$0xff] %v714
  %732 = vst.msk [vmem:[%s720 + $0x58] sm:$0xff] %vm223, %v715
  %733 = vst [vmem:[%s720 + $0x60] sm:$0xff] %v716
  %734 = vst [vmem:[%s720 + $0x68] sm:$0xff] %v717
  %735 = vst [vmem:[%s720 + $0x70] sm:$0xff] %v718
  %736 = vst.msk [vmem:[%s720 + $0x78] sm:$0xff] %vm223, %v719
  %s737 = scalar_lea.vmem %s1, 224
  %v738 = vld [vmem:[%s737] sm:$0xff]
  %v739 = vld [vmem:[%s737 + $0x8] sm:$0xff]
  %v740 = vld [vmem:[%s737 + $0x10] sm:$0xff]
  %v741 = vld [vmem:[%s737 + $0x18] sm:$0xff]
  %v742 = vld [vmem:[%s0] sm:$0xff]
  %v743 = vld [vmem:[%s0 + $0x8] sm:$0xff]
  %v744 = vld [vmem:[%s0 + $0x10] sm:$0xff]
  %v745 = vld [vmem:[%s0 + $0x18] sm:$0xff]
  %v746 = vld [vmem:[%s0 + $0x20] sm:$0xff]
  %v747 = vld [vmem:[%s0 + $0x28] sm:$0xff]
  %v748 = vld [vmem:[%s0 + $0x30] sm:$0xff]
  %v749 = vld [vmem:[%s0 + $0x38] sm:$0xff]
  %v750 = vld [vmem:[%s0 + $0x40] sm:$0xff]
  %v751 = vld [vmem:[%s0 + $0x48] sm:$0xff]
  %v752 = vld [vmem:[%s0 + $0x50] sm:$0xff]
  %v753 = vld [vmem:[%s0 + $0x58] sm:$0xff]
  %v754 = vld [vmem:[%s0 + $0x60] sm:$0xff]
  %v755 = vld [vmem:[%s0 + $0x68] sm:$0xff]
  %v756 = vld [vmem:[%s0 + $0x70] sm:$0xff]
  %v757 = vld [vmem:[%s0 + $0x78] sm:$0xff]
  %v758 = vld [vmem:[%s0 + $0x80] sm:$0xff]
  %v759 = vld [vmem:[%s0 + $0x88] sm:$0xff]
  %v760 = vld [vmem:[%s0 + $0x90] sm:$0xff]
  %v761 = vld [vmem:[%s0 + $0x98] sm:$0xff]
  %v762 = vld [vmem:[%s0 + $0xa0] sm:$0xff]
  %v763 = vld [vmem:[%s0 + $0xa8] sm:$0xff]
  %v764 = vld [vmem:[%s0 + $0xb0] sm:$0xff]
  %v765 = vld [vmem:[%s0 + $0xb8] sm:$0xff]
  %v766 = vld [vmem:[%s0 + $0xc0] sm:$0xff]
  %v767 = vld [vmem:[%s0 + $0xc8] sm:$0xff]
  %v768 = vld [vmem:[%s0 + $0xd0] sm:$0xff]
  %v769 = vld [vmem:[%s0 + $0xd8] sm:$0xff]
  %v770 = vld [vmem:[%s0 + $0xe0] sm:$0xff]
  %v771 = vld [vmem:[%s0 + $0xe8] sm:$0xff]
  %v772 = vld [vmem:[%s0 + $0xf0] sm:$0xff]
  %v773 = vld [vmem:[%s0 + $0xf8] sm:$0xff]
  %s774 = scalar_lea.vmem %s1, 32
  %v775 = vld [vmem:[%s774] sm:$0xff]
  %v776 = vld [vmem:[%s774 + $0x8] sm:$0xff]
  %v777 = vld [vmem:[%s774 + $0x10] sm:$0xff]
  %v778 = vld [vmem:[%s774 + $0x18] sm:$0xff]
  %811 = vrot.lane.b32.xlu0 %v742, 113
  %v812 = vpop.permute.xlu0 %811
  %813 = vrot.lane.b32.xlu0 %v743, 113
  %v814 = vpop.permute.xlu0 %813
  %815 = vrot.lane.b32.xlu0 %v744, 113
  %v816 = vpop.permute.xlu0 %815
  %817 = vrot.lane.b32.xlu0 %v745, 113
  %v818 = vpop.permute.xlu0 %817
  %819 = vrot.lane.b32.xlu0 %v746, 113
  %v820 = vpop.permute.xlu0 %819
  %821 = vrot.lane.b32.xlu0 %v747, 113
  %v822 = vpop.permute.xlu0 %821
  %823 = vrot.lane.b32.xlu0 %v748, 113
  %v824 = vpop.permute.xlu0 %823
  %825 = vrot.lane.b32.xlu0 %v749, 113
  %v826 = vpop.permute.xlu0 %825
  %827 = vrot.lane.b32.xlu0 %v750, 113
  %v828 = vpop.permute.xlu0 %827
  %829 = vrot.lane.b32.xlu0 %v751, 113
  %v830 = vpop.permute.xlu0 %829
  %831 = vrot.lane.b32.xlu0 %v752, 113
  %v832 = vpop.permute.xlu0 %831
  %833 = vrot.lane.b32.xlu0 %v753, 113
  %v834 = vpop.permute.xlu0 %833
  %835 = vrot.lane.b32.xlu0 %v754, 113
  %v836 = vpop.permute.xlu0 %835
  %837 = vrot.lane.b32.xlu0 %v755, 113
  %v838 = vpop.permute.xlu0 %837
  %839 = vrot.lane.b32.xlu0 %v756, 113
  %v840 = vpop.permute.xlu0 %839
  %841 = vrot.lane.b32.xlu0 %v757, 113
  %v842 = vpop.permute.xlu0 %841
  %843 = vrot.lane.b32.xlu0 %v758, 113
  %v844 = vpop.permute.xlu0 %843
  %845 = vrot.lane.b32.xlu0 %v759, 113
  %v846 = vpop.permute.xlu0 %845
  %847 = vrot.lane.b32.xlu0 %v760, 113
  %v848 = vpop.permute.xlu0 %847
  %849 = vrot.lane.b32.xlu0 %v761, 113
  %v850 = vpop.permute.xlu0 %849
  %851 = vrot.lane.b32.xlu0 %v762, 113
  %v852 = vpop.permute.xlu0 %851
  %853 = vrot.lane.b32.xlu0 %v763, 113
  %v854 = vpop.permute.xlu0 %853
  %855 = vrot.lane.b32.xlu0 %v764, 113
  %v856 = vpop.permute.xlu0 %855
  %857 = vrot.lane.b32.xlu0 %v765, 113
  %v858 = vpop.permute.xlu0 %857
  %859 = vrot.lane.b32.xlu0 %v766, 113
  %v860 = vpop.permute.xlu0 %859
  %861 = vrot.lane.b32.xlu0 %v767, 113
  %v862 = vpop.permute.xlu0 %861
  %863 = vrot.lane.b32.xlu0 %v768, 113
  %v864 = vpop.permute.xlu0 %863
  %865 = vrot.lane.b32.xlu0 %v769, 113
  %v866 = vpop.permute.xlu0 %865
  %867 = vrot.lane.b32.xlu0 %v770, 113
  %v868 = vpop.permute.xlu0 %867
  %869 = vrot.lane.b32.xlu0 %v771, 113
  %v870 = vpop.permute.xlu0 %869
  %871 = vrot.lane.b32.xlu0 %v772, 113
  %v872 = vpop.permute.xlu0 %871
  %873 = vrot.lane.b32.xlu0 %v773, 113
  %v874 = vpop.permute.xlu0 %873
  %vm875 = vcmask 924672
  %v876 = vsel %vm875, %v812, %v814
  %v877 = vsel %vm875, %v814, %v816
  %v878 = vsel %vm875, %v816, %v818
  %v879 = vsel %vm875, %v820, %v822
  %v880 = vsel %vm875, %v822, %v824
  %v881 = vsel %vm875, %v824, %v826
  %v882 = vsel %vm875, %v828, %v830
  %v883 = vsel %vm875, %v830, %v832
  %v884 = vsel %vm875, %v832, %v834
  %v885 = vsel %vm875, %v836, %v838
  %v886 = vsel %vm875, %v838, %v840
  %v887 = vsel %vm875, %v840, %v842
  %v888 = vsel %vm875, %v844, %v846
  %v889 = vsel %vm875, %v846, %v848
  %v890 = vsel %vm875, %v848, %v850
  %v891 = vsel %vm875, %v852, %v854
  %v892 = vsel %vm875, %v854, %v856
  %v893 = vsel %vm875, %v856, %v858
  %v894 = vsel %vm875, %v860, %v862
  %v895 = vsel %vm875, %v862, %v864
  %v896 = vsel %vm875, %v864, %v866
  %v897 = vsel %vm875, %v868, %v870
  %v898 = vsel %vm875, %v870, %v872
  %v899 = vsel %vm875, %v872, %v874
  %v933 = vsel %vm75, %v775, 0
  %v936 = vsel %vm75, %v776, 0
  %v939 = vsel %vm75, %v777, 0
  %v942 = vsel %vm75, %v778, 0
  %944 = vmatpush.msra.mxu0 0.0
  %945 = vmatpush.msra.mxu0 0.0
  %946 = vmatpush.msra.mxu0 0.0
  %947 = vmatpush.msra.mxu0 0.0
  %948 = vmatpush.msra.mxu0 0.0
  %949 = vmatpush.msra.mxu0 0.0
  %950 = vmatpush.msra.mxu0 0.0
  %951 = vmatpush.msra.mxu0 0.0
  %952 = vmatpush.msra.mxu0 %v897
  %953 = vmatpush.msra.mxu0 %v894
  %954 = vmatpush.msra.mxu0 %v891
  %955 = vmatpush.msra.mxu0 %v888
  %956 = vmatpush.msra.mxu0 %v885
  %957 = vmatpush.msra.mxu0 %v882
  %958 = vmatpush.msra.mxu0 %v879
  %959 = vmatpush.msra.mxu0 %v876
  %960 = vmatmul.f32.gmra.mxu0 %v933
  %v961 = vpop.f32.mrf.mxu0
  %v962 = vadd.f32 0.0, %v961
  %963 = vmatmul.f32.gmra.mxu0 %v936
  %v964 = vpop.f32.mrf.mxu0
  %v965 = vadd.f32 0.0, %v964
  %966 = vmatmul.f32.gmra.mxu0 %v939
  %v967 = vpop.f32.mrf.mxu0
  %v968 = vadd.f32 0.0, %v967
  %969 = vmatmul.f32.gmra.mxu0 %v942
  %v970 = vpop.f32.mrf.mxu0
  %v971 = vadd.f32 0.0, %v970
  %972 = vdwg.mxu0
  %973 = vmatpush.msra.mxu0 0.0
  %974 = vmatpush.msra.mxu0 0.0
  %975 = vmatpush.msra.mxu0 0.0
  %976 = vmatpush.msra.mxu0 0.0
  %977 = vmatpush.msra.mxu0 0.0
  %978 = vmatpush.msra.mxu0 0.0
  %979 = vmatpush.msra.mxu0 0.0
  %980 = vmatpush.msra.mxu0 0.0
  %981 = vmatpush.msra.mxu0 %v898
  %982 = vmatpush.msra.mxu0 %v895
  %983 = vmatpush.msra.mxu0 %v892
  %984 = vmatpush.msra.mxu0 %v889
  %985 = vmatpush.msra.mxu0 %v886
  %986 = vmatpush.msra.mxu0 %v883
  %987 = vmatpush.msra.mxu0 %v880
  %988 = vmatpush.msra.mxu0 %v877
  %989 = vmatmul.f32.gmra.mxu0 %v933
  %v990 = vpop.f32.mrf.mxu0
  %v991 = vadd.f32 0.0, %v990
  %992 = vmatmul.f32.gmra.mxu0 %v936
  %v993 = vpop.f32.mrf.mxu0
  %v994 = vadd.f32 0.0, %v993
  %995 = vmatmul.f32.gmra.mxu0 %v939
  %v996 = vpop.f32.mrf.mxu0
  %v997 = vadd.f32 0.0, %v996
  %998 = vmatmul.f32.gmra.mxu0 %v942
  %v999 = vpop.f32.mrf.mxu0
  %v1000 = vadd.f32 0.0, %v999
  %1001 = vdwg.mxu0
  %1002 = vmatpush.msra.mxu0 0.0
  %1003 = vmatpush.msra.mxu0 0.0
  %1004 = vmatpush.msra.mxu0 0.0
  %1005 = vmatpush.msra.mxu0 0.0
  %1006 = vmatpush.msra.mxu0 0.0
  %1007 = vmatpush.msra.mxu0 0.0
  %1008 = vmatpush.msra.mxu0 0.0
  %1009 = vmatpush.msra.mxu0 0.0
  %1010 = vmatpush.msra.mxu0 %v899
  %1011 = vmatpush.msra.mxu0 %v896
  %1012 = vmatpush.msra.mxu0 %v893
  %1013 = vmatpush.msra.mxu0 %v890
  %1014 = vmatpush.msra.mxu0 %v887
  %1015 = vmatpush.msra.mxu0 %v884
  %1016 = vmatpush.msra.mxu0 %v881
  %1017 = vmatpush.msra.mxu0 %v878
  %1018 = vmatmul.f32.gmra.mxu0 %v933
  %v1019 = vpop.f32.mrf.mxu0
  %v1020 = vadd.f32 0.0, %v1019
  %1021 = vmatmul.f32.gmra.mxu0 %v936
  %v1022 = vpop.f32.mrf.mxu0
  %v1023 = vadd.f32 0.0, %v1022
  %1024 = vmatmul.f32.gmra.mxu0 %v939
  %v1025 = vpop.f32.mrf.mxu0
  %v1026 = vadd.f32 0.0, %v1025
  %1027 = vmatmul.f32.gmra.mxu0 %v942
  %v1028 = vpop.f32.mrf.mxu0
  %v1029 = vadd.f32 0.0, %v1028
  %1030 = vdwg.mxu0
  %1031 = vmatpush.msra.mxu0 0.0
  %1032 = vmatpush.msra.mxu0 0.0
  %1033 = vmatpush.msra.mxu0 0.0
  %1034 = vmatpush.msra.mxu0 0.0
  %1035 = vmatpush.msra.mxu0 0.0
  %1036 = vmatpush.msra.mxu0 0.0
  %1037 = vmatpush.msra.mxu0 0.0
  %1038 = vmatpush.msra.mxu0 0.0
  %1039 = vmatpush.msra.mxu0 %v874
  %1040 = vmatpush.msra.mxu0 %v866
  %1041 = vmatpush.msra.mxu0 %v858
  %1042 = vmatpush.msra.mxu0 %v850
  %1043 = vmatpush.msra.mxu0 %v842
  %1044 = vmatpush.msra.mxu0 %v834
  %1045 = vmatpush.msra.mxu0 %v826
  %1046 = vmatpush.msra.mxu0 %v818
  %1047 = vmatmul.f32.gmra.mxu0 %v933
  %v1048 = vpop.f32.mrf.mxu0
  %v1049 = vadd.f32 0.0, %v1048
  %1050 = vmatmul.f32.gmra.mxu0 %v936
  %v1051 = vpop.f32.mrf.mxu0
  %v1052 = vadd.f32 0.0, %v1051
  %1053 = vmatmul.f32.gmra.mxu0 %v939
  %v1054 = vpop.f32.mrf.mxu0
  %v1055 = vadd.f32 0.0, %v1054
  %1056 = vmatmul.f32.gmra.mxu0 %v942
  %v1057 = vpop.f32.mrf.mxu0
  %v1058 = vadd.f32 0.0, %v1057
  %1059 = vdwg.mxu0
  %v1061 = vsel %vm75, %v738, 0
  %v1064 = vsel %vm75, %v739, 0
  %v1067 = vsel %vm75, %v740, 0
  %v1070 = vsel %vm75, %v741, 0
  %1072 = vmatpush.msra.mxu0 0.0
  %1073 = vmatpush.msra.mxu0 0.0
  %1074 = vmatpush.msra.mxu0 0.0
  %1075 = vmatpush.msra.mxu0 0.0
  %1076 = vmatpush.msra.mxu0 0.0
  %1077 = vmatpush.msra.mxu0 0.0
  %1078 = vmatpush.msra.mxu0 0.0
  %1079 = vmatpush.msra.mxu0 0.0
  %1080 = vmatpush.msra.mxu0 %v770
  %1081 = vmatpush.msra.mxu0 %v766
  %1082 = vmatpush.msra.mxu0 %v762
  %1083 = vmatpush.msra.mxu0 %v758
  %1084 = vmatpush.msra.mxu0 %v754
  %1085 = vmatpush.msra.mxu0 %v750
  %1086 = vmatpush.msra.mxu0 %v746
  %1087 = vmatpush.msra.mxu0 %v742
  %1088 = vmatmul.f32.gmra.mxu0 %v1061
  %v1089 = vpop.f32.mrf.mxu0
  %v1090 = vadd.f32 %v962, %v1089
  %1091 = vmatmul.f32.gmra.mxu0 %v1064
  %v1092 = vpop.f32.mrf.mxu0
  %v1093 = vadd.f32 %v965, %v1092
  %1094 = vmatmul.f32.gmra.mxu0 %v1067
  %v1095 = vpop.f32.mrf.mxu0
  %v1096 = vadd.f32 %v968, %v1095
  %1097 = vmatmul.f32.gmra.mxu0 %v1070
  %v1098 = vpop.f32.mrf.mxu0
  %v1099 = vadd.f32 %v971, %v1098
  %1100 = vdwg.mxu0
  %1101 = vmatpush.msra.mxu0 0.0
  %1102 = vmatpush.msra.mxu0 0.0
  %1103 = vmatpush.msra.mxu0 0.0
  %1104 = vmatpush.msra.mxu0 0.0
  %1105 = vmatpush.msra.mxu0 0.0
  %1106 = vmatpush.msra.mxu0 0.0
  %1107 = vmatpush.msra.mxu0 0.0
  %1108 = vmatpush.msra.mxu0 0.0
  %1109 = vmatpush.msra.mxu0 %v771
  %1110 = vmatpush.msra.mxu0 %v767
  %1111 = vmatpush.msra.mxu0 %v763
  %1112 = vmatpush.msra.mxu0 %v759
  %1113 = vmatpush.msra.mxu0 %v755
  %1114 = vmatpush.msra.mxu0 %v751
  %1115 = vmatpush.msra.mxu0 %v747
  %1116 = vmatpush.msra.mxu0 %v743
  %1117 = vmatmul.f32.gmra.mxu0 %v1061
  %v1118 = vpop.f32.mrf.mxu0
  %v1119 = vadd.f32 %v991, %v1118
  %1120 = vmatmul.f32.gmra.mxu0 %v1064
  %v1121 = vpop.f32.mrf.mxu0
  %v1122 = vadd.f32 %v994, %v1121
  %1123 = vmatmul.f32.gmra.mxu0 %v1067
  %v1124 = vpop.f32.mrf.mxu0
  %v1125 = vadd.f32 %v997, %v1124
  %1126 = vmatmul.f32.gmra.mxu0 %v1070
  %v1127 = vpop.f32.mrf.mxu0
  %v1128 = vadd.f32 %v1000, %v1127
  %1129 = vdwg.mxu0
  %1130 = vmatpush.msra.mxu0 0.0
  %1131 = vmatpush.msra.mxu0 0.0
  %1132 = vmatpush.msra.mxu0 0.0
  %1133 = vmatpush.msra.mxu0 0.0
  %1134 = vmatpush.msra.mxu0 0.0
  %1135 = vmatpush.msra.mxu0 0.0
  %1136 = vmatpush.msra.mxu0 0.0
  %1137 = vmatpush.msra.mxu0 0.0
  %1138 = vmatpush.msra.mxu0 %v772
  %1139 = vmatpush.msra.mxu0 %v768
  %1140 = vmatpush.msra.mxu0 %v764
  %1141 = vmatpush.msra.mxu0 %v760
  %1142 = vmatpush.msra.mxu0 %v756
  %1143 = vmatpush.msra.mxu0 %v752
  %1144 = vmatpush.msra.mxu0 %v748
  %1145 = vmatpush.msra.mxu0 %v744
  %1146 = vmatmul.f32.gmra.mxu0 %v1061
  %v1147 = vpop.f32.mrf.mxu0
  %v1148 = vadd.f32 %v1020, %v1147
  %1149 = vmatmul.f32.gmra.mxu0 %v1064
  %v1150 = vpop.f32.mrf.mxu0
  %v1151 = vadd.f32 %v1023, %v1150
  %1152 = vmatmul.f32.gmra.mxu0 %v1067
  %v1153 = vpop.f32.mrf.mxu0
  %v1154 = vadd.f32 %v1026, %v1153
  %1155 = vmatmul.f32.gmra.mxu0 %v1070
  %v1156 = vpop.f32.mrf.mxu0
  %v1157 = vadd.f32 %v1029, %v1156
  %1158 = vdwg.mxu0
  %1159 = vmatpush.msra.mxu0 0.0
  %1160 = vmatpush.msra.mxu0 0.0
  %1161 = vmatpush.msra.mxu0 0.0
  %1162 = vmatpush.msra.mxu0 0.0
  %1163 = vmatpush.msra.mxu0 0.0
  %1164 = vmatpush.msra.mxu0 0.0
  %1165 = vmatpush.msra.mxu0 0.0
  %1166 = vmatpush.msra.mxu0 0.0
  %1167 = vmatpush.msra.mxu0 %v773
  %1168 = vmatpush.msra.mxu0 %v769
  %1169 = vmatpush.msra.mxu0 %v765
  %1170 = vmatpush.msra.mxu0 %v761
  %1171 = vmatpush.msra.mxu0 %v757
  %1172 = vmatpush.msra.mxu0 %v753
  %1173 = vmatpush.msra.mxu0 %v749
  %1174 = vmatpush.msra.mxu0 %v745
  %1175 = vmatmul.f32.gmra.mxu0 %v1061
  %v1176 = vpop.f32.mrf.mxu0
  %v1177 = vadd.f32 %v1049, %v1176
  %1178 = vmatmul.f32.gmra.mxu0 %v1064
  %v1179 = vpop.f32.mrf.mxu0
  %v1180 = vadd.f32 %v1052, %v1179
  %1181 = vmatmul.f32.gmra.mxu0 %v1067
  %v1182 = vpop.f32.mrf.mxu0
  %v1183 = vadd.f32 %v1055, %v1182
  %1184 = vmatmul.f32.gmra.mxu0 %v1070
  %v1185 = vpop.f32.mrf.mxu0
  %v1186 = vadd.f32 %v1058, %v1185
  %1187 = vdwg.mxu0
  %v1188 = vadd.f32 %v1090, %v58
  %v1189 = vadd.f32 %v1119, %v58
  %v1190 = vadd.f32 %v1148, %v58
  %v1191 = vadd.f32 %v1177, %v58
  %v1192 = vadd.f32 %v1093, %v63
  %v1193 = vadd.f32 %v1122, %v63
  %v1194 = vadd.f32 %v1151, %v63
  %v1195 = vadd.f32 %v1180, %v63
  %v1196 = vadd.f32 %v1096, %v68
  %v1197 = vadd.f32 %v1125, %v68
  %v1198 = vadd.f32 %v1154, %v68
  %v1199 = vadd.f32 %v1183, %v68
  %v1200 = vadd.f32 %v1099, %v73
  %v1201 = vadd.f32 %v1128, %v73
  %v1202 = vadd.f32 %v1157, %v73
  %v1203 = vadd.f32 %v1186, %v73
  %v1204 = vmax.f32 %v1188, 0.0
  %v1205 = vmax.f32 %v1189, 0.0
  %v1206 = vmax.f32 %v1190, 0.0
  %v1207 = vmax.f32 %v1191, 0.0
  %v1208 = vmax.f32 %v1192, 0.0
  %v1209 = vmax.f32 %v1193, 0.0
  %v1210 = vmax.f32 %v1194, 0.0
  %v1211 = vmax.f32 %v1195, 0.0
  %v1212 = vmax.f32 %v1196, 0.0
  %v1213 = vmax.f32 %v1197, 0.0
  %v1214 = vmax.f32 %v1198, 0.0
  %v1215 = vmax.f32 %v1199, 0.0
  %v1216 = vmax.f32 %v1200, 0.0
  %v1217 = vmax.f32 %v1201, 0.0
  %v1218 = vmax.f32 %v1202, 0.0
  %v1219 = vmax.f32 %v1203, 0.0
  %s1220 = scalar_lea.vmem %s3, 256
  %1221 = vst [vmem:[%s1220] sm:$0xff] %v1204
  %1222 = vst [vmem:[%s1220 + $0x8] sm:$0xff] %v1205
  %1223 = vst [vmem:[%s1220 + $0x10] sm:$0xff] %v1206
  %1224 = vst.msk [vmem:[%s1220 + $0x18] sm:$0xff] %vm223, %v1207
  %1225 = vst [vmem:[%s1220 + $0x20] sm:$0xff] %v1208
  %1226 = vst [vmem:[%s1220 + $0x28] sm:$0xff] %v1209
  %1227 = vst [vmem:[%s1220 + $0x30] sm:$0xff] %v1210
  %1228 = vst.msk [vmem:[%s1220 + $0x38] sm:$0xff] %vm223, %v1211
  %1229 = vst [vmem:[%s1220 + $0x40] sm:$0xff] %v1212
  %1230 = vst [vmem:[%s1220 + $0x48] sm:$0xff] %v1213
  %1231 = vst [vmem:[%s1220 + $0x50] sm:$0xff] %v1214
  %1232 = vst.msk [vmem:[%s1220 + $0x58] sm:$0xff] %vm223, %v1215
  %1233 = vst [vmem:[%s1220 + $0x60] sm:$0xff] %v1216
  %1234 = vst [vmem:[%s1220 + $0x68] sm:$0xff] %v1217
  %1235 = vst [vmem:[%s1220 + $0x70] sm:$0xff] %v1218
  %1236 = vst.msk [vmem:[%s1220 + $0x78] sm:$0xff] %vm223, %v1219
  %s1237 = scalar_lea.vmem %s1, 256
  %v1238 = vld [vmem:[%s1237] sm:$0xff]
  %v1239 = vld [vmem:[%s1237 + $0x8] sm:$0xff]
  %v1240 = vld [vmem:[%s1237 + $0x10] sm:$0xff]
  %v1241 = vld [vmem:[%s1237 + $0x18] sm:$0xff]
  %v1242 = vld [vmem:[%s0] sm:$0xff]
  %v1243 = vld [vmem:[%s0 + $0x8] sm:$0xff]
  %v1244 = vld [vmem:[%s0 + $0x10] sm:$0xff]
  %v1245 = vld [vmem:[%s0 + $0x18] sm:$0xff]
  %v1246 = vld [vmem:[%s0 + $0x20] sm:$0xff]
  %v1247 = vld [vmem:[%s0 + $0x28] sm:$0xff]
  %v1248 = vld [vmem:[%s0 + $0x30] sm:$0xff]
  %v1249 = vld [vmem:[%s0 + $0x38] sm:$0xff]
  %v1250 = vld [vmem:[%s0 + $0x40] sm:$0xff]
  %v1251 = vld [vmem:[%s0 + $0x48] sm:$0xff]
  %v1252 = vld [vmem:[%s0 + $0x50] sm:$0xff]
  %v1253 = vld [vmem:[%s0 + $0x58] sm:$0xff]
  %v1254 = vld [vmem:[%s0 + $0x60] sm:$0xff]
  %v1255 = vld [vmem:[%s0 + $0x68] sm:$0xff]
  %v1256 = vld [vmem:[%s0 + $0x70] sm:$0xff]
  %v1257 = vld [vmem:[%s0 + $0x78] sm:$0xff]
  %v1258 = vld [vmem:[%s0 + $0x80] sm:$0xff]
  %v1259 = vld [vmem:[%s0 + $0x88] sm:$0xff]
  %v1260 = vld [vmem:[%s0 + $0x90] sm:$0xff]
  %v1261 = vld [vmem:[%s0 + $0x98] sm:$0xff]
  %v1262 = vld [vmem:[%s0 + $0xa0] sm:$0xff]
  %v1263 = vld [vmem:[%s0 + $0xa8] sm:$0xff]
  %v1264 = vld [vmem:[%s0 + $0xb0] sm:$0xff]
  %v1265 = vld [vmem:[%s0 + $0xb8] sm:$0xff]
  %v1266 = vld [vmem:[%s0 + $0xc0] sm:$0xff]
  %v1267 = vld [vmem:[%s0 + $0xc8] sm:$0xff]
  %v1268 = vld [vmem:[%s0 + $0xd0] sm:$0xff]
  %v1269 = vld [vmem:[%s0 + $0xd8] sm:$0xff]
  %v1270 = vld [vmem:[%s0 + $0xe0] sm:$0xff]
  %v1271 = vld [vmem:[%s0 + $0xe8] sm:$0xff]
  %v1272 = vld [vmem:[%s0 + $0xf0] sm:$0xff]
  %v1273 = vld [vmem:[%s0 + $0xf8] sm:$0xff]
  %s1274 = scalar_lea.vmem %s1, 192
  %v1275 = vld [vmem:[%s1274] sm:$0xff]
  %v1276 = vld [vmem:[%s1274 + $0x8] sm:$0xff]
  %v1277 = vld [vmem:[%s1274 + $0x10] sm:$0xff]
  %v1278 = vld [vmem:[%s1274 + $0x18] sm:$0xff]
  %1311 = vrot.lane.b32.xlu0 %v1242, 127
  %v1312 = vpop.permute.xlu0 %1311
  %1313 = vrot.lane.b32.xlu0 %v1243, 127
  %v1314 = vpop.permute.xlu0 %1313
  %1315 = vrot.lane.b32.xlu0 %v1244, 127
  %v1316 = vpop.permute.xlu0 %1315
  %1317 = vrot.lane.b32.xlu0 %v1245, 127
  %v1318 = vpop.permute.xlu0 %1317
  %1319 = vrot.lane.b32.xlu0 %v1246, 127
  %v1320 = vpop.permute.xlu0 %1319
  %1321 = vrot.lane.b32.xlu0 %v1247, 127
  %v1322 = vpop.permute.xlu0 %1321
  %1323 = vrot.lane.b32.xlu0 %v1248, 127
  %v1324 = vpop.permute.xlu0 %1323
  %1325 = vrot.lane.b32.xlu0 %v1249, 127
  %v1326 = vpop.permute.xlu0 %1325
  %1327 = vrot.lane.b32.xlu0 %v1250, 127
  %v1328 = vpop.permute.xlu0 %1327
  %1329 = vrot.lane.b32.xlu0 %v1251, 127
  %v1330 = vpop.permute.xlu0 %1329
  %1331 = vrot.lane.b32.xlu0 %v1252, 127
  %v1332 = vpop.permute.xlu0 %1331
  %1333 = vrot.lane.b32.xlu0 %v1253, 127
  %v1334 = vpop.permute.xlu0 %1333
  %1335 = vrot.lane.b32.xlu0 %v1254, 127
  %v1336 = vpop.permute.xlu0 %1335
  %1337 = vrot.lane.b32.xlu0 %v1255, 127
  %v1338 = vpop.permute.xlu0 %1337
  %1339 = vrot.lane.b32.xlu0 %v1256, 127
  %v1340 = vpop.permute.xlu0 %1339
  %1341 = vrot.lane.b32.xlu0 %v1257, 127
  %v1342 = vpop.permute.xlu0 %1341
  %1343 = vrot.lane.b32.xlu0 %v1258, 127
  %v1344 = vpop.permute.xlu0 %1343
  %1345 = vrot.lane.b32.xlu0 %v1259, 127
  %v1346 = vpop.permute.xlu0 %1345
  %1347 = vrot.lane.b32.xlu0 %v1260, 127
  %v1348 = vpop.permute.xlu0 %1347
  %1349 = vrot.lane.b32.xlu0 %v1261, 127
  %v1350 = vpop.permute.xlu0 %1349
  %1351 = vrot.lane.b32.xlu0 %v1262, 127
  %v1352 = vpop.permute.xlu0 %1351
  %1353 = vrot.lane.b32.xlu0 %v1263, 127
  %v1354 = vpop.permute.xlu0 %1353
  %1355 = vrot.lane.b32.xlu0 %v1264, 127
  %v1356 = vpop.permute.xlu0 %1355
  %1357 = vrot.lane.b32.xlu0 %v1265, 127
  %v1358 = vpop.permute.xlu0 %1357
  %1359 = vrot.lane.b32.xlu0 %v1266, 127
  %v1360 = vpop.permute.xlu0 %1359
  %1361 = vrot.lane.b32.xlu0 %v1267, 127
  %v1362 = vpop.permute.xlu0 %1361
  %1363 = vrot.lane.b32.xlu0 %v1268, 127
  %v1364 = vpop.permute.xlu0 %1363
  %1365 = vrot.lane.b32.xlu0 %v1269, 127
  %v1366 = vpop.permute.xlu0 %1365
  %1367 = vrot.lane.b32.xlu0 %v1270, 127
  %v1368 = vpop.permute.xlu0 %1367
  %1369 = vrot.lane.b32.xlu0 %v1271, 127
  %v1370 = vpop.permute.xlu0 %1369
  %1371 = vrot.lane.b32.xlu0 %v1272, 127
  %v1372 = vpop.permute.xlu0 %1371
  %1373 = vrot.lane.b32.xlu0 %v1273, 127
  %v1374 = vpop.permute.xlu0 %1373
  %v1375 = vsel %vm375, %v1312, %v1314
  %v1376 = vsel %vm375, %v1314, %v1316
  %v1377 = vsel %vm375, %v1316, %v1318
  %v1378 = vsel %vm375, %v1320, %v1322
  %v1379 = vsel %vm375, %v1322, %v1324
  %v1380 = vsel %vm375, %v1324, %v1326
  %v1381 = vsel %vm375, %v1328, %v1330
  %v1382 = vsel %vm375, %v1330, %v1332
  %v1383 = vsel %vm375, %v1332, %v1334
  %v1384 = vsel %vm375, %v1336, %v1338
  %v1385 = vsel %vm375, %v1338, %v1340
  %v1386 = vsel %vm375, %v1340, %v1342
  %v1387 = vsel %vm375, %v1344, %v1346
  %v1388 = vsel %vm375, %v1346, %v1348
  %v1389 = vsel %vm375, %v1348, %v1350
  %v1390 = vsel %vm375, %v1352, %v1354
  %v1391 = vsel %vm375, %v1354, %v1356
  %v1392 = vsel %vm375, %v1356, %v1358
  %v1393 = vsel %vm375, %v1360, %v1362
  %v1394 = vsel %vm375, %v1362, %v1364
  %v1395 = vsel %vm375, %v1364, %v1366
  %v1396 = vsel %vm375, %v1368, %v1370
  %v1397 = vsel %vm375, %v1370, %v1372
  %v1398 = vsel %vm375, %v1372, %v1374
  %v1432 = vsel %vm75, %v1275, 0
  %v1435 = vsel %vm75, %v1276, 0
  %v1438 = vsel %vm75, %v1277, 0
  %v1441 = vsel %vm75, %v1278, 0
  %1443 = vmatpush.msra.mxu0 0.0
  %1444 = vmatpush.msra.mxu0 0.0
  %1445 = vmatpush.msra.mxu0 0.0
  %1446 = vmatpush.msra.mxu0 0.0
  %1447 = vmatpush.msra.mxu0 0.0
  %1448 = vmatpush.msra.mxu0 0.0
  %1449 = vmatpush.msra.mxu0 0.0
  %1450 = vmatpush.msra.mxu0 0.0
  %1451 = vmatpush.msra.mxu0 %v1396
  %1452 = vmatpush.msra.mxu0 %v1393
  %1453 = vmatpush.msra.mxu0 %v1390
  %1454 = vmatpush.msra.mxu0 %v1387
  %1455 = vmatpush.msra.mxu0 %v1384
  %1456 = vmatpush.msra.mxu0 %v1381
  %1457 = vmatpush.msra.mxu0 %v1378
  %1458 = vmatpush.msra.mxu0 %v1375
  %1459 = vmatmul.f32.gmra.mxu0 %v1432
  %v1460 = vpop.f32.mrf.mxu0
  %v1461 = vadd.f32 0.0, %v1460
  %1462 = vmatmul.f32.gmra.mxu0 %v1435
  %v1463 = vpop.f32.mrf.mxu0
  %v1464 = vadd.f32 0.0, %v1463
  %1465 = vmatmul.f32.gmra.mxu0 %v1438
  %v1466 = vpop.f32.mrf.mxu0
  %v1467 = vadd.f32 0.0, %v1466
  %1468 = vmatmul.f32.gmra.mxu0 %v1441
  %v1469 = vpop.f32.mrf.mxu0
  %v1470 = vadd.f32 0.0, %v1469
  %1471 = vdwg.mxu0
  %1472 = vmatpush.msra.mxu0 0.0
  %1473 = vmatpush.msra.mxu0 0.0
  %1474 = vmatpush.msra.mxu0 0.0
  %1475 = vmatpush.msra.mxu0 0.0
  %1476 = vmatpush.msra.mxu0 0.0
  %1477 = vmatpush.msra.mxu0 0.0
  %1478 = vmatpush.msra.mxu0 0.0
  %1479 = vmatpush.msra.mxu0 0.0
  %1480 = vmatpush.msra.mxu0 %v1397
  %1481 = vmatpush.msra.mxu0 %v1394
  %1482 = vmatpush.msra.mxu0 %v1391
  %1483 = vmatpush.msra.mxu0 %v1388
  %1484 = vmatpush.msra.mxu0 %v1385
  %1485 = vmatpush.msra.mxu0 %v1382
  %1486 = vmatpush.msra.mxu0 %v1379
  %1487 = vmatpush.msra.mxu0 %v1376
  %1488 = vmatmul.f32.gmra.mxu0 %v1432
  %v1489 = vpop.f32.mrf.mxu0
  %v1490 = vadd.f32 0.0, %v1489
  %1491 = vmatmul.f32.gmra.mxu0 %v1435
  %v1492 = vpop.f32.mrf.mxu0
  %v1493 = vadd.f32 0.0, %v1492
  %1494 = vmatmul.f32.gmra.mxu0 %v1438
  %v1495 = vpop.f32.mrf.mxu0
  %v1496 = vadd.f32 0.0, %v1495
  %1497 = vmatmul.f32.gmra.mxu0 %v1441
  %v1498 = vpop.f32.mrf.mxu0
  %v1499 = vadd.f32 0.0, %v1498
  %1500 = vdwg.mxu0
  %1501 = vmatpush.msra.mxu0 0.0
  %1502 = vmatpush.msra.mxu0 0.0
  %1503 = vmatpush.msra.mxu0 0.0
  %1504 = vmatpush.msra.mxu0 0.0
  %1505 = vmatpush.msra.mxu0 0.0
  %1506 = vmatpush.msra.mxu0 0.0
  %1507 = vmatpush.msra.mxu0 0.0
  %1508 = vmatpush.msra.mxu0 0.0
  %1509 = vmatpush.msra.mxu0 %v1398
  %1510 = vmatpush.msra.mxu0 %v1395
  %1511 = vmatpush.msra.mxu0 %v1392
  %1512 = vmatpush.msra.mxu0 %v1389
  %1513 = vmatpush.msra.mxu0 %v1386
  %1514 = vmatpush.msra.mxu0 %v1383
  %1515 = vmatpush.msra.mxu0 %v1380
  %1516 = vmatpush.msra.mxu0 %v1377
  %1517 = vmatmul.f32.gmra.mxu0 %v1432
  %v1518 = vpop.f32.mrf.mxu0
  %v1519 = vadd.f32 0.0, %v1518
  %1520 = vmatmul.f32.gmra.mxu0 %v1435
  %v1521 = vpop.f32.mrf.mxu0
  %v1522 = vadd.f32 0.0, %v1521
  %1523 = vmatmul.f32.gmra.mxu0 %v1438
  %v1524 = vpop.f32.mrf.mxu0
  %v1525 = vadd.f32 0.0, %v1524
  %1526 = vmatmul.f32.gmra.mxu0 %v1441
  %v1527 = vpop.f32.mrf.mxu0
  %v1528 = vadd.f32 0.0, %v1527
  %1529 = vdwg.mxu0
  %1530 = vmatpush.msra.mxu0 0.0
  %1531 = vmatpush.msra.mxu0 0.0
  %1532 = vmatpush.msra.mxu0 0.0
  %1533 = vmatpush.msra.mxu0 0.0
  %1534 = vmatpush.msra.mxu0 0.0
  %1535 = vmatpush.msra.mxu0 0.0
  %1536 = vmatpush.msra.mxu0 0.0
  %1537 = vmatpush.msra.mxu0 0.0
  %1538 = vmatpush.msra.mxu0 %v1374
  %1539 = vmatpush.msra.mxu0 %v1366
  %1540 = vmatpush.msra.mxu0 %v1358
  %1541 = vmatpush.msra.mxu0 %v1350
  %1542 = vmatpush.msra.mxu0 %v1342
  %1543 = vmatpush.msra.mxu0 %v1334
  %1544 = vmatpush.msra.mxu0 %v1326
  %1545 = vmatpush.msra.mxu0 %v1318
  %1546 = vmatmul.f32.gmra.mxu0 %v1432
  %v1547 = vpop.f32.mrf.mxu0
  %v1548 = vadd.f32 0.0, %v1547
  %1549 = vmatmul.f32.gmra.mxu0 %v1435
  %v1550 = vpop.f32.mrf.mxu0
  %v1551 = vadd.f32 0.0, %v1550
  %1552 = vmatmul.f32.gmra.mxu0 %v1438
  %v1553 = vpop.f32.mrf.mxu0
  %v1554 = vadd.f32 0.0, %v1553
  %1555 = vmatmul.f32.gmra.mxu0 %v1441
  %v1556 = vpop.f32.mrf.mxu0
  %v1557 = vadd.f32 0.0, %v1556
  %1558 = vdwg.mxu0
  %v1560 = vsel %vm75, %v1238, 0
  %v1563 = vsel %vm75, %v1239, 0
  %v1566 = vsel %vm75, %v1240, 0
  %v1569 = vsel %vm75, %v1241, 0
  %1571 = vmatpush.msra.mxu0 0.0
  %1572 = vmatpush.msra.mxu0 0.0
  %1573 = vmatpush.msra.mxu0 0.0
  %1574 = vmatpush.msra.mxu0 0.0
  %1575 = vmatpush.msra.mxu0 0.0
  %1576 = vmatpush.msra.mxu0 0.0
  %1577 = vmatpush.msra.mxu0 0.0
  %1578 = vmatpush.msra.mxu0 0.0
  %1579 = vmatpush.msra.mxu0 %v1270
  %1580 = vmatpush.msra.mxu0 %v1266
  %1581 = vmatpush.msra.mxu0 %v1262
  %1582 = vmatpush.msra.mxu0 %v1258
  %1583 = vmatpush.msra.mxu0 %v1254
  %1584 = vmatpush.msra.mxu0 %v1250
  %1585 = vmatpush.msra.mxu0 %v1246
  %1586 = vmatpush.msra.mxu0 %v1242
  %1587 = vmatmul.f32.gmra.mxu0 %v1560
  %v1588 = vpop.f32.mrf.mxu0
  %v1589 = vadd.f32 %v1461, %v1588
  %1590 = vmatmul.f32.gmra.mxu0 %v1563
  %v1591 = vpop.f32.mrf.mxu0
  %v1592 = vadd.f32 %v1464, %v1591
  %1593 = vmatmul.f32.gmra.mxu0 %v1566
  %v1594 = vpop.f32.mrf.mxu0
  %v1595 = vadd.f32 %v1467, %v1594
  %1596 = vmatmul.f32.gmra.mxu0 %v1569
  %v1597 = vpop.f32.mrf.mxu0
  %v1598 = vadd.f32 %v1470, %v1597
  %1599 = vdwg.mxu0
  %1600 = vmatpush.msra.mxu0 0.0
  %1601 = vmatpush.msra.mxu0 0.0
  %1602 = vmatpush.msra.mxu0 0.0
  %1603 = vmatpush.msra.mxu0 0.0
  %1604 = vmatpush.msra.mxu0 0.0
  %1605 = vmatpush.msra.mxu0 0.0
  %1606 = vmatpush.msra.mxu0 0.0
  %1607 = vmatpush.msra.mxu0 0.0
  %1608 = vmatpush.msra.mxu0 %v1271
  %1609 = vmatpush.msra.mxu0 %v1267
  %1610 = vmatpush.msra.mxu0 %v1263
  %1611 = vmatpush.msra.mxu0 %v1259
  %1612 = vmatpush.msra.mxu0 %v1255
  %1613 = vmatpush.msra.mxu0 %v1251
  %1614 = vmatpush.msra.mxu0 %v1247
  %1615 = vmatpush.msra.mxu0 %v1243
  %1616 = vmatmul.f32.gmra.mxu0 %v1560
  %v1617 = vpop.f32.mrf.mxu0
  %v1618 = vadd.f32 %v1490, %v1617
  %1619 = vmatmul.f32.gmra.mxu0 %v1563
  %v1620 = vpop.f32.mrf.mxu0
  %v1621 = vadd.f32 %v1493, %v1620
  %1622 = vmatmul.f32.gmra.mxu0 %v1566
  %v1623 = vpop.f32.mrf.mxu0
  %v1624 = vadd.f32 %v1496, %v1623
  %1625 = vmatmul.f32.gmra.mxu0 %v1569
  %v1626 = vpop.f32.mrf.mxu0
  %v1627 = vadd.f32 %v1499, %v1626
  %1628 = vdwg.mxu0
  %1629 = vmatpush.msra.mxu0 0.0
  %1630 = vmatpush.msra.mxu0 0.0
  %1631 = vmatpush.msra.mxu0 0.0
  %1632 = vmatpush.msra.mxu0 0.0
  %1633 = vmatpush.msra.mxu0 0.0
  %1634 = vmatpush.msra.mxu0 0.0
  %1635 = vmatpush.msra.mxu0 0.0
  %1636 = vmatpush.msra.mxu0 0.0
  %1637 = vmatpush.msra.mxu0 %v1272
  %1638 = vmatpush.msra.mxu0 %v1268
  %1639 = vmatpush.msra.mxu0 %v1264
  %1640 = vmatpush.msra.mxu0 %v1260
  %1641 = vmatpush.msra.mxu0 %v1256
  %1642 = vmatpush.msra.mxu0 %v1252
  %1643 = vmatpush.msra.mxu0 %v1248
  %1644 = vmatpush.msra.mxu0 %v1244
  %1645 = vmatmul.f32.gmra.mxu0 %v1560
  %v1646 = vpop.f32.mrf.mxu0
  %v1647 = vadd.f32 %v1519, %v1646
  %1648 = vmatmul.f32.gmra.mxu0 %v1563
  %v1649 = vpop.f32.mrf.mxu0
  %v1650 = vadd.f32 %v1522, %v1649
  %1651 = vmatmul.f32.gmra.mxu0 %v1566
  %v1652 = vpop.f32.mrf.mxu0
  %v1653 = vadd.f32 %v1525, %v1652
  %1654 = vmatmul.f32.gmra.mxu0 %v1569
  %v1655 = vpop.f32.mrf.mxu0
  %v1656 = vadd.f32 %v1528, %v1655
  %1657 = vdwg.mxu0
  %1658 = vmatpush.msra.mxu0 0.0
  %1659 = vmatpush.msra.mxu0 0.0
  %1660 = vmatpush.msra.mxu0 0.0
  %1661 = vmatpush.msra.mxu0 0.0
  %1662 = vmatpush.msra.mxu0 0.0
  %1663 = vmatpush.msra.mxu0 0.0
  %1664 = vmatpush.msra.mxu0 0.0
  %1665 = vmatpush.msra.mxu0 0.0
  %1666 = vmatpush.msra.mxu0 %v1273
  %1667 = vmatpush.msra.mxu0 %v1269
  %1668 = vmatpush.msra.mxu0 %v1265
  %1669 = vmatpush.msra.mxu0 %v1261
  %1670 = vmatpush.msra.mxu0 %v1257
  %1671 = vmatpush.msra.mxu0 %v1253
  %1672 = vmatpush.msra.mxu0 %v1249
  %1673 = vmatpush.msra.mxu0 %v1245
  %1674 = vmatmul.f32.gmra.mxu0 %v1560
  %v1675 = vpop.f32.mrf.mxu0
  %v1676 = vadd.f32 %v1548, %v1675
  %1677 = vmatmul.f32.gmra.mxu0 %v1563
  %v1678 = vpop.f32.mrf.mxu0
  %v1679 = vadd.f32 %v1551, %v1678
  %1680 = vmatmul.f32.gmra.mxu0 %v1566
  %v1681 = vpop.f32.mrf.mxu0
  %v1682 = vadd.f32 %v1554, %v1681
  %1683 = vmatmul.f32.gmra.mxu0 %v1569
  %v1684 = vpop.f32.mrf.mxu0
  %v1685 = vadd.f32 %v1557, %v1684
  %1686 = vdwg.mxu0
  %s1687 = scalar_lea.vmem %s1, 64
  %v1688 = vld [vmem:[%s1687] sm:$0xff]
  %v1689 = vld [vmem:[%s1687 + $0x8] sm:$0xff]
  %v1690 = vld [vmem:[%s1687 + $0x10] sm:$0xff]
  %v1691 = vld [vmem:[%s1687 + $0x18] sm:$0xff]
  %1692 = vrot.lane.b32.xlu0 %v1242, 113
  %v1693 = vpop.permute.xlu0 %1692
  %1694 = vrot.lane.b32.xlu0 %v1243, 113
  %v1695 = vpop.permute.xlu0 %1694
  %1696 = vrot.lane.b32.xlu0 %v1244, 113
  %v1697 = vpop.permute.xlu0 %1696
  %1698 = vrot.lane.b32.xlu0 %v1245, 113
  %v1699 = vpop.permute.xlu0 %1698
  %1700 = vrot.lane.b32.xlu0 %v1246, 113
  %v1701 = vpop.permute.xlu0 %1700
  %1702 = vrot.lane.b32.xlu0 %v1247, 113
  %v1703 = vpop.permute.xlu0 %1702
  %1704 = vrot.lane.b32.xlu0 %v1248, 113
  %v1705 = vpop.permute.xlu0 %1704
  %1706 = vrot.lane.b32.xlu0 %v1249, 113
  %v1707 = vpop.permute.xlu0 %1706
  %1708 = vrot.lane.b32.xlu0 %v1250, 113
  %v1709 = vpop.permute.xlu0 %1708
  %1710 = vrot.lane.b32.xlu0 %v1251, 113
  %v1711 = vpop.permute.xlu0 %1710
  %1712 = vrot.lane.b32.xlu0 %v1252, 113
  %v1713 = vpop.permute.xlu0 %1712
  %1714 = vrot.lane.b32.xlu0 %v1253, 113
  %v1715 = vpop.permute.xlu0 %1714
  %1716 = vrot.lane.b32.xlu0 %v1254, 113
  %v1717 = vpop.permute.xlu0 %1716
  %1718 = vrot.lane.b32.xlu0 %v1255, 113
  %v1719 = vpop.permute.xlu0 %1718
  %1720 = vrot.lane.b32.xlu0 %v1256, 113
  %v1721 = vpop.permute.xlu0 %1720
  %1722 = vrot.lane.b32.xlu0 %v1257, 113
  %v1723 = vpop.permute.xlu0 %1722
  %1724 = vrot.lane.b32.xlu0 %v1258, 113
  %v1725 = vpop.permute.xlu0 %1724
  %1726 = vrot.lane.b32.xlu0 %v1259, 113
  %v1727 = vpop.permute.xlu0 %1726
  %1728 = vrot.lane.b32.xlu0 %v1260, 113
  %v1729 = vpop.permute.xlu0 %1728
  %1730 = vrot.lane.b32.xlu0 %v1261, 113
  %v1731 = vpop.permute.xlu0 %1730
  %1732 = vrot.lane.b32.xlu0 %v1262, 113
  %v1733 = vpop.permute.xlu0 %1732
  %1734 = vrot.lane.b32.xlu0 %v1263, 113
  %v1735 = vpop.permute.xlu0 %1734
  %1736 = vrot.lane.b32.xlu0 %v1264, 113
  %v1737 = vpop.permute.xlu0 %1736
  %1738 = vrot.lane.b32.xlu0 %v1265, 113
  %v1739 = vpop.permute.xlu0 %1738
  %1740 = vrot.lane.b32.xlu0 %v1266, 113
  %v1741 = vpop.permute.xlu0 %1740
  %1742 = vrot.lane.b32.xlu0 %v1267, 113
  %v1743 = vpop.permute.xlu0 %1742
  %1744 = vrot.lane.b32.xlu0 %v1268, 113
  %v1745 = vpop.permute.xlu0 %1744
  %1746 = vrot.lane.b32.xlu0 %v1269, 113
  %v1747 = vpop.permute.xlu0 %1746
  %1748 = vrot.lane.b32.xlu0 %v1270, 113
  %v1749 = vpop.permute.xlu0 %1748
  %1750 = vrot.lane.b32.xlu0 %v1271, 113
  %v1751 = vpop.permute.xlu0 %1750
  %1752 = vrot.lane.b32.xlu0 %v1272, 113
  %v1753 = vpop.permute.xlu0 %1752
  %1754 = vrot.lane.b32.xlu0 %v1273, 113
  %v1755 = vpop.permute.xlu0 %1754
  %v1756 = vsel %vm875, %v1693, %v1695
  %v1757 = vsel %vm875, %v1695, %v1697
  %v1758 = vsel %vm875, %v1697, %v1699
  %v1759 = vsel %vm875, %v1701, %v1703
  %v1760 = vsel %vm875, %v1703, %v1705
  %v1761 = vsel %vm875, %v1705, %v1707
  %v1762 = vsel %vm875, %v1709, %v1711
  %v1763 = vsel %vm875, %v1711, %v1713
  %v1764 = vsel %vm875, %v1713, %v1715
  %v1765 = vsel %vm875, %v1717, %v1719
  %v1766 = vsel %vm875, %v1719, %v1721
  %v1767 = vsel %vm875, %v1721, %v1723
  %v1768 = vsel %vm875, %v1725, %v1727
  %v1769 = vsel %vm875, %v1727, %v1729
  %v1770 = vsel %vm875, %v1729, %v1731
  %v1771 = vsel %vm875, %v1733, %v1735
  %v1772 = vsel %vm875, %v1735, %v1737
  %v1773 = vsel %vm875, %v1737, %v1739
  %v1774 = vsel %vm875, %v1741, %v1743
  %v1775 = vsel %vm875, %v1743, %v1745
  %v1776 = vsel %vm875, %v1745, %v1747
  %v1777 = vsel %vm875, %v1749, %v1751
  %v1778 = vsel %vm875, %v1751, %v1753
  %v1779 = vsel %vm875, %v1753, %v1755
  %v1813 = vsel %vm75, %v1688, 0
  %v1816 = vsel %vm75, %v1689, 0
  %v1819 = vsel %vm75, %v1690, 0
  %v1822 = vsel %vm75, %v1691, 0
  %1824 = vmatpush.msra.mxu0 0.0
  %1825 = vmatpush.msra.mxu0 0.0
  %1826 = vmatpush.msra.mxu0 0.0
  %1827 = vmatpush.msra.mxu0 0.0
  %1828 = vmatpush.msra.mxu0 0.0
  %1829 = vmatpush.msra.mxu0 0.0
  %1830 = vmatpush.msra.mxu0 0.0
  %1831 = vmatpush.msra.mxu0 0.0
  %1832 = vmatpush.msra.mxu0 %v1777
  %1833 = vmatpush.msra.mxu0 %v1774
  %1834 = vmatpush.msra.mxu0 %v1771
  %1835 = vmatpush.msra.mxu0 %v1768
  %1836 = vmatpush.msra.mxu0 %v1765
  %1837 = vmatpush.msra.mxu0 %v1762
  %1838 = vmatpush.msra.mxu0 %v1759
  %1839 = vmatpush.msra.mxu0 %v1756
  %1840 = vmatmul.f32.gmra.mxu0 %v1813
  %v1841 = vpop.f32.mrf.mxu0
  %v1842 = vadd.f32 0.0, %v1841
  %1843 = vmatmul.f32.gmra.mxu0 %v1816
  %v1844 = vpop.f32.mrf.mxu0
  %v1845 = vadd.f32 0.0, %v1844
  %1846 = vmatmul.f32.gmra.mxu0 %v1819
  %v1847 = vpop.f32.mrf.mxu0
  %v1848 = vadd.f32 0.0, %v1847
  %1849 = vmatmul.f32.gmra.mxu0 %v1822
  %v1850 = vpop.f32.mrf.mxu0
  %v1851 = vadd.f32 0.0, %v1850
  %1852 = vdwg.mxu0
  %1853 = vmatpush.msra.mxu0 0.0
  %1854 = vmatpush.msra.mxu0 0.0
  %1855 = vmatpush.msra.mxu0 0.0
  %1856 = vmatpush.msra.mxu0 0.0
  %1857 = vmatpush.msra.mxu0 0.0
  %1858 = vmatpush.msra.mxu0 0.0
  %1859 = vmatpush.msra.mxu0 0.0
  %1860 = vmatpush.msra.mxu0 0.0
  %1861 = vmatpush.msra.mxu0 %v1778
  %1862 = vmatpush.msra.mxu0 %v1775
  %1863 = vmatpush.msra.mxu0 %v1772
  %1864 = vmatpush.msra.mxu0 %v1769
  %1865 = vmatpush.msra.mxu0 %v1766
  %1866 = vmatpush.msra.mxu0 %v1763
  %1867 = vmatpush.msra.mxu0 %v1760
  %1868 = vmatpush.msra.mxu0 %v1757
  %1869 = vmatmul.f32.gmra.mxu0 %v1813
  %v1870 = vpop.f32.mrf.mxu0
  %v1871 = vadd.f32 0.0, %v1870
  %1872 = vmatmul.f32.gmra.mxu0 %v1816
  %v1873 = vpop.f32.mrf.mxu0
  %v1874 = vadd.f32 0.0, %v1873
  %1875 = vmatmul.f32.gmra.mxu0 %v1819
  %v1876 = vpop.f32.mrf.mxu0
  %v1877 = vadd.f32 0.0, %v1876
  %1878 = vmatmul.f32.gmra.mxu0 %v1822
  %v1879 = vpop.f32.mrf.mxu0
  %v1880 = vadd.f32 0.0, %v1879
  %1881 = vdwg.mxu0
  %1882 = vmatpush.msra.mxu0 0.0
  %1883 = vmatpush.msra.mxu0 0.0
  %1884 = vmatpush.msra.mxu0 0.0
  %1885 = vmatpush.msra.mxu0 0.0
  %1886 = vmatpush.msra.mxu0 0.0
  %1887 = vmatpush.msra.mxu0 0.0
  %1888 = vmatpush.msra.mxu0 0.0
  %1889 = vmatpush.msra.mxu0 0.0
  %1890 = vmatpush.msra.mxu0 %v1779
  %1891 = vmatpush.msra.mxu0 %v1776
  %1892 = vmatpush.msra.mxu0 %v1773
  %1893 = vmatpush.msra.mxu0 %v1770
  %1894 = vmatpush.msra.mxu0 %v1767
  %1895 = vmatpush.msra.mxu0 %v1764
  %1896 = vmatpush.msra.mxu0 %v1761
  %1897 = vmatpush.msra.mxu0 %v1758
  %1898 = vmatmul.f32.gmra.mxu0 %v1813
  %v1899 = vpop.f32.mrf.mxu0
  %v1900 = vadd.f32 0.0, %v1899
  %1901 = vmatmul.f32.gmra.mxu0 %v1816
  %v1902 = vpop.f32.mrf.mxu0
  %v1903 = vadd.f32 0.0, %v1902
  %1904 = vmatmul.f32.gmra.mxu0 %v1819
  %v1905 = vpop.f32.mrf.mxu0
  %v1906 = vadd.f32 0.0, %v1905
  %1907 = vmatmul.f32.gmra.mxu0 %v1822
  %v1908 = vpop.f32.mrf.mxu0
  %v1909 = vadd.f32 0.0, %v1908
  %1910 = vdwg.mxu0
  %1911 = vmatpush.msra.mxu0 0.0
  %1912 = vmatpush.msra.mxu0 0.0
  %1913 = vmatpush.msra.mxu0 0.0
  %1914 = vmatpush.msra.mxu0 0.0
  %1915 = vmatpush.msra.mxu0 0.0
  %1916 = vmatpush.msra.mxu0 0.0
  %1917 = vmatpush.msra.mxu0 0.0
  %1918 = vmatpush.msra.mxu0 0.0
  %1919 = vmatpush.msra.mxu0 %v1755
  %1920 = vmatpush.msra.mxu0 %v1747
  %1921 = vmatpush.msra.mxu0 %v1739
  %1922 = vmatpush.msra.mxu0 %v1731
  %1923 = vmatpush.msra.mxu0 %v1723
  %1924 = vmatpush.msra.mxu0 %v1715
  %1925 = vmatpush.msra.mxu0 %v1707
  %1926 = vmatpush.msra.mxu0 %v1699
  %1927 = vmatmul.f32.gmra.mxu0 %v1813
  %v1928 = vpop.f32.mrf.mxu0
  %v1929 = vadd.f32 0.0, %v1928
  %1930 = vmatmul.f32.gmra.mxu0 %v1816
  %v1931 = vpop.f32.mrf.mxu0
  %v1932 = vadd.f32 0.0, %v1931
  %1933 = vmatmul.f32.gmra.mxu0 %v1819
  %v1934 = vpop.f32.mrf.mxu0
  %v1935 = vadd.f32 0.0, %v1934
  %1936 = vmatmul.f32.gmra.mxu0 %v1822
  %v1937 = vpop.f32.mrf.mxu0
  %v1938 = vadd.f32 0.0, %v1937
  %1939 = vdwg.mxu0
  %v1940 = vadd.f32 %v1589, %v1842
  %v1941 = vadd.f32 %v1618, %v1871
  %v1942 = vadd.f32 %v1647, %v1900
  %v1943 = vadd.f32 %v1676, %v1929
  %v1944 = vadd.f32 %v1592, %v1845
  %v1945 = vadd.f32 %v1621, %v1874
  %v1946 = vadd.f32 %v1650, %v1903
  %v1947 = vadd.f32 %v1679, %v1932
  %v1948 = vadd.f32 %v1595, %v1848
  %v1949 = vadd.f32 %v1624, %v1877
  %v1950 = vadd.f32 %v1653, %v1906
  %v1951 = vadd.f32 %v1682, %v1935
  %v1952 = vadd.f32 %v1598, %v1851
  %v1953 = vadd.f32 %v1627, %v1880
  %v1954 = vadd.f32 %v1656, %v1909
  %v1955 = vadd.f32 %v1685, %v1938
  %v1956 = vld [vmem:[%s1] sm:$0xff]
  %v1957 = vld [vmem:[%s1 + $0x8] sm:$0xff]
  %v1958 = vld [vmem:[%s1 + $0x10] sm:$0xff]
  %v1959 = vld [vmem:[%s1 + $0x18] sm:$0xff]
  %1960 = vrot.lane.b32.xlu0 %v1242, 112
  %v1961 = vpop.permute.xlu0 %1960
  %1962 = vrot.lane.b32.xlu0 %v1243, 112
  %v1963 = vpop.permute.xlu0 %1962
  %1964 = vrot.lane.b32.xlu0 %v1244, 112
  %v1965 = vpop.permute.xlu0 %1964
  %1966 = vrot.lane.b32.xlu0 %v1245, 112
  %v1967 = vpop.permute.xlu0 %1966
  %1968 = vrot.lane.b32.xlu0 %v1246, 112
  %v1969 = vpop.permute.xlu0 %1968
  %1970 = vrot.lane.b32.xlu0 %v1247, 112
  %v1971 = vpop.permute.xlu0 %1970
  %1972 = vrot.lane.b32.xlu0 %v1248, 112
  %v1973 = vpop.permute.xlu0 %1972
  %1974 = vrot.lane.b32.xlu0 %v1249, 112
  %v1975 = vpop.permute.xlu0 %1974
  %1976 = vrot.lane.b32.xlu0 %v1250, 112
  %v1977 = vpop.permute.xlu0 %1976
  %1978 = vrot.lane.b32.xlu0 %v1251, 112
  %v1979 = vpop.permute.xlu0 %1978
  %1980 = vrot.lane.b32.xlu0 %v1252, 112
  %v1981 = vpop.permute.xlu0 %1980
  %1982 = vrot.lane.b32.xlu0 %v1253, 112
  %v1983 = vpop.permute.xlu0 %1982
  %1984 = vrot.lane.b32.xlu0 %v1254, 112
  %v1985 = vpop.permute.xlu0 %1984
  %1986 = vrot.lane.b32.xlu0 %v1255, 112
  %v1987 = vpop.permute.xlu0 %1986
  %1988 = vrot.lane.b32.xlu0 %v1256, 112
  %v1989 = vpop.permute.xlu0 %1988
  %1990 = vrot.lane.b32.xlu0 %v1257, 112
  %v1991 = vpop.permute.xlu0 %1990
  %1992 = vrot.lane.b32.xlu0 %v1258, 112
  %v1993 = vpop.permute.xlu0 %1992
  %1994 = vrot.lane.b32.xlu0 %v1259, 112
  %v1995 = vpop.permute.xlu0 %1994
  %1996 = vrot.lane.b32.xlu0 %v1260, 112
  %v1997 = vpop.permute.xlu0 %1996
  %1998 = vrot.lane.b32.xlu0 %v1261, 112
  %v1999 = vpop.permute.xlu0 %1998
  %2000 = vrot.lane.b32.xlu0 %v1262, 112
  %v2001 = vpop.permute.xlu0 %2000
  %2002 = vrot.lane.b32.xlu0 %v1263, 112
  %v2003 = vpop.permute.xlu0 %2002
  %2004 = vrot.lane.b32.xlu0 %v1264, 112
  %v2005 = vpop.permute.xlu0 %2004
  %2006 = vrot.lane.b32.xlu0 %v1265, 112
  %v2007 = vpop.permute.xlu0 %2006
  %2008 = vrot.lane.b32.xlu0 %v1266, 112
  %v2009 = vpop.permute.xlu0 %2008
  %2010 = vrot.lane.b32.xlu0 %v1267, 112
  %v2011 = vpop.permute.xlu0 %2010
  %2012 = vrot.lane.b32.xlu0 %v1268, 112
  %v2013 = vpop.permute.xlu0 %2012
  %2014 = vrot.lane.b32.xlu0 %v1269, 112
  %v2015 = vpop.permute.xlu0 %2014
  %2016 = vrot.lane.b32.xlu0 %v1270, 112
  %v2017 = vpop.permute.xlu0 %2016
  %2018 = vrot.lane.b32.xlu0 %v1271, 112
  %v2019 = vpop.permute.xlu0 %2018
  %2020 = vrot.lane.b32.xlu0 %v1272, 112
  %v2021 = vpop.permute.xlu0 %2020
  %2022 = vrot.lane.b32.xlu0 %v1273, 112
  %v2023 = vpop.permute.xlu0 %2022
  %vm2024 = vcmask 916480
  %v2025 = vsel %vm2024, %v1961, %v1963
  %v2026 = vsel %vm2024, %v1963, %v1965
  %v2027 = vsel %vm2024, %v1965, %v1967
  %v2028 = vsel %vm2024, %v1969, %v1971
  %v2029 = vsel %vm2024, %v1971, %v1973
  %v2030 = vsel %vm2024, %v1973, %v1975
  %v2031 = vsel %vm2024, %v1977, %v1979
  %v2032 = vsel %vm2024, %v1979, %v1981
  %v2033 = vsel %vm2024, %v1981, %v1983
  %v2034 = vsel %vm2024, %v1985, %v1987
  %v2035 = vsel %vm2024, %v1987, %v1989
  %v2036 = vsel %vm2024, %v1989, %v1991
  %v2037 = vsel %vm2024, %v1993, %v1995
  %v2038 = vsel %vm2024, %v1995, %v1997
  %v2039 = vsel %vm2024, %v1997, %v1999
  %v2040 = vsel %vm2024, %v2001, %v2003
  %v2041 = vsel %vm2024, %v2003, %v2005
  %v2042 = vsel %vm2024, %v2005, %v2007
  %v2043 = vsel %vm2024, %v2009, %v2011
  %v2044 = vsel %vm2024, %v2011, %v2013
  %v2045 = vsel %vm2024, %v2013, %v2015
  %v2046 = vsel %vm2024, %v2017, %v2019
  %v2047 = vsel %vm2024, %v2019, %v2021
  %v2048 = vsel %vm2024, %v2021, %v2023
  %v2082 = vsel %vm75, %v1956, 0
  %v2085 = vsel %vm75, %v1957, 0
  %v2088 = vsel %vm75, %v1958, 0
  %v2091 = vsel %vm75, %v1959, 0
  %2093 = vmatpush.msra.mxu0 0.0
  %2094 = vmatpush.msra.mxu0 0.0
  %2095 = vmatpush.msra.mxu0 0.0
  %2096 = vmatpush.msra.mxu0 0.0
  %2097 = vmatpush.msra.mxu0 0.0
  %2098 = vmatpush.msra.mxu0 0.0
  %2099 = vmatpush.msra.mxu0 0.0
  %2100 = vmatpush.msra.mxu0 0.0
  %2101 = vmatpush.msra.mxu0 %v2046
  %2102 = vmatpush.msra.mxu0 %v2043
  %2103 = vmatpush.msra.mxu0 %v2040
  %2104 = vmatpush.msra.mxu0 %v2037
  %2105 = vmatpush.msra.mxu0 %v2034
  %2106 = vmatpush.msra.mxu0 %v2031
  %2107 = vmatpush.msra.mxu0 %v2028
  %2108 = vmatpush.msra.mxu0 %v2025
  %2109 = vmatmul.f32.gmra.mxu0 %v2082
  %v2110 = vpop.f32.mrf.mxu0
  %v2111 = vadd.f32 0.0, %v2110
  %2112 = vmatmul.f32.gmra.mxu0 %v2085
  %v2113 = vpop.f32.mrf.mxu0
  %v2114 = vadd.f32 0.0, %v2113
  %2115 = vmatmul.f32.gmra.mxu0 %v2088
  %v2116 = vpop.f32.mrf.mxu0
  %v2117 = vadd.f32 0.0, %v2116
  %2118 = vmatmul.f32.gmra.mxu0 %v2091
  %v2119 = vpop.f32.mrf.mxu0
  %v2120 = vadd.f32 0.0, %v2119
  %2121 = vdwg.mxu0
  %2122 = vmatpush.msra.mxu0 0.0
  %2123 = vmatpush.msra.mxu0 0.0
  %2124 = vmatpush.msra.mxu0 0.0
  %2125 = vmatpush.msra.mxu0 0.0
  %2126 = vmatpush.msra.mxu0 0.0
  %2127 = vmatpush.msra.mxu0 0.0
  %2128 = vmatpush.msra.mxu0 0.0
  %2129 = vmatpush.msra.mxu0 0.0
  %2130 = vmatpush.msra.mxu0 %v2047
  %2131 = vmatpush.msra.mxu0 %v2044
  %2132 = vmatpush.msra.mxu0 %v2041
  %2133 = vmatpush.msra.mxu0 %v2038
  %2134 = vmatpush.msra.mxu0 %v2035
  %2135 = vmatpush.msra.mxu0 %v2032
  %2136 = vmatpush.msra.mxu0 %v2029
  %2137 = vmatpush.msra.mxu0 %v2026
  %2138 = vmatmul.f32.gmra.mxu0 %v2082
  %v2139 = vpop.f32.mrf.mxu0
  %v2140 = vadd.f32 0.0, %v2139
  %2141 = vmatmul.f32.gmra.mxu0 %v2085
  %v2142 = vpop.f32.mrf.mxu0
  %v2143 = vadd.f32 0.0, %v2142
  %2144 = vmatmul.f32.gmra.mxu0 %v2088
  %v2145 = vpop.f32.mrf.mxu0
  %v2146 = vadd.f32 0.0, %v2145
  %2147 = vmatmul.f32.gmra.mxu0 %v2091
  %v2148 = vpop.f32.mrf.mxu0
  %v2149 = vadd.f32 0.0, %v2148
  %2150 = vdwg.mxu0
  %2151 = vmatpush.msra.mxu0 0.0
  %2152 = vmatpush.msra.mxu0 0.0
  %2153 = vmatpush.msra.mxu0 0.0
  %2154 = vmatpush.msra.mxu0 0.0
  %2155 = vmatpush.msra.mxu0 0.0
  %2156 = vmatpush.msra.mxu0 0.0
  %2157 = vmatpush.msra.mxu0 0.0
  %2158 = vmatpush.msra.mxu0 0.0
  %2159 = vmatpush.msra.mxu0 %v2048
  %2160 = vmatpush.msra.mxu0 %v2045
  %2161 = vmatpush.msra.mxu0 %v2042
  %2162 = vmatpush.msra.mxu0 %v2039
  %2163 = vmatpush.msra.mxu0 %v2036
  %2164 = vmatpush.msra.mxu0 %v2033
  %2165 = vmatpush.msra.mxu0 %v2030
  %2166 = vmatpush.msra.mxu0 %v2027
  %2167 = vmatmul.f32.gmra.mxu0 %v2082
  %v2168 = vpop.f32.mrf.mxu0
  %v2169 = vadd.f32 0.0, %v2168
  %2170 = vmatmul.f32.gmra.mxu0 %v2085
  %v2171 = vpop.f32.mrf.mxu0
  %v2172 = vadd.f32 0.0, %v2171
  %2173 = vmatmul.f32.gmra.mxu0 %v2088
  %v2174 = vpop.f32.mrf.mxu0
  %v2175 = vadd.f32 0.0, %v2174
  %2176 = vmatmul.f32.gmra.mxu0 %v2091
  %v2177 = vpop.f32.mrf.mxu0
  %v2178 = vadd.f32 0.0, %v2177
  %2179 = vdwg.mxu0
  %2180 = vmatpush.msra.mxu0 0.0
  %2181 = vmatpush.msra.mxu0 0.0
  %2182 = vmatpush.msra.mxu0 0.0
  %2183 = vmatpush.msra.mxu0 0.0
  %2184 = vmatpush.msra.mxu0 0.0
  %2185 = vmatpush.msra.mxu0 0.0
  %2186 = vmatpush.msra.mxu0 0.0
  %2187 = vmatpush.msra.mxu0 0.0
  %2188 = vmatpush.msra.mxu0 %v2023
  %2189 = vmatpush.msra.mxu0 %v2015
  %2190 = vmatpush.msra.mxu0 %v2007
  %2191 = vmatpush.msra.mxu0 %v1999
  %2192 = vmatpush.msra.mxu0 %v1991
  %2193 = vmatpush.msra.mxu0 %v1983
  %2194 = vmatpush.msra.mxu0 %v1975
  %2195 = vmatpush.msra.mxu0 %v1967
  %2196 = vmatmul.f32.gmra.mxu0 %v2082
  %v2197 = vpop.f32.mrf.mxu0
  %v2198 = vadd.f32 0.0, %v2197
  %2199 = vmatmul.f32.gmra.mxu0 %v2085
  %v2200 = vpop.f32.mrf.mxu0
  %v2201 = vadd.f32 0.0, %v2200
  %2202 = vmatmul.f32.gmra.mxu0 %v2088
  %v2203 = vpop.f32.mrf.mxu0
  %v2204 = vadd.f32 0.0, %v2203
  %2205 = vmatmul.f32.gmra.mxu0 %v2091
  %v2206 = vpop.f32.mrf.mxu0
  %v2207 = vadd.f32 0.0, %v2206
  %2208 = vdwg.mxu0
  %v2209 = vadd.f32 %v1940, %v2111
  %v2210 = vadd.f32 %v1941, %v2140
  %v2211 = vadd.f32 %v1942, %v2169
  %v2212 = vadd.f32 %v1943, %v2198
  %v2213 = vadd.f32 %v1944, %v2114
  %v2214 = vadd.f32 %v1945, %v2143
  %v2215 = vadd.f32 %v1946, %v2172
  %v2216 = vadd.f32 %v1947, %v2201
  %v2217 = vadd.f32 %v1948, %v2117
  %v2218 = vadd.f32 %v1949, %v2146
  %v2219 = vadd.f32 %v1950, %v2175
  %v2220 = vadd.f32 %v1951, %v2204
  %v2221 = vadd.f32 %v1952, %v2120
  %v2222 = vadd.f32 %v1953, %v2149
  %v2223 = vadd.f32 %v1954, %v2178
  %v2224 = vadd.f32 %v1955, %v2207
  %v2225 = vadd.f32 %v2209, %v58
  %v2226 = vadd.f32 %v2210, %v58
  %v2227 = vadd.f32 %v2211, %v58
  %v2228 = vadd.f32 %v2212, %v58
  %v2229 = vadd.f32 %v2213, %v63
  %v2230 = vadd.f32 %v2214, %v63
  %v2231 = vadd.f32 %v2215, %v63
  %v2232 = vadd.f32 %v2216, %v63
  %v2233 = vadd.f32 %v2217, %v68
  %v2234 = vadd.f32 %v2218, %v68
  %v2235 = vadd.f32 %v2219, %v68
  %v2236 = vadd.f32 %v2220, %v68
  %v2237 = vadd.f32 %v2221, %v73
  %v2238 = vadd.f32 %v2222, %v73
  %v2239 = vadd.f32 %v2223, %v73
  %v2240 = vadd.f32 %v2224, %v73
  %v2241 = vmax.f32 %v2225, 0.0
  %v2242 = vmax.f32 %v2226, 0.0
  %v2243 = vmax.f32 %v2227, 0.0
  %v2244 = vmax.f32 %v2228, 0.0
  %v2245 = vmax.f32 %v2229, 0.0
  %v2246 = vmax.f32 %v2230, 0.0
  %v2247 = vmax.f32 %v2231, 0.0
  %v2248 = vmax.f32 %v2232, 0.0
  %v2249 = vmax.f32 %v2233, 0.0
  %v2250 = vmax.f32 %v2234, 0.0
  %v2251 = vmax.f32 %v2235, 0.0
  %v2252 = vmax.f32 %v2236, 0.0
  %v2253 = vmax.f32 %v2237, 0.0
  %v2254 = vmax.f32 %v2238, 0.0
  %v2255 = vmax.f32 %v2239, 0.0
  %v2256 = vmax.f32 %v2240, 0.0
  %s2257 = scalar_lea.vmem %s3, 384
  %2258 = vst [vmem:[%s2257] sm:$0xff] %v2241
  %2259 = vst [vmem:[%s2257 + $0x8] sm:$0xff] %v2242
  %2260 = vst [vmem:[%s2257 + $0x10] sm:$0xff] %v2243
  %2261 = vst.msk [vmem:[%s2257 + $0x18] sm:$0xff] %vm223, %v2244
  %2262 = vst [vmem:[%s2257 + $0x20] sm:$0xff] %v2245
  %2263 = vst [vmem:[%s2257 + $0x28] sm:$0xff] %v2246
  %2264 = vst [vmem:[%s2257 + $0x30] sm:$0xff] %v2247
  %2265 = vst.msk [vmem:[%s2257 + $0x38] sm:$0xff] %vm223, %v2248
  %2266 = vst [vmem:[%s2257 + $0x40] sm:$0xff] %v2249
  %2267 = vst [vmem:[%s2257 + $0x48] sm:$0xff] %v2250
  %2268 = vst [vmem:[%s2257 + $0x50] sm:$0xff] %v2251
  %2269 = vst.msk [vmem:[%s2257 + $0x58] sm:$0xff] %vm223, %v2252
  %2270 = vst [vmem:[%s2257 + $0x60] sm:$0xff] %v2253
  %2271 = vst [vmem:[%s2257 + $0x68] sm:$0xff] %v2254
  %2272 = vst [vmem:[%s2257 + $0x70] sm:$0xff] %v2255
  %2273 = vst.msk [vmem:[%s2257 + $0x78] sm:$0xff] %vm223, %v2256
  // Predicated region
  $region14: #{decoder_forward.6} parent=0 // pred_check
    _
  $region15: #{decoder_forward.6} parent=0 // pred_check_branch
    %2275 = sbr.rel (0) target = $region17
  $region16: #{decoder_forward.6} parent=0 // pred_region
    _
  $region17: #{decoder_forward.6} parent=0 // pred_fallthru
    _
  // Predicated region
  $region18: #{decoder_forward.6} parent=0 // pred_check
    _
  $region19: #{decoder_forward.6} parent=0 // pred_check_branch
    %2277 = sbr.rel (0) target = $region21
  $region20: #{decoder_forward.6} parent=0 // pred_region
    _
  $region21: #{decoder_forward.6} parent=0 // pred_fallthru
    _

// kernel: decoder_forward.7
$region0: #{decoder_forward.7}
  #allocation0 [shape = 'u32[]', space=smem, size = 0x4, offset = 0x4, fixed_abs, tag = 'smem constant byte address 0x4 - core index']
  #allocation1 [shape = 'u32[72,128]{1,0:T(1,128)}', space=vmem, size = 0x9000, scoped, tag = 'internal scratch']
  #allocation2 [shape = 'f32[1,1]{1,0:T(1,128)S(1)}', space=vmem, size = 0x200, scoped, tag = 'scoped memory for decoder_forward.7']
  %s0 = inlined_call_operand.vmem [shape: f32[32,1862], index: 0, kind: input, shape index: {}]
  %s1 = inlined_call_operand.vmem [shape: f32[3,3,1,32], index: 1, kind: input, shape index: {}]
  %s2 = inlined_call_operand.<no memory space> [shape: f32[1,1], index: 2, kind: input, shape index: {}]
  %s3 = inlined_call_operand.vmem [shape: f32[1,1800], index: 3, kind: output, shape index: {}]
  %s4 = sld [smem:[#allocation0]]
  $region22: #{decoder_forward.7} parent=0
    _
  %s6 = ssub.s32 1, %s4
  %s7 = scalar_select 0, %s6, %s4
  %v8 = vstv %s2
  %9 = vst [vmem:[#allocation2] sm:$0x1] %v8
  // Predicated region
  $region2: #{decoder_forward.7} parent=0 // pred_check
    _
  $region3: #{decoder_forward.7} parent=0 // pred_check_branch
    %11 = sbr.rel (0) target = $region5
  $region4: #{decoder_forward.7} parent=0 // pred_region
    _
  $region5: #{decoder_forward.7} parent=0 // pred_fallthru
    _
  // Predicated region
  $region6: #{decoder_forward.7} parent=0 // pred_check
    _
  $region7: #{decoder_forward.7} parent=0 // pred_check_branch
    %13 = sbr.rel (0) target = $region9
  $region8: #{decoder_forward.7} parent=0 // pred_region
    _
  $region9: #{decoder_forward.7} parent=0 // pred_fallthru
    _
  // Predicated region
  $region10: #{decoder_forward.7} parent=0 // pred_check
    _
  $region11: #{decoder_forward.7} parent=0 // pred_check_branch
    %15 = sbr.rel (0) target = $region13
  $region12: #{decoder_forward.7} parent=0 // pred_region
    _
  $region13: #{decoder_forward.7} parent=0 // pred_fallthru
    _
  %v16 = vld [vmem:[#allocation2] sm:$0x1]
  %v17 = vld [vmem:[%s1] sm:$0x1]
  %v18 = vld [vmem:[%s0] sm:$0xff]
  %v19 = vld [vmem:[%s0 + $0x8] sm:$0xff]
  %v20 = vld [vmem:[%s0 + $0x10] sm:$0xff]
  %v21 = vld [vmem:[%s0 + $0x18] sm:$0xff]
  %v22 = vld [vmem:[%s0 + $0x20] sm:$0xff]
  %v23 = vld [vmem:[%s0 + $0x28] sm:$0xff]
  %v24 = vld [vmem:[%s0 + $0x30] sm:$0xff]
  %v25 = vld [vmem:[%s0 + $0x38] sm:$0xff]
  %v26 = vld [vmem:[%s0 + $0x40] sm:$0xff]
  %v27 = vld [vmem:[%s0 + $0x48] sm:$0xff]
  %v28 = vld [vmem:[%s0 + $0x50] sm:$0xff]
  %v29 = vld [vmem:[%s0 + $0x58] sm:$0xff]
  %v30 = vld [vmem:[%s0 + $0x60] sm:$0xff]
  %v31 = vld [vmem:[%s0 + $0x68] sm:$0xff]
  %v32 = vld [vmem:[%s0 + $0x70] sm:$0xff]
  %v33 = vld [vmem:[%s0 + $0x78] sm:$0xff]
  %v34 = vld [vmem:[%s0 + $0x80] sm:$0xff]
  %v35 = vld [vmem:[%s0 + $0x88] sm:$0xff]
  %v36 = vld [vmem:[%s0 + $0x90] sm:$0xff]
  %v37 = vld [vmem:[%s0 + $0x98] sm:$0xff]
  %v38 = vld [vmem:[%s0 + $0xa0] sm:$0xff]
  %v39 = vld [vmem:[%s0 + $0xa8] sm:$0xff]
  %v40 = vld [vmem:[%s0 + $0xb0] sm:$0xff]
  %v41 = vld [vmem:[%s0 + $0xb8] sm:$0xff]
  %v42 = vld [vmem:[%s0 + $0xc0] sm:$0xff]
  %v43 = vld [vmem:[%s0 + $0xc8] sm:$0xff]
  %v44 = vld [vmem:[%s0 + $0xd0] sm:$0xff]
  %v45 = vld [vmem:[%s0 + $0xd8] sm:$0xff]
  %v46 = vld [vmem:[%s0 + $0xe0] sm:$0xff]
  %v47 = vld [vmem:[%s0 + $0xe8] sm:$0xff]
  %v48 = vld [vmem:[%s0 + $0xf0] sm:$0xff]
  %v49 = vld [vmem:[%s0 + $0xf8] sm:$0xff]
  %v50 = vld [vmem:[%s0 + $0x100] sm:$0xff]
  %v51 = vld [vmem:[%s0 + $0x108] sm:$0xff]
  %v52 = vld [vmem:[%s0 + $0x110] sm:$0xff]
  %v53 = vld [vmem:[%s0 + $0x118] sm:$0xff]
  %v54 = vld [vmem:[%s0 + $0x120] sm:$0xff]
  %v55 = vld [vmem:[%s0 + $0x128] sm:$0xff]
  %v56 = vld [vmem:[%s0 + $0x130] sm:$0xff]
  %v57 = vld [vmem:[%s0 + $0x138] sm:$0xff]
  %v58 = vld [vmem:[%s0 + $0x140] sm:$0xff]
  %v59 = vld [vmem:[%s0 + $0x148] sm:$0xff]
  %v60 = vld [vmem:[%s0 + $0x150] sm:$0xff]
  %v61 = vld [vmem:[%s0 + $0x158] sm:$0xff]
  %v62 = vld [vmem:[%s0 + $0x160] sm:$0xff]
  %v63 = vld [vmem:[%s0 + $0x168] sm:$0xff]
  %v64 = vld [vmem:[%s0 + $0x170] sm:$0xff]
  %v65 = vld [vmem:[%s0 + $0x178] sm:$0xff]
  %v66 = vld [vmem:[%s0 + $0x180] sm:$0xff]
  %v67 = vld [vmem:[%s0 + $0x188] sm:$0xff]
  %v68 = vld [vmem:[%s0 + $0x190] sm:$0xff]
  %v69 = vld [vmem:[%s0 + $0x198] sm:$0xff]
  %v70 = vld [vmem:[%s0 + $0x1a0] sm:$0xff]
  %v71 = vld [vmem:[%s0 + $0x1a8] sm:$0xff]
  %v72 = vld [vmem:[%s0 + $0x1b0] sm:$0xff]
  %v73 = vld [vmem:[%s0 + $0x1b8] sm:$0xff]
  %v74 = vld [vmem:[%s0 + $0x1c0] sm:$0xff]
  %v75 = vld [vmem:[%s0 + $0x1c8] sm:$0xff]
  %v76 = vld [vmem:[%s0 + $0x1d0] sm:$0xff]
  %v77 = vld [vmem:[%s0 + $0x1d8] sm:$0xff]
  %vm78 = vcmask 261120
  %v80 = vsel %vm78, %v17, 0
  %82 = vmatpush.msra.mxu0 0.0
  %83 = vmatpush.msra.mxu0 0.0
  %84 = vmatpush.msra.mxu0 0.0
  %85 = vmatpush.msra.mxu0 0.0
  %86 = vmatpush.msra.mxu0 0.0
  %87 = vmatpush.msra.mxu0 0.0
  %88 = vmatpush.msra.mxu0 0.0
  %89 = vmatpush.msra.mxu0 0.0
  %90 = vmatpush.msra.mxu0 0.0
  %91 = vmatpush.msra.mxu0 0.0
  %92 = vmatpush.msra.mxu0 0.0
  %93 = vmatpush.msra.mxu0 0.0
  %94 = vmatpush.msra.mxu0 %v63
  %95 = vmatpush.msra.mxu0 %v48
  %96 = vmatpush.msra.mxu0 %v33
  %97 = vmatpush.msra.mxu0 %v18
  %98 = vmatmul.f32.gmra.mxu0 %v80
  %v99 = vpop.f32.mrf.mxu0
  %v100 = vadd.f32 0.0, %v99
  %101 = vdwg.mxu0
  %102 = vmatpush.msra.mxu0 0.0
  %103 = vmatpush.msra.mxu0 0.0
  %104 = vmatpush.msra.mxu0 0.0
  %105 = vmatpush.msra.mxu0 0.0
  %106 = vmatpush.msra.mxu0 0.0
  %107 = vmatpush.msra.mxu0 0.0
  %108 = vmatpush.msra.mxu0 0.0
  %109 = vmatpush.msra.mxu0 0.0
  %110 = vmatpush.msra.mxu0 0.0
  %111 = vmatpush.msra.mxu0 0.0
  %112 = vmatpush.msra.mxu0 0.0
  %113 = vmatpush.msra.mxu0 0.0
  %114 = vmatpush.msra.mxu0 %v64
  %115 = vmatpush.msra.mxu0 %v49
  %116 = vmatpush.msra.mxu0 %v34
  %117 = vmatpush.msra.mxu0 %v19
  %118 = vmatmul.f32.gmra.mxu0 %v80
  %v119 = vpop.f32.mrf.mxu0
  %v120 = vadd.f32 0.0, %v119
  %121 = vdwg.mxu0
  %122 = vmatpush.msra.mxu0 0.0
  %123 = vmatpush.msra.mxu0 0.0
  %124 = vmatpush.msra.mxu0 0.0
  %125 = vmatpush.msra.mxu0 0.0
  %126 = vmatpush.msra.mxu0 0.0
  %127 = vmatpush.msra.mxu0 0.0
  %128 = vmatpush.msra.mxu0 0.0
  %129 = vmatpush.msra.mxu0 0.0
  %130 = vmatpush.msra.mxu0 0.0
  %131 = vmatpush.msra.mxu0 0.0
  %132 = vmatpush.msra.mxu0 0.0
  %133 = vmatpush.msra.mxu0 0.0
  %134 = vmatpush.msra.mxu0 %v65
  %135 = vmatpush.msra.mxu0 %v50
  %136 = vmatpush.msra.mxu0 %v35
  %137 = vmatpush.msra.mxu0 %v20
  %138 = vmatmul.f32.gmra.mxu0 %v80
  %v139 = vpop.f32.mrf.mxu0
  %v140 = vadd.f32 0.0, %v139
  %141 = vdwg.mxu0
  %142 = vmatpush.msra.mxu0 0.0
  %143 = vmatpush.msra.mxu0 0.0
  %144 = vmatpush.msra.mxu0 0.0
  %145 = vmatpush.msra.mxu0 0.0
  %146 = vmatpush.msra.mxu0 0.0
  %147 = vmatpush.msra.mxu0 0.0
  %148 = vmatpush.msra.mxu0 0.0
  %149 = vmatpush.msra.mxu0 0.0
  %150 = vmatpush.msra.mxu0 0.0
  %151 = vmatpush.msra.mxu0 0.0
  %152 = vmatpush.msra.mxu0 0.0
  %153 = vmatpush.msra.mxu0 0.0
  %154 = vmatpush.msra.mxu0 %v66
  %155 = vmatpush.msra.mxu0 %v51
  %156 = vmatpush.msra.mxu0 %v36
  %157 = vmatpush.msra.mxu0 %v21
  %158 = vmatmul.f32.gmra.mxu0 %v80
  %v159 = vpop.f32.mrf.mxu0
  %v160 = vadd.f32 0.0, %v159
  %161 = vdwg.mxu0
  %162 = vmatpush.msra.mxu0 0.0
  %163 = vmatpush.msra.mxu0 0.0
  %164 = vmatpush.msra.mxu0 0.0
  %165 = vmatpush.msra.mxu0 0.0
  %166 = vmatpush.msra.mxu0 0.0
  %167 = vmatpush.msra.mxu0 0.0
  %168 = vmatpush.msra.mxu0 0.0
  %169 = vmatpush.msra.mxu0 0.0
  %170 = vmatpush.msra.mxu0 0.0
  %171 = vmatpush.msra.mxu0 0.0
  %172 = vmatpush.msra.mxu0 0.0
  %173 = vmatpush.msra.mxu0 0.0
  %174 = vmatpush.msra.mxu0 %v67
  %175 = vmatpush.msra.mxu0 %v52
  %176 = vmatpush.msra.mxu0 %v37
  %177 = vmatpush.msra.mxu0 %v22
  %178 = vmatmul.f32.gmra.mxu0 %v80
  %v179 = vpop.f32.mrf.mxu0
  %v180 = vadd.f32 0.0, %v179
  %181 = vdwg.mxu0
  %182 = vmatpush.msra.mxu0 0.0
  %183 = vmatpush.msra.mxu0 0.0
  %184 = vmatpush.msra.mxu0 0.0
  %185 = vmatpush.msra.mxu0 0.0
  %186 = vmatpush.msra.mxu0 0.0
  %187 = vmatpush.msra.mxu0 0.0
  %188 = vmatpush.msra.mxu0 0.0
  %189 = vmatpush.msra.mxu0 0.0
  %190 = vmatpush.msra.mxu0 0.0
  %191 = vmatpush.msra.mxu0 0.0
  %192 = vmatpush.msra.mxu0 0.0
  %193 = vmatpush.msra.mxu0 0.0
  %194 = vmatpush.msra.mxu0 %v68
  %195 = vmatpush.msra.mxu0 %v53
  %196 = vmatpush.msra.mxu0 %v38
  %197 = vmatpush.msra.mxu0 %v23
  %198 = vmatmul.f32.gmra.mxu0 %v80
  %v199 = vpop.f32.mrf.mxu0
  %v200 = vadd.f32 0.0, %v199
  %201 = vdwg.mxu0
  %202 = vmatpush.msra.mxu0 0.0
  %203 = vmatpush.msra.mxu0 0.0
  %204 = vmatpush.msra.mxu0 0.0
  %205 = vmatpush.msra.mxu0 0.0
  %206 = vmatpush.msra.mxu0 0.0
  %207 = vmatpush.msra.mxu0 0.0
  %208 = vmatpush.msra.mxu0 0.0
  %209 = vmatpush.msra.mxu0 0.0
  %210 = vmatpush.msra.mxu0 0.0
  %211 = vmatpush.msra.mxu0 0.0
  %212 = vmatpush.msra.mxu0 0.0
  %213 = vmatpush.msra.mxu0 0.0
  %214 = vmatpush.msra.mxu0 %v69
  %215 = vmatpush.msra.mxu0 %v54
  %216 = vmatpush.msra.mxu0 %v39
  %217 = vmatpush.msra.mxu0 %v24
  %218 = vmatmul.f32.gmra.mxu0 %v80
  %v219 = vpop.f32.mrf.mxu0
  %v220 = vadd.f32 0.0, %v219
  %221 = vdwg.mxu0
  %222 = vmatpush.msra.mxu0 0.0
  %223 = vmatpush.msra.mxu0 0.0
  %224 = vmatpush.msra.mxu0 0.0
  %225 = vmatpush.msra.mxu0 0.0
  %226 = vmatpush.msra.mxu0 0.0
  %227 = vmatpush.msra.mxu0 0.0
  %228 = vmatpush.msra.mxu0 0.0
  %229 = vmatpush.msra.mxu0 0.0
  %230 = vmatpush.msra.mxu0 0.0
  %231 = vmatpush.msra.mxu0 0.0
  %232 = vmatpush.msra.mxu0 0.0
  %233 = vmatpush.msra.mxu0 0.0
  %234 = vmatpush.msra.mxu0 %v70
  %235 = vmatpush.msra.mxu0 %v55
  %236 = vmatpush.msra.mxu0 %v40
  %237 = vmatpush.msra.mxu0 %v25
  %238 = vmatmul.f32.gmra.mxu0 %v80
  %v239 = vpop.f32.mrf.mxu0
  %v240 = vadd.f32 0.0, %v239
  %241 = vdwg.mxu0
  %242 = vmatpush.msra.mxu0 0.0
  %243 = vmatpush.msra.mxu0 0.0
  %244 = vmatpush.msra.mxu0 0.0
  %245 = vmatpush.msra.mxu0 0.0
  %246 = vmatpush.msra.mxu0 0.0
  %247 = vmatpush.msra.mxu0 0.0
  %248 = vmatpush.msra.mxu0 0.0
  %249 = vmatpush.msra.mxu0 0.0
  %250 = vmatpush.msra.mxu0 0.0
  %251 = vmatpush.msra.mxu0 0.0
  %252 = vmatpush.msra.mxu0 0.0
  %253 = vmatpush.msra.mxu0 0.0
  %254 = vmatpush.msra.mxu0 %v71
  %255 = vmatpush.msra.mxu0 %v56
  %256 = vmatpush.msra.mxu0 %v41
  %257 = vmatpush.msra.mxu0 %v26
  %258 = vmatmul.f32.gmra.mxu0 %v80
  %v259 = vpop.f32.mrf.mxu0
  %v260 = vadd.f32 0.0, %v259
  %261 = vdwg.mxu0
  %262 = vmatpush.msra.mxu0 0.0
  %263 = vmatpush.msra.mxu0 0.0
  %264 = vmatpush.msra.mxu0 0.0
  %265 = vmatpush.msra.mxu0 0.0
  %266 = vmatpush.msra.mxu0 0.0
  %267 = vmatpush.msra.mxu0 0.0
  %268 = vmatpush.msra.mxu0 0.0
  %269 = vmatpush.msra.mxu0 0.0
  %270 = vmatpush.msra.mxu0 0.0
  %271 = vmatpush.msra.mxu0 0.0
  %272 = vmatpush.msra.mxu0 0.0
  %273 = vmatpush.msra.mxu0 0.0
  %274 = vmatpush.msra.mxu0 %v72
  %275 = vmatpush.msra.mxu0 %v57
  %276 = vmatpush.msra.mxu0 %v42
  %277 = vmatpush.msra.mxu0 %v27
  %278 = vmatmul.f32.gmra.mxu0 %v80
  %v279 = vpop.f32.mrf.mxu0
  %v280 = vadd.f32 0.0, %v279
  %281 = vdwg.mxu0
  %282 = vmatpush.msra.mxu0 0.0
  %283 = vmatpush.msra.mxu0 0.0
  %284 = vmatpush.msra.mxu0 0.0
  %285 = vmatpush.msra.mxu0 0.0
  %286 = vmatpush.msra.mxu0 0.0
  %287 = vmatpush.msra.mxu0 0.0
  %288 = vmatpush.msra.mxu0 0.0
  %289 = vmatpush.msra.mxu0 0.0
  %290 = vmatpush.msra.mxu0 0.0
  %291 = vmatpush.msra.mxu0 0.0
  %292 = vmatpush.msra.mxu0 0.0
  %293 = vmatpush.msra.mxu0 0.0
  %294 = vmatpush.msra.mxu0 %v73
  %295 = vmatpush.msra.mxu0 %v58
  %296 = vmatpush.msra.mxu0 %v43
  %297 = vmatpush.msra.mxu0 %v28
  %298 = vmatmul.f32.gmra.mxu0 %v80
  %v299 = vpop.f32.mrf.mxu0
  %v300 = vadd.f32 0.0, %v299
  %301 = vdwg.mxu0
  %302 = vmatpush.msra.mxu0 0.0
  %303 = vmatpush.msra.mxu0 0.0
  %304 = vmatpush.msra.mxu0 0.0
  %305 = vmatpush.msra.mxu0 0.0
  %306 = vmatpush.msra.mxu0 0.0
  %307 = vmatpush.msra.mxu0 0.0
  %308 = vmatpush.msra.mxu0 0.0
  %309 = vmatpush.msra.mxu0 0.0
  %310 = vmatpush.msra.mxu0 0.0
  %311 = vmatpush.msra.mxu0 0.0
  %312 = vmatpush.msra.mxu0 0.0
  %313 = vmatpush.msra.mxu0 0.0
  %314 = vmatpush.msra.mxu0 %v74
  %315 = vmatpush.msra.mxu0 %v59
  %316 = vmatpush.msra.mxu0 %v44
  %317 = vmatpush.msra.mxu0 %v29
  %318 = vmatmul.f32.gmra.mxu0 %v80
  %v319 = vpop.f32.mrf.mxu0
  %v320 = vadd.f32 0.0, %v319
  %321 = vdwg.mxu0
  %322 = vmatpush.msra.mxu0 0.0
  %323 = vmatpush.msra.mxu0 0.0
  %324 = vmatpush.msra.mxu0 0.0
  %325 = vmatpush.msra.mxu0 0.0
  %326 = vmatpush.msra.mxu0 0.0
  %327 = vmatpush.msra.mxu0 0.0
  %328 = vmatpush.msra.mxu0 0.0
  %329 = vmatpush.msra.mxu0 0.0
  %330 = vmatpush.msra.mxu0 0.0
  %331 = vmatpush.msra.mxu0 0.0
  %332 = vmatpush.msra.mxu0 0.0
  %333 = vmatpush.msra.mxu0 0.0
  %334 = vmatpush.msra.mxu0 %v75
  %335 = vmatpush.msra.mxu0 %v60
  %336 = vmatpush.msra.mxu0 %v45
  %337 = vmatpush.msra.mxu0 %v30
  %338 = vmatmul.f32.gmra.mxu0 %v80
  %v339 = vpop.f32.mrf.mxu0
  %v340 = vadd.f32 0.0, %v339
  %341 = vdwg.mxu0
  %342 = vmatpush.msra.mxu0 0.0
  %343 = vmatpush.msra.mxu0 0.0
  %344 = vmatpush.msra.mxu0 0.0
  %345 = vmatpush.msra.mxu0 0.0
  %346 = vmatpush.msra.mxu0 0.0
  %347 = vmatpush.msra.mxu0 0.0
  %348 = vmatpush.msra.mxu0 0.0
  %349 = vmatpush.msra.mxu0 0.0
  %350 = vmatpush.msra.mxu0 0.0
  %351 = vmatpush.msra.mxu0 0.0
  %352 = vmatpush.msra.mxu0 0.0
  %353 = vmatpush.msra.mxu0 0.0
  %354 = vmatpush.msra.mxu0 %v76
  %355 = vmatpush.msra.mxu0 %v61
  %356 = vmatpush.msra.mxu0 %v46
  %357 = vmatpush.msra.mxu0 %v31
  %358 = vmatmul.f32.gmra.mxu0 %v80
  %v359 = vpop.f32.mrf.mxu0
  %v360 = vadd.f32 0.0, %v359
  %361 = vdwg.mxu0
  %362 = vmatpush.msra.mxu0 0.0
  %363 = vmatpush.msra.mxu0 0.0
  %364 = vmatpush.msra.mxu0 0.0
  %365 = vmatpush.msra.mxu0 0.0
  %366 = vmatpush.msra.mxu0 0.0
  %367 = vmatpush.msra.mxu0 0.0
  %368 = vmatpush.msra.mxu0 0.0
  %369 = vmatpush.msra.mxu0 0.0
  %370 = vmatpush.msra.mxu0 0.0
  %371 = vmatpush.msra.mxu0 0.0
  %372 = vmatpush.msra.mxu0 0.0
  %373 = vmatpush.msra.mxu0 0.0
  %374 = vmatpush.msra.mxu0 %v77
  %375 = vmatpush.msra.mxu0 %v62
  %376 = vmatpush.msra.mxu0 %v47
  %377 = vmatpush.msra.mxu0 %v32
  %378 = vmatmul.f32.gmra.mxu0 %v80
  %v379 = vpop.f32.mrf.mxu0
  %v380 = vadd.f32 0.0, %v379
  %381 = vdwg.mxu0
  %383 = vset.pattern.permute.xlu0 0
  %384 = vperm.xlu0 %383, %v16
  %v385 = vpop.permute.xlu0 %384
  %v387 = vperm.slane %v385, 0
  %v388 = vadd.f32 %v387, %v100
  %v389 = vadd.f32 %v387, %v120
  %v390 = vadd.f32 %v387, %v140
  %v391 = vadd.f32 %v387, %v160
  %v392 = vadd.f32 %v387, %v180
  %v393 = vadd.f32 %v387, %v200
  %v394 = vadd.f32 %v387, %v220
  %v395 = vadd.f32 %v387, %v240
  %v396 = vadd.f32 %v387, %v260
  %v397 = vadd.f32 %v387, %v280
  %v398 = vadd.f32 %v387, %v300
  %v399 = vadd.f32 %v387, %v320
  %v400 = vadd.f32 %v387, %v340
  %v401 = vadd.f32 %v387, %v360
  %v402 = vadd.f32 %v387, %v380
  %s403 = scalar_lea.vmem %s1, 1
  %v404 = vld [vmem:[%s403] sm:$0x1]
  %465 = vrot.lane.b32.xlu0 %v18, 127
  %v466 = vpop.permute.xlu0 %465
  %467 = vrot.lane.b32.xlu0 %v19, 127
  %v468 = vpop.permute.xlu0 %467
  %469 = vrot.lane.b32.xlu0 %v20, 127
  %v470 = vpop.permute.xlu0 %469
  %471 = vrot.lane.b32.xlu0 %v21, 127
  %v472 = vpop.permute.xlu0 %471
  %473 = vrot.lane.b32.xlu0 %v22, 127
  %v474 = vpop.permute.xlu0 %473
  %475 = vrot.lane.b32.xlu0 %v23, 127
  %v476 = vpop.permute.xlu0 %475
  %477 = vrot.lane.b32.xlu0 %v24, 127
  %v478 = vpop.permute.xlu0 %477
  %479 = vrot.lane.b32.xlu0 %v25, 127
  %v480 = vpop.permute.xlu0 %479
  %481 = vrot.lane.b32.xlu0 %v26, 127
  %v482 = vpop.permute.xlu0 %481
  %483 = vrot.lane.b32.xlu0 %v27, 127
  %v484 = vpop.permute.xlu0 %483
  %485 = vrot.lane.b32.xlu0 %v28, 127
  %v486 = vpop.permute.xlu0 %485
  %487 = vrot.lane.b32.xlu0 %v29, 127
  %v488 = vpop.permute.xlu0 %487
  %489 = vrot.lane.b32.xlu0 %v30, 127
  %v490 = vpop.permute.xlu0 %489
  %491 = vrot.lane.b32.xlu0 %v31, 127
  %v492 = vpop.permute.xlu0 %491
  %493 = vrot.lane.b32.xlu0 %v32, 127
  %v494 = vpop.permute.xlu0 %493
  %495 = vrot.lane.b32.xlu0 %v33, 127
  %v496 = vpop.permute.xlu0 %495
  %497 = vrot.lane.b32.xlu0 %v34, 127
  %v498 = vpop.permute.xlu0 %497
  %499 = vrot.lane.b32.xlu0 %v35, 127
  %v500 = vpop.permute.xlu0 %499
  %501 = vrot.lane.b32.xlu0 %v36, 127
  %v502 = vpop.permute.xlu0 %501
  %503 = vrot.lane.b32.xlu0 %v37, 127
  %v504 = vpop.permute.xlu0 %503
  %505 = vrot.lane.b32.xlu0 %v38, 127
  %v506 = vpop.permute.xlu0 %505
  %507 = vrot.lane.b32.xlu0 %v39, 127
  %v508 = vpop.permute.xlu0 %507
  %509 = vrot.lane.b32.xlu0 %v40, 127
  %v510 = vpop.permute.xlu0 %509
  %511 = vrot.lane.b32.xlu0 %v41, 127
  %v512 = vpop.permute.xlu0 %511
  %513 = vrot.lane.b32.xlu0 %v42, 127
  %v514 = vpop.permute.xlu0 %513
  %515 = vrot.lane.b32.xlu0 %v43, 127
  %v516 = vpop.permute.xlu0 %515
  %517 = vrot.lane.b32.xlu0 %v44, 127
  %v518 = vpop.permute.xlu0 %517
  %519 = vrot.lane.b32.xlu0 %v45, 127
  %v520 = vpop.permute.xlu0 %519
  %521 = vrot.lane.b32.xlu0 %v46, 127
  %v522 = vpop.permute.xlu0 %521
  %523 = vrot.lane.b32.xlu0 %v47, 127
  %v524 = vpop.permute.xlu0 %523
  %525 = vrot.lane.b32.xlu0 %v48, 127
  %v526 = vpop.permute.xlu0 %525
  %527 = vrot.lane.b32.xlu0 %v49, 127
  %v528 = vpop.permute.xlu0 %527
  %529 = vrot.lane.b32.xlu0 %v50, 127
  %v530 = vpop.permute.xlu0 %529
  %531 = vrot.lane.b32.xlu0 %v51, 127
  %v532 = vpop.permute.xlu0 %531
  %533 = vrot.lane.b32.xlu0 %v52, 127
  %v534 = vpop.permute.xlu0 %533
  %535 = vrot.lane.b32.xlu0 %v53, 127
  %v536 = vpop.permute.xlu0 %535
  %537 = vrot.lane.b32.xlu0 %v54, 127
  %v538 = vpop.permute.xlu0 %537
  %539 = vrot.lane.b32.xlu0 %v55, 127
  %v540 = vpop.permute.xlu0 %539
  %541 = vrot.lane.b32.xlu0 %v56, 127
  %v542 = vpop.permute.xlu0 %541
  %543 = vrot.lane.b32.xlu0 %v57, 127
  %v544 = vpop.permute.xlu0 %543
  %545 = vrot.lane.b32.xlu0 %v58, 127
  %v546 = vpop.permute.xlu0 %545
  %547 = vrot.lane.b32.xlu0 %v59, 127
  %v548 = vpop.permute.xlu0 %547
  %549 = vrot.lane.b32.xlu0 %v60, 127
  %v550 = vpop.permute.xlu0 %549
  %551 = vrot.lane.b32.xlu0 %v61, 127
  %v552 = vpop.permute.xlu0 %551
  %553 = vrot.lane.b32.xlu0 %v62, 127
  %v554 = vpop.permute.xlu0 %553
  %555 = vrot.lane.b32.xlu0 %v63, 127
  %v556 = vpop.permute.xlu0 %555
  %557 = vrot.lane.b32.xlu0 %v64, 127
  %v558 = vpop.permute.xlu0 %557
  %559 = vrot.lane.b32.xlu0 %v65, 127
  %v560 = vpop.permute.xlu0 %559
  %561 = vrot.lane.b32.xlu0 %v66, 127
  %v562 = vpop.permute.xlu0 %561
  %563 = vrot.lane.b32.xlu0 %v67, 127
  %v564 = vpop.permute.xlu0 %563
  %565 = vrot.lane.b32.xlu0 %v68, 127
  %v566 = vpop.permute.xlu0 %565
  %567 = vrot.lane.b32.xlu0 %v69, 127
  %v568 = vpop.permute.xlu0 %567
  %569 = vrot.lane.b32.xlu0 %v70, 127
  %v570 = vpop.permute.xlu0 %569
  %571 = vrot.lane.b32.xlu0 %v71, 127
  %v572 = vpop.permute.xlu0 %571
  %573 = vrot.lane.b32.xlu0 %v72, 127
  %v574 = vpop.permute.xlu0 %573
  %575 = vrot.lane.b32.xlu0 %v73, 127
  %v576 = vpop.permute.xlu0 %575
  %577 = vrot.lane.b32.xlu0 %v74, 127
  %v578 = vpop.permute.xlu0 %577
  %579 = vrot.lane.b32.xlu0 %v75, 127
  %v580 = vpop.permute.xlu0 %579
  %581 = vrot.lane.b32.xlu0 %v76, 127
  %v582 = vpop.permute.xlu0 %581
  %583 = vrot.lane.b32.xlu0 %v77, 127
  %v584 = vpop.permute.xlu0 %583
  %vm585 = vcmask 1039360
  %v586 = vsel %vm585, %v466, %v468
  %v587 = vsel %vm585, %v468, %v470
  %v588 = vsel %vm585, %v470, %v472
  %v589 = vsel %vm585, %v472, %v474
  %v590 = vsel %vm585, %v474, %v476
  %v591 = vsel %vm585, %v476, %v478
  %v592 = vsel %vm585, %v478, %v480
  %v593 = vsel %vm585, %v480, %v482
  %v594 = vsel %vm585, %v482, %v484
  %v595 = vsel %vm585, %v484, %v486
  %v596 = vsel %vm585, %v486, %v488
  %v597 = vsel %vm585, %v488, %v490
  %v598 = vsel %vm585, %v490, %v492
  %v599 = vsel %vm585, %v492, %v494
  %v600 = vsel %vm585, %v496, %v498
  %v601 = vsel %vm585, %v498, %v500
  %v602 = vsel %vm585, %v500, %v502
  %v603 = vsel %vm585, %v502, %v504
  %v604 = vsel %vm585, %v504, %v506
  %v605 = vsel %vm585, %v506, %v508
  %v606 = vsel %vm585, %v508, %v510
  %v607 = vsel %vm585, %v510, %v512
  %v608 = vsel %vm585, %v512, %v514
  %v609 = vsel %vm585, %v514, %v516
  %v610 = vsel %vm585, %v516, %v518
  %v611 = vsel %vm585, %v518, %v520
  %v612 = vsel %vm585, %v520, %v522
  %v613 = vsel %vm585, %v522, %v524
  %v614 = vsel %vm585, %v526, %v528
  %v615 = vsel %vm585, %v528, %v530
  %v616 = vsel %vm585, %v530, %v532
  %v617 = vsel %vm585, %v532, %v534
  %v618 = vsel %vm585, %v534, %v536
  %v619 = vsel %vm585, %v536, %v538
  %v620 = vsel %vm585, %v538, %v540
  %v621 = vsel %vm585, %v540, %v542
  %v622 = vsel %vm585, %v542, %v544
  %v623 = vsel %vm585, %v544, %v546
  %v624 = vsel %vm585, %v546, %v548
  %v625 = vsel %vm585, %v548, %v550
  %v626 = vsel %vm585, %v550, %v552
  %v627 = vsel %vm585, %v552, %v554
  %v628 = vsel %vm585, %v556, %v558
  %v629 = vsel %vm585, %v558, %v560
  %v630 = vsel %vm585, %v560, %v562
  %v631 = vsel %vm585, %v562, %v564
  %v632 = vsel %vm585, %v564, %v566
  %v633 = vsel %vm585, %v566, %v568
  %v634 = vsel %vm585, %v568, %v570
  %v635 = vsel %vm585, %v570, %v572
  %v636 = vsel %vm585, %v572, %v574
  %v637 = vsel %vm585, %v574, %v576
  %v638 = vsel %vm585, %v576, %v578
  %v639 = vsel %vm585, %v578, %v580
  %v640 = vsel %vm585, %v580, %v582
  %v641 = vsel %vm585, %v582, %v584
  %v703 = vsel %vm78, %v404, 0
  %705 = vmatpush.msra.mxu0 0.0
  %706 = vmatpush.msra.mxu0 0.0
  %707 = vmatpush.msra.mxu0 0.0
  %708 = vmatpush.msra.mxu0 0.0
  %709 = vmatpush.msra.mxu0 0.0
  %710 = vmatpush.msra.mxu0 0.0
  %711 = vmatpush.msra.mxu0 0.0
  %712 = vmatpush.msra.mxu0 0.0
  %713 = vmatpush.msra.mxu0 0.0
  %714 = vmatpush.msra.mxu0 0.0
  %715 = vmatpush.msra.mxu0 0.0
  %716 = vmatpush.msra.mxu0 0.0
  %717 = vmatpush.msra.mxu0 %v628
  %718 = vmatpush.msra.mxu0 %v614
  %719 = vmatpush.msra.mxu0 %v600
  %720 = vmatpush.msra.mxu0 %v586
  %721 = vmatmul.f32.gmra.mxu0 %v703
  %v722 = vpop.f32.mrf.mxu0
  %v723 = vadd.f32 0.0, %v722
  %724 = vdwg.mxu0
  %725 = vmatpush.msra.mxu0 0.0
  %726 = vmatpush.msra.mxu0 0.0
  %727 = vmatpush.msra.mxu0 0.0
  %728 = vmatpush.msra.mxu0 0.0
  %729 = vmatpush.msra.mxu0 0.0
  %730 = vmatpush.msra.mxu0 0.0
  %731 = vmatpush.msra.mxu0 0.0
  %732 = vmatpush.msra.mxu0 0.0
  %733 = vmatpush.msra.mxu0 0.0
  %734 = vmatpush.msra.mxu0 0.0
  %735 = vmatpush.msra.mxu0 0.0
  %736 = vmatpush.msra.mxu0 0.0
  %737 = vmatpush.msra.mxu0 %v629
  %738 = vmatpush.msra.mxu0 %v615
  %739 = vmatpush.msra.mxu0 %v601
  %740 = vmatpush.msra.mxu0 %v587
  %741 = vmatmul.f32.gmra.mxu0 %v703
  %v742 = vpop.f32.mrf.mxu0
  %v743 = vadd.f32 0.0, %v742
  %744 = vdwg.mxu0
  %745 = vmatpush.msra.mxu0 0.0
  %746 = vmatpush.msra.mxu0 0.0
  %747 = vmatpush.msra.mxu0 0.0
  %748 = vmatpush.msra.mxu0 0.0
  %749 = vmatpush.msra.mxu0 0.0
  %750 = vmatpush.msra.mxu0 0.0
  %751 = vmatpush.msra.mxu0 0.0
  %752 = vmatpush.msra.mxu0 0.0
  %753 = vmatpush.msra.mxu0 0.0
  %754 = vmatpush.msra.mxu0 0.0
  %755 = vmatpush.msra.mxu0 0.0
  %756 = vmatpush.msra.mxu0 0.0
  %757 = vmatpush.msra.mxu0 %v630
  %758 = vmatpush.msra.mxu0 %v616
  %759 = vmatpush.msra.mxu0 %v602
  %760 = vmatpush.msra.mxu0 %v588
  %761 = vmatmul.f32.gmra.mxu0 %v703
  %v762 = vpop.f32.mrf.mxu0
  %v763 = vadd.f32 0.0, %v762
  %764 = vdwg.mxu0
  %765 = vmatpush.msra.mxu0 0.0
  %766 = vmatpush.msra.mxu0 0.0
  %767 = vmatpush.msra.mxu0 0.0
  %768 = vmatpush.msra.mxu0 0.0
  %769 = vmatpush.msra.mxu0 0.0
  %770 = vmatpush.msra.mxu0 0.0
  %771 = vmatpush.msra.mxu0 0.0
  %772 = vmatpush.msra.mxu0 0.0
  %773 = vmatpush.msra.mxu0 0.0
  %774 = vmatpush.msra.mxu0 0.0
  %775 = vmatpush.msra.mxu0 0.0
  %776 = vmatpush.msra.mxu0 0.0
  %777 = vmatpush.msra.mxu0 %v631
  %778 = vmatpush.msra.mxu0 %v617
  %779 = vmatpush.msra.mxu0 %v603
  %780 = vmatpush.msra.mxu0 %v589
  %781 = vmatmul.f32.gmra.mxu0 %v703
  %v782 = vpop.f32.mrf.mxu0
  %v783 = vadd.f32 0.0, %v782
  %784 = vdwg.mxu0
  %785 = vmatpush.msra.mxu0 0.0
  %786 = vmatpush.msra.mxu0 0.0
  %787 = vmatpush.msra.mxu0 0.0
  %788 = vmatpush.msra.mxu0 0.0
  %789 = vmatpush.msra.mxu0 0.0
  %790 = vmatpush.msra.mxu0 0.0
  %791 = vmatpush.msra.mxu0 0.0
  %792 = vmatpush.msra.mxu0 0.0
  %793 = vmatpush.msra.mxu0 0.0
  %794 = vmatpush.msra.mxu0 0.0
  %795 = vmatpush.msra.mxu0 0.0
  %796 = vmatpush.msra.mxu0 0.0
  %797 = vmatpush.msra.mxu0 %v632
  %798 = vmatpush.msra.mxu0 %v618
  %799 = vmatpush.msra.mxu0 %v604
  %800 = vmatpush.msra.mxu0 %v590
  %801 = vmatmul.f32.gmra.mxu0 %v703
  %v802 = vpop.f32.mrf.mxu0
  %v803 = vadd.f32 0.0, %v802
  %804 = vdwg.mxu0
  %805 = vmatpush.msra.mxu0 0.0
  %806 = vmatpush.msra.mxu0 0.0
  %807 = vmatpush.msra.mxu0 0.0
  %808 = vmatpush.msra.mxu0 0.0
  %809 = vmatpush.msra.mxu0 0.0
  %810 = vmatpush.msra.mxu0 0.0
  %811 = vmatpush.msra.mxu0 0.0
  %812 = vmatpush.msra.mxu0 0.0
  %813 = vmatpush.msra.mxu0 0.0
  %814 = vmatpush.msra.mxu0 0.0
  %815 = vmatpush.msra.mxu0 0.0
  %816 = vmatpush.msra.mxu0 0.0
  %817 = vmatpush.msra.mxu0 %v633
  %818 = vmatpush.msra.mxu0 %v619
  %819 = vmatpush.msra.mxu0 %v605
  %820 = vmatpush.msra.mxu0 %v591
  %821 = vmatmul.f32.gmra.mxu0 %v703
  %v822 = vpop.f32.mrf.mxu0
  %v823 = vadd.f32 0.0, %v822
  %824 = vdwg.mxu0
  %825 = vmatpush.msra.mxu0 0.0
  %826 = vmatpush.msra.mxu0 0.0
  %827 = vmatpush.msra.mxu0 0.0
  %828 = vmatpush.msra.mxu0 0.0
  %829 = vmatpush.msra.mxu0 0.0
  %830 = vmatpush.msra.mxu0 0.0
  %831 = vmatpush.msra.mxu0 0.0
  %832 = vmatpush.msra.mxu0 0.0
  %833 = vmatpush.msra.mxu0 0.0
  %834 = vmatpush.msra.mxu0 0.0
  %835 = vmatpush.msra.mxu0 0.0
  %836 = vmatpush.msra.mxu0 0.0
  %837 = vmatpush.msra.mxu0 %v634
  %838 = vmatpush.msra.mxu0 %v620
  %839 = vmatpush.msra.mxu0 %v606
  %840 = vmatpush.msra.mxu0 %v592
  %841 = vmatmul.f32.gmra.mxu0 %v703
  %v842 = vpop.f32.mrf.mxu0
  %v843 = vadd.f32 0.0, %v842
  %844 = vdwg.mxu0
  %845 = vmatpush.msra.mxu0 0.0
  %846 = vmatpush.msra.mxu0 0.0
  %847 = vmatpush.msra.mxu0 0.0
  %848 = vmatpush.msra.mxu0 0.0
  %849 = vmatpush.msra.mxu0 0.0
  %850 = vmatpush.msra.mxu0 0.0
  %851 = vmatpush.msra.mxu0 0.0
  %852 = vmatpush.msra.mxu0 0.0
  %853 = vmatpush.msra.mxu0 0.0
  %854 = vmatpush.msra.mxu0 0.0
  %855 = vmatpush.msra.mxu0 0.0
  %856 = vmatpush.msra.mxu0 0.0
  %857 = vmatpush.msra.mxu0 %v635
  %858 = vmatpush.msra.mxu0 %v621
  %859 = vmatpush.msra.mxu0 %v607
  %860 = vmatpush.msra.mxu0 %v593
  %861 = vmatmul.f32.gmra.mxu0 %v703
  %v862 = vpop.f32.mrf.mxu0
  %v863 = vadd.f32 0.0, %v862
  %864 = vdwg.mxu0
  %865 = vmatpush.msra.mxu0 0.0
  %866 = vmatpush.msra.mxu0 0.0
  %867 = vmatpush.msra.mxu0 0.0
  %868 = vmatpush.msra.mxu0 0.0
  %869 = vmatpush.msra.mxu0 0.0
  %870 = vmatpush.msra.mxu0 0.0
  %871 = vmatpush.msra.mxu0 0.0
  %872 = vmatpush.msra.mxu0 0.0
  %873 = vmatpush.msra.mxu0 0.0
  %874 = vmatpush.msra.mxu0 0.0
  %875 = vmatpush.msra.mxu0 0.0
  %876 = vmatpush.msra.mxu0 0.0
  %877 = vmatpush.msra.mxu0 %v636
  %878 = vmatpush.msra.mxu0 %v622
  %879 = vmatpush.msra.mxu0 %v608
  %880 = vmatpush.msra.mxu0 %v594
  %881 = vmatmul.f32.gmra.mxu0 %v703
  %v882 = vpop.f32.mrf.mxu0
  %v883 = vadd.f32 0.0, %v882
  %884 = vdwg.mxu0
  %885 = vmatpush.msra.mxu0 0.0
  %886 = vmatpush.msra.mxu0 0.0
  %887 = vmatpush.msra.mxu0 0.0
  %888 = vmatpush.msra.mxu0 0.0
  %889 = vmatpush.msra.mxu0 0.0
  %890 = vmatpush.msra.mxu0 0.0
  %891 = vmatpush.msra.mxu0 0.0
  %892 = vmatpush.msra.mxu0 0.0
  %893 = vmatpush.msra.mxu0 0.0
  %894 = vmatpush.msra.mxu0 0.0
  %895 = vmatpush.msra.mxu0 0.0
  %896 = vmatpush.msra.mxu0 0.0
  %897 = vmatpush.msra.mxu0 %v637
  %898 = vmatpush.msra.mxu0 %v623
  %899 = vmatpush.msra.mxu0 %v609
  %900 = vmatpush.msra.mxu0 %v595
  %901 = vmatmul.f32.gmra.mxu0 %v703
  %v902 = vpop.f32.mrf.mxu0
  %v903 = vadd.f32 0.0, %v902
  %904 = vdwg.mxu0
  %905 = vmatpush.msra.mxu0 0.0
  %906 = vmatpush.msra.mxu0 0.0
  %907 = vmatpush.msra.mxu0 0.0
  %908 = vmatpush.msra.mxu0 0.0
  %909 = vmatpush.msra.mxu0 0.0
  %910 = vmatpush.msra.mxu0 0.0
  %911 = vmatpush.msra.mxu0 0.0
  %912 = vmatpush.msra.mxu0 0.0
  %913 = vmatpush.msra.mxu0 0.0
  %914 = vmatpush.msra.mxu0 0.0
  %915 = vmatpush.msra.mxu0 0.0
  %916 = vmatpush.msra.mxu0 0.0
  %917 = vmatpush.msra.mxu0 %v638
  %918 = vmatpush.msra.mxu0 %v624
  %919 = vmatpush.msra.mxu0 %v610
  %920 = vmatpush.msra.mxu0 %v596
  %921 = vmatmul.f32.gmra.mxu0 %v703
  %v922 = vpop.f32.mrf.mxu0
  %v923 = vadd.f32 0.0, %v922
  %924 = vdwg.mxu0
  %925 = vmatpush.msra.mxu0 0.0
  %926 = vmatpush.msra.mxu0 0.0
  %927 = vmatpush.msra.mxu0 0.0
  %928 = vmatpush.msra.mxu0 0.0
  %929 = vmatpush.msra.mxu0 0.0
  %930 = vmatpush.msra.mxu0 0.0
  %931 = vmatpush.msra.mxu0 0.0
  %932 = vmatpush.msra.mxu0 0.0
  %933 = vmatpush.msra.mxu0 0.0
  %934 = vmatpush.msra.mxu0 0.0
  %935 = vmatpush.msra.mxu0 0.0
  %936 = vmatpush.msra.mxu0 0.0
  %937 = vmatpush.msra.mxu0 %v639
  %938 = vmatpush.msra.mxu0 %v625
  %939 = vmatpush.msra.mxu0 %v611
  %940 = vmatpush.msra.mxu0 %v597
  %941 = vmatmul.f32.gmra.mxu0 %v703
  %v942 = vpop.f32.mrf.mxu0
  %v943 = vadd.f32 0.0, %v942
  %944 = vdwg.mxu0
  %945 = vmatpush.msra.mxu0 0.0
  %946 = vmatpush.msra.mxu0 0.0
  %947 = vmatpush.msra.mxu0 0.0
  %948 = vmatpush.msra.mxu0 0.0
  %949 = vmatpush.msra.mxu0 0.0
  %950 = vmatpush.msra.mxu0 0.0
  %951 = vmatpush.msra.mxu0 0.0
  %952 = vmatpush.msra.mxu0 0.0
  %953 = vmatpush.msra.mxu0 0.0
  %954 = vmatpush.msra.mxu0 0.0
  %955 = vmatpush.msra.mxu0 0.0
  %956 = vmatpush.msra.mxu0 0.0
  %957 = vmatpush.msra.mxu0 %v640
  %958 = vmatpush.msra.mxu0 %v626
  %959 = vmatpush.msra.mxu0 %v612
  %960 = vmatpush.msra.mxu0 %v598
  %961 = vmatmul.f32.gmra.mxu0 %v703
  %v962 = vpop.f32.mrf.mxu0
  %v963 = vadd.f32 0.0, %v962
  %964 = vdwg.mxu0
  %965 = vmatpush.msra.mxu0 0.0
  %966 = vmatpush.msra.mxu0 0.0
  %967 = vmatpush.msra.mxu0 0.0
  %968 = vmatpush.msra.mxu0 0.0
  %969 = vmatpush.msra.mxu0 0.0
  %970 = vmatpush.msra.mxu0 0.0
  %971 = vmatpush.msra.mxu0 0.0
  %972 = vmatpush.msra.mxu0 0.0
  %973 = vmatpush.msra.mxu0 0.0
  %974 = vmatpush.msra.mxu0 0.0
  %975 = vmatpush.msra.mxu0 0.0
  %976 = vmatpush.msra.mxu0 0.0
  %977 = vmatpush.msra.mxu0 %v641
  %978 = vmatpush.msra.mxu0 %v627
  %979 = vmatpush.msra.mxu0 %v613
  %980 = vmatpush.msra.mxu0 %v599
  %981 = vmatmul.f32.gmra.mxu0 %v703
  %v982 = vpop.f32.mrf.mxu0
  %v983 = vadd.f32 0.0, %v982
  %984 = vdwg.mxu0
  %985 = vmatpush.msra.mxu0 0.0
  %986 = vmatpush.msra.mxu0 0.0
  %987 = vmatpush.msra.mxu0 0.0
  %988 = vmatpush.msra.mxu0 0.0
  %989 = vmatpush.msra.mxu0 0.0
  %990 = vmatpush.msra.mxu0 0.0
  %991 = vmatpush.msra.mxu0 0.0
  %992 = vmatpush.msra.mxu0 0.0
  %993 = vmatpush.msra.mxu0 0.0
  %994 = vmatpush.msra.mxu0 0.0
  %995 = vmatpush.msra.mxu0 0.0
  %996 = vmatpush.msra.mxu0 0.0
  %997 = vmatpush.msra.mxu0 %v584
  %998 = vmatpush.msra.mxu0 %v554
  %999 = vmatpush.msra.mxu0 %v524
  %1000 = vmatpush.msra.mxu0 %v494
  %1001 = vmatmul.f32.gmra.mxu0 %v703
  %v1002 = vpop.f32.mrf.mxu0
  %v1003 = vadd.f32 0.0, %v1002
  %1004 = vdwg.mxu0
  %v1005 = vadd.f32 %v388, %v723
  %v1006 = vadd.f32 %v389, %v743
  %v1007 = vadd.f32 %v390, %v763
  %v1008 = vadd.f32 %v391, %v783
  %v1009 = vadd.f32 %v392, %v803
  %v1010 = vadd.f32 %v393, %v823
  %v1011 = vadd.f32 %v394, %v843
  %v1012 = vadd.f32 %v395, %v863
  %v1013 = vadd.f32 %v396, %v883
  %v1014 = vadd.f32 %v397, %v903
  %v1015 = vadd.f32 %v398, %v923
  %v1016 = vadd.f32 %v399, %v943
  %v1017 = vadd.f32 %v400, %v963
  %v1018 = vadd.f32 %v401, %v983
  %v1019 = vadd.f32 %v402, %v1003
  %s1020 = scalar_lea.vmem %s1, 2
  %v1021 = vld [vmem:[%s1020] sm:$0x1]
  %1022 = vrot.lane.b32.xlu0 %v18, 126
  %v1023 = vpop.permute.xlu0 %1022
  %1024 = vrot.lane.b32.xlu0 %v19, 126
  %v1025 = vpop.permute.xlu0 %1024
  %1026 = vrot.lane.b32.xlu0 %v20, 126
  %v1027 = vpop.permute.xlu0 %1026
  %1028 = vrot.lane.b32.xlu0 %v21, 126
  %v1029 = vpop.permute.xlu0 %1028
  %1030 = vrot.lane.b32.xlu0 %v22, 126
  %v1031 = vpop.permute.xlu0 %1030
  %1032 = vrot.lane.b32.xlu0 %v23, 126
  %v1033 = vpop.permute.xlu0 %1032
  %1034 = vrot.lane.b32.xlu0 %v24, 126
  %v1035 = vpop.permute.xlu0 %1034
  %1036 = vrot.lane.b32.xlu0 %v25, 126
  %v1037 = vpop.permute.xlu0 %1036
  %1038 = vrot.lane.b32.xlu0 %v26, 126
  %v1039 = vpop.permute.xlu0 %1038
  %1040 = vrot.lane.b32.xlu0 %v27, 126
  %v1041 = vpop.permute.xlu0 %1040
  %1042 = vrot.lane.b32.xlu0 %v28, 126
  %v1043 = vpop.permute.xlu0 %1042
  %1044 = vrot.lane.b32.xlu0 %v29, 126
  %v1045 = vpop.permute.xlu0 %1044
  %1046 = vrot.lane.b32.xlu0 %v30, 126
  %v1047 = vpop.permute.xlu0 %1046
  %1048 = vrot.lane.b32.xlu0 %v31, 126
  %v1049 = vpop.permute.xlu0 %1048
  %1050 = vrot.lane.b32.xlu0 %v32, 126
  %v1051 = vpop.permute.xlu0 %1050
  %1052 = vrot.lane.b32.xlu0 %v33, 126
  %v1053 = vpop.permute.xlu0 %1052
  %1054 = vrot.lane.b32.xlu0 %v34, 126
  %v1055 = vpop.permute.xlu0 %1054
  %1056 = vrot.lane.b32.xlu0 %v35, 126
  %v1057 = vpop.permute.xlu0 %1056
  %1058 = vrot.lane.b32.xlu0 %v36, 126
  %v1059 = vpop.permute.xlu0 %1058
  %1060 = vrot.lane.b32.xlu0 %v37, 126
  %v1061 = vpop.permute.xlu0 %1060
  %1062 = vrot.lane.b32.xlu0 %v38, 126
  %v1063 = vpop.permute.xlu0 %1062
  %1064 = vrot.lane.b32.xlu0 %v39, 126
  %v1065 = vpop.permute.xlu0 %1064
  %1066 = vrot.lane.b32.xlu0 %v40, 126
  %v1067 = vpop.permute.xlu0 %1066
  %1068 = vrot.lane.b32.xlu0 %v41, 126
  %v1069 = vpop.permute.xlu0 %1068
  %1070 = vrot.lane.b32.xlu0 %v42, 126
  %v1071 = vpop.permute.xlu0 %1070
  %1072 = vrot.lane.b32.xlu0 %v43, 126
  %v1073 = vpop.permute.xlu0 %1072
  %1074 = vrot.lane.b32.xlu0 %v44, 126
  %v1075 = vpop.permute.xlu0 %1074
  %1076 = vrot.lane.b32.xlu0 %v45, 126
  %v1077 = vpop.permute.xlu0 %1076
  %1078 = vrot.lane.b32.xlu0 %v46, 126
  %v1079 = vpop.permute.xlu0 %1078
  %1080 = vrot.lane.b32.xlu0 %v47, 126
  %v1081 = vpop.permute.xlu0 %1080
  %1082 = vrot.lane.b32.xlu0 %v48, 126
  %v1083 = vpop.permute.xlu0 %1082
  %1084 = vrot.lane.b32.xlu0 %v49, 126
  %v1085 = vpop.permute.xlu0 %1084
  %1086 = vrot.lane.b32.xlu0 %v50, 126
  %v1087 = vpop.permute.xlu0 %1086
  %1088 = vrot.lane.b32.xlu0 %v51, 126
  %v1089 = vpop.permute.xlu0 %1088
  %1090 = vrot.lane.b32.xlu0 %v52, 126
  %v1091 = vpop.permute.xlu0 %1090
  %1092 = vrot.lane.b32.xlu0 %v53, 126
  %v1093 = vpop.permute.xlu0 %1092
  %1094 = vrot.lane.b32.xlu0 %v54, 126
  %v1095 = vpop.permute.xlu0 %1094
  %1096 = vrot.lane.b32.xlu0 %v55, 126
  %v1097 = vpop.permute.xlu0 %1096
  %1098 = vrot.lane.b32.xlu0 %v56, 126
  %v1099 = vpop.permute.xlu0 %1098
  %1100 = vrot.lane.b32.xlu0 %v57, 126
  %v1101 = vpop.permute.xlu0 %1100
  %1102 = vrot.lane.b32.xlu0 %v58, 126
  %v1103 = vpop.permute.xlu0 %1102
  %1104 = vrot.lane.b32.xlu0 %v59, 126
  %v1105 = vpop.permute.xlu0 %1104
  %1106 = vrot.lane.b32.xlu0 %v60, 126
  %v1107 = vpop.permute.xlu0 %1106
  %1108 = vrot.lane.b32.xlu0 %v61, 126
  %v1109 = vpop.permute.xlu0 %1108
  %1110 = vrot.lane.b32.xlu0 %v62, 126
  %v1111 = vpop.permute.xlu0 %1110
  %1112 = vrot.lane.b32.xlu0 %v63, 126
  %v1113 = vpop.permute.xlu0 %1112
  %1114 = vrot.lane.b32.xlu0 %v64, 126
  %v1115 = vpop.permute.xlu0 %1114
  %1116 = vrot.lane.b32.xlu0 %v65, 126
  %v1117 = vpop.permute.xlu0 %1116
  %1118 = vrot.lane.b32.xlu0 %v66, 126
  %v1119 = vpop.permute.xlu0 %1118
  %1120 = vrot.lane.b32.xlu0 %v67, 126
  %v1121 = vpop.permute.xlu0 %1120
  %1122 = vrot.lane.b32.xlu0 %v68, 126
  %v1123 = vpop.permute.xlu0 %1122
  %1124 = vrot.lane.b32.xlu0 %v69, 126
  %v1125 = vpop.permute.xlu0 %1124
  %1126 = vrot.lane.b32.xlu0 %v70, 126
  %v1127 = vpop.permute.xlu0 %1126
  %1128 = vrot.lane.b32.xlu0 %v71, 126
  %v1129 = vpop.permute.xlu0 %1128
  %1130 = vrot.lane.b32.xlu0 %v72, 126
  %v1131 = vpop.permute.xlu0 %1130
  %1132 = vrot.lane.b32.xlu0 %v73, 126
  %v1133 = vpop.permute.xlu0 %1132
  %1134 = vrot.lane.b32.xlu0 %v74, 126
  %v1135 = vpop.permute.xlu0 %1134
  %1136 = vrot.lane.b32.xlu0 %v75, 126
  %v1137 = vpop.permute.xlu0 %1136
  %1138 = vrot.lane.b32.xlu0 %v76, 126
  %v1139 = vpop.permute.xlu0 %1138
  %1140 = vrot.lane.b32.xlu0 %v77, 126
  %v1141 = vpop.permute.xlu0 %1140
  %vm1142 = vcmask 1031168
  %v1143 = vsel %vm1142, %v1023, %v1025
  %v1144 = vsel %vm1142, %v1025, %v1027
  %v1145 = vsel %vm1142, %v1027, %v1029
  %v1146 = vsel %vm1142, %v1029, %v1031
  %v1147 = vsel %vm1142, %v1031, %v1033
  %v1148 = vsel %vm1142, %v1033, %v1035
  %v1149 = vsel %vm1142, %v1035, %v1037
  %v1150 = vsel %vm1142, %v1037, %v1039
  %v1151 = vsel %vm1142, %v1039, %v1041
  %v1152 = vsel %vm1142, %v1041, %v1043
  %v1153 = vsel %vm1142, %v1043, %v1045
  %v1154 = vsel %vm1142, %v1045, %v1047
  %v1155 = vsel %vm1142, %v1047, %v1049
  %v1156 = vsel %vm1142, %v1049, %v1051
  %v1157 = vsel %vm1142, %v1053, %v1055
  %v1158 = vsel %vm1142, %v1055, %v1057
  %v1159 = vsel %vm1142, %v1057, %v1059
  %v1160 = vsel %vm1142, %v1059, %v1061
  %v1161 = vsel %vm1142, %v1061, %v1063
  %v1162 = vsel %vm1142, %v1063, %v1065
  %v1163 = vsel %vm1142, %v1065, %v1067
  %v1164 = vsel %vm1142, %v1067, %v1069
  %v1165 = vsel %vm1142, %v1069, %v1071
  %v1166 = vsel %vm1142, %v1071, %v1073
  %v1167 = vsel %vm1142, %v1073, %v1075
  %v1168 = vsel %vm1142, %v1075, %v1077
  %v1169 = vsel %vm1142, %v1077, %v1079
  %v1170 = vsel %vm1142, %v1079, %v1081
  %v1171 = vsel %vm1142, %v1083, %v1085
  %v1172 = vsel %vm1142, %v1085, %v1087
  %v1173 = vsel %vm1142, %v1087, %v1089
  %v1174 = vsel %vm1142, %v1089, %v1091
  %v1175 = vsel %vm1142, %v1091, %v1093
  %v1176 = vsel %vm1142, %v1093, %v1095
  %v1177 = vsel %vm1142, %v1095, %v1097
  %v1178 = vsel %vm1142, %v1097, %v1099
  %v1179 = vsel %vm1142, %v1099, %v1101
  %v1180 = vsel %vm1142, %v1101, %v1103
  %v1181 = vsel %vm1142, %v1103, %v1105
  %v1182 = vsel %vm1142, %v1105, %v1107
  %v1183 = vsel %vm1142, %v1107, %v1109
  %v1184 = vsel %vm1142, %v1109, %v1111
  %v1185 = vsel %vm1142, %v1113, %v1115
  %v1186 = vsel %vm1142, %v1115, %v1117
  %v1187 = vsel %vm1142, %v1117, %v1119
  %v1188 = vsel %vm1142, %v1119, %v1121
  %v1189 = vsel %vm1142, %v1121, %v1123
  %v1190 = vsel %vm1142, %v1123, %v1125
  %v1191 = vsel %vm1142, %v1125, %v1127
  %v1192 = vsel %vm1142, %v1127, %v1129
  %v1193 = vsel %vm1142, %v1129, %v1131
  %v1194 = vsel %vm1142, %v1131, %v1133
  %v1195 = vsel %vm1142, %v1133, %v1135
  %v1196 = vsel %vm1142, %v1135, %v1137
  %v1197 = vsel %vm1142, %v1137, %v1139
  %v1198 = vsel %vm1142, %v1139, %v1141
  %v1260 = vsel %vm78, %v1021, 0
  %1262 = vmatpush.msra.mxu0 0.0
  %1263 = vmatpush.msra.mxu0 0.0
  %1264 = vmatpush.msra.mxu0 0.0
  %1265 = vmatpush.msra.mxu0 0.0
  %1266 = vmatpush.msra.mxu0 0.0
  %1267 = vmatpush.msra.mxu0 0.0
  %1268 = vmatpush.msra.mxu0 0.0
  %1269 = vmatpush.msra.mxu0 0.0
  %1270 = vmatpush.msra.mxu0 0.0
  %1271 = vmatpush.msra.mxu0 0.0
  %1272 = vmatpush.msra.mxu0 0.0
  %1273 = vmatpush.msra.mxu0 0.0
  %1274 = vmatpush.msra.mxu0 %v1185
  %1275 = vmatpush.msra.mxu0 %v1171
  %1276 = vmatpush.msra.mxu0 %v1157
  %1277 = vmatpush.msra.mxu0 %v1143
  %1278 = vmatmul.f32.gmra.mxu0 %v1260
  %v1279 = vpop.f32.mrf.mxu0
  %v1280 = vadd.f32 0.0, %v1279
  %1281 = vdwg.mxu0
  %1282 = vmatpush.msra.mxu0 0.0
  %1283 = vmatpush.msra.mxu0 0.0
  %1284 = vmatpush.msra.mxu0 0.0
  %1285 = vmatpush.msra.mxu0 0.0
  %1286 = vmatpush.msra.mxu0 0.0
  %1287 = vmatpush.msra.mxu0 0.0
  %1288 = vmatpush.msra.mxu0 0.0
  %1289 = vmatpush.msra.mxu0 0.0
  %1290 = vmatpush.msra.mxu0 0.0
  %1291 = vmatpush.msra.mxu0 0.0
  %1292 = vmatpush.msra.mxu0 0.0
  %1293 = vmatpush.msra.mxu0 0.0
  %1294 = vmatpush.msra.mxu0 %v1186
  %1295 = vmatpush.msra.mxu0 %v1172
  %1296 = vmatpush.msra.mxu0 %v1158
  %1297 = vmatpush.msra.mxu0 %v1144
  %1298 = vmatmul.f32.gmra.mxu0 %v1260
  %v1299 = vpop.f32.mrf.mxu0
  %v1300 = vadd.f32 0.0, %v1299
  %1301 = vdwg.mxu0
  %1302 = vmatpush.msra.mxu0 0.0
  %1303 = vmatpush.msra.mxu0 0.0
  %1304 = vmatpush.msra.mxu0 0.0
  %1305 = vmatpush.msra.mxu0 0.0
  %1306 = vmatpush.msra.mxu0 0.0
  %1307 = vmatpush.msra.mxu0 0.0
  %1308 = vmatpush.msra.mxu0 0.0
  %1309 = vmatpush.msra.mxu0 0.0
  %1310 = vmatpush.msra.mxu0 0.0
  %1311 = vmatpush.msra.mxu0 0.0
  %1312 = vmatpush.msra.mxu0 0.0
  %1313 = vmatpush.msra.mxu0 0.0
  %1314 = vmatpush.msra.mxu0 %v1187
  %1315 = vmatpush.msra.mxu0 %v1173
  %1316 = vmatpush.msra.mxu0 %v1159
  %1317 = vmatpush.msra.mxu0 %v1145
  %1318 = vmatmul.f32.gmra.mxu0 %v1260
  %v1319 = vpop.f32.mrf.mxu0
  %v1320 = vadd.f32 0.0, %v1319
  %1321 = vdwg.mxu0
  %1322 = vmatpush.msra.mxu0 0.0
  %1323 = vmatpush.msra.mxu0 0.0
  %1324 = vmatpush.msra.mxu0 0.0
  %1325 = vmatpush.msra.mxu0 0.0
  %1326 = vmatpush.msra.mxu0 0.0
  %1327 = vmatpush.msra.mxu0 0.0
  %1328 = vmatpush.msra.mxu0 0.0
  %1329 = vmatpush.msra.mxu0 0.0
  %1330 = vmatpush.msra.mxu0 0.0
  %1331 = vmatpush.msra.mxu0 0.0
  %1332 = vmatpush.msra.mxu0 0.0
  %1333 = vmatpush.msra.mxu0 0.0
  %1334 = vmatpush.msra.mxu0 %v1188
  %1335 = vmatpush.msra.mxu0 %v1174
  %1336 = vmatpush.msra.mxu0 %v1160
  %1337 = vmatpush.msra.mxu0 %v1146
  %1338 = vmatmul.f32.gmra.mxu0 %v1260
  %v1339 = vpop.f32.mrf.mxu0
  %v1340 = vadd.f32 0.0, %v1339
  %1341 = vdwg.mxu0
  %1342 = vmatpush.msra.mxu0 0.0
  %1343 = vmatpush.msra.mxu0 0.0
  %1344 = vmatpush.msra.mxu0 0.0
  %1345 = vmatpush.msra.mxu0 0.0
  %1346 = vmatpush.msra.mxu0 0.0
  %1347 = vmatpush.msra.mxu0 0.0
  %1348 = vmatpush.msra.mxu0 0.0
  %1349 = vmatpush.msra.mxu0 0.0
  %1350 = vmatpush.msra.mxu0 0.0
  %1351 = vmatpush.msra.mxu0 0.0
  %1352 = vmatpush.msra.mxu0 0.0
  %1353 = vmatpush.msra.mxu0 0.0
  %1354 = vmatpush.msra.mxu0 %v1189
  %1355 = vmatpush.msra.mxu0 %v1175
  %1356 = vmatpush.msra.mxu0 %v1161
  %1357 = vmatpush.msra.mxu0 %v1147
  %1358 = vmatmul.f32.gmra.mxu0 %v1260
  %v1359 = vpop.f32.mrf.mxu0
  %v1360 = vadd.f32 0.0, %v1359
  %1361 = vdwg.mxu0
  %1362 = vmatpush.msra.mxu0 0.0
  %1363 = vmatpush.msra.mxu0 0.0
  %1364 = vmatpush.msra.mxu0 0.0
  %1365 = vmatpush.msra.mxu0 0.0
  %1366 = vmatpush.msra.mxu0 0.0
  %1367 = vmatpush.msra.mxu0 0.0
  %1368 = vmatpush.msra.mxu0 0.0
  %1369 = vmatpush.msra.mxu0 0.0
  %1370 = vmatpush.msra.mxu0 0.0
  %1371 = vmatpush.msra.mxu0 0.0
  %1372 = vmatpush.msra.mxu0 0.0
  %1373 = vmatpush.msra.mxu0 0.0
  %1374 = vmatpush.msra.mxu0 %v1190
  %1375 = vmatpush.msra.mxu0 %v1176
  %1376 = vmatpush.msra.mxu0 %v1162
  %1377 = vmatpush.msra.mxu0 %v1148
  %1378 = vmatmul.f32.gmra.mxu0 %v1260
  %v1379 = vpop.f32.mrf.mxu0
  %v1380 = vadd.f32 0.0, %v1379
  %1381 = vdwg.mxu0
  %1382 = vmatpush.msra.mxu0 0.0
  %1383 = vmatpush.msra.mxu0 0.0
  %1384 = vmatpush.msra.mxu0 0.0
  %1385 = vmatpush.msra.mxu0 0.0
  %1386 = vmatpush.msra.mxu0 0.0
  %1387 = vmatpush.msra.mxu0 0.0
  %1388 = vmatpush.msra.mxu0 0.0
  %1389 = vmatpush.msra.mxu0 0.0
  %1390 = vmatpush.msra.mxu0 0.0
  %1391 = vmatpush.msra.mxu0 0.0
  %1392 = vmatpush.msra.mxu0 0.0
  %1393 = vmatpush.msra.mxu0 0.0
  %1394 = vmatpush.msra.mxu0 %v1191
  %1395 = vmatpush.msra.mxu0 %v1177
  %1396 = vmatpush.msra.mxu0 %v1163
  %1397 = vmatpush.msra.mxu0 %v1149
  %1398 = vmatmul.f32.gmra.mxu0 %v1260
  %v1399 = vpop.f32.mrf.mxu0
  %v1400 = vadd.f32 0.0, %v1399
  %1401 = vdwg.mxu0
  %1402 = vmatpush.msra.mxu0 0.0
  %1403 = vmatpush.msra.mxu0 0.0
  %1404 = vmatpush.msra.mxu0 0.0
  %1405 = vmatpush.msra.mxu0 0.0
  %1406 = vmatpush.msra.mxu0 0.0
  %1407 = vmatpush.msra.mxu0 0.0
  %1408 = vmatpush.msra.mxu0 0.0
  %1409 = vmatpush.msra.mxu0 0.0
  %1410 = vmatpush.msra.mxu0 0.0
  %1411 = vmatpush.msra.mxu0 0.0
  %1412 = vmatpush.msra.mxu0 0.0
  %1413 = vmatpush.msra.mxu0 0.0
  %1414 = vmatpush.msra.mxu0 %v1192
  %1415 = vmatpush.msra.mxu0 %v1178
  %1416 = vmatpush.msra.mxu0 %v1164
  %1417 = vmatpush.msra.mxu0 %v1150
  %1418 = vmatmul.f32.gmra.mxu0 %v1260
  %v1419 = vpop.f32.mrf.mxu0
  %v1420 = vadd.f32 0.0, %v1419
  %1421 = vdwg.mxu0
  %1422 = vmatpush.msra.mxu0 0.0
  %1423 = vmatpush.msra.mxu0 0.0
  %1424 = vmatpush.msra.mxu0 0.0
  %1425 = vmatpush.msra.mxu0 0.0
  %1426 = vmatpush.msra.mxu0 0.0
  %1427 = vmatpush.msra.mxu0 0.0
  %1428 = vmatpush.msra.mxu0 0.0
  %1429 = vmatpush.msra.mxu0 0.0
  %1430 = vmatpush.msra.mxu0 0.0
  %1431 = vmatpush.msra.mxu0 0.0
  %1432 = vmatpush.msra.mxu0 0.0
  %1433 = vmatpush.msra.mxu0 0.0
  %1434 = vmatpush.msra.mxu0 %v1193
  %1435 = vmatpush.msra.mxu0 %v1179
  %1436 = vmatpush.msra.mxu0 %v1165
  %1437 = vmatpush.msra.mxu0 %v1151
  %1438 = vmatmul.f32.gmra.mxu0 %v1260
  %v1439 = vpop.f32.mrf.mxu0
  %v1440 = vadd.f32 0.0, %v1439
  %1441 = vdwg.mxu0
  %1442 = vmatpush.msra.mxu0 0.0
  %1443 = vmatpush.msra.mxu0 0.0
  %1444 = vmatpush.msra.mxu0 0.0
  %1445 = vmatpush.msra.mxu0 0.0
  %1446 = vmatpush.msra.mxu0 0.0
  %1447 = vmatpush.msra.mxu0 0.0
  %1448 = vmatpush.msra.mxu0 0.0
  %1449 = vmatpush.msra.mxu0 0.0
  %1450 = vmatpush.msra.mxu0 0.0
  %1451 = vmatpush.msra.mxu0 0.0
  %1452 = vmatpush.msra.mxu0 0.0
  %1453 = vmatpush.msra.mxu0 0.0
  %1454 = vmatpush.msra.mxu0 %v1194
  %1455 = vmatpush.msra.mxu0 %v1180
  %1456 = vmatpush.msra.mxu0 %v1166
  %1457 = vmatpush.msra.mxu0 %v1152
  %1458 = vmatmul.f32.gmra.mxu0 %v1260
  %v1459 = vpop.f32.mrf.mxu0
  %v1460 = vadd.f32 0.0, %v1459
  %1461 = vdwg.mxu0
  %1462 = vmatpush.msra.mxu0 0.0
  %1463 = vmatpush.msra.mxu0 0.0
  %1464 = vmatpush.msra.mxu0 0.0
  %1465 = vmatpush.msra.mxu0 0.0
  %1466 = vmatpush.msra.mxu0 0.0
  %1467 = vmatpush.msra.mxu0 0.0
  %1468 = vmatpush.msra.mxu0 0.0
  %1469 = vmatpush.msra.mxu0 0.0
  %1470 = vmatpush.msra.mxu0 0.0
  %1471 = vmatpush.msra.mxu0 0.0
  %1472 = vmatpush.msra.mxu0 0.0
  %1473 = vmatpush.msra.mxu0 0.0
  %1474 = vmatpush.msra.mxu0 %v1195
  %1475 = vmatpush.msra.mxu0 %v1181
  %1476 = vmatpush.msra.mxu0 %v1167
  %1477 = vmatpush.msra.mxu0 %v1153
  %1478 = vmatmul.f32.gmra.mxu0 %v1260
  %v1479 = vpop.f32.mrf.mxu0
  %v1480 = vadd.f32 0.0, %v1479
  %1481 = vdwg.mxu0
  %1482 = vmatpush.msra.mxu0 0.0
  %1483 = vmatpush.msra.mxu0 0.0
  %1484 = vmatpush.msra.mxu0 0.0
  %1485 = vmatpush.msra.mxu0 0.0
  %1486 = vmatpush.msra.mxu0 0.0
  %1487 = vmatpush.msra.mxu0 0.0
  %1488 = vmatpush.msra.mxu0 0.0
  %1489 = vmatpush.msra.mxu0 0.0
  %1490 = vmatpush.msra.mxu0 0.0
  %1491 = vmatpush.msra.mxu0 0.0
  %1492 = vmatpush.msra.mxu0 0.0
  %1493 = vmatpush.msra.mxu0 0.0
  %1494 = vmatpush.msra.mxu0 %v1196
  %1495 = vmatpush.msra.mxu0 %v1182
  %1496 = vmatpush.msra.mxu0 %v1168
  %1497 = vmatpush.msra.mxu0 %v1154
  %1498 = vmatmul.f32.gmra.mxu0 %v1260
  %v1499 = vpop.f32.mrf.mxu0
  %v1500 = vadd.f32 0.0, %v1499
  %1501 = vdwg.mxu0
  %1502 = vmatpush.msra.mxu0 0.0
  %1503 = vmatpush.msra.mxu0 0.0
  %1504 = vmatpush.msra.mxu0 0.0
  %1505 = vmatpush.msra.mxu0 0.0
  %1506 = vmatpush.msra.mxu0 0.0
  %1507 = vmatpush.msra.mxu0 0.0
  %1508 = vmatpush.msra.mxu0 0.0
  %1509 = vmatpush.msra.mxu0 0.0
  %1510 = vmatpush.msra.mxu0 0.0
  %1511 = vmatpush.msra.mxu0 0.0
  %1512 = vmatpush.msra.mxu0 0.0
  %1513 = vmatpush.msra.mxu0 0.0
  %1514 = vmatpush.msra.mxu0 %v1197
  %1515 = vmatpush.msra.mxu0 %v1183
  %1516 = vmatpush.msra.mxu0 %v1169
  %1517 = vmatpush.msra.mxu0 %v1155
  %1518 = vmatmul.f32.gmra.mxu0 %v1260
  %v1519 = vpop.f32.mrf.mxu0
  %v1520 = vadd.f32 0.0, %v1519
  %1521 = vdwg.mxu0
  %1522 = vmatpush.msra.mxu0 0.0
  %1523 = vmatpush.msra.mxu0 0.0
  %1524 = vmatpush.msra.mxu0 0.0
  %1525 = vmatpush.msra.mxu0 0.0
  %1526 = vmatpush.msra.mxu0 0.0
  %1527 = vmatpush.msra.mxu0 0.0
  %1528 = vmatpush.msra.mxu0 0.0
  %1529 = vmatpush.msra.mxu0 0.0
  %1530 = vmatpush.msra.mxu0 0.0
  %1531 = vmatpush.msra.mxu0 0.0
  %1532 = vmatpush.msra.mxu0 0.0
  %1533 = vmatpush.msra.mxu0 0.0
  %1534 = vmatpush.msra.mxu0 %v1198
  %1535 = vmatpush.msra.mxu0 %v1184
  %1536 = vmatpush.msra.mxu0 %v1170
  %1537 = vmatpush.msra.mxu0 %v1156
  %1538 = vmatmul.f32.gmra.mxu0 %v1260
  %v1539 = vpop.f32.mrf.mxu0
  %v1540 = vadd.f32 0.0, %v1539
  %1541 = vdwg.mxu0
  %1542 = vmatpush.msra.mxu0 0.0
  %1543 = vmatpush.msra.mxu0 0.0
  %1544 = vmatpush.msra.mxu0 0.0
  %1545 = vmatpush.msra.mxu0 0.0
  %1546 = vmatpush.msra.mxu0 0.0
  %1547 = vmatpush.msra.mxu0 0.0
  %1548 = vmatpush.msra.mxu0 0.0
  %1549 = vmatpush.msra.mxu0 0.0
  %1550 = vmatpush.msra.mxu0 0.0
  %1551 = vmatpush.msra.mxu0 0.0
  %1552 = vmatpush.msra.mxu0 0.0
  %1553 = vmatpush.msra.mxu0 0.0
  %1554 = vmatpush.msra.mxu0 %v1141
  %1555 = vmatpush.msra.mxu0 %v1111
  %1556 = vmatpush.msra.mxu0 %v1081
  %1557 = vmatpush.msra.mxu0 %v1051
  %1558 = vmatmul.f32.gmra.mxu0 %v1260
  %v1559 = vpop.f32.mrf.mxu0
  %v1560 = vadd.f32 0.0, %v1559
  %1561 = vdwg.mxu0
  %v1562 = vadd.f32 %v1005, %v1280
  %v1563 = vadd.f32 %v1006, %v1300
  %v1564 = vadd.f32 %v1007, %v1320
  %v1565 = vadd.f32 %v1008, %v1340
  %v1566 = vadd.f32 %v1009, %v1360
  %v1567 = vadd.f32 %v1010, %v1380
  %v1568 = vadd.f32 %v1011, %v1400
  %v1569 = vadd.f32 %v1012, %v1420
  %v1570 = vadd.f32 %v1013, %v1440
  %v1571 = vadd.f32 %v1014, %v1460
  %v1572 = vadd.f32 %v1015, %v1480
  %v1573 = vadd.f32 %v1016, %v1500
  %v1574 = vadd.f32 %v1017, %v1520
  %v1575 = vadd.f32 %v1018, %v1540
  %v1576 = vadd.f32 %v1019, %v1560
  %s1577 = scalar_lea.vmem %s1, 3
  %v1578 = vld [vmem:[%s1577] sm:$0x1]
  %1579 = vrot.lane.b32.xlu0 %v18, 98
  %v1580 = vpop.permute.xlu0 %1579
  %1581 = vrot.lane.b32.xlu0 %v19, 98
  %v1582 = vpop.permute.xlu0 %1581
  %1583 = vrot.lane.b32.xlu0 %v20, 98
  %v1584 = vpop.permute.xlu0 %1583
  %1585 = vrot.lane.b32.xlu0 %v21, 98
  %v1586 = vpop.permute.xlu0 %1585
  %1587 = vrot.lane.b32.xlu0 %v22, 98
  %v1588 = vpop.permute.xlu0 %1587
  %1589 = vrot.lane.b32.xlu0 %v23, 98
  %v1590 = vpop.permute.xlu0 %1589
  %1591 = vrot.lane.b32.xlu0 %v24, 98
  %v1592 = vpop.permute.xlu0 %1591
  %1593 = vrot.lane.b32.xlu0 %v25, 98
  %v1594 = vpop.permute.xlu0 %1593
  %1595 = vrot.lane.b32.xlu0 %v26, 98
  %v1596 = vpop.permute.xlu0 %1595
  %1597 = vrot.lane.b32.xlu0 %v27, 98
  %v1598 = vpop.permute.xlu0 %1597
  %1599 = vrot.lane.b32.xlu0 %v28, 98
  %v1600 = vpop.permute.xlu0 %1599
  %1601 = vrot.lane.b32.xlu0 %v29, 98
  %v1602 = vpop.permute.xlu0 %1601
  %1603 = vrot.lane.b32.xlu0 %v30, 98
  %v1604 = vpop.permute.xlu0 %1603
  %1605 = vrot.lane.b32.xlu0 %v31, 98
  %v1606 = vpop.permute.xlu0 %1605
  %1607 = vrot.lane.b32.xlu0 %v32, 98
  %v1608 = vpop.permute.xlu0 %1607
  %1609 = vrot.lane.b32.xlu0 %v33, 98
  %v1610 = vpop.permute.xlu0 %1609
  %1611 = vrot.lane.b32.xlu0 %v34, 98
  %v1612 = vpop.permute.xlu0 %1611
  %1613 = vrot.lane.b32.xlu0 %v35, 98
  %v1614 = vpop.permute.xlu0 %1613
  %1615 = vrot.lane.b32.xlu0 %v36, 98
  %v1616 = vpop.permute.xlu0 %1615
  %1617 = vrot.lane.b32.xlu0 %v37, 98
  %v1618 = vpop.permute.xlu0 %1617
  %1619 = vrot.lane.b32.xlu0 %v38, 98
  %v1620 = vpop.permute.xlu0 %1619
  %1621 = vrot.lane.b32.xlu0 %v39, 98
  %v1622 = vpop.permute.xlu0 %1621
  %1623 = vrot.lane.b32.xlu0 %v40, 98
  %v1624 = vpop.permute.xlu0 %1623
  %1625 = vrot.lane.b32.xlu0 %v41, 98
  %v1626 = vpop.permute.xlu0 %1625
  %1627 = vrot.lane.b32.xlu0 %v42, 98
  %v1628 = vpop.permute.xlu0 %1627
  %1629 = vrot.lane.b32.xlu0 %v43, 98
  %v1630 = vpop.permute.xlu0 %1629
  %1631 = vrot.lane.b32.xlu0 %v44, 98
  %v1632 = vpop.permute.xlu0 %1631
  %1633 = vrot.lane.b32.xlu0 %v45, 98
  %v1634 = vpop.permute.xlu0 %1633
  %1635 = vrot.lane.b32.xlu0 %v46, 98
  %v1636 = vpop.permute.xlu0 %1635
  %1637 = vrot.lane.b32.xlu0 %v47, 98
  %v1638 = vpop.permute.xlu0 %1637
  %1639 = vrot.lane.b32.xlu0 %v48, 98
  %v1640 = vpop.permute.xlu0 %1639
  %1641 = vrot.lane.b32.xlu0 %v49, 98
  %v1642 = vpop.permute.xlu0 %1641
  %1643 = vrot.lane.b32.xlu0 %v50, 98
  %v1644 = vpop.permute.xlu0 %1643
  %1645 = vrot.lane.b32.xlu0 %v51, 98
  %v1646 = vpop.permute.xlu0 %1645
  %1647 = vrot.lane.b32.xlu0 %v52, 98
  %v1648 = vpop.permute.xlu0 %1647
  %1649 = vrot.lane.b32.xlu0 %v53, 98
  %v1650 = vpop.permute.xlu0 %1649
  %1651 = vrot.lane.b32.xlu0 %v54, 98
  %v1652 = vpop.permute.xlu0 %1651
  %1653 = vrot.lane.b32.xlu0 %v55, 98
  %v1654 = vpop.permute.xlu0 %1653
  %1655 = vrot.lane.b32.xlu0 %v56, 98
  %v1656 = vpop.permute.xlu0 %1655
  %1657 = vrot.lane.b32.xlu0 %v57, 98
  %v1658 = vpop.permute.xlu0 %1657
  %1659 = vrot.lane.b32.xlu0 %v58, 98
  %v1660 = vpop.permute.xlu0 %1659
  %1661 = vrot.lane.b32.xlu0 %v59, 98
  %v1662 = vpop.permute.xlu0 %1661
  %1663 = vrot.lane.b32.xlu0 %v60, 98
  %v1664 = vpop.permute.xlu0 %1663
  %1665 = vrot.lane.b32.xlu0 %v61, 98
  %v1666 = vpop.permute.xlu0 %1665
  %1667 = vrot.lane.b32.xlu0 %v62, 98
  %v1668 = vpop.permute.xlu0 %1667
  %1669 = vrot.lane.b32.xlu0 %v63, 98
  %v1670 = vpop.permute.xlu0 %1669
  %1671 = vrot.lane.b32.xlu0 %v64, 98
  %v1672 = vpop.permute.xlu0 %1671
  %1673 = vrot.lane.b32.xlu0 %v65, 98
  %v1674 = vpop.permute.xlu0 %1673
  %1675 = vrot.lane.b32.xlu0 %v66, 98
  %v1676 = vpop.permute.xlu0 %1675
  %1677 = vrot.lane.b32.xlu0 %v67, 98
  %v1678 = vpop.permute.xlu0 %1677
  %1679 = vrot.lane.b32.xlu0 %v68, 98
  %v1680 = vpop.permute.xlu0 %1679
  %1681 = vrot.lane.b32.xlu0 %v69, 98
  %v1682 = vpop.permute.xlu0 %1681
  %1683 = vrot.lane.b32.xlu0 %v70, 98
  %v1684 = vpop.permute.xlu0 %1683
  %1685 = vrot.lane.b32.xlu0 %v71, 98
  %v1686 = vpop.permute.xlu0 %1685
  %1687 = vrot.lane.b32.xlu0 %v72, 98
  %v1688 = vpop.permute.xlu0 %1687
  %1689 = vrot.lane.b32.xlu0 %v73, 98
  %v1690 = vpop.permute.xlu0 %1689
  %1691 = vrot.lane.b32.xlu0 %v74, 98
  %v1692 = vpop.permute.xlu0 %1691
  %1693 = vrot.lane.b32.xlu0 %v75, 98
  %v1694 = vpop.permute.xlu0 %1693
  %1695 = vrot.lane.b32.xlu0 %v76, 98
  %v1696 = vpop.permute.xlu0 %1695
  %1697 = vrot.lane.b32.xlu0 %v77, 98
  %v1698 = vpop.permute.xlu0 %1697
  %vm1699 = vcmask 801792
  %v1700 = vsel %vm1699, %v1580, %v1582
  %v1701 = vsel %vm1699, %v1582, %v1584
  %v1702 = vsel %vm1699, %v1584, %v1586
  %v1703 = vsel %vm1699, %v1586, %v1588
  %v1704 = vsel %vm1699, %v1588, %v1590
  %v1705 = vsel %vm1699, %v1590, %v1592
  %v1706 = vsel %vm1699, %v1592, %v1594
  %v1707 = vsel %vm1699, %v1594, %v1596
  %v1708 = vsel %vm1699, %v1596, %v1598
  %v1709 = vsel %vm1699, %v1598, %v1600
  %v1710 = vsel %vm1699, %v1600, %v1602
  %v1711 = vsel %vm1699, %v1602, %v1604
  %v1712 = vsel %vm1699, %v1604, %v1606
  %v1713 = vsel %vm1699, %v1606, %v1608
  %v1714 = vsel %vm1699, %v1610, %v1612
  %v1715 = vsel %vm1699, %v1612, %v1614
  %v1716 = vsel %vm1699, %v1614, %v1616
  %v1717 = vsel %vm1699, %v1616, %v1618
  %v1718 = vsel %vm1699, %v1618, %v1620
  %v1719 = vsel %vm1699, %v1620, %v1622
  %v1720 = vsel %vm1699, %v1622, %v1624
  %v1721 = vsel %vm1699, %v1624, %v1626
  %v1722 = vsel %vm1699, %v1626, %v1628
  %v1723 = vsel %vm1699, %v1628, %v1630
  %v1724 = vsel %vm1699, %v1630, %v1632
  %v1725 = vsel %vm1699, %v1632, %v1634
  %v1726 = vsel %vm1699, %v1634, %v1636
  %v1727 = vsel %vm1699, %v1636, %v1638
  %v1728 = vsel %vm1699, %v1640, %v1642
  %v1729 = vsel %vm1699, %v1642, %v1644
  %v1730 = vsel %vm1699, %v1644, %v1646
  %v1731 = vsel %vm1699, %v1646, %v1648
  %v1732 = vsel %vm1699, %v1648, %v1650
  %v1733 = vsel %vm1699, %v1650, %v1652
  %v1734 = vsel %vm1699, %v1652, %v1654
  %v1735 = vsel %vm1699, %v1654, %v1656
  %v1736 = vsel %vm1699, %v1656, %v1658
  %v1737 = vsel %vm1699, %v1658, %v1660
  %v1738 = vsel %vm1699, %v1660, %v1662
  %v1739 = vsel %vm1699, %v1662, %v1664
  %v1740 = vsel %vm1699, %v1664, %v1666
  %v1741 = vsel %vm1699, %v1666, %v1668
  %v1742 = vsel %vm1699, %v1670, %v1672
  %v1743 = vsel %vm1699, %v1672, %v1674
  %v1744 = vsel %vm1699, %v1674, %v1676
  %v1745 = vsel %vm1699, %v1676, %v1678
  %v1746 = vsel %vm1699, %v1678, %v1680
  %v1747 = vsel %vm1699, %v1680, %v1682
  %v1748 = vsel %vm1699, %v1682, %v1684
  %v1749 = vsel %vm1699, %v1684, %v1686
  %v1750 = vsel %vm1699, %v1686, %v1688
  %v1751 = vsel %vm1699, %v1688, %v1690
  %v1752 = vsel %vm1699, %v1690, %v1692
  %v1753 = vsel %vm1699, %v1692, %v1694
  %v1754 = vsel %vm1699, %v1694, %v1696
  %v1755 = vsel %vm1699, %v1696, %v1698
  %v1817 = vsel %vm78, %v1578, 0
  %1819 = vmatpush.msra.mxu0 0.0
  %1820 = vmatpush.msra.mxu0 0.0
  %1821 = vmatpush.msra.mxu0 0.0
  %1822 = vmatpush.msra.mxu0 0.0
  %1823 = vmatpush.msra.mxu0 0.0
  %1824 = vmatpush.msra.mxu0 0.0
  %1825 = vmatpush.msra.mxu0 0.0
  %1826 = vmatpush.msra.mxu0 0.0
  %1827 = vmatpush.msra.mxu0 0.0
  %1828 = vmatpush.msra.mxu0 0.0
  %1829 = vmatpush.msra.mxu0 0.0
  %1830 = vmatpush.msra.mxu0 0.0
  %1831 = vmatpush.msra.mxu0 %v1742
  %1832 = vmatpush.msra.mxu0 %v1728
  %1833 = vmatpush.msra.mxu0 %v1714
  %1834 = vmatpush.msra.mxu0 %v1700
  %1835 = vmatmul.f32.gmra.mxu0 %v1817
  %v1836 = vpop.f32.mrf.mxu0
  %v1837 = vadd.f32 0.0, %v1836
  %1838 = vdwg.mxu0
  %1839 = vmatpush.msra.mxu0 0.0
  %1840 = vmatpush.msra.mxu0 0.0
  %1841 = vmatpush.msra.mxu0 0.0
  %1842 = vmatpush.msra.mxu0 0.0
  %1843 = vmatpush.msra.mxu0 0.0
  %1844 = vmatpush.msra.mxu0 0.0
  %1845 = vmatpush.msra.mxu0 0.0
  %1846 = vmatpush.msra.mxu0 0.0
  %1847 = vmatpush.msra.mxu0 0.0
  %1848 = vmatpush.msra.mxu0 0.0
  %1849 = vmatpush.msra.mxu0 0.0
  %1850 = vmatpush.msra.mxu0 0.0
  %1851 = vmatpush.msra.mxu0 %v1743
  %1852 = vmatpush.msra.mxu0 %v1729
  %1853 = vmatpush.msra.mxu0 %v1715
  %1854 = vmatpush.msra.mxu0 %v1701
  %1855 = vmatmul.f32.gmra.mxu0 %v1817
  %v1856 = vpop.f32.mrf.mxu0
  %v1857 = vadd.f32 0.0, %v1856
  %1858 = vdwg.mxu0
  %1859 = vmatpush.msra.mxu0 0.0
  %1860 = vmatpush.msra.mxu0 0.0
  %1861 = vmatpush.msra.mxu0 0.0
  %1862 = vmatpush.msra.mxu0 0.0
  %1863 = vmatpush.msra.mxu0 0.0
  %1864 = vmatpush.msra.mxu0 0.0
  %1865 = vmatpush.msra.mxu0 0.0
  %1866 = vmatpush.msra.mxu0 0.0
  %1867 = vmatpush.msra.mxu0 0.0
  %1868 = vmatpush.msra.mxu0 0.0
  %1869 = vmatpush.msra.mxu0 0.0
  %1870 = vmatpush.msra.mxu0 0.0
  %1871 = vmatpush.msra.mxu0 %v1744
  %1872 = vmatpush.msra.mxu0 %v1730
  %1873 = vmatpush.msra.mxu0 %v1716
  %1874 = vmatpush.msra.mxu0 %v1702
  %1875 = vmatmul.f32.gmra.mxu0 %v1817
  %v1876 = vpop.f32.mrf.mxu0
  %v1877 = vadd.f32 0.0, %v1876
  %1878 = vdwg.mxu0
  %1879 = vmatpush.msra.mxu0 0.0
  %1880 = vmatpush.msra.mxu0 0.0
  %1881 = vmatpush.msra.mxu0 0.0
  %1882 = vmatpush.msra.mxu0 0.0
  %1883 = vmatpush.msra.mxu0 0.0
  %1884 = vmatpush.msra.mxu0 0.0
  %1885 = vmatpush.msra.mxu0 0.0
  %1886 = vmatpush.msra.mxu0 0.0
  %1887 = vmatpush.msra.mxu0 0.0
  %1888 = vmatpush.msra.mxu0 0.0
  %1889 = vmatpush.msra.mxu0 0.0
  %1890 = vmatpush.msra.mxu0 0.0
  %1891 = vmatpush.msra.mxu0 %v1745
  %1892 = vmatpush.msra.mxu0 %v1731
  %1893 = vmatpush.msra.mxu0 %v1717
  %1894 = vmatpush.msra.mxu0 %v1703
  %1895 = vmatmul.f32.gmra.mxu0 %v1817
  %v1896 = vpop.f32.mrf.mxu0
  %v1897 = vadd.f32 0.0, %v1896
  %1898 = vdwg.mxu0
  %1899 = vmatpush.msra.mxu0 0.0
  %1900 = vmatpush.msra.mxu0 0.0
  %1901 = vmatpush.msra.mxu0 0.0
  %1902 = vmatpush.msra.mxu0 0.0
  %1903 = vmatpush.msra.mxu0 0.0
  %1904 = vmatpush.msra.mxu0 0.0
  %1905 = vmatpush.msra.mxu0 0.0
  %1906 = vmatpush.msra.mxu0 0.0
  %1907 = vmatpush.msra.mxu0 0.0
  %1908 = vmatpush.msra.mxu0 0.0
  %1909 = vmatpush.msra.mxu0 0.0
  %1910 = vmatpush.msra.mxu0 0.0
  %1911 = vmatpush.msra.mxu0 %v1746
  %1912 = vmatpush.msra.mxu0 %v1732
  %1913 = vmatpush.msra.mxu0 %v1718
  %1914 = vmatpush.msra.mxu0 %v1704
  %1915 = vmatmul.f32.gmra.mxu0 %v1817
  %v1916 = vpop.f32.mrf.mxu0
  %v1917 = vadd.f32 0.0, %v1916
  %1918 = vdwg.mxu0
  %1919 = vmatpush.msra.mxu0 0.0
  %1920 = vmatpush.msra.mxu0 0.0
  %1921 = vmatpush.msra.mxu0 0.0
  %1922 = vmatpush.msra.mxu0 0.0
  %1923 = vmatpush.msra.mxu0 0.0
  %1924 = vmatpush.msra.mxu0 0.0
  %1925 = vmatpush.msra.mxu0 0.0
  %1926 = vmatpush.msra.mxu0 0.0
  %1927 = vmatpush.msra.mxu0 0.0
  %1928 = vmatpush.msra.mxu0 0.0
  %1929 = vmatpush.msra.mxu0 0.0
  %1930 = vmatpush.msra.mxu0 0.0
  %1931 = vmatpush.msra.mxu0 %v1747
  %1932 = vmatpush.msra.mxu0 %v1733
  %1933 = vmatpush.msra.mxu0 %v1719
  %1934 = vmatpush.msra.mxu0 %v1705
  %1935 = vmatmul.f32.gmra.mxu0 %v1817
  %v1936 = vpop.f32.mrf.mxu0
  %v1937 = vadd.f32 0.0, %v1936
  %1938 = vdwg.mxu0
  %1939 = vmatpush.msra.mxu0 0.0
  %1940 = vmatpush.msra.mxu0 0.0
  %1941 = vmatpush.msra.mxu0 0.0
  %1942 = vmatpush.msra.mxu0 0.0
  %1943 = vmatpush.msra.mxu0 0.0
  %1944 = vmatpush.msra.mxu0 0.0
  %1945 = vmatpush.msra.mxu0 0.0
  %1946 = vmatpush.msra.mxu0 0.0
  %1947 = vmatpush.msra.mxu0 0.0
  %1948 = vmatpush.msra.mxu0 0.0
  %1949 = vmatpush.msra.mxu0 0.0
  %1950 = vmatpush.msra.mxu0 0.0
  %1951 = vmatpush.msra.mxu0 %v1748
  %1952 = vmatpush.msra.mxu0 %v1734
  %1953 = vmatpush.msra.mxu0 %v1720
  %1954 = vmatpush.msra.mxu0 %v1706
  %1955 = vmatmul.f32.gmra.mxu0 %v1817
  %v1956 = vpop.f32.mrf.mxu0
  %v1957 = vadd.f32 0.0, %v1956
  %1958 = vdwg.mxu0
  %1959 = vmatpush.msra.mxu0 0.0
  %1960 = vmatpush.msra.mxu0 0.0
  %1961 = vmatpush.msra.mxu0 0.0
  %1962 = vmatpush.msra.mxu0 0.0
  %1963 = vmatpush.msra.mxu0 0.0
  %1964 = vmatpush.msra.mxu0 0.0
  %1965 = vmatpush.msra.mxu0 0.0
  %1966 = vmatpush.msra.mxu0 0.0
  %1967 = vmatpush.msra.mxu0 0.0
  %1968 = vmatpush.msra.mxu0 0.0
  %1969 = vmatpush.msra.mxu0 0.0
  %1970 = vmatpush.msra.mxu0 0.0
  %1971 = vmatpush.msra.mxu0 %v1749
  %1972 = vmatpush.msra.mxu0 %v1735
  %1973 = vmatpush.msra.mxu0 %v1721
  %1974 = vmatpush.msra.mxu0 %v1707
  %1975 = vmatmul.f32.gmra.mxu0 %v1817
  %v1976 = vpop.f32.mrf.mxu0
  %v1977 = vadd.f32 0.0, %v1976
  %1978 = vdwg.mxu0
  %1979 = vmatpush.msra.mxu0 0.0
  %1980 = vmatpush.msra.mxu0 0.0
  %1981 = vmatpush.msra.mxu0 0.0
  %1982 = vmatpush.msra.mxu0 0.0
  %1983 = vmatpush.msra.mxu0 0.0
  %1984 = vmatpush.msra.mxu0 0.0
  %1985 = vmatpush.msra.mxu0 0.0
  %1986 = vmatpush.msra.mxu0 0.0
  %1987 = vmatpush.msra.mxu0 0.0
  %1988 = vmatpush.msra.mxu0 0.0
  %1989 = vmatpush.msra.mxu0 0.0
  %1990 = vmatpush.msra.mxu0 0.0
  %1991 = vmatpush.msra.mxu0 %v1750
  %1992 = vmatpush.msra.mxu0 %v1736
  %1993 = vmatpush.msra.mxu0 %v1722
  %1994 = vmatpush.msra.mxu0 %v1708
  %1995 = vmatmul.f32.gmra.mxu0 %v1817
  %v1996 = vpop.f32.mrf.mxu0
  %v1997 = vadd.f32 0.0, %v1996
  %1998 = vdwg.mxu0
  %1999 = vmatpush.msra.mxu0 0.0
  %2000 = vmatpush.msra.mxu0 0.0
  %2001 = vmatpush.msra.mxu0 0.0
  %2002 = vmatpush.msra.mxu0 0.0
  %2003 = vmatpush.msra.mxu0 0.0
  %2004 = vmatpush.msra.mxu0 0.0
  %2005 = vmatpush.msra.mxu0 0.0
  %2006 = vmatpush.msra.mxu0 0.0
  %2007 = vmatpush.msra.mxu0 0.0
  %2008 = vmatpush.msra.mxu0 0.0
  %2009 = vmatpush.msra.mxu0 0.0
  %2010 = vmatpush.msra.mxu0 0.0
  %2011 = vmatpush.msra.mxu0 %v1751
  %2012 = vmatpush.msra.mxu0 %v1737
  %2013 = vmatpush.msra.mxu0 %v1723
  %2014 = vmatpush.msra.mxu0 %v1709
  %2015 = vmatmul.f32.gmra.mxu0 %v1817
  %v2016 = vpop.f32.mrf.mxu0
  %v2017 = vadd.f32 0.0, %v2016
  %2018 = vdwg.mxu0
  %2019 = vmatpush.msra.mxu0 0.0
  %2020 = vmatpush.msra.mxu0 0.0
  %2021 = vmatpush.msra.mxu0 0.0
  %2022 = vmatpush.msra.mxu0 0.0
  %2023 = vmatpush.msra.mxu0 0.0
  %2024 = vmatpush.msra.mxu0 0.0
  %2025 = vmatpush.msra.mxu0 0.0
  %2026 = vmatpush.msra.mxu0 0.0
  %2027 = vmatpush.msra.mxu0 0.0
  %2028 = vmatpush.msra.mxu0 0.0
  %2029 = vmatpush.msra.mxu0 0.0
  %2030 = vmatpush.msra.mxu0 0.0
  %2031 = vmatpush.msra.mxu0 %v1752
  %2032 = vmatpush.msra.mxu0 %v1738
  %2033 = vmatpush.msra.mxu0 %v1724
  %2034 = vmatpush.msra.mxu0 %v1710
  %2035 = vmatmul.f32.gmra.mxu0 %v1817
  %v2036 = vpop.f32.mrf.mxu0
  %v2037 = vadd.f32 0.0, %v2036
  %2038 = vdwg.mxu0
  %2039 = vmatpush.msra.mxu0 0.0
  %2040 = vmatpush.msra.mxu0 0.0
  %2041 = vmatpush.msra.mxu0 0.0
  %2042 = vmatpush.msra.mxu0 0.0
  %2043 = vmatpush.msra.mxu0 0.0
  %2044 = vmatpush.msra.mxu0 0.0
  %2045 = vmatpush.msra.mxu0 0.0
  %2046 = vmatpush.msra.mxu0 0.0
  %2047 = vmatpush.msra.mxu0 0.0
  %2048 = vmatpush.msra.mxu0 0.0
  %2049 = vmatpush.msra.mxu0 0.0
  %2050 = vmatpush.msra.mxu0 0.0
  %2051 = vmatpush.msra.mxu0 %v1753
  %2052 = vmatpush.msra.mxu0 %v1739
  %2053 = vmatpush.msra.mxu0 %v1725
  %2054 = vmatpush.msra.mxu0 %v1711
  %2055 = vmatmul.f32.gmra.mxu0 %v1817
  %v2056 = vpop.f32.mrf.mxu0
  %v2057 = vadd.f32 0.0, %v2056
  %2058 = vdwg.mxu0
  %2059 = vmatpush.msra.mxu0 0.0
  %2060 = vmatpush.msra.mxu0 0.0
  %2061 = vmatpush.msra.mxu0 0.0
  %2062 = vmatpush.msra.mxu0 0.0
  %2063 = vmatpush.msra.mxu0 0.0
  %2064 = vmatpush.msra.mxu0 0.0
  %2065 = vmatpush.msra.mxu0 0.0
  %2066 = vmatpush.msra.mxu0 0.0
  %2067 = vmatpush.msra.mxu0 0.0
  %2068 = vmatpush.msra.mxu0 0.0
  %2069 = vmatpush.msra.mxu0 0.0
  %2070 = vmatpush.msra.mxu0 0.0
  %2071 = vmatpush.msra.mxu0 %v1754
  %2072 = vmatpush.msra.mxu0 %v1740
  %2073 = vmatpush.msra.mxu0 %v1726
  %2074 = vmatpush.msra.mxu0 %v1712
  %2075 = vmatmul.f32.gmra.mxu0 %v1817
  %v2076 = vpop.f32.mrf.mxu0
  %v2077 = vadd.f32 0.0, %v2076
  %2078 = vdwg.mxu0
  %2079 = vmatpush.msra.mxu0 0.0
  %2080 = vmatpush.msra.mxu0 0.0
  %2081 = vmatpush.msra.mxu0 0.0
  %2082 = vmatpush.msra.mxu0 0.0
  %2083 = vmatpush.msra.mxu0 0.0
  %2084 = vmatpush.msra.mxu0 0.0
  %2085 = vmatpush.msra.mxu0 0.0
  %2086 = vmatpush.msra.mxu0 0.0
  %2087 = vmatpush.msra.mxu0 0.0
  %2088 = vmatpush.msra.mxu0 0.0
  %2089 = vmatpush.msra.mxu0 0.0
  %2090 = vmatpush.msra.mxu0 0.0
  %2091 = vmatpush.msra.mxu0 %v1755
  %2092 = vmatpush.msra.mxu0 %v1741
  %2093 = vmatpush.msra.mxu0 %v1727
  %2094 = vmatpush.msra.mxu0 %v1713
  %2095 = vmatmul.f32.gmra.mxu0 %v1817
  %v2096 = vpop.f32.mrf.mxu0
  %v2097 = vadd.f32 0.0, %v2096
  %2098 = vdwg.mxu0
  %2099 = vmatpush.msra.mxu0 0.0
  %2100 = vmatpush.msra.mxu0 0.0
  %2101 = vmatpush.msra.mxu0 0.0
  %2102 = vmatpush.msra.mxu0 0.0
  %2103 = vmatpush.msra.mxu0 0.0
  %2104 = vmatpush.msra.mxu0 0.0
  %2105 = vmatpush.msra.mxu0 0.0
  %2106 = vmatpush.msra.mxu0 0.0
  %2107 = vmatpush.msra.mxu0 0.0
  %2108 = vmatpush.msra.mxu0 0.0
  %2109 = vmatpush.msra.mxu0 0.0
  %2110 = vmatpush.msra.mxu0 0.0
  %2111 = vmatpush.msra.mxu0 %v1698
  %2112 = vmatpush.msra.mxu0 %v1668
  %2113 = vmatpush.msra.mxu0 %v1638
  %2114 = vmatpush.msra.mxu0 %v1608
  %2115 = vmatmul.f32.gmra.mxu0 %v1817
  %v2116 = vpop.f32.mrf.mxu0
  %v2117 = vadd.f32 0.0, %v2116
  %2118 = vdwg.mxu0
  %v2119 = vadd.f32 %v1562, %v1837
  %v2120 = vadd.f32 %v1563, %v1857
  %v2121 = vadd.f32 %v1564, %v1877
  %v2122 = vadd.f32 %v1565, %v1897
  %v2123 = vadd.f32 %v1566, %v1917
  %v2124 = vadd.f32 %v1567, %v1937
  %v2125 = vadd.f32 %v1568, %v1957
  %v2126 = vadd.f32 %v1569, %v1977
  %v2127 = vadd.f32 %v1570, %v1997
  %v2128 = vadd.f32 %v1571, %v2017
  %v2129 = vadd.f32 %v1572, %v2037
  %v2130 = vadd.f32 %v1573, %v2057
  %v2131 = vadd.f32 %v1574, %v2077
  %v2132 = vadd.f32 %v1575, %v2097
  %v2133 = vadd.f32 %v1576, %v2117
  %s2134 = scalar_lea.vmem %s1, 4
  %v2135 = vld [vmem:[%s2134] sm:$0x1]
  %2136 = vrot.lane.b32.xlu0 %v18, 97
  %v2137 = vpop.permute.xlu0 %2136
  %2138 = vrot.lane.b32.xlu0 %v19, 97
  %v2139 = vpop.permute.xlu0 %2138
  %2140 = vrot.lane.b32.xlu0 %v20, 97
  %v2141 = vpop.permute.xlu0 %2140
  %2142 = vrot.lane.b32.xlu0 %v21, 97
  %v2143 = vpop.permute.xlu0 %2142
  %2144 = vrot.lane.b32.xlu0 %v22, 97
  %v2145 = vpop.permute.xlu0 %2144
  %2146 = vrot.lane.b32.xlu0 %v23, 97
  %v2147 = vpop.permute.xlu0 %2146
  %2148 = vrot.lane.b32.xlu0 %v24, 97
  %v2149 = vpop.permute.xlu0 %2148
  %2150 = vrot.lane.b32.xlu0 %v25, 97
  %v2151 = vpop.permute.xlu0 %2150
  %2152 = vrot.lane.b32.xlu0 %v26, 97
  %v2153 = vpop.permute.xlu0 %2152
  %2154 = vrot.lane.b32.xlu0 %v27, 97
  %v2155 = vpop.permute.xlu0 %2154
  %2156 = vrot.lane.b32.xlu0 %v28, 97
  %v2157 = vpop.permute.xlu0 %2156
  %2158 = vrot.lane.b32.xlu0 %v29, 97
  %v2159 = vpop.permute.xlu0 %2158
  %2160 = vrot.lane.b32.xlu0 %v30, 97
  %v2161 = vpop.permute.xlu0 %2160
  %2162 = vrot.lane.b32.xlu0 %v31, 97
  %v2163 = vpop.permute.xlu0 %2162
  %2164 = vrot.lane.b32.xlu0 %v32, 97
  %v2165 = vpop.permute.xlu0 %2164
  %2166 = vrot.lane.b32.xlu0 %v33, 97
  %v2167 = vpop.permute.xlu0 %2166
  %2168 = vrot.lane.b32.xlu0 %v34, 97
  %v2169 = vpop.permute.xlu0 %2168
  %2170 = vrot.lane.b32.xlu0 %v35, 97
  %v2171 = vpop.permute.xlu0 %2170
  %2172 = vrot.lane.b32.xlu0 %v36, 97
  %v2173 = vpop.permute.xlu0 %2172
  %2174 = vrot.lane.b32.xlu0 %v37, 97
  %v2175 = vpop.permute.xlu0 %2174
  %2176 = vrot.lane.b32.xlu0 %v38, 97
  %v2177 = vpop.permute.xlu0 %2176
  %2178 = vrot.lane.b32.xlu0 %v39, 97
  %v2179 = vpop.permute.xlu0 %2178
  %2180 = vrot.lane.b32.xlu0 %v40, 97
  %v2181 = vpop.permute.xlu0 %2180
  %2182 = vrot.lane.b32.xlu0 %v41, 97
  %v2183 = vpop.permute.xlu0 %2182
  %2184 = vrot.lane.b32.xlu0 %v42, 97
  %v2185 = vpop.permute.xlu0 %2184
  %2186 = vrot.lane.b32.xlu0 %v43, 97
  %v2187 = vpop.permute.xlu0 %2186
  %2188 = vrot.lane.b32.xlu0 %v44, 97
  %v2189 = vpop.permute.xlu0 %2188
  %2190 = vrot.lane.b32.xlu0 %v45, 97
  %v2191 = vpop.permute.xlu0 %2190
  %2192 = vrot.lane.b32.xlu0 %v46, 97
  %v2193 = vpop.permute.xlu0 %2192
  %2194 = vrot.lane.b32.xlu0 %v47, 97
  %v2195 = vpop.permute.xlu0 %2194
  %2196 = vrot.lane.b32.xlu0 %v48, 97
  %v2197 = vpop.permute.xlu0 %2196
  %2198 = vrot.lane.b32.xlu0 %v49, 97
  %v2199 = vpop.permute.xlu0 %2198
  %2200 = vrot.lane.b32.xlu0 %v50, 97
  %v2201 = vpop.permute.xlu0 %2200
  %2202 = vrot.lane.b32.xlu0 %v51, 97
  %v2203 = vpop.permute.xlu0 %2202
  %2204 = vrot.lane.b32.xlu0 %v52, 97
  %v2205 = vpop.permute.xlu0 %2204
  %2206 = vrot.lane.b32.xlu0 %v53, 97
  %v2207 = vpop.permute.xlu0 %2206
  %2208 = vrot.lane.b32.xlu0 %v54, 97
  %v2209 = vpop.permute.xlu0 %2208
  %2210 = vrot.lane.b32.xlu0 %v55, 97
  %v2211 = vpop.permute.xlu0 %2210
  %2212 = vrot.lane.b32.xlu0 %v56, 97
  %v2213 = vpop.permute.xlu0 %2212
  %2214 = vrot.lane.b32.xlu0 %v57, 97
  %v2215 = vpop.permute.xlu0 %2214
  %2216 = vrot.lane.b32.xlu0 %v58, 97
  %v2217 = vpop.permute.xlu0 %2216
  %2218 = vrot.lane.b32.xlu0 %v59, 97
  %v2219 = vpop.permute.xlu0 %2218
  %2220 = vrot.lane.b32.xlu0 %v60, 97
  %v2221 = vpop.permute.xlu0 %2220
  %2222 = vrot.lane.b32.xlu0 %v61, 97
  %v2223 = vpop.permute.xlu0 %2222
  %2224 = vrot.lane.b32.xlu0 %v62, 97
  %v2225 = vpop.permute.xlu0 %2224
  %2226 = vrot.lane.b32.xlu0 %v63, 97
  %v2227 = vpop.permute.xlu0 %2226
  %2228 = vrot.lane.b32.xlu0 %v64, 97
  %v2229 = vpop.permute.xlu0 %2228
  %2230 = vrot.lane.b32.xlu0 %v65, 97
  %v2231 = vpop.permute.xlu0 %2230
  %2232 = vrot.lane.b32.xlu0 %v66, 97
  %v2233 = vpop.permute.xlu0 %2232
  %2234 = vrot.lane.b32.xlu0 %v67, 97
  %v2235 = vpop.permute.xlu0 %2234
  %2236 = vrot.lane.b32.xlu0 %v68, 97
  %v2237 = vpop.permute.xlu0 %2236
  %2238 = vrot.lane.b32.xlu0 %v69, 97
  %v2239 = vpop.permute.xlu0 %2238
  %2240 = vrot.lane.b32.xlu0 %v70, 97
  %v2241 = vpop.permute.xlu0 %2240
  %2242 = vrot.lane.b32.xlu0 %v71, 97
  %v2243 = vpop.permute.xlu0 %2242
  %2244 = vrot.lane.b32.xlu0 %v72, 97
  %v2245 = vpop.permute.xlu0 %2244
  %2246 = vrot.lane.b32.xlu0 %v73, 97
  %v2247 = vpop.permute.xlu0 %2246
  %2248 = vrot.lane.b32.xlu0 %v74, 97
  %v2249 = vpop.permute.xlu0 %2248
  %2250 = vrot.lane.b32.xlu0 %v75, 97
  %v2251 = vpop.permute.xlu0 %2250
  %2252 = vrot.lane.b32.xlu0 %v76, 97
  %v2253 = vpop.permute.xlu0 %2252
  %2254 = vrot.lane.b32.xlu0 %v77, 97
  %v2255 = vpop.permute.xlu0 %2254
  %vm2256 = vcmask 793600
  %v2257 = vsel %vm2256, %v2137, %v2139
  %v2258 = vsel %vm2256, %v2139, %v2141
  %v2259 = vsel %vm2256, %v2141, %v2143
  %v2260 = vsel %vm2256, %v2143, %v2145
  %v2261 = vsel %vm2256, %v2145, %v2147
  %v2262 = vsel %vm2256, %v2147, %v2149
  %v2263 = vsel %vm2256, %v2149, %v2151
  %v2264 = vsel %vm2256, %v2151, %v2153
  %v2265 = vsel %vm2256, %v2153, %v2155
  %v2266 = vsel %vm2256, %v2155, %v2157
  %v2267 = vsel %vm2256, %v2157, %v2159
  %v2268 = vsel %vm2256, %v2159, %v2161
  %v2269 = vsel %vm2256, %v2161, %v2163
  %v2270 = vsel %vm2256, %v2163, %v2165
  %v2271 = vsel %vm2256, %v2167, %v2169
  %v2272 = vsel %vm2256, %v2169, %v2171
  %v2273 = vsel %vm2256, %v2171, %v2173
  %v2274 = vsel %vm2256, %v2173, %v2175
  %v2275 = vsel %vm2256, %v2175, %v2177
  %v2276 = vsel %vm2256, %v2177, %v2179
  %v2277 = vsel %vm2256, %v2179, %v2181
  %v2278 = vsel %vm2256, %v2181, %v2183
  %v2279 = vsel %vm2256, %v2183, %v2185
  %v2280 = vsel %vm2256, %v2185, %v2187
  %v2281 = vsel %vm2256, %v2187, %v2189
  %v2282 = vsel %vm2256, %v2189, %v2191
  %v2283 = vsel %vm2256, %v2191, %v2193
  %v2284 = vsel %vm2256, %v2193, %v2195
  %v2285 = vsel %vm2256, %v2197, %v2199
  %v2286 = vsel %vm2256, %v2199, %v2201
  %v2287 = vsel %vm2256, %v2201, %v2203
  %v2288 = vsel %vm2256, %v2203, %v2205
  %v2289 = vsel %vm2256, %v2205, %v2207
  %v2290 = vsel %vm2256, %v2207, %v2209
  %v2291 = vsel %vm2256, %v2209, %v2211
  %v2292 = vsel %vm2256, %v2211, %v2213
  %v2293 = vsel %vm2256, %v2213, %v2215
  %v2294 = vsel %vm2256, %v2215, %v2217
  %v2295 = vsel %vm2256, %v2217, %v2219
  %v2296 = vsel %vm2256, %v2219, %v2221
  %v2297 = vsel %vm2256, %v2221, %v2223
  %v2298 = vsel %vm2256, %v2223, %v2225
  %v2299 = vsel %vm2256, %v2227, %v2229
  %v2300 = vsel %vm2256, %v2229, %v2231
  %v2301 = vsel %vm2256, %v2231, %v2233
  %v2302 = vsel %vm2256, %v2233, %v2235
  %v2303 = vsel %vm2256, %v2235, %v2237
  %v2304 = vsel %vm2256, %v2237, %v2239
  %v2305 = vsel %vm2256, %v2239, %v2241
  %v2306 = vsel %vm2256, %v2241, %v2243
  %v2307 = vsel %vm2256, %v2243, %v2245
  %v2308 = vsel %vm2256, %v2245, %v2247
  %v2309 = vsel %vm2256, %v2247, %v2249
  %v2310 = vsel %vm2256, %v2249, %v2251
  %v2311 = vsel %vm2256, %v2251, %v2253
  %v2312 = vsel %vm2256, %v2253, %v2255
  %v2374 = vsel %vm78, %v2135, 0
  %2376 = vmatpush.msra.mxu0 0.0
  %2377 = vmatpush.msra.mxu0 0.0
  %2378 = vmatpush.msra.mxu0 0.0
  %2379 = vmatpush.msra.mxu0 0.0
  %2380 = vmatpush.msra.mxu0 0.0
  %2381 = vmatpush.msra.mxu0 0.0
  %2382 = vmatpush.msra.mxu0 0.0
  %2383 = vmatpush.msra.mxu0 0.0
  %2384 = vmatpush.msra.mxu0 0.0
  %2385 = vmatpush.msra.mxu0 0.0
  %2386 = vmatpush.msra.mxu0 0.0
  %2387 = vmatpush.msra.mxu0 0.0
  %2388 = vmatpush.msra.mxu0 %v2299
  %2389 = vmatpush.msra.mxu0 %v2285
  %2390 = vmatpush.msra.mxu0 %v2271
  %2391 = vmatpush.msra.mxu0 %v2257
  %2392 = vmatmul.f32.gmra.mxu0 %v2374
  %v2393 = vpop.f32.mrf.mxu0
  %v2394 = vadd.f32 0.0, %v2393
  %2395 = vdwg.mxu0
  %2396 = vmatpush.msra.mxu0 0.0
  %2397 = vmatpush.msra.mxu0 0.0
  %2398 = vmatpush.msra.mxu0 0.0
  %2399 = vmatpush.msra.mxu0 0.0
  %2400 = vmatpush.msra.mxu0 0.0
  %2401 = vmatpush.msra.mxu0 0.0
  %2402 = vmatpush.msra.mxu0 0.0
  %2403 = vmatpush.msra.mxu0 0.0
  %2404 = vmatpush.msra.mxu0 0.0
  %2405 = vmatpush.msra.mxu0 0.0
  %2406 = vmatpush.msra.mxu0 0.0
  %2407 = vmatpush.msra.mxu0 0.0
  %2408 = vmatpush.msra.mxu0 %v2300
  %2409 = vmatpush.msra.mxu0 %v2286
  %2410 = vmatpush.msra.mxu0 %v2272
  %2411 = vmatpush.msra.mxu0 %v2258
  %2412 = vmatmul.f32.gmra.mxu0 %v2374
  %v2413 = vpop.f32.mrf.mxu0
  %v2414 = vadd.f32 0.0, %v2413
  %2415 = vdwg.mxu0
  %2416 = vmatpush.msra.mxu0 0.0
  %2417 = vmatpush.msra.mxu0 0.0
  %2418 = vmatpush.msra.mxu0 0.0
  %2419 = vmatpush.msra.mxu0 0.0
  %2420 = vmatpush.msra.mxu0 0.0
  %2421 = vmatpush.msra.mxu0 0.0
  %2422 = vmatpush.msra.mxu0 0.0
  %2423 = vmatpush.msra.mxu0 0.0
  %2424 = vmatpush.msra.mxu0 0.0
  %2425 = vmatpush.msra.mxu0 0.0
  %2426 = vmatpush.msra.mxu0 0.0
  %2427 = vmatpush.msra.mxu0 0.0
  %2428 = vmatpush.msra.mxu0 %v2301
  %2429 = vmatpush.msra.mxu0 %v2287
  %2430 = vmatpush.msra.mxu0 %v2273
  %2431 = vmatpush.msra.mxu0 %v2259
  %2432 = vmatmul.f32.gmra.mxu0 %v2374
  %v2433 = vpop.f32.mrf.mxu0
  %v2434 = vadd.f32 0.0, %v2433
  %2435 = vdwg.mxu0
  %2436 = vmatpush.msra.mxu0 0.0
  %2437 = vmatpush.msra.mxu0 0.0
  %2438 = vmatpush.msra.mxu0 0.0
  %2439 = vmatpush.msra.mxu0 0.0
  %2440 = vmatpush.msra.mxu0 0.0
  %2441 = vmatpush.msra.mxu0 0.0
  %2442 = vmatpush.msra.mxu0 0.0
  %2443 = vmatpush.msra.mxu0 0.0
  %2444 = vmatpush.msra.mxu0 0.0
  %2445 = vmatpush.msra.mxu0 0.0
  %2446 = vmatpush.msra.mxu0 0.0
  %2447 = vmatpush.msra.mxu0 0.0
  %2448 = vmatpush.msra.mxu0 %v2302
  %2449 = vmatpush.msra.mxu0 %v2288
  %2450 = vmatpush.msra.mxu0 %v2274
  %2451 = vmatpush.msra.mxu0 %v2260
  %2452 = vmatmul.f32.gmra.mxu0 %v2374
  %v2453 = vpop.f32.mrf.mxu0
  %v2454 = vadd.f32 0.0, %v2453
  %2455 = vdwg.mxu0
  %2456 = vmatpush.msra.mxu0 0.0
  %2457 = vmatpush.msra.mxu0 0.0
  %2458 = vmatpush.msra.mxu0 0.0
  %2459 = vmatpush.msra.mxu0 0.0
  %2460 = vmatpush.msra.mxu0 0.0
  %2461 = vmatpush.msra.mxu0 0.0
  %2462 = vmatpush.msra.mxu0 0.0
  %2463 = vmatpush.msra.mxu0 0.0
  %2464 = vmatpush.msra.mxu0 0.0
  %2465 = vmatpush.msra.mxu0 0.0
  %2466 = vmatpush.msra.mxu0 0.0
  %2467 = vmatpush.msra.mxu0 0.0
  %2468 = vmatpush.msra.mxu0 %v2303
  %2469 = vmatpush.msra.mxu0 %v2289
  %2470 = vmatpush.msra.mxu0 %v2275
  %2471 = vmatpush.msra.mxu0 %v2261
  %2472 = vmatmul.f32.gmra.mxu0 %v2374
  %v2473 = vpop.f32.mrf.mxu0
  %v2474 = vadd.f32 0.0, %v2473
  %2475 = vdwg.mxu0
  %2476 = vmatpush.msra.mxu0 0.0
  %2477 = vmatpush.msra.mxu0 0.0
  %2478 = vmatpush.msra.mxu0 0.0
  %2479 = vmatpush.msra.mxu0 0.0
  %2480 = vmatpush.msra.mxu0 0.0
  %2481 = vmatpush.msra.mxu0 0.0
  %2482 = vmatpush.msra.mxu0 0.0
  %2483 = vmatpush.msra.mxu0 0.0
  %2484 = vmatpush.msra.mxu0 0.0
  %2485 = vmatpush.msra.mxu0 0.0
  %2486 = vmatpush.msra.mxu0 0.0
  %2487 = vmatpush.msra.mxu0 0.0
  %2488 = vmatpush.msra.mxu0 %v2304
  %2489 = vmatpush.msra.mxu0 %v2290
  %2490 = vmatpush.msra.mxu0 %v2276
  %2491 = vmatpush.msra.mxu0 %v2262
  %2492 = vmatmul.f32.gmra.mxu0 %v2374
  %v2493 = vpop.f32.mrf.mxu0
  %v2494 = vadd.f32 0.0, %v2493
  %2495 = vdwg.mxu0
  %2496 = vmatpush.msra.mxu0 0.0
  %2497 = vmatpush.msra.mxu0 0.0
  %2498 = vmatpush.msra.mxu0 0.0
  %2499 = vmatpush.msra.mxu0 0.0
  %2500 = vmatpush.msra.mxu0 0.0
  %2501 = vmatpush.msra.mxu0 0.0
  %2502 = vmatpush.msra.mxu0 0.0
  %2503 = vmatpush.msra.mxu0 0.0
  %2504 = vmatpush.msra.mxu0 0.0
  %2505 = vmatpush.msra.mxu0 0.0
  %2506 = vmatpush.msra.mxu0 0.0
  %2507 = vmatpush.msra.mxu0 0.0
  %2508 = vmatpush.msra.mxu0 %v2305
  %2509 = vmatpush.msra.mxu0 %v2291
  %2510 = vmatpush.msra.mxu0 %v2277
  %2511 = vmatpush.msra.mxu0 %v2263
  %2512 = vmatmul.f32.gmra.mxu0 %v2374
  %v2513 = vpop.f32.mrf.mxu0
  %v2514 = vadd.f32 0.0, %v2513
  %2515 = vdwg.mxu0
  %2516 = vmatpush.msra.mxu0 0.0
  %2517 = vmatpush.msra.mxu0 0.0
  %2518 = vmatpush.msra.mxu0 0.0
  %2519 = vmatpush.msra.mxu0 0.0
  %2520 = vmatpush.msra.mxu0 0.0
  %2521 = vmatpush.msra.mxu0 0.0
  %2522 = vmatpush.msra.mxu0 0.0
  %2523 = vmatpush.msra.mxu0 0.0
  %2524 = vmatpush.msra.mxu0 0.0
  %2525 = vmatpush.msra.mxu0 0.0
  %2526 = vmatpush.msra.mxu0 0.0
  %2527 = vmatpush.msra.mxu0 0.0
  %2528 = vmatpush.msra.mxu0 %v2306
  %2529 = vmatpush.msra.mxu0 %v2292
  %2530 = vmatpush.msra.mxu0 %v2278
  %2531 = vmatpush.msra.mxu0 %v2264
  %2532 = vmatmul.f32.gmra.mxu0 %v2374
  %v2533 = vpop.f32.mrf.mxu0
  %v2534 = vadd.f32 0.0, %v2533
  %2535 = vdwg.mxu0
  %2536 = vmatpush.msra.mxu0 0.0
  %2537 = vmatpush.msra.mxu0 0.0
  %2538 = vmatpush.msra.mxu0 0.0
  %2539 = vmatpush.msra.mxu0 0.0
  %2540 = vmatpush.msra.mxu0 0.0
  %2541 = vmatpush.msra.mxu0 0.0
  %2542 = vmatpush.msra.mxu0 0.0
  %2543 = vmatpush.msra.mxu0 0.0
  %2544 = vmatpush.msra.mxu0 0.0
  %2545 = vmatpush.msra.mxu0 0.0
  %2546 = vmatpush.msra.mxu0 0.0
  %2547 = vmatpush.msra.mxu0 0.0
  %2548 = vmatpush.msra.mxu0 %v2307
  %2549 = vmatpush.msra.mxu0 %v2293
  %2550 = vmatpush.msra.mxu0 %v2279
  %2551 = vmatpush.msra.mxu0 %v2265
  %2552 = vmatmul.f32.gmra.mxu0 %v2374
  %v2553 = vpop.f32.mrf.mxu0
  %v2554 = vadd.f32 0.0, %v2553
  %2555 = vdwg.mxu0
  %2556 = vmatpush.msra.mxu0 0.0
  %2557 = vmatpush.msra.mxu0 0.0
  %2558 = vmatpush.msra.mxu0 0.0
  %2559 = vmatpush.msra.mxu0 0.0
  %2560 = vmatpush.msra.mxu0 0.0
  %2561 = vmatpush.msra.mxu0 0.0
  %2562 = vmatpush.msra.mxu0 0.0
  %2563 = vmatpush.msra.mxu0 0.0
  %2564 = vmatpush.msra.mxu0 0.0
  %2565 = vmatpush.msra.mxu0 0.0
  %2566 = vmatpush.msra.mxu0 0.0
  %2567 = vmatpush.msra.mxu0 0.0
  %2568 = vmatpush.msra.mxu0 %v2308
  %2569 = vmatpush.msra.mxu0 %v2294
  %2570 = vmatpush.msra.mxu0 %v2280
  %2571 = vmatpush.msra.mxu0 %v2266
  %2572 = vmatmul.f32.gmra.mxu0 %v2374
  %v2573 = vpop.f32.mrf.mxu0
  %v2574 = vadd.f32 0.0, %v2573
  %2575 = vdwg.mxu0
  %2576 = vmatpush.msra.mxu0 0.0
  %2577 = vmatpush.msra.mxu0 0.0
  %2578 = vmatpush.msra.mxu0 0.0
  %2579 = vmatpush.msra.mxu0 0.0
  %2580 = vmatpush.msra.mxu0 0.0
  %2581 = vmatpush.msra.mxu0 0.0
  %2582 = vmatpush.msra.mxu0 0.0
  %2583 = vmatpush.msra.mxu0 0.0
  %2584 = vmatpush.msra.mxu0 0.0
  %2585 = vmatpush.msra.mxu0 0.0
  %2586 = vmatpush.msra.mxu0 0.0
  %2587 = vmatpush.msra.mxu0 0.0
  %2588 = vmatpush.msra.mxu0 %v2309
  %2589 = vmatpush.msra.mxu0 %v2295
  %2590 = vmatpush.msra.mxu0 %v2281
  %2591 = vmatpush.msra.mxu0 %v2267
  %2592 = vmatmul.f32.gmra.mxu0 %v2374
  %v2593 = vpop.f32.mrf.mxu0
  %v2594 = vadd.f32 0.0, %v2593
  %2595 = vdwg.mxu0
  %2596 = vmatpush.msra.mxu0 0.0
  %2597 = vmatpush.msra.mxu0 0.0
  %2598 = vmatpush.msra.mxu0 0.0
  %2599 = vmatpush.msra.mxu0 0.0
  %2600 = vmatpush.msra.mxu0 0.0
  %2601 = vmatpush.msra.mxu0 0.0
  %2602 = vmatpush.msra.mxu0 0.0
  %2603 = vmatpush.msra.mxu0 0.0
  %2604 = vmatpush.msra.mxu0 0.0
  %2605 = vmatpush.msra.mxu0 0.0
  %2606 = vmatpush.msra.mxu0 0.0
  %2607 = vmatpush.msra.mxu0 0.0
  %2608 = vmatpush.msra.mxu0 %v2310
  %2609 = vmatpush.msra.mxu0 %v2296
  %2610 = vmatpush.msra.mxu0 %v2282
  %2611 = vmatpush.msra.mxu0 %v2268
  %2612 = vmatmul.f32.gmra.mxu0 %v2374
  %v2613 = vpop.f32.mrf.mxu0
  %v2614 = vadd.f32 0.0, %v2613
  %2615 = vdwg.mxu0
  %2616 = vmatpush.msra.mxu0 0.0
  %2617 = vmatpush.msra.mxu0 0.0
  %2618 = vmatpush.msra.mxu0 0.0
  %2619 = vmatpush.msra.mxu0 0.0
  %2620 = vmatpush.msra.mxu0 0.0
  %2621 = vmatpush.msra.mxu0 0.0
  %2622 = vmatpush.msra.mxu0 0.0
  %2623 = vmatpush.msra.mxu0 0.0
  %2624 = vmatpush.msra.mxu0 0.0
  %2625 = vmatpush.msra.mxu0 0.0
  %2626 = vmatpush.msra.mxu0 0.0
  %2627 = vmatpush.msra.mxu0 0.0
  %2628 = vmatpush.msra.mxu0 %v2311
  %2629 = vmatpush.msra.mxu0 %v2297
  %2630 = vmatpush.msra.mxu0 %v2283
  %2631 = vmatpush.msra.mxu0 %v2269
  %2632 = vmatmul.f32.gmra.mxu0 %v2374
  %v2633 = vpop.f32.mrf.mxu0
  %v2634 = vadd.f32 0.0, %v2633
  %2635 = vdwg.mxu0
  %2636 = vmatpush.msra.mxu0 0.0
  %2637 = vmatpush.msra.mxu0 0.0
  %2638 = vmatpush.msra.mxu0 0.0
  %2639 = vmatpush.msra.mxu0 0.0
  %2640 = vmatpush.msra.mxu0 0.0
  %2641 = vmatpush.msra.mxu0 0.0
  %2642 = vmatpush.msra.mxu0 0.0
  %2643 = vmatpush.msra.mxu0 0.0
  %2644 = vmatpush.msra.mxu0 0.0
  %2645 = vmatpush.msra.mxu0 0.0
  %2646 = vmatpush.msra.mxu0 0.0
  %2647 = vmatpush.msra.mxu0 0.0
  %2648 = vmatpush.msra.mxu0 %v2312
  %2649 = vmatpush.msra.mxu0 %v2298
  %2650 = vmatpush.msra.mxu0 %v2284
  %2651 = vmatpush.msra.mxu0 %v2270
  %2652 = vmatmul.f32.gmra.mxu0 %v2374
  %v2653 = vpop.f32.mrf.mxu0
  %v2654 = vadd.f32 0.0, %v2653
  %2655 = vdwg.mxu0
  %2656 = vmatpush.msra.mxu0 0.0
  %2657 = vmatpush.msra.mxu0 0.0
  %2658 = vmatpush.msra.mxu0 0.0
  %2659 = vmatpush.msra.mxu0 0.0
  %2660 = vmatpush.msra.mxu0 0.0
  %2661 = vmatpush.msra.mxu0 0.0
  %2662 = vmatpush.msra.mxu0 0.0
  %2663 = vmatpush.msra.mxu0 0.0
  %2664 = vmatpush.msra.mxu0 0.0
  %2665 = vmatpush.msra.mxu0 0.0
  %2666 = vmatpush.msra.mxu0 0.0
  %2667 = vmatpush.msra.mxu0 0.0
  %2668 = vmatpush.msra.mxu0 %v2255
  %2669 = vmatpush.msra.mxu0 %v2225
  %2670 = vmatpush.msra.mxu0 %v2195
  %2671 = vmatpush.msra.mxu0 %v2165
  %2672 = vmatmul.f32.gmra.mxu0 %v2374
  %v2673 = vpop.f32.mrf.mxu0
  %v2674 = vadd.f32 0.0, %v2673
  %2675 = vdwg.mxu0
  %v2676 = vadd.f32 %v2119, %v2394
  %v2677 = vadd.f32 %v2120, %v2414
  %v2678 = vadd.f32 %v2121, %v2434
  %v2679 = vadd.f32 %v2122, %v2454
  %v2680 = vadd.f32 %v2123, %v2474
  %v2681 = vadd.f32 %v2124, %v2494
  %v2682 = vadd.f32 %v2125, %v2514
  %v2683 = vadd.f32 %v2126, %v2534
  %v2684 = vadd.f32 %v2127, %v2554
  %v2685 = vadd.f32 %v2128, %v2574
  %v2686 = vadd.f32 %v2129, %v2594
  %v2687 = vadd.f32 %v2130, %v2614
  %v2688 = vadd.f32 %v2131, %v2634
  %v2689 = vadd.f32 %v2132, %v2654
  %v2690 = vadd.f32 %v2133, %v2674
  %s2691 = scalar_lea.vmem %s1, 5
  %v2692 = vld [vmem:[%s2691] sm:$0x1]
  %2693 = vrot.lane.b32.xlu0 %v18, 96
  %v2694 = vpop.permute.xlu0 %2693
  %2695 = vrot.lane.b32.xlu0 %v19, 96
  %v2696 = vpop.permute.xlu0 %2695
  %2697 = vrot.lane.b32.xlu0 %v20, 96
  %v2698 = vpop.permute.xlu0 %2697
  %2699 = vrot.lane.b32.xlu0 %v21, 96
  %v2700 = vpop.permute.xlu0 %2699
  %2701 = vrot.lane.b32.xlu0 %v22, 96
  %v2702 = vpop.permute.xlu0 %2701
  %2703 = vrot.lane.b32.xlu0 %v23, 96
  %v2704 = vpop.permute.xlu0 %2703
  %2705 = vrot.lane.b32.xlu0 %v24, 96
  %v2706 = vpop.permute.xlu0 %2705
  %2707 = vrot.lane.b32.xlu0 %v25, 96
  %v2708 = vpop.permute.xlu0 %2707
  %2709 = vrot.lane.b32.xlu0 %v26, 96
  %v2710 = vpop.permute.xlu0 %2709
  %2711 = vrot.lane.b32.xlu0 %v27, 96
  %v2712 = vpop.permute.xlu0 %2711
  %2713 = vrot.lane.b32.xlu0 %v28, 96
  %v2714 = vpop.permute.xlu0 %2713
  %2715 = vrot.lane.b32.xlu0 %v29, 96
  %v2716 = vpop.permute.xlu0 %2715
  %2717 = vrot.lane.b32.xlu0 %v30, 96
  %v2718 = vpop.permute.xlu0 %2717
  %2719 = vrot.lane.b32.xlu0 %v31, 96
  %v2720 = vpop.permute.xlu0 %2719
  %2721 = vrot.lane.b32.xlu0 %v32, 96
  %v2722 = vpop.permute.xlu0 %2721
  %2723 = vrot.lane.b32.xlu0 %v33, 96
  %v2724 = vpop.permute.xlu0 %2723
  %2725 = vrot.lane.b32.xlu0 %v34, 96
  %v2726 = vpop.permute.xlu0 %2725
  %2727 = vrot.lane.b32.xlu0 %v35, 96
  %v2728 = vpop.permute.xlu0 %2727
  %2729 = vrot.lane.b32.xlu0 %v36, 96
  %v2730 = vpop.permute.xlu0 %2729
  %2731 = vrot.lane.b32.xlu0 %v37, 96
  %v2732 = vpop.permute.xlu0 %2731
  %2733 = vrot.lane.b32.xlu0 %v38, 96
  %v2734 = vpop.permute.xlu0 %2733
  %2735 = vrot.lane.b32.xlu0 %v39, 96
  %v2736 = vpop.permute.xlu0 %2735
  %2737 = vrot.lane.b32.xlu0 %v40, 96
  %v2738 = vpop.permute.xlu0 %2737
  %2739 = vrot.lane.b32.xlu0 %v41, 96
  %v2740 = vpop.permute.xlu0 %2739
  %2741 = vrot.lane.b32.xlu0 %v42, 96
  %v2742 = vpop.permute.xlu0 %2741
  %2743 = vrot.lane.b32.xlu0 %v43, 96
  %v2744 = vpop.permute.xlu0 %2743
  %2745 = vrot.lane.b32.xlu0 %v44, 96
  %v2746 = vpop.permute.xlu0 %2745
  %2747 = vrot.lane.b32.xlu0 %v45, 96
  %v2748 = vpop.permute.xlu0 %2747
  %2749 = vrot.lane.b32.xlu0 %v46, 96
  %v2750 = vpop.permute.xlu0 %2749
  %2751 = vrot.lane.b32.xlu0 %v47, 96
  %v2752 = vpop.permute.xlu0 %2751
  %2753 = vrot.lane.b32.xlu0 %v48, 96
  %v2754 = vpop.permute.xlu0 %2753
  %2755 = vrot.lane.b32.xlu0 %v49, 96
  %v2756 = vpop.permute.xlu0 %2755
  %2757 = vrot.lane.b32.xlu0 %v50, 96
  %v2758 = vpop.permute.xlu0 %2757
  %2759 = vrot.lane.b32.xlu0 %v51, 96
  %v2760 = vpop.permute.xlu0 %2759
  %2761 = vrot.lane.b32.xlu0 %v52, 96
  %v2762 = vpop.permute.xlu0 %2761
  %2763 = vrot.lane.b32.xlu0 %v53, 96
  %v2764 = vpop.permute.xlu0 %2763
  %2765 = vrot.lane.b32.xlu0 %v54, 96
  %v2766 = vpop.permute.xlu0 %2765
  %2767 = vrot.lane.b32.xlu0 %v55, 96
  %v2768 = vpop.permute.xlu0 %2767
  %2769 = vrot.lane.b32.xlu0 %v56, 96
  %v2770 = vpop.permute.xlu0 %2769
  %2771 = vrot.lane.b32.xlu0 %v57, 96
  %v2772 = vpop.permute.xlu0 %2771
  %2773 = vrot.lane.b32.xlu0 %v58, 96
  %v2774 = vpop.permute.xlu0 %2773
  %2775 = vrot.lane.b32.xlu0 %v59, 96
  %v2776 = vpop.permute.xlu0 %2775
  %2777 = vrot.lane.b32.xlu0 %v60, 96
  %v2778 = vpop.permute.xlu0 %2777
  %2779 = vrot.lane.b32.xlu0 %v61, 96
  %v2780 = vpop.permute.xlu0 %2779
  %2781 = vrot.lane.b32.xlu0 %v62, 96
  %v2782 = vpop.permute.xlu0 %2781
  %2783 = vrot.lane.b32.xlu0 %v63, 96
  %v2784 = vpop.permute.xlu0 %2783
  %2785 = vrot.lane.b32.xlu0 %v64, 96
  %v2786 = vpop.permute.xlu0 %2785
  %2787 = vrot.lane.b32.xlu0 %v65, 96
  %v2788 = vpop.permute.xlu0 %2787
  %2789 = vrot.lane.b32.xlu0 %v66, 96
  %v2790 = vpop.permute.xlu0 %2789
  %2791 = vrot.lane.b32.xlu0 %v67, 96
  %v2792 = vpop.permute.xlu0 %2791
  %2793 = vrot.lane.b32.xlu0 %v68, 96
  %v2794 = vpop.permute.xlu0 %2793
  %2795 = vrot.lane.b32.xlu0 %v69, 96
  %v2796 = vpop.permute.xlu0 %2795
  %2797 = vrot.lane.b32.xlu0 %v70, 96
  %v2798 = vpop.permute.xlu0 %2797
  %2799 = vrot.lane.b32.xlu0 %v71, 96
  %v2800 = vpop.permute.xlu0 %2799
  %2801 = vrot.lane.b32.xlu0 %v72, 96
  %v2802 = vpop.permute.xlu0 %2801
  %2803 = vrot.lane.b32.xlu0 %v73, 96
  %v2804 = vpop.permute.xlu0 %2803
  %2805 = vrot.lane.b32.xlu0 %v74, 96
  %v2806 = vpop.permute.xlu0 %2805
  %2807 = vrot.lane.b32.xlu0 %v75, 96
  %v2808 = vpop.permute.xlu0 %2807
  %2809 = vrot.lane.b32.xlu0 %v76, 96
  %v2810 = vpop.permute.xlu0 %2809
  %2811 = vrot.lane.b32.xlu0 %v77, 96
  %v2812 = vpop.permute.xlu0 %2811
  %vm2813 = vcmask 785408
  %v2814 = vsel %vm2813, %v2694, %v2696
  %v2815 = vsel %vm2813, %v2696, %v2698
  %v2816 = vsel %vm2813, %v2698, %v2700
  %v2817 = vsel %vm2813, %v2700, %v2702
  %v2818 = vsel %vm2813, %v2702, %v2704
  %v2819 = vsel %vm2813, %v2704, %v2706
  %v2820 = vsel %vm2813, %v2706, %v2708
  %v2821 = vsel %vm2813, %v2708, %v2710
  %v2822 = vsel %vm2813, %v2710, %v2712
  %v2823 = vsel %vm2813, %v2712, %v2714
  %v2824 = vsel %vm2813, %v2714, %v2716
  %v2825 = vsel %vm2813, %v2716, %v2718
  %v2826 = vsel %vm2813, %v2718, %v2720
  %v2827 = vsel %vm2813, %v2720, %v2722
  %v2828 = vsel %vm2813, %v2724, %v2726
  %v2829 = vsel %vm2813, %v2726, %v2728
  %v2830 = vsel %vm2813, %v2728, %v2730
  %v2831 = vsel %vm2813, %v2730, %v2732
  %v2832 = vsel %vm2813, %v2732, %v2734
  %v2833 = vsel %vm2813, %v2734, %v2736
  %v2834 = vsel %vm2813, %v2736, %v2738
  %v2835 = vsel %vm2813, %v2738, %v2740
  %v2836 = vsel %vm2813, %v2740, %v2742
  %v2837 = vsel %vm2813, %v2742, %v2744
  %v2838 = vsel %vm2813, %v2744, %v2746
  %v2839 = vsel %vm2813, %v2746, %v2748
  %v2840 = vsel %vm2813, %v2748, %v2750
  %v2841 = vsel %vm2813, %v2750, %v2752
  %v2842 = vsel %vm2813, %v2754, %v2756
  %v2843 = vsel %vm2813, %v2756, %v2758
  %v2844 = vsel %vm2813, %v2758, %v2760
  %v2845 = vsel %vm2813, %v2760, %v2762
  %v2846 = vsel %vm2813, %v2762, %v2764
  %v2847 = vsel %vm2813, %v2764, %v2766
  %v2848 = vsel %vm2813, %v2766, %v2768
  %v2849 = vsel %vm2813, %v2768, %v2770
  %v2850 = vsel %vm2813, %v2770, %v2772
  %v2851 = vsel %vm2813, %v2772, %v2774
  %v2852 = vsel %vm2813, %v2774, %v2776
  %v2853 = vsel %vm2813, %v2776, %v2778
  %v2854 = vsel %vm2813, %v2778, %v2780
  %v2855 = vsel %vm2813, %v2780, %v2782
  %v2856 = vsel %vm2813, %v2784, %v2786
  %v2857 = vsel %vm2813, %v2786, %v2788
  %v2858 = vsel %vm2813, %v2788, %v2790
  %v2859 = vsel %vm2813, %v2790, %v2792
  %v2860 = vsel %vm2813, %v2792, %v2794
  %v2861 = vsel %vm2813, %v2794, %v2796
  %v2862 = vsel %vm2813, %v2796, %v2798
  %v2863 = vsel %vm2813, %v2798, %v2800
  %v2864 = vsel %vm2813, %v2800, %v2802
  %v2865 = vsel %vm2813, %v2802, %v2804
  %v2866 = vsel %vm2813, %v2804, %v2806
  %v2867 = vsel %vm2813, %v2806, %v2808
  %v2868 = vsel %vm2813, %v2808, %v2810
  %v2869 = vsel %vm2813, %v2810, %v2812
  %v2931 = vsel %vm78, %v2692, 0
  %2933 = vmatpush.msra.mxu0 0.0
  %2934 = vmatpush.msra.mxu0 0.0
  %2935 = vmatpush.msra.mxu0 0.0
  %2936 = vmatpush.msra.mxu0 0.0
  %2937 = vmatpush.msra.mxu0 0.0
  %2938 = vmatpush.msra.mxu0 0.0
  %2939 = vmatpush.msra.mxu0 0.0
  %2940 = vmatpush.msra.mxu0 0.0
  %2941 = vmatpush.msra.mxu0 0.0
  %2942 = vmatpush.msra.mxu0 0.0
  %2943 = vmatpush.msra.mxu0 0.0
  %2944 = vmatpush.msra.mxu0 0.0
  %2945 = vmatpush.msra.mxu0 %v2856
  %2946 = vmatpush.msra.mxu0 %v2842
  %2947 = vmatpush.msra.mxu0 %v2828
  %2948 = vmatpush.msra.mxu0 %v2814
  %2949 = vmatmul.f32.gmra.mxu0 %v2931
  %v2950 = vpop.f32.mrf.mxu0
  %v2951 = vadd.f32 0.0, %v2950
  %2952 = vdwg.mxu0
  %2953 = vmatpush.msra.mxu0 0.0
  %2954 = vmatpush.msra.mxu0 0.0
  %2955 = vmatpush.msra.mxu0 0.0
  %2956 = vmatpush.msra.mxu0 0.0
  %2957 = vmatpush.msra.mxu0 0.0
  %2958 = vmatpush.msra.mxu0 0.0
  %2959 = vmatpush.msra.mxu0 0.0
  %2960 = vmatpush.msra.mxu0 0.0
  %2961 = vmatpush.msra.mxu0 0.0
  %2962 = vmatpush.msra.mxu0 0.0
  %2963 = vmatpush.msra.mxu0 0.0
  %2964 = vmatpush.msra.mxu0 0.0
  %2965 = vmatpush.msra.mxu0 %v2857
  %2966 = vmatpush.msra.mxu0 %v2843
  %2967 = vmatpush.msra.mxu0 %v2829
  %2968 = vmatpush.msra.mxu0 %v2815
  %2969 = vmatmul.f32.gmra.mxu0 %v2931
  %v2970 = vpop.f32.mrf.mxu0
  %v2971 = vadd.f32 0.0, %v2970
  %2972 = vdwg.mxu0
  %2973 = vmatpush.msra.mxu0 0.0
  %2974 = vmatpush.msra.mxu0 0.0
  %2975 = vmatpush.msra.mxu0 0.0
  %2976 = vmatpush.msra.mxu0 0.0
  %2977 = vmatpush.msra.mxu0 0.0
  %2978 = vmatpush.msra.mxu0 0.0
  %2979 = vmatpush.msra.mxu0 0.0
  %2980 = vmatpush.msra.mxu0 0.0
  %2981 = vmatpush.msra.mxu0 0.0
  %2982 = vmatpush.msra.mxu0 0.0
  %2983 = vmatpush.msra.mxu0 0.0
  %2984 = vmatpush.msra.mxu0 0.0
  %2985 = vmatpush.msra.mxu0 %v2858
  %2986 = vmatpush.msra.mxu0 %v2844
  %2987 = vmatpush.msra.mxu0 %v2830
  %2988 = vmatpush.msra.mxu0 %v2816
  %2989 = vmatmul.f32.gmra.mxu0 %v2931
  %v2990 = vpop.f32.mrf.mxu0
  %v2991 = vadd.f32 0.0, %v2990
  %2992 = vdwg.mxu0
  %2993 = vmatpush.msra.mxu0 0.0
  %2994 = vmatpush.msra.mxu0 0.0
  %2995 = vmatpush.msra.mxu0 0.0
  %2996 = vmatpush.msra.mxu0 0.0
  %2997 = vmatpush.msra.mxu0 0.0
  %2998 = vmatpush.msra.mxu0 0.0
  %2999 = vmatpush.msra.mxu0 0.0
  %3000 = vmatpush.msra.mxu0 0.0
  %3001 = vmatpush.msra.mxu0 0.0
  %3002 = vmatpush.msra.mxu0 0.0
  %3003 = vmatpush.msra.mxu0 0.0
  %3004 = vmatpush.msra.mxu0 0.0
  %3005 = vmatpush.msra.mxu0 %v2859
  %3006 = vmatpush.msra.mxu0 %v2845
  %3007 = vmatpush.msra.mxu0 %v2831
  %3008 = vmatpush.msra.mxu0 %v2817
  %3009 = vmatmul.f32.gmra.mxu0 %v2931
  %v3010 = vpop.f32.mrf.mxu0
  %v3011 = vadd.f32 0.0, %v3010
  %3012 = vdwg.mxu0
  %3013 = vmatpush.msra.mxu0 0.0
  %3014 = vmatpush.msra.mxu0 0.0
  %3015 = vmatpush.msra.mxu0 0.0
  %3016 = vmatpush.msra.mxu0 0.0
  %3017 = vmatpush.msra.mxu0 0.0
  %3018 = vmatpush.msra.mxu0 0.0
  %3019 = vmatpush.msra.mxu0 0.0
  %3020 = vmatpush.msra.mxu0 0.0
  %3021 = vmatpush.msra.mxu0 0.0
  %3022 = vmatpush.msra.mxu0 0.0
  %3023 = vmatpush.msra.mxu0 0.0
  %3024 = vmatpush.msra.mxu0 0.0
  %3025 = vmatpush.msra.mxu0 %v2860
  %3026 = vmatpush.msra.mxu0 %v2846
  %3027 = vmatpush.msra.mxu0 %v2832
  %3028 = vmatpush.msra.mxu0 %v2818
  %3029 = vmatmul.f32.gmra.mxu0 %v2931
  %v3030 = vpop.f32.mrf.mxu0
  %v3031 = vadd.f32 0.0, %v3030
  %3032 = vdwg.mxu0
  %3033 = vmatpush.msra.mxu0 0.0
  %3034 = vmatpush.msra.mxu0 0.0
  %3035 = vmatpush.msra.mxu0 0.0
  %3036 = vmatpush.msra.mxu0 0.0
  %3037 = vmatpush.msra.mxu0 0.0
  %3038 = vmatpush.msra.mxu0 0.0
  %3039 = vmatpush.msra.mxu0 0.0
  %3040 = vmatpush.msra.mxu0 0.0
  %3041 = vmatpush.msra.mxu0 0.0
  %3042 = vmatpush.msra.mxu0 0.0
  %3043 = vmatpush.msra.mxu0 0.0
  %3044 = vmatpush.msra.mxu0 0.0
  %3045 = vmatpush.msra.mxu0 %v2861
  %3046 = vmatpush.msra.mxu0 %v2847
  %3047 = vmatpush.msra.mxu0 %v2833
  %3048 = vmatpush.msra.mxu0 %v2819
  %3049 = vmatmul.f32.gmra.mxu0 %v2931
  %v3050 = vpop.f32.mrf.mxu0
  %v3051 = vadd.f32 0.0, %v3050
  %3052 = vdwg.mxu0
  %3053 = vmatpush.msra.mxu0 0.0
  %3054 = vmatpush.msra.mxu0 0.0
  %3055 = vmatpush.msra.mxu0 0.0
  %3056 = vmatpush.msra.mxu0 0.0
  %3057 = vmatpush.msra.mxu0 0.0
  %3058 = vmatpush.msra.mxu0 0.0
  %3059 = vmatpush.msra.mxu0 0.0
  %3060 = vmatpush.msra.mxu0 0.0
  %3061 = vmatpush.msra.mxu0 0.0
  %3062 = vmatpush.msra.mxu0 0.0
  %3063 = vmatpush.msra.mxu0 0.0
  %3064 = vmatpush.msra.mxu0 0.0
  %3065 = vmatpush.msra.mxu0 %v2862
  %3066 = vmatpush.msra.mxu0 %v2848
  %3067 = vmatpush.msra.mxu0 %v2834
  %3068 = vmatpush.msra.mxu0 %v2820
  %3069 = vmatmul.f32.gmra.mxu0 %v2931
  %v3070 = vpop.f32.mrf.mxu0
  %v3071 = vadd.f32 0.0, %v3070
  %3072 = vdwg.mxu0
  %3073 = vmatpush.msra.mxu0 0.0
  %3074 = vmatpush.msra.mxu0 0.0
  %3075 = vmatpush.msra.mxu0 0.0
  %3076 = vmatpush.msra.mxu0 0.0
  %3077 = vmatpush.msra.mxu0 0.0
  %3078 = vmatpush.msra.mxu0 0.0
  %3079 = vmatpush.msra.mxu0 0.0
  %3080 = vmatpush.msra.mxu0 0.0
  %3081 = vmatpush.msra.mxu0 0.0
  %3082 = vmatpush.msra.mxu0 0.0
  %3083 = vmatpush.msra.mxu0 0.0
  %3084 = vmatpush.msra.mxu0 0.0
  %3085 = vmatpush.msra.mxu0 %v2863
  %3086 = vmatpush.msra.mxu0 %v2849
  %3087 = vmatpush.msra.mxu0 %v2835
  %3088 = vmatpush.msra.mxu0 %v2821
  %3089 = vmatmul.f32.gmra.mxu0 %v2931
  %v3090 = vpop.f32.mrf.mxu0
  %v3091 = vadd.f32 0.0, %v3090
  %3092 = vdwg.mxu0
  %3093 = vmatpush.msra.mxu0 0.0
  %3094 = vmatpush.msra.mxu0 0.0
  %3095 = vmatpush.msra.mxu0 0.0
  %3096 = vmatpush.msra.mxu0 0.0
  %3097 = vmatpush.msra.mxu0 0.0
  %3098 = vmatpush.msra.mxu0 0.0
  %3099 = vmatpush.msra.mxu0 0.0
  %3100 = vmatpush.msra.mxu0 0.0
  %3101 = vmatpush.msra.mxu0 0.0
  %3102 = vmatpush.msra.mxu0 0.0
  %3103 = vmatpush.msra.mxu0 0.0
  %3104 = vmatpush.msra.mxu0 0.0
  %3105 = vmatpush.msra.mxu0 %v2864
  %3106 = vmatpush.msra.mxu0 %v2850
  %3107 = vmatpush.msra.mxu0 %v2836
  %3108 = vmatpush.msra.mxu0 %v2822
  %3109 = vmatmul.f32.gmra.mxu0 %v2931
  %v3110 = vpop.f32.mrf.mxu0
  %v3111 = vadd.f32 0.0, %v3110
  %3112 = vdwg.mxu0
  %3113 = vmatpush.msra.mxu0 0.0
  %3114 = vmatpush.msra.mxu0 0.0
  %3115 = vmatpush.msra.mxu0 0.0
  %3116 = vmatpush.msra.mxu0 0.0
  %3117 = vmatpush.msra.mxu0 0.0
  %3118 = vmatpush.msra.mxu0 0.0
  %3119 = vmatpush.msra.mxu0 0.0
  %3120 = vmatpush.msra.mxu0 0.0
  %3121 = vmatpush.msra.mxu0 0.0
  %3122 = vmatpush.msra.mxu0 0.0
  %3123 = vmatpush.msra.mxu0 0.0
  %3124 = vmatpush.msra.mxu0 0.0
  %3125 = vmatpush.msra.mxu0 %v2865
  %3126 = vmatpush.msra.mxu0 %v2851
  %3127 = vmatpush.msra.mxu0 %v2837
  %3128 = vmatpush.msra.mxu0 %v2823
  %3129 = vmatmul.f32.gmra.mxu0 %v2931
  %v3130 = vpop.f32.mrf.mxu0
  %v3131 = vadd.f32 0.0, %v3130
  %3132 = vdwg.mxu0
  %3133 = vmatpush.msra.mxu0 0.0
  %3134 = vmatpush.msra.mxu0 0.0
  %3135 = vmatpush.msra.mxu0 0.0
  %3136 = vmatpush.msra.mxu0 0.0
  %3137 = vmatpush.msra.mxu0 0.0
  %3138 = vmatpush.msra.mxu0 0.0
  %3139 = vmatpush.msra.mxu0 0.0
  %3140 = vmatpush.msra.mxu0 0.0
  %3141 = vmatpush.msra.mxu0 0.0
  %3142 = vmatpush.msra.mxu0 0.0
  %3143 = vmatpush.msra.mxu0 0.0
  %3144 = vmatpush.msra.mxu0 0.0
  %3145 = vmatpush.msra.mxu0 %v2866
  %3146 = vmatpush.msra.mxu0 %v2852
  %3147 = vmatpush.msra.mxu0 %v2838
  %3148 = vmatpush.msra.mxu0 %v2824
  %3149 = vmatmul.f32.gmra.mxu0 %v2931
  %v3150 = vpop.f32.mrf.mxu0
  %v3151 = vadd.f32 0.0, %v3150
  %3152 = vdwg.mxu0
  %3153 = vmatpush.msra.mxu0 0.0
  %3154 = vmatpush.msra.mxu0 0.0
  %3155 = vmatpush.msra.mxu0 0.0
  %3156 = vmatpush.msra.mxu0 0.0
  %3157 = vmatpush.msra.mxu0 0.0
  %3158 = vmatpush.msra.mxu0 0.0
  %3159 = vmatpush.msra.mxu0 0.0
  %3160 = vmatpush.msra.mxu0 0.0
  %3161 = vmatpush.msra.mxu0 0.0
  %3162 = vmatpush.msra.mxu0 0.0
  %3163 = vmatpush.msra.mxu0 0.0
  %3164 = vmatpush.msra.mxu0 0.0
  %3165 = vmatpush.msra.mxu0 %v2867
  %3166 = vmatpush.msra.mxu0 %v2853
  %3167 = vmatpush.msra.mxu0 %v2839
  %3168 = vmatpush.msra.mxu0 %v2825
  %3169 = vmatmul.f32.gmra.mxu0 %v2931
  %v3170 = vpop.f32.mrf.mxu0
  %v3171 = vadd.f32 0.0, %v3170
  %3172 = vdwg.mxu0
  %3173 = vmatpush.msra.mxu0 0.0
  %3174 = vmatpush.msra.mxu0 0.0
  %3175 = vmatpush.msra.mxu0 0.0
  %3176 = vmatpush.msra.mxu0 0.0
  %3177 = vmatpush.msra.mxu0 0.0
  %3178 = vmatpush.msra.mxu0 0.0
  %3179 = vmatpush.msra.mxu0 0.0
  %3180 = vmatpush.msra.mxu0 0.0
  %3181 = vmatpush.msra.mxu0 0.0
  %3182 = vmatpush.msra.mxu0 0.0
  %3183 = vmatpush.msra.mxu0 0.0
  %3184 = vmatpush.msra.mxu0 0.0
  %3185 = vmatpush.msra.mxu0 %v2868
  %3186 = vmatpush.msra.mxu0 %v2854
  %3187 = vmatpush.msra.mxu0 %v2840
  %3188 = vmatpush.msra.mxu0 %v2826
  %3189 = vmatmul.f32.gmra.mxu0 %v2931
  %v3190 = vpop.f32.mrf.mxu0
  %v3191 = vadd.f32 0.0, %v3190
  %3192 = vdwg.mxu0
  %3193 = vmatpush.msra.mxu0 0.0
  %3194 = vmatpush.msra.mxu0 0.0
  %3195 = vmatpush.msra.mxu0 0.0
  %3196 = vmatpush.msra.mxu0 0.0
  %3197 = vmatpush.msra.mxu0 0.0
  %3198 = vmatpush.msra.mxu0 0.0
  %3199 = vmatpush.msra.mxu0 0.0
  %3200 = vmatpush.msra.mxu0 0.0
  %3201 = vmatpush.msra.mxu0 0.0
  %3202 = vmatpush.msra.mxu0 0.0
  %3203 = vmatpush.msra.mxu0 0.0
  %3204 = vmatpush.msra.mxu0 0.0
  %3205 = vmatpush.msra.mxu0 %v2869
  %3206 = vmatpush.msra.mxu0 %v2855
  %3207 = vmatpush.msra.mxu0 %v2841
  %3208 = vmatpush.msra.mxu0 %v2827
  %3209 = vmatmul.f32.gmra.mxu0 %v2931
  %v3210 = vpop.f32.mrf.mxu0
  %v3211 = vadd.f32 0.0, %v3210
  %3212 = vdwg.mxu0
  %3213 = vmatpush.msra.mxu0 0.0
  %3214 = vmatpush.msra.mxu0 0.0
  %3215 = vmatpush.msra.mxu0 0.0
  %3216 = vmatpush.msra.mxu0 0.0
  %3217 = vmatpush.msra.mxu0 0.0
  %3218 = vmatpush.msra.mxu0 0.0
  %3219 = vmatpush.msra.mxu0 0.0
  %3220 = vmatpush.msra.mxu0 0.0
  %3221 = vmatpush.msra.mxu0 0.0
  %3222 = vmatpush.msra.mxu0 0.0
  %3223 = vmatpush.msra.mxu0 0.0
  %3224 = vmatpush.msra.mxu0 0.0
  %3225 = vmatpush.msra.mxu0 %v2812
  %3226 = vmatpush.msra.mxu0 %v2782
  %3227 = vmatpush.msra.mxu0 %v2752
  %3228 = vmatpush.msra.mxu0 %v2722
  %3229 = vmatmul.f32.gmra.mxu0 %v2931
  %v3230 = vpop.f32.mrf.mxu0
  %v3231 = vadd.f32 0.0, %v3230
  %3232 = vdwg.mxu0
  %v3233 = vadd.f32 %v2676, %v2951
  %v3234 = vadd.f32 %v2677, %v2971
  %v3235 = vadd.f32 %v2678, %v2991
  %v3236 = vadd.f32 %v2679, %v3011
  %v3237 = vadd.f32 %v2680, %v3031
  %v3238 = vadd.f32 %v2681, %v3051
  %v3239 = vadd.f32 %v2682, %v3071
  %v3240 = vadd.f32 %v2683, %v3091
  %v3241 = vadd.f32 %v2684, %v3111
  %v3242 = vadd.f32 %v2685, %v3131
  %v3243 = vadd.f32 %v2686, %v3151
  %v3244 = vadd.f32 %v2687, %v3171
  %v3245 = vadd.f32 %v2688, %v3191
  %v3246 = vadd.f32 %v2689, %v3211
  %v3247 = vadd.f32 %v2690, %v3231
  %s3248 = scalar_lea.vmem %s1, 6
  %v3249 = vld [vmem:[%s3248] sm:$0x1]
  %3250 = vrot.lane.b32.xlu0 %v18, 68
  %v3251 = vpop.permute.xlu0 %3250
  %3252 = vrot.lane.b32.xlu0 %v19, 68
  %v3253 = vpop.permute.xlu0 %3252
  %3254 = vrot.lane.b32.xlu0 %v20, 68
  %v3255 = vpop.permute.xlu0 %3254
  %3256 = vrot.lane.b32.xlu0 %v21, 68
  %v3257 = vpop.permute.xlu0 %3256
  %3258 = vrot.lane.b32.xlu0 %v22, 68
  %v3259 = vpop.permute.xlu0 %3258
  %3260 = vrot.lane.b32.xlu0 %v23, 68
  %v3261 = vpop.permute.xlu0 %3260
  %3262 = vrot.lane.b32.xlu0 %v24, 68
  %v3263 = vpop.permute.xlu0 %3262
  %3264 = vrot.lane.b32.xlu0 %v25, 68
  %v3265 = vpop.permute.xlu0 %3264
  %3266 = vrot.lane.b32.xlu0 %v26, 68
  %v3267 = vpop.permute.xlu0 %3266
  %3268 = vrot.lane.b32.xlu0 %v27, 68
  %v3269 = vpop.permute.xlu0 %3268
  %3270 = vrot.lane.b32.xlu0 %v28, 68
  %v3271 = vpop.permute.xlu0 %3270
  %3272 = vrot.lane.b32.xlu0 %v29, 68
  %v3273 = vpop.permute.xlu0 %3272
  %3274 = vrot.lane.b32.xlu0 %v30, 68
  %v3275 = vpop.permute.xlu0 %3274
  %3276 = vrot.lane.b32.xlu0 %v31, 68
  %v3277 = vpop.permute.xlu0 %3276
  %3278 = vrot.lane.b32.xlu0 %v32, 68
  %v3279 = vpop.permute.xlu0 %3278
  %3280 = vrot.lane.b32.xlu0 %v33, 68
  %v3281 = vpop.permute.xlu0 %3280
  %3282 = vrot.lane.b32.xlu0 %v34, 68
  %v3283 = vpop.permute.xlu0 %3282
  %3284 = vrot.lane.b32.xlu0 %v35, 68
  %v3285 = vpop.permute.xlu0 %3284
  %3286 = vrot.lane.b32.xlu0 %v36, 68
  %v3287 = vpop.permute.xlu0 %3286
  %3288 = vrot.lane.b32.xlu0 %v37, 68
  %v3289 = vpop.permute.xlu0 %3288
  %3290 = vrot.lane.b32.xlu0 %v38, 68
  %v3291 = vpop.permute.xlu0 %3290
  %3292 = vrot.lane.b32.xlu0 %v39, 68
  %v3293 = vpop.permute.xlu0 %3292
  %3294 = vrot.lane.b32.xlu0 %v40, 68
  %v3295 = vpop.permute.xlu0 %3294
  %3296 = vrot.lane.b32.xlu0 %v41, 68
  %v3297 = vpop.permute.xlu0 %3296
  %3298 = vrot.lane.b32.xlu0 %v42, 68
  %v3299 = vpop.permute.xlu0 %3298
  %3300 = vrot.lane.b32.xlu0 %v43, 68
  %v3301 = vpop.permute.xlu0 %3300
  %3302 = vrot.lane.b32.xlu0 %v44, 68
  %v3303 = vpop.permute.xlu0 %3302
  %3304 = vrot.lane.b32.xlu0 %v45, 68
  %v3305 = vpop.permute.xlu0 %3304
  %3306 = vrot.lane.b32.xlu0 %v46, 68
  %v3307 = vpop.permute.xlu0 %3306
  %3308 = vrot.lane.b32.xlu0 %v47, 68
  %v3309 = vpop.permute.xlu0 %3308
  %3310 = vrot.lane.b32.xlu0 %v48, 68
  %v3311 = vpop.permute.xlu0 %3310
  %3312 = vrot.lane.b32.xlu0 %v49, 68
  %v3313 = vpop.permute.xlu0 %3312
  %3314 = vrot.lane.b32.xlu0 %v50, 68
  %v3315 = vpop.permute.xlu0 %3314
  %3316 = vrot.lane.b32.xlu0 %v51, 68
  %v3317 = vpop.permute.xlu0 %3316
  %3318 = vrot.lane.b32.xlu0 %v52, 68
  %v3319 = vpop.permute.xlu0 %3318
  %3320 = vrot.lane.b32.xlu0 %v53, 68
  %v3321 = vpop.permute.xlu0 %3320
  %3322 = vrot.lane.b32.xlu0 %v54, 68
  %v3323 = vpop.permute.xlu0 %3322
  %3324 = vrot.lane.b32.xlu0 %v55, 68
  %v3325 = vpop.permute.xlu0 %3324
  %3326 = vrot.lane.b32.xlu0 %v56, 68
  %v3327 = vpop.permute.xlu0 %3326
  %3328 = vrot.lane.b32.xlu0 %v57, 68
  %v3329 = vpop.permute.xlu0 %3328
  %3330 = vrot.lane.b32.xlu0 %v58, 68
  %v3331 = vpop.permute.xlu0 %3330
  %3332 = vrot.lane.b32.xlu0 %v59, 68
  %v3333 = vpop.permute.xlu0 %3332
  %3334 = vrot.lane.b32.xlu0 %v60, 68
  %v3335 = vpop.permute.xlu0 %3334
  %3336 = vrot.lane.b32.xlu0 %v61, 68
  %v3337 = vpop.permute.xlu0 %3336
  %3338 = vrot.lane.b32.xlu0 %v62, 68
  %v3339 = vpop.permute.xlu0 %3338
  %3340 = vrot.lane.b32.xlu0 %v63, 68
  %v3341 = vpop.permute.xlu0 %3340
  %3342 = vrot.lane.b32.xlu0 %v64, 68
  %v3343 = vpop.permute.xlu0 %3342
  %3344 = vrot.lane.b32.xlu0 %v65, 68
  %v3345 = vpop.permute.xlu0 %3344
  %3346 = vrot.lane.b32.xlu0 %v66, 68
  %v3347 = vpop.permute.xlu0 %3346
  %3348 = vrot.lane.b32.xlu0 %v67, 68
  %v3349 = vpop.permute.xlu0 %3348
  %3350 = vrot.lane.b32.xlu0 %v68, 68
  %v3351 = vpop.permute.xlu0 %3350
  %3352 = vrot.lane.b32.xlu0 %v69, 68
  %v3353 = vpop.permute.xlu0 %3352
  %3354 = vrot.lane.b32.xlu0 %v70, 68
  %v3355 = vpop.permute.xlu0 %3354
  %3356 = vrot.lane.b32.xlu0 %v71, 68
  %v3357 = vpop.permute.xlu0 %3356
  %3358 = vrot.lane.b32.xlu0 %v72, 68
  %v3359 = vpop.permute.xlu0 %3358
  %3360 = vrot.lane.b32.xlu0 %v73, 68
  %v3361 = vpop.permute.xlu0 %3360
  %3362 = vrot.lane.b32.xlu0 %v74, 68
  %v3363 = vpop.permute.xlu0 %3362
  %3364 = vrot.lane.b32.xlu0 %v75, 68
  %v3365 = vpop.permute.xlu0 %3364
  %3366 = vrot.lane.b32.xlu0 %v76, 68
  %v3367 = vpop.permute.xlu0 %3366
  %3368 = vrot.lane.b32.xlu0 %v77, 68
  %v3369 = vpop.permute.xlu0 %3368
  %vm3370 = vcmask 556032
  %v3371 = vsel %vm3370, %v3251, %v3253
  %v3372 = vsel %vm3370, %v3253, %v3255
  %v3373 = vsel %vm3370, %v3255, %v3257
  %v3374 = vsel %vm3370, %v3257, %v3259
  %v3375 = vsel %vm3370, %v3259, %v3261
  %v3376 = vsel %vm3370, %v3261, %v3263
  %v3377 = vsel %vm3370, %v3263, %v3265
  %v3378 = vsel %vm3370, %v3265, %v3267
  %v3379 = vsel %vm3370, %v3267, %v3269
  %v3380 = vsel %vm3370, %v3269, %v3271
  %v3381 = vsel %vm3370, %v3271, %v3273
  %v3382 = vsel %vm3370, %v3273, %v3275
  %v3383 = vsel %vm3370, %v3275, %v3277
  %v3384 = vsel %vm3370, %v3277, %v3279
  %v3385 = vsel %vm3370, %v3281, %v3283
  %v3386 = vsel %vm3370, %v3283, %v3285
  %v3387 = vsel %vm3370, %v3285, %v3287
  %v3388 = vsel %vm3370, %v3287, %v3289
  %v3389 = vsel %vm3370, %v3289, %v3291
  %v3390 = vsel %vm3370, %v3291, %v3293
  %v3391 = vsel %vm3370, %v3293, %v3295
  %v3392 = vsel %vm3370, %v3295, %v3297
  %v3393 = vsel %vm3370, %v3297, %v3299
  %v3394 = vsel %vm3370, %v3299, %v3301
  %v3395 = vsel %vm3370, %v3301, %v3303
  %v3396 = vsel %vm3370, %v3303, %v3305
  %v3397 = vsel %vm3370, %v3305, %v3307
  %v3398 = vsel %vm3370, %v3307, %v3309
  %v3399 = vsel %vm3370, %v3311, %v3313
  %v3400 = vsel %vm3370, %v3313, %v3315
  %v3401 = vsel %vm3370, %v3315, %v3317
  %v3402 = vsel %vm3370, %v3317, %v3319
  %v3403 = vsel %vm3370, %v3319, %v3321
  %v3404 = vsel %vm3370, %v3321, %v3323
  %v3405 = vsel %vm3370, %v3323, %v3325
  %v3406 = vsel %vm3370, %v3325, %v3327
  %v3407 = vsel %vm3370, %v3327, %v3329
  %v3408 = vsel %vm3370, %v3329, %v3331
  %v3409 = vsel %vm3370, %v3331, %v3333
  %v3410 = vsel %vm3370, %v3333, %v3335
  %v3411 = vsel %vm3370, %v3335, %v3337
  %v3412 = vsel %vm3370, %v3337, %v3339
  %v3413 = vsel %vm3370, %v3341, %v3343
  %v3414 = vsel %vm3370, %v3343, %v3345
  %v3415 = vsel %vm3370, %v3345, %v3347
  %v3416 = vsel %vm3370, %v3347, %v3349
  %v3417 = vsel %vm3370, %v3349, %v3351
  %v3418 = vsel %vm3370, %v3351, %v3353
  %v3419 = vsel %vm3370, %v3353, %v3355
  %v3420 = vsel %vm3370, %v3355, %v3357
  %v3421 = vsel %vm3370, %v3357, %v3359
  %v3422 = vsel %vm3370, %v3359, %v3361
  %v3423 = vsel %vm3370, %v3361, %v3363
  %v3424 = vsel %vm3370, %v3363, %v3365
  %v3425 = vsel %vm3370, %v3365, %v3367
  %v3426 = vsel %vm3370, %v3367, %v3369
  %v3488 = vsel %vm78, %v3249, 0
  %3490 = vmatpush.msra.mxu0 0.0
  %3491 = vmatpush.msra.mxu0 0.0
  %3492 = vmatpush.msra.mxu0 0.0
  %3493 = vmatpush.msra.mxu0 0.0
  %3494 = vmatpush.msra.mxu0 0.0
  %3495 = vmatpush.msra.mxu0 0.0
  %3496 = vmatpush.msra.mxu0 0.0
  %3497 = vmatpush.msra.mxu0 0.0
  %3498 = vmatpush.msra.mxu0 0.0
  %3499 = vmatpush.msra.mxu0 0.0
  %3500 = vmatpush.msra.mxu0 0.0
  %3501 = vmatpush.msra.mxu0 0.0
  %3502 = vmatpush.msra.mxu0 %v3413
  %3503 = vmatpush.msra.mxu0 %v3399
  %3504 = vmatpush.msra.mxu0 %v3385
  %3505 = vmatpush.msra.mxu0 %v3371
  %3506 = vmatmul.f32.gmra.mxu0 %v3488
  %v3507 = vpop.f32.mrf.mxu0
  %v3508 = vadd.f32 0.0, %v3507
  %3509 = vdwg.mxu0
  %3510 = vmatpush.msra.mxu0 0.0
  %3511 = vmatpush.msra.mxu0 0.0
  %3512 = vmatpush.msra.mxu0 0.0
  %3513 = vmatpush.msra.mxu0 0.0
  %3514 = vmatpush.msra.mxu0 0.0
  %3515 = vmatpush.msra.mxu0 0.0
  %3516 = vmatpush.msra.mxu0 0.0
  %3517 = vmatpush.msra.mxu0 0.0
  %3518 = vmatpush.msra.mxu0 0.0
  %3519 = vmatpush.msra.mxu0 0.0
  %3520 = vmatpush.msra.mxu0 0.0
  %3521 = vmatpush.msra.mxu0 0.0
  %3522 = vmatpush.msra.mxu0 %v3414
  %3523 = vmatpush.msra.mxu0 %v3400
  %3524 = vmatpush.msra.mxu0 %v3386
  %3525 = vmatpush.msra.mxu0 %v3372
  %3526 = vmatmul.f32.gmra.mxu0 %v3488
  %v3527 = vpop.f32.mrf.mxu0
  %v3528 = vadd.f32 0.0, %v3527
  %3529 = vdwg.mxu0
  %3530 = vmatpush.msra.mxu0 0.0
  %3531 = vmatpush.msra.mxu0 0.0
  %3532 = vmatpush.msra.mxu0 0.0
  %3533 = vmatpush.msra.mxu0 0.0
  %3534 = vmatpush.msra.mxu0 0.0
  %3535 = vmatpush.msra.mxu0 0.0
  %3536 = vmatpush.msra.mxu0 0.0
  %3537 = vmatpush.msra.mxu0 0.0
  %3538 = vmatpush.msra.mxu0 0.0
  %3539 = vmatpush.msra.mxu0 0.0
  %3540 = vmatpush.msra.mxu0 0.0
  %3541 = vmatpush.msra.mxu0 0.0
  %3542 = vmatpush.msra.mxu0 %v3415
  %3543 = vmatpush.msra.mxu0 %v3401
  %3544 = vmatpush.msra.mxu0 %v3387
  %3545 = vmatpush.msra.mxu0 %v3373
  %3546 = vmatmul.f32.gmra.mxu0 %v3488
  %v3547 = vpop.f32.mrf.mxu0
  %v3548 = vadd.f32 0.0, %v3547
  %3549 = vdwg.mxu0
  %3550 = vmatpush.msra.mxu0 0.0
  %3551 = vmatpush.msra.mxu0 0.0
  %3552 = vmatpush.msra.mxu0 0.0
  %3553 = vmatpush.msra.mxu0 0.0
  %3554 = vmatpush.msra.mxu0 0.0
  %3555 = vmatpush.msra.mxu0 0.0
  %3556 = vmatpush.msra.mxu0 0.0
  %3557 = vmatpush.msra.mxu0 0.0
  %3558 = vmatpush.msra.mxu0 0.0
  %3559 = vmatpush.msra.mxu0 0.0
  %3560 = vmatpush.msra.mxu0 0.0
  %3561 = vmatpush.msra.mxu0 0.0
  %3562 = vmatpush.msra.mxu0 %v3416
  %3563 = vmatpush.msra.mxu0 %v3402
  %3564 = vmatpush.msra.mxu0 %v3388
  %3565 = vmatpush.msra.mxu0 %v3374
  %3566 = vmatmul.f32.gmra.mxu0 %v3488
  %v3567 = vpop.f32.mrf.mxu0
  %v3568 = vadd.f32 0.0, %v3567
  %3569 = vdwg.mxu0
  %3570 = vmatpush.msra.mxu0 0.0
  %3571 = vmatpush.msra.mxu0 0.0
  %3572 = vmatpush.msra.mxu0 0.0
  %3573 = vmatpush.msra.mxu0 0.0
  %3574 = vmatpush.msra.mxu0 0.0
  %3575 = vmatpush.msra.mxu0 0.0
  %3576 = vmatpush.msra.mxu0 0.0
  %3577 = vmatpush.msra.mxu0 0.0
  %3578 = vmatpush.msra.mxu0 0.0
  %3579 = vmatpush.msra.mxu0 0.0
  %3580 = vmatpush.msra.mxu0 0.0
  %3581 = vmatpush.msra.mxu0 0.0
  %3582 = vmatpush.msra.mxu0 %v3417
  %3583 = vmatpush.msra.mxu0 %v3403
  %3584 = vmatpush.msra.mxu0 %v3389
  %3585 = vmatpush.msra.mxu0 %v3375
  %3586 = vmatmul.f32.gmra.mxu0 %v3488
  %v3587 = vpop.f32.mrf.mxu0
  %v3588 = vadd.f32 0.0, %v3587
  %3589 = vdwg.mxu0
  %3590 = vmatpush.msra.mxu0 0.0
  %3591 = vmatpush.msra.mxu0 0.0
  %3592 = vmatpush.msra.mxu0 0.0
  %3593 = vmatpush.msra.mxu0 0.0
  %3594 = vmatpush.msra.mxu0 0.0
  %3595 = vmatpush.msra.mxu0 0.0
  %3596 = vmatpush.msra.mxu0 0.0
  %3597 = vmatpush.msra.mxu0 0.0
  %3598 = vmatpush.msra.mxu0 0.0
  %3599 = vmatpush.msra.mxu0 0.0
  %3600 = vmatpush.msra.mxu0 0.0
  %3601 = vmatpush.msra.mxu0 0.0
  %3602 = vmatpush.msra.mxu0 %v3418
  %3603 = vmatpush.msra.mxu0 %v3404
  %3604 = vmatpush.msra.mxu0 %v3390
  %3605 = vmatpush.msra.mxu0 %v3376
  %3606 = vmatmul.f32.gmra.mxu0 %v3488
  %v3607 = vpop.f32.mrf.mxu0
  %v3608 = vadd.f32 0.0, %v3607
  %3609 = vdwg.mxu0
  %3610 = vmatpush.msra.mxu0 0.0
  %3611 = vmatpush.msra.mxu0 0.0
  %3612 = vmatpush.msra.mxu0 0.0
  %3613 = vmatpush.msra.mxu0 0.0
  %3614 = vmatpush.msra.mxu0 0.0
  %3615 = vmatpush.msra.mxu0 0.0
  %3616 = vmatpush.msra.mxu0 0.0
  %3617 = vmatpush.msra.mxu0 0.0
  %3618 = vmatpush.msra.mxu0 0.0
  %3619 = vmatpush.msra.mxu0 0.0
  %3620 = vmatpush.msra.mxu0 0.0
  %3621 = vmatpush.msra.mxu0 0.0
  %3622 = vmatpush.msra.mxu0 %v3419
  %3623 = vmatpush.msra.mxu0 %v3405
  %3624 = vmatpush.msra.mxu0 %v3391
  %3625 = vmatpush.msra.mxu0 %v3377
  %3626 = vmatmul.f32.gmra.mxu0 %v3488
  %v3627 = vpop.f32.mrf.mxu0
  %v3628 = vadd.f32 0.0, %v3627
  %3629 = vdwg.mxu0
  %3630 = vmatpush.msra.mxu0 0.0
  %3631 = vmatpush.msra.mxu0 0.0
  %3632 = vmatpush.msra.mxu0 0.0
  %3633 = vmatpush.msra.mxu0 0.0
  %3634 = vmatpush.msra.mxu0 0.0
  %3635 = vmatpush.msra.mxu0 0.0
  %3636 = vmatpush.msra.mxu0 0.0
  %3637 = vmatpush.msra.mxu0 0.0
  %3638 = vmatpush.msra.mxu0 0.0
  %3639 = vmatpush.msra.mxu0 0.0
  %3640 = vmatpush.msra.mxu0 0.0
  %3641 = vmatpush.msra.mxu0 0.0
  %3642 = vmatpush.msra.mxu0 %v3420
  %3643 = vmatpush.msra.mxu0 %v3406
  %3644 = vmatpush.msra.mxu0 %v3392
  %3645 = vmatpush.msra.mxu0 %v3378
  %3646 = vmatmul.f32.gmra.mxu0 %v3488
  %v3647 = vpop.f32.mrf.mxu0
  %v3648 = vadd.f32 0.0, %v3647
  %3649 = vdwg.mxu0
  %3650 = vmatpush.msra.mxu0 0.0
  %3651 = vmatpush.msra.mxu0 0.0
  %3652 = vmatpush.msra.mxu0 0.0
  %3653 = vmatpush.msra.mxu0 0.0
  %3654 = vmatpush.msra.mxu0 0.0
  %3655 = vmatpush.msra.mxu0 0.0
  %3656 = vmatpush.msra.mxu0 0.0
  %3657 = vmatpush.msra.mxu0 0.0
  %3658 = vmatpush.msra.mxu0 0.0
  %3659 = vmatpush.msra.mxu0 0.0
  %3660 = vmatpush.msra.mxu0 0.0
  %3661 = vmatpush.msra.mxu0 0.0
  %3662 = vmatpush.msra.mxu0 %v3421
  %3663 = vmatpush.msra.mxu0 %v3407
  %3664 = vmatpush.msra.mxu0 %v3393
  %3665 = vmatpush.msra.mxu0 %v3379
  %3666 = vmatmul.f32.gmra.mxu0 %v3488
  %v3667 = vpop.f32.mrf.mxu0
  %v3668 = vadd.f32 0.0, %v3667
  %3669 = vdwg.mxu0
  %3670 = vmatpush.msra.mxu0 0.0
  %3671 = vmatpush.msra.mxu0 0.0
  %3672 = vmatpush.msra.mxu0 0.0
  %3673 = vmatpush.msra.mxu0 0.0
  %3674 = vmatpush.msra.mxu0 0.0
  %3675 = vmatpush.msra.mxu0 0.0
  %3676 = vmatpush.msra.mxu0 0.0
  %3677 = vmatpush.msra.mxu0 0.0
  %3678 = vmatpush.msra.mxu0 0.0
  %3679 = vmatpush.msra.mxu0 0.0
  %3680 = vmatpush.msra.mxu0 0.0
  %3681 = vmatpush.msra.mxu0 0.0
  %3682 = vmatpush.msra.mxu0 %v3422
  %3683 = vmatpush.msra.mxu0 %v3408
  %3684 = vmatpush.msra.mxu0 %v3394
  %3685 = vmatpush.msra.mxu0 %v3380
  %3686 = vmatmul.f32.gmra.mxu0 %v3488
  %v3687 = vpop.f32.mrf.mxu0
  %v3688 = vadd.f32 0.0, %v3687
  %3689 = vdwg.mxu0
  %3690 = vmatpush.msra.mxu0 0.0
  %3691 = vmatpush.msra.mxu0 0.0
  %3692 = vmatpush.msra.mxu0 0.0
  %3693 = vmatpush.msra.mxu0 0.0
  %3694 = vmatpush.msra.mxu0 0.0
  %3695 = vmatpush.msra.mxu0 0.0
  %3696 = vmatpush.msra.mxu0 0.0
  %3697 = vmatpush.msra.mxu0 0.0
  %3698 = vmatpush.msra.mxu0 0.0
  %3699 = vmatpush.msra.mxu0 0.0
  %3700 = vmatpush.msra.mxu0 0.0
  %3701 = vmatpush.msra.mxu0 0.0
  %3702 = vmatpush.msra.mxu0 %v3423
  %3703 = vmatpush.msra.mxu0 %v3409
  %3704 = vmatpush.msra.mxu0 %v3395
  %3705 = vmatpush.msra.mxu0 %v3381
  %3706 = vmatmul.f32.gmra.mxu0 %v3488
  %v3707 = vpop.f32.mrf.mxu0
  %v3708 = vadd.f32 0.0, %v3707
  %3709 = vdwg.mxu0
  %3710 = vmatpush.msra.mxu0 0.0
  %3711 = vmatpush.msra.mxu0 0.0
  %3712 = vmatpush.msra.mxu0 0.0
  %3713 = vmatpush.msra.mxu0 0.0
  %3714 = vmatpush.msra.mxu0 0.0
  %3715 = vmatpush.msra.mxu0 0.0
  %3716 = vmatpush.msra.mxu0 0.0
  %3717 = vmatpush.msra.mxu0 0.0
  %3718 = vmatpush.msra.mxu0 0.0
  %3719 = vmatpush.msra.mxu0 0.0
  %3720 = vmatpush.msra.mxu0 0.0
  %3721 = vmatpush.msra.mxu0 0.0
  %3722 = vmatpush.msra.mxu0 %v3424
  %3723 = vmatpush.msra.mxu0 %v3410
  %3724 = vmatpush.msra.mxu0 %v3396
  %3725 = vmatpush.msra.mxu0 %v3382
  %3726 = vmatmul.f32.gmra.mxu0 %v3488
  %v3727 = vpop.f32.mrf.mxu0
  %v3728 = vadd.f32 0.0, %v3727
  %3729 = vdwg.mxu0
  %3730 = vmatpush.msra.mxu0 0.0
  %3731 = vmatpush.msra.mxu0 0.0
  %3732 = vmatpush.msra.mxu0 0.0
  %3733 = vmatpush.msra.mxu0 0.0
  %3734 = vmatpush.msra.mxu0 0.0
  %3735 = vmatpush.msra.mxu0 0.0
  %3736 = vmatpush.msra.mxu0 0.0
  %3737 = vmatpush.msra.mxu0 0.0
  %3738 = vmatpush.msra.mxu0 0.0
  %3739 = vmatpush.msra.mxu0 0.0
  %3740 = vmatpush.msra.mxu0 0.0
  %3741 = vmatpush.msra.mxu0 0.0
  %3742 = vmatpush.msra.mxu0 %v3425
  %3743 = vmatpush.msra.mxu0 %v3411
  %3744 = vmatpush.msra.mxu0 %v3397
  %3745 = vmatpush.msra.mxu0 %v3383
  %3746 = vmatmul.f32.gmra.mxu0 %v3488
  %v3747 = vpop.f32.mrf.mxu0
  %v3748 = vadd.f32 0.0, %v3747
  %3749 = vdwg.mxu0
  %3750 = vmatpush.msra.mxu0 0.0
  %3751 = vmatpush.msra.mxu0 0.0
  %3752 = vmatpush.msra.mxu0 0.0
  %3753 = vmatpush.msra.mxu0 0.0
  %3754 = vmatpush.msra.mxu0 0.0
  %3755 = vmatpush.msra.mxu0 0.0
  %3756 = vmatpush.msra.mxu0 0.0
  %3757 = vmatpush.msra.mxu0 0.0
  %3758 = vmatpush.msra.mxu0 0.0
  %3759 = vmatpush.msra.mxu0 0.0
  %3760 = vmatpush.msra.mxu0 0.0
  %3761 = vmatpush.msra.mxu0 0.0
  %3762 = vmatpush.msra.mxu0 %v3426
  %3763 = vmatpush.msra.mxu0 %v3412
  %3764 = vmatpush.msra.mxu0 %v3398
  %3765 = vmatpush.msra.mxu0 %v3384
  %3766 = vmatmul.f32.gmra.mxu0 %v3488
  %v3767 = vpop.f32.mrf.mxu0
  %v3768 = vadd.f32 0.0, %v3767
  %3769 = vdwg.mxu0
  %3770 = vmatpush.msra.mxu0 0.0
  %3771 = vmatpush.msra.mxu0 0.0
  %3772 = vmatpush.msra.mxu0 0.0
  %3773 = vmatpush.msra.mxu0 0.0
  %3774 = vmatpush.msra.mxu0 0.0
  %3775 = vmatpush.msra.mxu0 0.0
  %3776 = vmatpush.msra.mxu0 0.0
  %3777 = vmatpush.msra.mxu0 0.0
  %3778 = vmatpush.msra.mxu0 0.0
  %3779 = vmatpush.msra.mxu0 0.0
  %3780 = vmatpush.msra.mxu0 0.0
  %3781 = vmatpush.msra.mxu0 0.0
  %3782 = vmatpush.msra.mxu0 %v3369
  %3783 = vmatpush.msra.mxu0 %v3339
  %3784 = vmatpush.msra.mxu0 %v3309
  %3785 = vmatpush.msra.mxu0 %v3279
  %3786 = vmatmul.f32.gmra.mxu0 %v3488
  %v3787 = vpop.f32.mrf.mxu0
  %v3788 = vadd.f32 0.0, %v3787
  %3789 = vdwg.mxu0
  %v3790 = vadd.f32 %v3233, %v3508
  %v3791 = vadd.f32 %v3234, %v3528
  %v3792 = vadd.f32 %v3235, %v3548
  %v3793 = vadd.f32 %v3236, %v3568
  %v3794 = vadd.f32 %v3237, %v3588
  %v3795 = vadd.f32 %v3238, %v3608
  %v3796 = vadd.f32 %v3239, %v3628
  %v3797 = vadd.f32 %v3240, %v3648
  %v3798 = vadd.f32 %v3241, %v3668
  %v3799 = vadd.f32 %v3242, %v3688
  %v3800 = vadd.f32 %v3243, %v3708
  %v3801 = vadd.f32 %v3244, %v3728
  %v3802 = vadd.f32 %v3245, %v3748
  %v3803 = vadd.f32 %v3246, %v3768
  %v3804 = vadd.f32 %v3247, %v3788
  %s3805 = scalar_lea.vmem %s1, 7
  %v3806 = vld [vmem:[%s3805] sm:$0x1]
  %3807 = vrot.lane.b32.xlu0 %v18, 67
  %v3808 = vpop.permute.xlu0 %3807
  %3809 = vrot.lane.b32.xlu0 %v19, 67
  %v3810 = vpop.permute.xlu0 %3809
  %3811 = vrot.lane.b32.xlu0 %v20, 67
  %v3812 = vpop.permute.xlu0 %3811
  %3813 = vrot.lane.b32.xlu0 %v21, 67
  %v3814 = vpop.permute.xlu0 %3813
  %3815 = vrot.lane.b32.xlu0 %v22, 67
  %v3816 = vpop.permute.xlu0 %3815
  %3817 = vrot.lane.b32.xlu0 %v23, 67
  %v3818 = vpop.permute.xlu0 %3817
  %3819 = vrot.lane.b32.xlu0 %v24, 67
  %v3820 = vpop.permute.xlu0 %3819
  %3821 = vrot.lane.b32.xlu0 %v25, 67
  %v3822 = vpop.permute.xlu0 %3821
  %3823 = vrot.lane.b32.xlu0 %v26, 67
  %v3824 = vpop.permute.xlu0 %3823
  %3825 = vrot.lane.b32.xlu0 %v27, 67
  %v3826 = vpop.permute.xlu0 %3825
  %3827 = vrot.lane.b32.xlu0 %v28, 67
  %v3828 = vpop.permute.xlu0 %3827
  %3829 = vrot.lane.b32.xlu0 %v29, 67
  %v3830 = vpop.permute.xlu0 %3829
  %3831 = vrot.lane.b32.xlu0 %v30, 67
  %v3832 = vpop.permute.xlu0 %3831
  %3833 = vrot.lane.b32.xlu0 %v31, 67
  %v3834 = vpop.permute.xlu0 %3833
  %3835 = vrot.lane.b32.xlu0 %v32, 67
  %v3836 = vpop.permute.xlu0 %3835
  %3837 = vrot.lane.b32.xlu0 %v33, 67
  %v3838 = vpop.permute.xlu0 %3837
  %3839 = vrot.lane.b32.xlu0 %v34, 67
  %v3840 = vpop.permute.xlu0 %3839
  %3841 = vrot.lane.b32.xlu0 %v35, 67
  %v3842 = vpop.permute.xlu0 %3841
  %3843 = vrot.lane.b32.xlu0 %v36, 67
  %v3844 = vpop.permute.xlu0 %3843
  %3845 = vrot.lane.b32.xlu0 %v37, 67
  %v3846 = vpop.permute.xlu0 %3845
  %3847 = vrot.lane.b32.xlu0 %v38, 67
  %v3848 = vpop.permute.xlu0 %3847
  %3849 = vrot.lane.b32.xlu0 %v39, 67
  %v3850 = vpop.permute.xlu0 %3849
  %3851 = vrot.lane.b32.xlu0 %v40, 67
  %v3852 = vpop.permute.xlu0 %3851
  %3853 = vrot.lane.b32.xlu0 %v41, 67
  %v3854 = vpop.permute.xlu0 %3853
  %3855 = vrot.lane.b32.xlu0 %v42, 67
  %v3856 = vpop.permute.xlu0 %3855
  %3857 = vrot.lane.b32.xlu0 %v43, 67
  %v3858 = vpop.permute.xlu0 %3857
  %3859 = vrot.lane.b32.xlu0 %v44, 67
  %v3860 = vpop.permute.xlu0 %3859
  %3861 = vrot.lane.b32.xlu0 %v45, 67
  %v3862 = vpop.permute.xlu0 %3861
  %3863 = vrot.lane.b32.xlu0 %v46, 67
  %v3864 = vpop.permute.xlu0 %3863
  %3865 = vrot.lane.b32.xlu0 %v47, 67
  %v3866 = vpop.permute.xlu0 %3865
  %3867 = vrot.lane.b32.xlu0 %v48, 67
  %v3868 = vpop.permute.xlu0 %3867
  %3869 = vrot.lane.b32.xlu0 %v49, 67
  %v3870 = vpop.permute.xlu0 %3869
  %3871 = vrot.lane.b32.xlu0 %v50, 67
  %v3872 = vpop.permute.xlu0 %3871
  %3873 = vrot.lane.b32.xlu0 %v51, 67
  %v3874 = vpop.permute.xlu0 %3873
  %3875 = vrot.lane.b32.xlu0 %v52, 67
  %v3876 = vpop.permute.xlu0 %3875
  %3877 = vrot.lane.b32.xlu0 %v53, 67
  %v3878 = vpop.permute.xlu0 %3877
  %3879 = vrot.lane.b32.xlu0 %v54, 67
  %v3880 = vpop.permute.xlu0 %3879
  %3881 = vrot.lane.b32.xlu0 %v55, 67
  %v3882 = vpop.permute.xlu0 %3881
  %3883 = vrot.lane.b32.xlu0 %v56, 67
  %v3884 = vpop.permute.xlu0 %3883
  %3885 = vrot.lane.b32.xlu0 %v57, 67
  %v3886 = vpop.permute.xlu0 %3885
  %3887 = vrot.lane.b32.xlu0 %v58, 67
  %v3888 = vpop.permute.xlu0 %3887
  %3889 = vrot.lane.b32.xlu0 %v59, 67
  %v3890 = vpop.permute.xlu0 %3889
  %3891 = vrot.lane.b32.xlu0 %v60, 67
  %v3892 = vpop.permute.xlu0 %3891
  %3893 = vrot.lane.b32.xlu0 %v61, 67
  %v3894 = vpop.permute.xlu0 %3893
  %3895 = vrot.lane.b32.xlu0 %v62, 67
  %v3896 = vpop.permute.xlu0 %3895
  %3897 = vrot.lane.b32.xlu0 %v63, 67
  %v3898 = vpop.permute.xlu0 %3897
  %3899 = vrot.lane.b32.xlu0 %v64, 67
  %v3900 = vpop.permute.xlu0 %3899
  %3901 = vrot.lane.b32.xlu0 %v65, 67
  %v3902 = vpop.permute.xlu0 %3901
  %3903 = vrot.lane.b32.xlu0 %v66, 67
  %v3904 = vpop.permute.xlu0 %3903
  %3905 = vrot.lane.b32.xlu0 %v67, 67
  %v3906 = vpop.permute.xlu0 %3905
  %3907 = vrot.lane.b32.xlu0 %v68, 67
  %v3908 = vpop.permute.xlu0 %3907
  %3909 = vrot.lane.b32.xlu0 %v69, 67
  %v3910 = vpop.permute.xlu0 %3909
  %3911 = vrot.lane.b32.xlu0 %v70, 67
  %v3912 = vpop.permute.xlu0 %3911
  %3913 = vrot.lane.b32.xlu0 %v71, 67
  %v3914 = vpop.permute.xlu0 %3913
  %3915 = vrot.lane.b32.xlu0 %v72, 67
  %v3916 = vpop.permute.xlu0 %3915
  %3917 = vrot.lane.b32.xlu0 %v73, 67
  %v3918 = vpop.permute.xlu0 %3917
  %3919 = vrot.lane.b32.xlu0 %v74, 67
  %v3920 = vpop.permute.xlu0 %3919
  %3921 = vrot.lane.b32.xlu0 %v75, 67
  %v3922 = vpop.permute.xlu0 %3921
  %3923 = vrot.lane.b32.xlu0 %v76, 67
  %v3924 = vpop.permute.xlu0 %3923
  %3925 = vrot.lane.b32.xlu0 %v77, 67
  %v3926 = vpop.permute.xlu0 %3925
  %vm3927 = vcmask 547840
  %v3928 = vsel %vm3927, %v3808, %v3810
  %v3929 = vsel %vm3927, %v3810, %v3812
  %v3930 = vsel %vm3927, %v3812, %v3814
  %v3931 = vsel %vm3927, %v3814, %v3816
  %v3932 = vsel %vm3927, %v3816, %v3818
  %v3933 = vsel %vm3927, %v3818, %v3820
  %v3934 = vsel %vm3927, %v3820, %v3822
  %v3935 = vsel %vm3927, %v3822, %v3824
  %v3936 = vsel %vm3927, %v3824, %v3826
  %v3937 = vsel %vm3927, %v3826, %v3828
  %v3938 = vsel %vm3927, %v3828, %v3830
  %v3939 = vsel %vm3927, %v3830, %v3832
  %v3940 = vsel %vm3927, %v3832, %v3834
  %v3941 = vsel %vm3927, %v3834, %v3836
  %v3942 = vsel %vm3927, %v3838, %v3840
  %v3943 = vsel %vm3927, %v3840, %v3842
  %v3944 = vsel %vm3927, %v3842, %v3844
  %v3945 = vsel %vm3927, %v3844, %v3846
  %v3946 = vsel %vm3927, %v3846, %v3848
  %v3947 = vsel %vm3927, %v3848, %v3850
  %v3948 = vsel %vm3927, %v3850, %v3852
  %v3949 = vsel %vm3927, %v3852, %v3854
  %v3950 = vsel %vm3927, %v3854, %v3856
  %v3951 = vsel %vm3927, %v3856, %v3858
  %v3952 = vsel %vm3927, %v3858, %v3860
  %v3953 = vsel %vm3927, %v3860, %v3862
  %v3954 = vsel %vm3927, %v3862, %v3864
  %v3955 = vsel %vm3927, %v3864, %v3866
  %v3956 = vsel %vm3927, %v3868, %v3870
  %v3957 = vsel %vm3927, %v3870, %v3872
  %v3958 = vsel %vm3927, %v3872, %v3874
  %v3959 = vsel %vm3927, %v3874, %v3876
  %v3960 = vsel %vm3927, %v3876, %v3878
  %v3961 = vsel %vm3927, %v3878, %v3880
  %v3962 = vsel %vm3927, %v3880, %v3882
  %v3963 = vsel %vm3927, %v3882, %v3884
  %v3964 = vsel %vm3927, %v3884, %v3886
  %v3965 = vsel %vm3927, %v3886, %v3888
  %v3966 = vsel %vm3927, %v3888, %v3890
  %v3967 = vsel %vm3927, %v3890, %v3892
  %v3968 = vsel %vm3927, %v3892, %v3894
  %v3969 = vsel %vm3927, %v3894, %v3896
  %v3970 = vsel %vm3927, %v3898, %v3900
  %v3971 = vsel %vm3927, %v3900, %v3902
  %v3972 = vsel %vm3927, %v3902, %v3904
  %v3973 = vsel %vm3927, %v3904, %v3906
  %v3974 = vsel %vm3927, %v3906, %v3908
  %v3975 = vsel %vm3927, %v3908, %v3910
  %v3976 = vsel %vm3927, %v3910, %v3912
  %v3977 = vsel %vm3927, %v3912, %v3914
  %v3978 = vsel %vm3927, %v3914, %v3916
  %v3979 = vsel %vm3927, %v3916, %v3918
  %v3980 = vsel %vm3927, %v3918, %v3920
  %v3981 = vsel %vm3927, %v3920, %v3922
  %v3982 = vsel %vm3927, %v3922, %v3924
  %v3983 = vsel %vm3927, %v3924, %v3926
  %v4045 = vsel %vm78, %v3806, 0
  %4047 = vmatpush.msra.mxu0 0.0
  %4048 = vmatpush.msra.mxu0 0.0
  %4049 = vmatpush.msra.mxu0 0.0
  %4050 = vmatpush.msra.mxu0 0.0
  %4051 = vmatpush.msra.mxu0 0.0
  %4052 = vmatpush.msra.mxu0 0.0
  %4053 = vmatpush.msra.mxu0 0.0
  %4054 = vmatpush.msra.mxu0 0.0
  %4055 = vmatpush.msra.mxu0 0.0
  %4056 = vmatpush.msra.mxu0 0.0
  %4057 = vmatpush.msra.mxu0 0.0
  %4058 = vmatpush.msra.mxu0 0.0
  %4059 = vmatpush.msra.mxu0 %v3970
  %4060 = vmatpush.msra.mxu0 %v3956
  %4061 = vmatpush.msra.mxu0 %v3942
  %4062 = vmatpush.msra.mxu0 %v3928
  %4063 = vmatmul.f32.gmra.mxu0 %v4045
  %v4064 = vpop.f32.mrf.mxu0
  %v4065 = vadd.f32 0.0, %v4064
  %4066 = vdwg.mxu0
  %4067 = vmatpush.msra.mxu0 0.0
  %4068 = vmatpush.msra.mxu0 0.0
  %4069 = vmatpush.msra.mxu0 0.0
  %4070 = vmatpush.msra.mxu0 0.0
  %4071 = vmatpush.msra.mxu0 0.0
  %4072 = vmatpush.msra.mxu0 0.0
  %4073 = vmatpush.msra.mxu0 0.0
  %4074 = vmatpush.msra.mxu0 0.0
  %4075 = vmatpush.msra.mxu0 0.0
  %4076 = vmatpush.msra.mxu0 0.0
  %4077 = vmatpush.msra.mxu0 0.0
  %4078 = vmatpush.msra.mxu0 0.0
  %4079 = vmatpush.msra.mxu0 %v3971
  %4080 = vmatpush.msra.mxu0 %v3957
  %4081 = vmatpush.msra.mxu0 %v3943
  %4082 = vmatpush.msra.mxu0 %v3929
  %4083 = vmatmul.f32.gmra.mxu0 %v4045
  %v4084 = vpop.f32.mrf.mxu0
  %v4085 = vadd.f32 0.0, %v4084
  %4086 = vdwg.mxu0
  %4087 = vmatpush.msra.mxu0 0.0
  %4088 = vmatpush.msra.mxu0 0.0
  %4089 = vmatpush.msra.mxu0 0.0
  %4090 = vmatpush.msra.mxu0 0.0
  %4091 = vmatpush.msra.mxu0 0.0
  %4092 = vmatpush.msra.mxu0 0.0
  %4093 = vmatpush.msra.mxu0 0.0
  %4094 = vmatpush.msra.mxu0 0.0
  %4095 = vmatpush.msra.mxu0 0.0
  %4096 = vmatpush.msra.mxu0 0.0
  %4097 = vmatpush.msra.mxu0 0.0
  %4098 = vmatpush.msra.mxu0 0.0
  %4099 = vmatpush.msra.mxu0 %v3972
  %4100 = vmatpush.msra.mxu0 %v3958
  %4101 = vmatpush.msra.mxu0 %v3944
  %4102 = vmatpush.msra.mxu0 %v3930
  %4103 = vmatmul.f32.gmra.mxu0 %v4045
  %v4104 = vpop.f32.mrf.mxu0
  %v4105 = vadd.f32 0.0, %v4104
  %4106 = vdwg.mxu0
  %4107 = vmatpush.msra.mxu0 0.0
  %4108 = vmatpush.msra.mxu0 0.0
  %4109 = vmatpush.msra.mxu0 0.0
  %4110 = vmatpush.msra.mxu0 0.0
  %4111 = vmatpush.msra.mxu0 0.0
  %4112 = vmatpush.msra.mxu0 0.0
  %4113 = vmatpush.msra.mxu0 0.0
  %4114 = vmatpush.msra.mxu0 0.0
  %4115 = vmatpush.msra.mxu0 0.0
  %4116 = vmatpush.msra.mxu0 0.0
  %4117 = vmatpush.msra.mxu0 0.0
  %4118 = vmatpush.msra.mxu0 0.0
  %4119 = vmatpush.msra.mxu0 %v3973
  %4120 = vmatpush.msra.mxu0 %v3959
  %4121 = vmatpush.msra.mxu0 %v3945
  %4122 = vmatpush.msra.mxu0 %v3931
  %4123 = vmatmul.f32.gmra.mxu0 %v4045
  %v4124 = vpop.f32.mrf.mxu0
  %v4125 = vadd.f32 0.0, %v4124
  %4126 = vdwg.mxu0
  %4127 = vmatpush.msra.mxu0 0.0
  %4128 = vmatpush.msra.mxu0 0.0
  %4129 = vmatpush.msra.mxu0 0.0
  %4130 = vmatpush.msra.mxu0 0.0
  %4131 = vmatpush.msra.mxu0 0.0
  %4132 = vmatpush.msra.mxu0 0.0
  %4133 = vmatpush.msra.mxu0 0.0
  %4134 = vmatpush.msra.mxu0 0.0
  %4135 = vmatpush.msra.mxu0 0.0
  %4136 = vmatpush.msra.mxu0 0.0
  %4137 = vmatpush.msra.mxu0 0.0
  %4138 = vmatpush.msra.mxu0 0.0
  %4139 = vmatpush.msra.mxu0 %v3974
  %4140 = vmatpush.msra.mxu0 %v3960
  %4141 = vmatpush.msra.mxu0 %v3946
  %4142 = vmatpush.msra.mxu0 %v3932
  %4143 = vmatmul.f32.gmra.mxu0 %v4045
  %v4144 = vpop.f32.mrf.mxu0
  %v4145 = vadd.f32 0.0, %v4144
  %4146 = vdwg.mxu0
  %4147 = vmatpush.msra.mxu0 0.0
  %4148 = vmatpush.msra.mxu0 0.0
  %4149 = vmatpush.msra.mxu0 0.0
  %4150 = vmatpush.msra.mxu0 0.0
  %4151 = vmatpush.msra.mxu0 0.0
  %4152 = vmatpush.msra.mxu0 0.0
  %4153 = vmatpush.msra.mxu0 0.0
  %4154 = vmatpush.msra.mxu0 0.0
  %4155 = vmatpush.msra.mxu0 0.0
  %4156 = vmatpush.msra.mxu0 0.0
  %4157 = vmatpush.msra.mxu0 0.0
  %4158 = vmatpush.msra.mxu0 0.0
  %4159 = vmatpush.msra.mxu0 %v3975
  %4160 = vmatpush.msra.mxu0 %v3961
  %4161 = vmatpush.msra.mxu0 %v3947
  %4162 = vmatpush.msra.mxu0 %v3933
  %4163 = vmatmul.f32.gmra.mxu0 %v4045
  %v4164 = vpop.f32.mrf.mxu0
  %v4165 = vadd.f32 0.0, %v4164
  %4166 = vdwg.mxu0
  %4167 = vmatpush.msra.mxu0 0.0
  %4168 = vmatpush.msra.mxu0 0.0
  %4169 = vmatpush.msra.mxu0 0.0
  %4170 = vmatpush.msra.mxu0 0.0
  %4171 = vmatpush.msra.mxu0 0.0
  %4172 = vmatpush.msra.mxu0 0.0
  %4173 = vmatpush.msra.mxu0 0.0
  %4174 = vmatpush.msra.mxu0 0.0
  %4175 = vmatpush.msra.mxu0 0.0
  %4176 = vmatpush.msra.mxu0 0.0
  %4177 = vmatpush.msra.mxu0 0.0
  %4178 = vmatpush.msra.mxu0 0.0
  %4179 = vmatpush.msra.mxu0 %v3976
  %4180 = vmatpush.msra.mxu0 %v3962
  %4181 = vmatpush.msra.mxu0 %v3948
  %4182 = vmatpush.msra.mxu0 %v3934
  %4183 = vmatmul.f32.gmra.mxu0 %v4045
  %v4184 = vpop.f32.mrf.mxu0
  %v4185 = vadd.f32 0.0, %v4184
  %4186 = vdwg.mxu0
  %4187 = vmatpush.msra.mxu0 0.0
  %4188 = vmatpush.msra.mxu0 0.0
  %4189 = vmatpush.msra.mxu0 0.0
  %4190 = vmatpush.msra.mxu0 0.0
  %4191 = vmatpush.msra.mxu0 0.0
  %4192 = vmatpush.msra.mxu0 0.0
  %4193 = vmatpush.msra.mxu0 0.0
  %4194 = vmatpush.msra.mxu0 0.0
  %4195 = vmatpush.msra.mxu0 0.0
  %4196 = vmatpush.msra.mxu0 0.0
  %4197 = vmatpush.msra.mxu0 0.0
  %4198 = vmatpush.msra.mxu0 0.0
  %4199 = vmatpush.msra.mxu0 %v3977
  %4200 = vmatpush.msra.mxu0 %v3963
  %4201 = vmatpush.msra.mxu0 %v3949
  %4202 = vmatpush.msra.mxu0 %v3935
  %4203 = vmatmul.f32.gmra.mxu0 %v4045
  %v4204 = vpop.f32.mrf.mxu0
  %v4205 = vadd.f32 0.0, %v4204
  %4206 = vdwg.mxu0
  %4207 = vmatpush.msra.mxu0 0.0
  %4208 = vmatpush.msra.mxu0 0.0
  %4209 = vmatpush.msra.mxu0 0.0
  %4210 = vmatpush.msra.mxu0 0.0
  %4211 = vmatpush.msra.mxu0 0.0
  %4212 = vmatpush.msra.mxu0 0.0
  %4213 = vmatpush.msra.mxu0 0.0
  %4214 = vmatpush.msra.mxu0 0.0
  %4215 = vmatpush.msra.mxu0 0.0
  %4216 = vmatpush.msra.mxu0 0.0
  %4217 = vmatpush.msra.mxu0 0.0
  %4218 = vmatpush.msra.mxu0 0.0
  %4219 = vmatpush.msra.mxu0 %v3978
  %4220 = vmatpush.msra.mxu0 %v3964
  %4221 = vmatpush.msra.mxu0 %v3950
  %4222 = vmatpush.msra.mxu0 %v3936
  %4223 = vmatmul.f32.gmra.mxu0 %v4045
  %v4224 = vpop.f32.mrf.mxu0
  %v4225 = vadd.f32 0.0, %v4224
  %4226 = vdwg.mxu0
  %4227 = vmatpush.msra.mxu0 0.0
  %4228 = vmatpush.msra.mxu0 0.0
  %4229 = vmatpush.msra.mxu0 0.0
  %4230 = vmatpush.msra.mxu0 0.0
  %4231 = vmatpush.msra.mxu0 0.0
  %4232 = vmatpush.msra.mxu0 0.0
  %4233 = vmatpush.msra.mxu0 0.0
  %4234 = vmatpush.msra.mxu0 0.0
  %4235 = vmatpush.msra.mxu0 0.0
  %4236 = vmatpush.msra.mxu0 0.0
  %4237 = vmatpush.msra.mxu0 0.0
  %4238 = vmatpush.msra.mxu0 0.0
  %4239 = vmatpush.msra.mxu0 %v3979
  %4240 = vmatpush.msra.mxu0 %v3965
  %4241 = vmatpush.msra.mxu0 %v3951
  %4242 = vmatpush.msra.mxu0 %v3937
  %4243 = vmatmul.f32.gmra.mxu0 %v4045
  %v4244 = vpop.f32.mrf.mxu0
  %v4245 = vadd.f32 0.0, %v4244
  %4246 = vdwg.mxu0
  %4247 = vmatpush.msra.mxu0 0.0
  %4248 = vmatpush.msra.mxu0 0.0
  %4249 = vmatpush.msra.mxu0 0.0
  %4250 = vmatpush.msra.mxu0 0.0
  %4251 = vmatpush.msra.mxu0 0.0
  %4252 = vmatpush.msra.mxu0 0.0
  %4253 = vmatpush.msra.mxu0 0.0
  %4254 = vmatpush.msra.mxu0 0.0
  %4255 = vmatpush.msra.mxu0 0.0
  %4256 = vmatpush.msra.mxu0 0.0
  %4257 = vmatpush.msra.mxu0 0.0
  %4258 = vmatpush.msra.mxu0 0.0
  %4259 = vmatpush.msra.mxu0 %v3980
  %4260 = vmatpush.msra.mxu0 %v3966
  %4261 = vmatpush.msra.mxu0 %v3952
  %4262 = vmatpush.msra.mxu0 %v3938
  %4263 = vmatmul.f32.gmra.mxu0 %v4045
  %v4264 = vpop.f32.mrf.mxu0
  %v4265 = vadd.f32 0.0, %v4264
  %4266 = vdwg.mxu0
  %4267 = vmatpush.msra.mxu0 0.0
  %4268 = vmatpush.msra.mxu0 0.0
  %4269 = vmatpush.msra.mxu0 0.0
  %4270 = vmatpush.msra.mxu0 0.0
  %4271 = vmatpush.msra.mxu0 0.0
  %4272 = vmatpush.msra.mxu0 0.0
  %4273 = vmatpush.msra.mxu0 0.0
  %4274 = vmatpush.msra.mxu0 0.0
  %4275 = vmatpush.msra.mxu0 0.0
  %4276 = vmatpush.msra.mxu0 0.0
  %4277 = vmatpush.msra.mxu0 0.0
  %4278 = vmatpush.msra.mxu0 0.0
  %4279 = vmatpush.msra.mxu0 %v3981
  %4280 = vmatpush.msra.mxu0 %v3967
  %4281 = vmatpush.msra.mxu0 %v3953
  %4282 = vmatpush.msra.mxu0 %v3939
  %4283 = vmatmul.f32.gmra.mxu0 %v4045
  %v4284 = vpop.f32.mrf.mxu0
  %v4285 = vadd.f32 0.0, %v4284
  %4286 = vdwg.mxu0
  %4287 = vmatpush.msra.mxu0 0.0
  %4288 = vmatpush.msra.mxu0 0.0
  %4289 = vmatpush.msra.mxu0 0.0
  %4290 = vmatpush.msra.mxu0 0.0
  %4291 = vmatpush.msra.mxu0 0.0
  %4292 = vmatpush.msra.mxu0 0.0
  %4293 = vmatpush.msra.mxu0 0.0
  %4294 = vmatpush.msra.mxu0 0.0
  %4295 = vmatpush.msra.mxu0 0.0
  %4296 = vmatpush.msra.mxu0 0.0
  %4297 = vmatpush.msra.mxu0 0.0
  %4298 = vmatpush.msra.mxu0 0.0
  %4299 = vmatpush.msra.mxu0 %v3982
  %4300 = vmatpush.msra.mxu0 %v3968
  %4301 = vmatpush.msra.mxu0 %v3954
  %4302 = vmatpush.msra.mxu0 %v3940
  %4303 = vmatmul.f32.gmra.mxu0 %v4045
  %v4304 = vpop.f32.mrf.mxu0
  %v4305 = vadd.f32 0.0, %v4304
  %4306 = vdwg.mxu0
  %4307 = vmatpush.msra.mxu0 0.0
  %4308 = vmatpush.msra.mxu0 0.0
  %4309 = vmatpush.msra.mxu0 0.0
  %4310 = vmatpush.msra.mxu0 0.0
  %4311 = vmatpush.msra.mxu0 0.0
  %4312 = vmatpush.msra.mxu0 0.0
  %4313 = vmatpush.msra.mxu0 0.0
  %4314 = vmatpush.msra.mxu0 0.0
  %4315 = vmatpush.msra.mxu0 0.0
  %4316 = vmatpush.msra.mxu0 0.0
  %4317 = vmatpush.msra.mxu0 0.0
  %4318 = vmatpush.msra.mxu0 0.0
  %4319 = vmatpush.msra.mxu0 %v3983
  %4320 = vmatpush.msra.mxu0 %v3969
  %4321 = vmatpush.msra.mxu0 %v3955
  %4322 = vmatpush.msra.mxu0 %v3941
  %4323 = vmatmul.f32.gmra.mxu0 %v4045
  %v4324 = vpop.f32.mrf.mxu0
  %v4325 = vadd.f32 0.0, %v4324
  %4326 = vdwg.mxu0
  %4327 = vmatpush.msra.mxu0 0.0
  %4328 = vmatpush.msra.mxu0 0.0
  %4329 = vmatpush.msra.mxu0 0.0
  %4330 = vmatpush.msra.mxu0 0.0
  %4331 = vmatpush.msra.mxu0 0.0
  %4332 = vmatpush.msra.mxu0 0.0
  %4333 = vmatpush.msra.mxu0 0.0
  %4334 = vmatpush.msra.mxu0 0.0
  %4335 = vmatpush.msra.mxu0 0.0
  %4336 = vmatpush.msra.mxu0 0.0
  %4337 = vmatpush.msra.mxu0 0.0
  %4338 = vmatpush.msra.mxu0 0.0
  %4339 = vmatpush.msra.mxu0 %v3926
  %4340 = vmatpush.msra.mxu0 %v3896
  %4341 = vmatpush.msra.mxu0 %v3866
  %4342 = vmatpush.msra.mxu0 %v3836
  %4343 = vmatmul.f32.gmra.mxu0 %v4045
  %v4344 = vpop.f32.mrf.mxu0
  %v4345 = vadd.f32 0.0, %v4344
  %4346 = vdwg.mxu0
  %v4347 = vadd.f32 %v3790, %v4065
  %v4348 = vadd.f32 %v3791, %v4085
  %v4349 = vadd.f32 %v3792, %v4105
  %v4350 = vadd.f32 %v3793, %v4125
  %v4351 = vadd.f32 %v3794, %v4145
  %v4352 = vadd.f32 %v3795, %v4165
  %v4353 = vadd.f32 %v3796, %v4185
  %v4354 = vadd.f32 %v3797, %v4205
  %v4355 = vadd.f32 %v3798, %v4225
  %v4356 = vadd.f32 %v3799, %v4245
  %v4357 = vadd.f32 %v3800, %v4265
  %v4358 = vadd.f32 %v3801, %v4285
  %v4359 = vadd.f32 %v3802, %v4305
  %v4360 = vadd.f32 %v3803, %v4325
  %v4361 = vadd.f32 %v3804, %v4345
  %s4362 = scalar_lea.vmem %s1, 8
  %v4363 = vld [vmem:[%s4362] sm:$0x1]
  %4364 = vrot.lane.b32.xlu0 %v18, 66
  %v4365 = vpop.permute.xlu0 %4364
  %4366 = vrot.lane.b32.xlu0 %v19, 66
  %v4367 = vpop.permute.xlu0 %4366
  %4368 = vrot.lane.b32.xlu0 %v20, 66
  %v4369 = vpop.permute.xlu0 %4368
  %4370 = vrot.lane.b32.xlu0 %v21, 66
  %v4371 = vpop.permute.xlu0 %4370
  %4372 = vrot.lane.b32.xlu0 %v22, 66
  %v4373 = vpop.permute.xlu0 %4372
  %4374 = vrot.lane.b32.xlu0 %v23, 66
  %v4375 = vpop.permute.xlu0 %4374
  %4376 = vrot.lane.b32.xlu0 %v24, 66
  %v4377 = vpop.permute.xlu0 %4376
  %4378 = vrot.lane.b32.xlu0 %v25, 66
  %v4379 = vpop.permute.xlu0 %4378
  %4380 = vrot.lane.b32.xlu0 %v26, 66
  %v4381 = vpop.permute.xlu0 %4380
  %4382 = vrot.lane.b32.xlu0 %v27, 66
  %v4383 = vpop.permute.xlu0 %4382
  %4384 = vrot.lane.b32.xlu0 %v28, 66
  %v4385 = vpop.permute.xlu0 %4384
  %4386 = vrot.lane.b32.xlu0 %v29, 66
  %v4387 = vpop.permute.xlu0 %4386
  %4388 = vrot.lane.b32.xlu0 %v30, 66
  %v4389 = vpop.permute.xlu0 %4388
  %4390 = vrot.lane.b32.xlu0 %v31, 66
  %v4391 = vpop.permute.xlu0 %4390
  %4392 = vrot.lane.b32.xlu0 %v32, 66
  %v4393 = vpop.permute.xlu0 %4392
  %4394 = vrot.lane.b32.xlu0 %v33, 66
  %v4395 = vpop.permute.xlu0 %4394
  %4396 = vrot.lane.b32.xlu0 %v34, 66
  %v4397 = vpop.permute.xlu0 %4396
  %4398 = vrot.lane.b32.xlu0 %v35, 66
  %v4399 = vpop.permute.xlu0 %4398
  %4400 = vrot.lane.b32.xlu0 %v36, 66
  %v4401 = vpop.permute.xlu0 %4400
  %4402 = vrot.lane.b32.xlu0 %v37, 66
  %v4403 = vpop.permute.xlu0 %4402
  %4404 = vrot.lane.b32.xlu0 %v38, 66
  %v4405 = vpop.permute.xlu0 %4404
  %4406 = vrot.lane.b32.xlu0 %v39, 66
  %v4407 = vpop.permute.xlu0 %4406
  %4408 = vrot.lane.b32.xlu0 %v40, 66
  %v4409 = vpop.permute.xlu0 %4408
  %4410 = vrot.lane.b32.xlu0 %v41, 66
  %v4411 = vpop.permute.xlu0 %4410
  %4412 = vrot.lane.b32.xlu0 %v42, 66
  %v4413 = vpop.permute.xlu0 %4412
  %4414 = vrot.lane.b32.xlu0 %v43, 66
  %v4415 = vpop.permute.xlu0 %4414
  %4416 = vrot.lane.b32.xlu0 %v44, 66
  %v4417 = vpop.permute.xlu0 %4416
  %4418 = vrot.lane.b32.xlu0 %v45, 66
  %v4419 = vpop.permute.xlu0 %4418
  %4420 = vrot.lane.b32.xlu0 %v46, 66
  %v4421 = vpop.permute.xlu0 %4420
  %4422 = vrot.lane.b32.xlu0 %v47, 66
  %v4423 = vpop.permute.xlu0 %4422
  %4424 = vrot.lane.b32.xlu0 %v48, 66
  %v4425 = vpop.permute.xlu0 %4424
  %4426 = vrot.lane.b32.xlu0 %v49, 66
  %v4427 = vpop.permute.xlu0 %4426
  %4428 = vrot.lane.b32.xlu0 %v50, 66
  %v4429 = vpop.permute.xlu0 %4428
  %4430 = vrot.lane.b32.xlu0 %v51, 66
  %v4431 = vpop.permute.xlu0 %4430
  %4432 = vrot.lane.b32.xlu0 %v52, 66
  %v4433 = vpop.permute.xlu0 %4432
  %4434 = vrot.lane.b32.xlu0 %v53, 66
  %v4435 = vpop.permute.xlu0 %4434
  %4436 = vrot.lane.b32.xlu0 %v54, 66
  %v4437 = vpop.permute.xlu0 %4436
  %4438 = vrot.lane.b32.xlu0 %v55, 66
  %v4439 = vpop.permute.xlu0 %4438
  %4440 = vrot.lane.b32.xlu0 %v56, 66
  %v4441 = vpop.permute.xlu0 %4440
  %4442 = vrot.lane.b32.xlu0 %v57, 66
  %v4443 = vpop.permute.xlu0 %4442
  %4444 = vrot.lane.b32.xlu0 %v58, 66
  %v4445 = vpop.permute.xlu0 %4444
  %4446 = vrot.lane.b32.xlu0 %v59, 66
  %v4447 = vpop.permute.xlu0 %4446
  %4448 = vrot.lane.b32.xlu0 %v60, 66
  %v4449 = vpop.permute.xlu0 %4448
  %4450 = vrot.lane.b32.xlu0 %v61, 66
  %v4451 = vpop.permute.xlu0 %4450
  %4452 = vrot.lane.b32.xlu0 %v62, 66
  %v4453 = vpop.permute.xlu0 %4452
  %4454 = vrot.lane.b32.xlu0 %v63, 66
  %v4455 = vpop.permute.xlu0 %4454
  %4456 = vrot.lane.b32.xlu0 %v64, 66
  %v4457 = vpop.permute.xlu0 %4456
  %4458 = vrot.lane.b32.xlu0 %v65, 66
  %v4459 = vpop.permute.xlu0 %4458
  %4460 = vrot.lane.b32.xlu0 %v66, 66
  %v4461 = vpop.permute.xlu0 %4460
  %4462 = vrot.lane.b32.xlu0 %v67, 66
  %v4463 = vpop.permute.xlu0 %4462
  %4464 = vrot.lane.b32.xlu0 %v68, 66
  %v4465 = vpop.permute.xlu0 %4464
  %4466 = vrot.lane.b32.xlu0 %v69, 66
  %v4467 = vpop.permute.xlu0 %4466
  %4468 = vrot.lane.b32.xlu0 %v70, 66
  %v4469 = vpop.permute.xlu0 %4468
  %4470 = vrot.lane.b32.xlu0 %v71, 66
  %v4471 = vpop.permute.xlu0 %4470
  %4472 = vrot.lane.b32.xlu0 %v72, 66
  %v4473 = vpop.permute.xlu0 %4472
  %4474 = vrot.lane.b32.xlu0 %v73, 66
  %v4475 = vpop.permute.xlu0 %4474
  %4476 = vrot.lane.b32.xlu0 %v74, 66
  %v4477 = vpop.permute.xlu0 %4476
  %4478 = vrot.lane.b32.xlu0 %v75, 66
  %v4479 = vpop.permute.xlu0 %4478
  %4480 = vrot.lane.b32.xlu0 %v76, 66
  %v4481 = vpop.permute.xlu0 %4480
  %4482 = vrot.lane.b32.xlu0 %v77, 66
  %v4483 = vpop.permute.xlu0 %4482
  %vm4484 = vcmask 539648
  %v4485 = vsel %vm4484, %v4365, %v4367
  %v4486 = vsel %vm4484, %v4367, %v4369
  %v4487 = vsel %vm4484, %v4369, %v4371
  %v4488 = vsel %vm4484, %v4371, %v4373
  %v4489 = vsel %vm4484, %v4373, %v4375
  %v4490 = vsel %vm4484, %v4375, %v4377
  %v4491 = vsel %vm4484, %v4377, %v4379
  %v4492 = vsel %vm4484, %v4379, %v4381
  %v4493 = vsel %vm4484, %v4381, %v4383
  %v4494 = vsel %vm4484, %v4383, %v4385
  %v4495 = vsel %vm4484, %v4385, %v4387
  %v4496 = vsel %vm4484, %v4387, %v4389
  %v4497 = vsel %vm4484, %v4389, %v4391
  %v4498 = vsel %vm4484, %v4391, %v4393
  %v4499 = vsel %vm4484, %v4395, %v4397
  %v4500 = vsel %vm4484, %v4397, %v4399
  %v4501 = vsel %vm4484, %v4399, %v4401
  %v4502 = vsel %vm4484, %v4401, %v4403
  %v4503 = vsel %vm4484, %v4403, %v4405
  %v4504 = vsel %vm4484, %v4405, %v4407
  %v4505 = vsel %vm4484, %v4407, %v4409
  %v4506 = vsel %vm4484, %v4409, %v4411
  %v4507 = vsel %vm4484, %v4411, %v4413
  %v4508 = vsel %vm4484, %v4413, %v4415
  %v4509 = vsel %vm4484, %v4415, %v4417
  %v4510 = vsel %vm4484, %v4417, %v4419
  %v4511 = vsel %vm4484, %v4419, %v4421
  %v4512 = vsel %vm4484, %v4421, %v4423
  %v4513 = vsel %vm4484, %v4425, %v4427
  %v4514 = vsel %vm4484, %v4427, %v4429
  %v4515 = vsel %vm4484, %v4429, %v4431
  %v4516 = vsel %vm4484, %v4431, %v4433
  %v4517 = vsel %vm4484, %v4433, %v4435
  %v4518 = vsel %vm4484, %v4435, %v4437
  %v4519 = vsel %vm4484, %v4437, %v4439
  %v4520 = vsel %vm4484, %v4439, %v4441
  %v4521 = vsel %vm4484, %v4441, %v4443
  %v4522 = vsel %vm4484, %v4443, %v4445
  %v4523 = vsel %vm4484, %v4445, %v4447
  %v4524 = vsel %vm4484, %v4447, %v4449
  %v4525 = vsel %vm4484, %v4449, %v4451
  %v4526 = vsel %vm4484, %v4451, %v4453
  %v4527 = vsel %vm4484, %v4455, %v4457
  %v4528 = vsel %vm4484, %v4457, %v4459
  %v4529 = vsel %vm4484, %v4459, %v4461
  %v4530 = vsel %vm4484, %v4461, %v4463
  %v4531 = vsel %vm4484, %v4463, %v4465
  %v4532 = vsel %vm4484, %v4465, %v4467
  %v4533 = vsel %vm4484, %v4467, %v4469
  %v4534 = vsel %vm4484, %v4469, %v4471
  %v4535 = vsel %vm4484, %v4471, %v4473
  %v4536 = vsel %vm4484, %v4473, %v4475
  %v4537 = vsel %vm4484, %v4475, %v4477
  %v4538 = vsel %vm4484, %v4477, %v4479
  %v4539 = vsel %vm4484, %v4479, %v4481
  %v4540 = vsel %vm4484, %v4481, %v4483
  %v4602 = vsel %vm78, %v4363, 0
  %4604 = vmatpush.msra.mxu0 0.0
  %4605 = vmatpush.msra.mxu0 0.0
  %4606 = vmatpush.msra.mxu0 0.0
  %4607 = vmatpush.msra.mxu0 0.0
  %4608 = vmatpush.msra.mxu0 0.0
  %4609 = vmatpush.msra.mxu0 0.0
  %4610 = vmatpush.msra.mxu0 0.0
  %4611 = vmatpush.msra.mxu0 0.0
  %4612 = vmatpush.msra.mxu0 0.0
  %4613 = vmatpush.msra.mxu0 0.0
  %4614 = vmatpush.msra.mxu0 0.0
  %4615 = vmatpush.msra.mxu0 0.0
  %4616 = vmatpush.msra.mxu0 %v4527
  %4617 = vmatpush.msra.mxu0 %v4513
  %4618 = vmatpush.msra.mxu0 %v4499
  %4619 = vmatpush.msra.mxu0 %v4485
  %4620 = vmatmul.f32.gmra.mxu0 %v4602
  %v4621 = vpop.f32.mrf.mxu0
  %v4622 = vadd.f32 0.0, %v4621
  %4623 = vdwg.mxu0
  %4624 = vmatpush.msra.mxu0 0.0
  %4625 = vmatpush.msra.mxu0 0.0
  %4626 = vmatpush.msra.mxu0 0.0
  %4627 = vmatpush.msra.mxu0 0.0
  %4628 = vmatpush.msra.mxu0 0.0
  %4629 = vmatpush.msra.mxu0 0.0
  %4630 = vmatpush.msra.mxu0 0.0
  %4631 = vmatpush.msra.mxu0 0.0
  %4632 = vmatpush.msra.mxu0 0.0
  %4633 = vmatpush.msra.mxu0 0.0
  %4634 = vmatpush.msra.mxu0 0.0
  %4635 = vmatpush.msra.mxu0 0.0
  %4636 = vmatpush.msra.mxu0 %v4528
  %4637 = vmatpush.msra.mxu0 %v4514
  %4638 = vmatpush.msra.mxu0 %v4500
  %4639 = vmatpush.msra.mxu0 %v4486
  %4640 = vmatmul.f32.gmra.mxu0 %v4602
  %v4641 = vpop.f32.mrf.mxu0
  %v4642 = vadd.f32 0.0, %v4641
  %4643 = vdwg.mxu0
  %4644 = vmatpush.msra.mxu0 0.0
  %4645 = vmatpush.msra.mxu0 0.0
  %4646 = vmatpush.msra.mxu0 0.0
  %4647 = vmatpush.msra.mxu0 0.0
  %4648 = vmatpush.msra.mxu0 0.0
  %4649 = vmatpush.msra.mxu0 0.0
  %4650 = vmatpush.msra.mxu0 0.0
  %4651 = vmatpush.msra.mxu0 0.0
  %4652 = vmatpush.msra.mxu0 0.0
  %4653 = vmatpush.msra.mxu0 0.0
  %4654 = vmatpush.msra.mxu0 0.0
  %4655 = vmatpush.msra.mxu0 0.0
  %4656 = vmatpush.msra.mxu0 %v4529
  %4657 = vmatpush.msra.mxu0 %v4515
  %4658 = vmatpush.msra.mxu0 %v4501
  %4659 = vmatpush.msra.mxu0 %v4487
  %4660 = vmatmul.f32.gmra.mxu0 %v4602
  %v4661 = vpop.f32.mrf.mxu0
  %v4662 = vadd.f32 0.0, %v4661
  %4663 = vdwg.mxu0
  %4664 = vmatpush.msra.mxu0 0.0
  %4665 = vmatpush.msra.mxu0 0.0
  %4666 = vmatpush.msra.mxu0 0.0
  %4667 = vmatpush.msra.mxu0 0.0
  %4668 = vmatpush.msra.mxu0 0.0
  %4669 = vmatpush.msra.mxu0 0.0
  %4670 = vmatpush.msra.mxu0 0.0
  %4671 = vmatpush.msra.mxu0 0.0
  %4672 = vmatpush.msra.mxu0 0.0
  %4673 = vmatpush.msra.mxu0 0.0
  %4674 = vmatpush.msra.mxu0 0.0
  %4675 = vmatpush.msra.mxu0 0.0
  %4676 = vmatpush.msra.mxu0 %v4530
  %4677 = vmatpush.msra.mxu0 %v4516
  %4678 = vmatpush.msra.mxu0 %v4502
  %4679 = vmatpush.msra.mxu0 %v4488
  %4680 = vmatmul.f32.gmra.mxu0 %v4602
  %v4681 = vpop.f32.mrf.mxu0
  %v4682 = vadd.f32 0.0, %v4681
  %4683 = vdwg.mxu0
  %4684 = vmatpush.msra.mxu0 0.0
  %4685 = vmatpush.msra.mxu0 0.0
  %4686 = vmatpush.msra.mxu0 0.0
  %4687 = vmatpush.msra.mxu0 0.0
  %4688 = vmatpush.msra.mxu0 0.0
  %4689 = vmatpush.msra.mxu0 0.0
  %4690 = vmatpush.msra.mxu0 0.0
  %4691 = vmatpush.msra.mxu0 0.0
  %4692 = vmatpush.msra.mxu0 0.0
  %4693 = vmatpush.msra.mxu0 0.0
  %4694 = vmatpush.msra.mxu0 0.0
  %4695 = vmatpush.msra.mxu0 0.0
  %4696 = vmatpush.msra.mxu0 %v4531
  %4697 = vmatpush.msra.mxu0 %v4517
  %4698 = vmatpush.msra.mxu0 %v4503
  %4699 = vmatpush.msra.mxu0 %v4489
  %4700 = vmatmul.f32.gmra.mxu0 %v4602
  %v4701 = vpop.f32.mrf.mxu0
  %v4702 = vadd.f32 0.0, %v4701
  %4703 = vdwg.mxu0
  %4704 = vmatpush.msra.mxu0 0.0
  %4705 = vmatpush.msra.mxu0 0.0
  %4706 = vmatpush.msra.mxu0 0.0
  %4707 = vmatpush.msra.mxu0 0.0
  %4708 = vmatpush.msra.mxu0 0.0
  %4709 = vmatpush.msra.mxu0 0.0
  %4710 = vmatpush.msra.mxu0 0.0
  %4711 = vmatpush.msra.mxu0 0.0
  %4712 = vmatpush.msra.mxu0 0.0
  %4713 = vmatpush.msra.mxu0 0.0
  %4714 = vmatpush.msra.mxu0 0.0
  %4715 = vmatpush.msra.mxu0 0.0
  %4716 = vmatpush.msra.mxu0 %v4532
  %4717 = vmatpush.msra.mxu0 %v4518
  %4718 = vmatpush.msra.mxu0 %v4504
  %4719 = vmatpush.msra.mxu0 %v4490
  %4720 = vmatmul.f32.gmra.mxu0 %v4602
  %v4721 = vpop.f32.mrf.mxu0
  %v4722 = vadd.f32 0.0, %v4721
  %4723 = vdwg.mxu0
  %4724 = vmatpush.msra.mxu0 0.0
  %4725 = vmatpush.msra.mxu0 0.0
  %4726 = vmatpush.msra.mxu0 0.0
  %4727 = vmatpush.msra.mxu0 0.0
  %4728 = vmatpush.msra.mxu0 0.0
  %4729 = vmatpush.msra.mxu0 0.0
  %4730 = vmatpush.msra.mxu0 0.0
  %4731 = vmatpush.msra.mxu0 0.0
  %4732 = vmatpush.msra.mxu0 0.0
  %4733 = vmatpush.msra.mxu0 0.0
  %4734 = vmatpush.msra.mxu0 0.0
  %4735 = vmatpush.msra.mxu0 0.0
  %4736 = vmatpush.msra.mxu0 %v4533
  %4737 = vmatpush.msra.mxu0 %v4519
  %4738 = vmatpush.msra.mxu0 %v4505
  %4739 = vmatpush.msra.mxu0 %v4491
  %4740 = vmatmul.f32.gmra.mxu0 %v4602
  %v4741 = vpop.f32.mrf.mxu0
  %v4742 = vadd.f32 0.0, %v4741
  %4743 = vdwg.mxu0
  %4744 = vmatpush.msra.mxu0 0.0
  %4745 = vmatpush.msra.mxu0 0.0
  %4746 = vmatpush.msra.mxu0 0.0
  %4747 = vmatpush.msra.mxu0 0.0
  %4748 = vmatpush.msra.mxu0 0.0
  %4749 = vmatpush.msra.mxu0 0.0
  %4750 = vmatpush.msra.mxu0 0.0
  %4751 = vmatpush.msra.mxu0 0.0
  %4752 = vmatpush.msra.mxu0 0.0
  %4753 = vmatpush.msra.mxu0 0.0
  %4754 = vmatpush.msra.mxu0 0.0
  %4755 = vmatpush.msra.mxu0 0.0
  %4756 = vmatpush.msra.mxu0 %v4534
  %4757 = vmatpush.msra.mxu0 %v4520
  %4758 = vmatpush.msra.mxu0 %v4506
  %4759 = vmatpush.msra.mxu0 %v4492
  %4760 = vmatmul.f32.gmra.mxu0 %v4602
  %v4761 = vpop.f32.mrf.mxu0
  %v4762 = vadd.f32 0.0, %v4761
  %4763 = vdwg.mxu0
  %4764 = vmatpush.msra.mxu0 0.0
  %4765 = vmatpush.msra.mxu0 0.0
  %4766 = vmatpush.msra.mxu0 0.0
  %4767 = vmatpush.msra.mxu0 0.0
  %4768 = vmatpush.msra.mxu0 0.0
  %4769 = vmatpush.msra.mxu0 0.0
  %4770 = vmatpush.msra.mxu0 0.0
  %4771 = vmatpush.msra.mxu0 0.0
  %4772 = vmatpush.msra.mxu0 0.0
  %4773 = vmatpush.msra.mxu0 0.0
  %4774 = vmatpush.msra.mxu0 0.0
  %4775 = vmatpush.msra.mxu0 0.0
  %4776 = vmatpush.msra.mxu0 %v4535
  %4777 = vmatpush.msra.mxu0 %v4521
  %4778 = vmatpush.msra.mxu0 %v4507
  %4779 = vmatpush.msra.mxu0 %v4493
  %4780 = vmatmul.f32.gmra.mxu0 %v4602
  %v4781 = vpop.f32.mrf.mxu0
  %v4782 = vadd.f32 0.0, %v4781
  %4783 = vdwg.mxu0
  %4784 = vmatpush.msra.mxu0 0.0
  %4785 = vmatpush.msra.mxu0 0.0
  %4786 = vmatpush.msra.mxu0 0.0
  %4787 = vmatpush.msra.mxu0 0.0
  %4788 = vmatpush.msra.mxu0 0.0
  %4789 = vmatpush.msra.mxu0 0.0
  %4790 = vmatpush.msra.mxu0 0.0
  %4791 = vmatpush.msra.mxu0 0.0
  %4792 = vmatpush.msra.mxu0 0.0
  %4793 = vmatpush.msra.mxu0 0.0
  %4794 = vmatpush.msra.mxu0 0.0
  %4795 = vmatpush.msra.mxu0 0.0
  %4796 = vmatpush.msra.mxu0 %v4536
  %4797 = vmatpush.msra.mxu0 %v4522
  %4798 = vmatpush.msra.mxu0 %v4508
  %4799 = vmatpush.msra.mxu0 %v4494
  %4800 = vmatmul.f32.gmra.mxu0 %v4602
  %v4801 = vpop.f32.mrf.mxu0
  %v4802 = vadd.f32 0.0, %v4801
  %4803 = vdwg.mxu0
  %4804 = vmatpush.msra.mxu0 0.0
  %4805 = vmatpush.msra.mxu0 0.0
  %4806 = vmatpush.msra.mxu0 0.0
  %4807 = vmatpush.msra.mxu0 0.0
  %4808 = vmatpush.msra.mxu0 0.0
  %4809 = vmatpush.msra.mxu0 0.0
  %4810 = vmatpush.msra.mxu0 0.0
  %4811 = vmatpush.msra.mxu0 0.0
  %4812 = vmatpush.msra.mxu0 0.0
  %4813 = vmatpush.msra.mxu0 0.0
  %4814 = vmatpush.msra.mxu0 0.0
  %4815 = vmatpush.msra.mxu0 0.0
  %4816 = vmatpush.msra.mxu0 %v4537
  %4817 = vmatpush.msra.mxu0 %v4523
  %4818 = vmatpush.msra.mxu0 %v4509
  %4819 = vmatpush.msra.mxu0 %v4495
  %4820 = vmatmul.f32.gmra.mxu0 %v4602
  %v4821 = vpop.f32.mrf.mxu0
  %v4822 = vadd.f32 0.0, %v4821
  %4823 = vdwg.mxu0
  %4824 = vmatpush.msra.mxu0 0.0
  %4825 = vmatpush.msra.mxu0 0.0
  %4826 = vmatpush.msra.mxu0 0.0
  %4827 = vmatpush.msra.mxu0 0.0
  %4828 = vmatpush.msra.mxu0 0.0
  %4829 = vmatpush.msra.mxu0 0.0
  %4830 = vmatpush.msra.mxu0 0.0
  %4831 = vmatpush.msra.mxu0 0.0
  %4832 = vmatpush.msra.mxu0 0.0
  %4833 = vmatpush.msra.mxu0 0.0
  %4834 = vmatpush.msra.mxu0 0.0
  %4835 = vmatpush.msra.mxu0 0.0
  %4836 = vmatpush.msra.mxu0 %v4538
  %4837 = vmatpush.msra.mxu0 %v4524
  %4838 = vmatpush.msra.mxu0 %v4510
  %4839 = vmatpush.msra.mxu0 %v4496
  %4840 = vmatmul.f32.gmra.mxu0 %v4602
  %v4841 = vpop.f32.mrf.mxu0
  %v4842 = vadd.f32 0.0, %v4841
  %4843 = vdwg.mxu0
  %4844 = vmatpush.msra.mxu0 0.0
  %4845 = vmatpush.msra.mxu0 0.0
  %4846 = vmatpush.msra.mxu0 0.0
  %4847 = vmatpush.msra.mxu0 0.0
  %4848 = vmatpush.msra.mxu0 0.0
  %4849 = vmatpush.msra.mxu0 0.0
  %4850 = vmatpush.msra.mxu0 0.0
  %4851 = vmatpush.msra.mxu0 0.0
  %4852 = vmatpush.msra.mxu0 0.0
  %4853 = vmatpush.msra.mxu0 0.0
  %4854 = vmatpush.msra.mxu0 0.0
  %4855 = vmatpush.msra.mxu0 0.0
  %4856 = vmatpush.msra.mxu0 %v4539
  %4857 = vmatpush.msra.mxu0 %v4525
  %4858 = vmatpush.msra.mxu0 %v4511
  %4859 = vmatpush.msra.mxu0 %v4497
  %4860 = vmatmul.f32.gmra.mxu0 %v4602
  %v4861 = vpop.f32.mrf.mxu0
  %v4862 = vadd.f32 0.0, %v4861
  %4863 = vdwg.mxu0
  %4864 = vmatpush.msra.mxu0 0.0
  %4865 = vmatpush.msra.mxu0 0.0
  %4866 = vmatpush.msra.mxu0 0.0
  %4867 = vmatpush.msra.mxu0 0.0
  %4868 = vmatpush.msra.mxu0 0.0
  %4869 = vmatpush.msra.mxu0 0.0
  %4870 = vmatpush.msra.mxu0 0.0
  %4871 = vmatpush.msra.mxu0 0.0
  %4872 = vmatpush.msra.mxu0 0.0
  %4873 = vmatpush.msra.mxu0 0.0
  %4874 = vmatpush.msra.mxu0 0.0
  %4875 = vmatpush.msra.mxu0 0.0
  %4876 = vmatpush.msra.mxu0 %v4540
  %4877 = vmatpush.msra.mxu0 %v4526
  %4878 = vmatpush.msra.mxu0 %v4512
  %4879 = vmatpush.msra.mxu0 %v4498
  %4880 = vmatmul.f32.gmra.mxu0 %v4602
  %v4881 = vpop.f32.mrf.mxu0
  %v4882 = vadd.f32 0.0, %v4881
  %4883 = vdwg.mxu0
  %4884 = vmatpush.msra.mxu0 0.0
  %4885 = vmatpush.msra.mxu0 0.0
  %4886 = vmatpush.msra.mxu0 0.0
  %4887 = vmatpush.msra.mxu0 0.0
  %4888 = vmatpush.msra.mxu0 0.0
  %4889 = vmatpush.msra.mxu0 0.0
  %4890 = vmatpush.msra.mxu0 0.0
  %4891 = vmatpush.msra.mxu0 0.0
  %4892 = vmatpush.msra.mxu0 0.0
  %4893 = vmatpush.msra.mxu0 0.0
  %4894 = vmatpush.msra.mxu0 0.0
  %4895 = vmatpush.msra.mxu0 0.0
  %4896 = vmatpush.msra.mxu0 %v4483
  %4897 = vmatpush.msra.mxu0 %v4453
  %4898 = vmatpush.msra.mxu0 %v4423
  %4899 = vmatpush.msra.mxu0 %v4393
  %4900 = vmatmul.f32.gmra.mxu0 %v4602
  %v4901 = vpop.f32.mrf.mxu0
  %v4902 = vadd.f32 0.0, %v4901
  %4903 = vdwg.mxu0
  %v4904 = vadd.f32 %v4347, %v4622
  %v4905 = vadd.f32 %v4348, %v4642
  %v4906 = vadd.f32 %v4349, %v4662
  %v4907 = vadd.f32 %v4350, %v4682
  %v4908 = vadd.f32 %v4351, %v4702
  %v4909 = vadd.f32 %v4352, %v4722
  %v4910 = vadd.f32 %v4353, %v4742
  %v4911 = vadd.f32 %v4354, %v4762
  %v4912 = vadd.f32 %v4355, %v4782
  %v4913 = vadd.f32 %v4356, %v4802
  %v4914 = vadd.f32 %v4357, %v4822
  %v4915 = vadd.f32 %v4358, %v4842
  %v4916 = vadd.f32 %v4359, %v4862
  %v4917 = vadd.f32 %v4360, %v4882
  %v4918 = vadd.f32 %v4361, %v4902
  %v4919 = vtanh.pop %v4904
  %v4920 = vtanh.pop %v4905
  %v4921 = vtanh.pop %v4906
  %v4922 = vtanh.pop %v4907
  %v4923 = vtanh.pop %v4908
  %v4924 = vtanh.pop %v4909
  %v4925 = vtanh.pop %v4910
  %v4926 = vtanh.pop %v4911
  %v4927 = vtanh.pop %v4912
  %v4928 = vtanh.pop %v4913
  %v4929 = vtanh.pop %v4914
  %v4930 = vtanh.pop %v4915
  %v4931 = vtanh.pop %v4916
  %v4932 = vtanh.pop %v4917
  %v4933 = vtanh.pop %v4918
  %v4949 = vrot.slane %v4920, 7
  %v4950 = vrot.slane %v4921, 6
  %v4951 = vrot.slane %v4922, 5
  %v4952 = vrot.slane %v4923, 4
  %v4953 = vrot.slane %v4924, 3
  %v4954 = vrot.slane %v4925, 2
  %v4955 = vrot.slane %v4926, 1
  %v4956 = vrot.slane %v4928, 7
  %v4957 = vrot.slane %v4929, 6
  %v4958 = vrot.slane %v4930, 5
  %v4959 = vrot.slane %v4931, 4
  %v4960 = vrot.slane %v4932, 3
  %v4961 = vrot.slane %v4933, 2
  %vm4962 = vcmask 1040384
  %v4963 = vsel %vm4962, %v4919, %v4949
  %vm4964 = vcmask 1042434
  %v4965 = vsel %vm4964, %v4950, %v4951
  %vm4966 = vcmask 1041408
  %v4967 = vsel %vm4966, %v4963, %v4965
  %vm4968 = vcmask 1044484
  %v4969 = vsel %vm4968, %v4952, %v4953
  %vm4970 = vcmask 1046534
  %v4971 = vsel %vm4970, %v4954, %v4955
  %vm4972 = vcmask 1045508
  %v4973 = vsel %vm4972, %v4969, %v4971
  %vm4974 = vcmask 1043456
  %v4975 = vsel %vm4974, %v4967, %v4973
  %v4976 = vsel %vm4962, %v4927, %v4956
  %v4977 = vsel %vm4964, %v4957, %v4958
  %v4978 = vsel %vm4966, %v4976, %v4977
  %v4979 = vsel %vm4968, %v4959, %v4960
  %v4980 = vsel %vm4972, %v4979, %v4961
  %v4981 = vsel %vm4974, %v4978, %v4980
  %4984 = vst [vmem:[%s3] sm:$0xff] %v4975
  %v4985 = vlaneseq
  %vm4986 = vcmp.ge.s32.totalorder %v4985, 0
  %vm4987 = vcmp.lt.s32.totalorder %v4985, 776
  %vm4988 = vmand %vm4986, %vm4987
  %4989 = vst.msk [vmem:[%s3 + $0x8] sm:$0x7f] %vm4988, %v4981
  // Predicated region
  $region14: #{decoder_forward.7} parent=0 // pred_check
    _
  $region15: #{decoder_forward.7} parent=0 // pred_check_branch
    %4991 = sbr.rel (0) target = $region17
  $region16: #{decoder_forward.7} parent=0 // pred_region
    _
  $region17: #{decoder_forward.7} parent=0 // pred_fallthru
    _
  // Predicated region
  $region18: #{decoder_forward.7} parent=0 // pred_check
    _
  $region19: #{decoder_forward.7} parent=0 // pred_check_branch
    %4993 = sbr.rel (0) target = $region21
  $region20: #{decoder_forward.7} parent=0 // pred_region
    _
  $region21: #{decoder_forward.7} parent=0 // pred_fallthru
    _

</llo_original>
